<compile_context>
chip_gen: v7x
topology: tpu7x:2x2x1
jax: 0.10.0
libtpu: 0.0.40
codegen_flags: <defaults>
</compile_context>

<pallas_src>
import math

import jax
import jax.numpy as jnp
from jax.experimental import pallas as pl
from jax.experimental.pallas import tpu as pltpu


# ----------------------------- in-kernel helpers ------------------------------
def _silu(x):
    # x * sigmoid(x); exp and the approximate reciprocal both run on the EUP slot.
    return x * pl.reciprocal(1.0 + jnp.exp(-x), approx=True)


# ----------------------------- fused Pallas cell ------------------------------
def _residual_conv_cell_pallas(x_nhwc, params, layer_ks, *, residual):
    """x_nhwc: (B, H, W, Cin) f32. params: list of (w_hwio, b). Returns (B,H,W,Cout)."""
    B, H, W, Cin = x_nhwc.shape
    L = len(params)
    c_out_last = params[-1][0].shape[-1]

    # --- prepare matmul-ready operands (bf16 weights, f32 biases) ---------------
    flat_inputs = [x_nhwc]
    in_specs = [pl.BlockSpec((1, H, W, Cin), lambda b: (b, 0, 0, 0))]
    for (w, bvec), k in zip(params, layer_ks):
        ci, co = w.shape[2], w.shape[3]
        w_mat = w.reshape(k * k, ci, co).astype(jnp.bfloat16)   # tap-major
        b_mat = bvec.reshape(1, co).astype(jnp.float32)
        flat_inputs += [w_mat, b_mat]
        in_specs += [pl.BlockSpec((k * k, ci, co), lambda b: (0, 0, 0)),
                     pl.BlockSpec((1, co), lambda b: (0, 0))]

    # --- padded-activation scratch for the spatial (k>1) convs ------------------
    spatial_ks = sorted({k for k in layer_ks if k > 1})
    has_pad = bool(spatial_ks)
    scratch_shapes = []
    col_off = 8                                   # sublane-tile aligned interior
    if has_pad:
        assert len(spatial_ks) == 1, "all spatial convs share one kernel_size"
        k_sp = spatial_ks[0]
        assert k_sp <= 9
        pad_c = max(w.shape[2] for (w, _), k in zip(params, layer_ks) if k > 1)
        hp = H + k_sp - 1
        wp = col_off + W + 8                      # zero halo on both sides of W
        scratch_shapes.append(pltpu.VMEM((hp, wp, pad_c), jnp.float32))

    def kernel(*refs):
        # refs = [x, (w, b) * L, out, (pad scratch)]
        x_ref = refs[0]
        w_refs = refs[1:1 + 2 * L:2]
        b_refs = refs[2:2 + 2 * L:2]
        o_ref = refs[1 + 2 * L]
        pad_ref = refs[2 + 2 * L] if has_pad else None

        xin = x_ref[0].astype(jnp.float32)                    # (H, W, Cin)

        if has_pad:
            # zero the halo once; the interior is overwritten before every use
            pad_ref[...] = jnp.zeros_like(pad_ref)

        h = xin
        for li, k in enumerate(layer_ks):
            h = _silu(h)                                       # (H, W, c) f32
            c = h.shape[-1]
            w_ref = w_refs[li]
            co = w_ref.shape[-1]
            if k == 1:
                y = jnp.dot(h.reshape(H * W, c).astype(jnp.bfloat16), w_ref[0],
                            preferred_element_type=jnp.float32)
            else:
                lo = (k - 1) // 2
                # aligned interior store (row offset is a major dim, col offset = 8)
                pad_ref[lo:lo + H, col_off:col_off + W, 0:c] = h
                y = jnp.zeros((H * W, co), jnp.float32)
                for kh in range(k):
                    for kw in range(k):
                        cs = col_off + kw - lo
                        win = pad_ref[kh:kh + H, cs:cs + W, 0:c]   # (H, W, c)
                        y = y + jnp.dot(
                            win.reshape(H * W, c).astype(jnp.bfloat16),
                            w_ref[kh * k + kw],
                            preferred_element_type=jnp.float32)
            y = y + b_refs[li][...]                            # (H*W, co) + (1, co)
            h = y.reshape(H, W, co)

        out = h.reshape(H * W, h.shape[-1])
        if residual:
            out = out + xin.reshape(H * W, Cin)
        o_ref[0] = out.astype(o_ref.dtype)

    out = pl.pallas_call(
        kernel,
        out_shape=jax.ShapeDtypeStruct((B, H * W, c_out_last), jnp.float32),
        grid=(B,),
        in_specs=in_specs,
        out_specs=pl.BlockSpec((1, H * W, c_out_last), lambda b: (b, 0, 0)),
        scratch_shapes=scratch_shapes,
        compiler_params=pltpu.CompilerParams(dimension_semantics=("parallel",)),
    )(*flat_inputs)
    return out.reshape(B, H, W, c_out_last)


# ----------------------------- public wrapper (NCHW) --------------------------
def residual_conv_cell_forward(params, layer_ks, x_nchw, *, residual=True):
    """ResidualConvCell.forward.  x_nchw: (B, Cin, H, W) as in PyTorch."""
    x = jnp.transpose(x_nchw, (0, 2, 3, 1)).astype(jnp.float32)   # one boundary transpose
    out = _residual_conv_cell_pallas(x, params, layer_ks, residual=residual)
    return jnp.transpose(out, (0, 3, 1, 2))                       # back to NCHW


# ----------------------------- parameter construction -------------------------
def make_residual_conv_cell_params(key, *, n_layers, in_filters, bottleneck_ratio,
                                   kernel_size, init_scaler, residual=True,
                                   use_1x1=True, output_ratio=1.0):
    """Mirrors ResidualConvCell.__init__ (weights in HWIO layout)."""
    if residual:
        assert output_ratio == 1.0
    out_filters = int(in_filters * output_ratio)
    bneck = int(in_filters * bottleneck_ratio)
    k_edge = 1 if use_1x1 else kernel_size
    descs = [(k_edge, in_filters, bneck)]
    descs += [(kernel_size, bneck, bneck)] * n_layers
    descs += [(k_edge, bneck, out_filters)]

    keys = jax.random.split(key, len(descs))
    params = []
    for i, ((k, ci, co), kk) in enumerate(zip(descs, keys)):
        wkey, bkey = jax.random.split(kk)
        w = jax.random.normal(wkey, (k, k, ci, co), jnp.float32) / math.sqrt(k * k * ci)
        b = 0.01 * jax.random.normal(bkey, (co,), jnp.float32)
        if i == len(descs) - 1:
            w = w * init_scaler            # convs[-1].weight.data *= init_scaler
        params.append((w, b))
    layer_ks = tuple(k for (k, _, _) in descs)
    return params, layer_ks


# ----------------------------- pure-JAX reference -----------------------------
def residual_conv_cell_reference(params, layer_ks, x_nchw, *, residual=True):
    x = jnp.transpose(x_nchw, (0, 2, 3, 1)).astype(jnp.float32)
    h = x
    for (w, b), _k in zip(params, layer_ks):
        h = h * jax.nn.sigmoid(h)                               # SiLU
        h = jax.lax.conv_general_dilated(
            h, w, window_strides=(1, 1), padding="SAME",
            dimension_numbers=("NHWC", "HWIO", "NHWC"),
            precision=jax.lax.Precision.HIGHEST) + b.reshape(1, 1, 1, -1)
    out = x + h if residual else h
    return jnp.transpose(out, (0, 3, 1, 2))


# ----------------------------- demo -------------------------------------------
if __name__ == "__main__":
    key = jax.random.PRNGKey(0)
    kp, kx = jax.random.split(key)

    B, H, W = 2, 16, 16
    in_filters = 32
    n_layers = 2
    bottleneck_ratio = 0.5
    kernel_size = 3
    init_scaler = 1.0 / math.sqrt(6.0)
    residual = True
    use_1x1 = True

    params, layer_ks = make_residual_conv_cell_params(
        kp, n_layers=n_layers, in_filters=in_filters,
        bottleneck_ratio=bottleneck_ratio, kernel_size=kernel_size,
        init_scaler=init_scaler, residual=residual, use_1x1=use_1x1,
        output_ratio=1.0)

    x = jax.random.normal(kx, (B, in_filters, H, W), jnp.float32)   # NCHW input

    fwd = jax.jit(lambda p, xx: residual_conv_cell_forward(
        p, layer_ks, xx, residual=residual))
    out = fwd(params, x)
    jax.block_until_ready(out)

    ref = residual_conv_cell_reference(params, layer_ks, x, residual=residual)
    assert out.shape == (B, in_filters, H, W), out.shape
    err = float(jnp.max(jnp.abs(out - ref)))
    scale = float(jnp.max(jnp.abs(ref)))
    # bf16 matmul operands + approx reciprocal vs. full-f32 reference
    assert err <= 0.05 * scale + 1e-3, (err, scale)
    print("KERNEL_OK")
</pallas_src>

<mosaic_0001>
module attributes {stable_mosaic.version = 11 : i64} {
  func.func @kernel(%arg0: i32, %arg1: memref<1x16x16x32xf32, #tpu.memory_space<vmem>>, %arg2: memref<1x32x16xbf16, #tpu.memory_space<vmem>>, %arg3: memref<1x16xf32, #tpu.memory_space<vmem>>, %arg4: memref<9x16x16xbf16, #tpu.memory_space<vmem>>, %arg5: memref<1x16xf32, #tpu.memory_space<vmem>>, %arg6: memref<9x16x16xbf16, #tpu.memory_space<vmem>>, %arg7: memref<1x16xf32, #tpu.memory_space<vmem>>, %arg8: memref<1x16x32xbf16, #tpu.memory_space<vmem>>, %arg9: memref<1x32xf32, #tpu.memory_space<vmem>>, %arg10: memref<1x256x32xf32, #tpu.memory_space<vmem>>, %arg11: memref<18x32x16xf32, #tpu.memory_space<vmem>>) attributes {dimension_semantics = [#tpu.dimension_semantics<parallel>], iteration_bounds = array<i64: 2>, scalar_prefetch = 0 : i64, scratch_operands = 1 : i64, tpu.core_type = #tpu.core_type<tc>, window_params = [{transform_indices = @transform_0, window_bounds = array<i64: 1, 16, 16, 32>}, {pipeline_mode = #tpu.pipeline_mode<synchronous>, transform_indices = @transform_1, window_bounds = array<i64: 1, 32, 16>}, {pipeline_mode = #tpu.pipeline_mode<synchronous>, transform_indices = @transform_2, window_bounds = array<i64: 1, 16>}, {pipeline_mode = #tpu.pipeline_mode<synchronous>, transform_indices = @transform_3, window_bounds = array<i64: 9, 16, 16>}, {pipeline_mode = #tpu.pipeline_mode<synchronous>, transform_indices = @transform_4, window_bounds = array<i64: 1, 16>}, {pipeline_mode = #tpu.pipeline_mode<synchronous>, transform_indices = @transform_5, window_bounds = array<i64: 9, 16, 16>}, {pipeline_mode = #tpu.pipeline_mode<synchronous>, transform_indices = @transform_6, window_bounds = array<i64: 1, 16>}, {pipeline_mode = #tpu.pipeline_mode<synchronous>, transform_indices = @transform_7, window_bounds = array<i64: 1, 16, 32>}, {pipeline_mode = #tpu.pipeline_mode<synchronous>, transform_indices = @transform_8, window_bounds = array<i64: 1, 32>}, {transform_indices = @transform_9, window_bounds = array<i64: 1, 256, 32>}]} {
    %c0 = arith.constant 0 : index
    %c0_0 = arith.constant 0 : index
    %c0_1 = arith.constant 0 : index
    %c0_2 = arith.constant 0 : index
    %0 = vector.load %arg1[%c0, %c0_0, %c0_1, %c0_2] : memref<1x16x16x32xf32, #tpu.memory_space<vmem>>, vector<1x16x16x32xf32>
    %1 = vector.shape_cast %0 : vector<1x16x16x32xf32> to vector<16x16x32xf32>
    %cst = arith.constant 0.000000e+00 : f32
    %2 = vector.broadcast %cst : f32 to vector<18x32x16xf32>
    %c0_3 = arith.constant 0 : index
    %c0_4 = arith.constant 0 : index
    %c0_5 = arith.constant 0 : index
    %3 = vector.load %arg11[%c0_3, %c0_4, %c0_5] : memref<18x32x16xf32, #tpu.memory_space<vmem>>, vector<18x32x16xf32>
    tpu.vector_store %arg11[%c0_3, %c0_4, %c0_5], %2 {strides = array<i32>} : memref<18x32x16xf32, #tpu.memory_space<vmem>>, vector<18x32x16xf32>,
    %cst_6 = arith.constant 0.000000e+00 : f32
    %4 = vector.broadcast %cst_6 : f32 to vector<16x16x32xf32>
    %5 = arith.subf %4, %1 : vector<16x16x32xf32>
    %6 = math.exp %5 : vector<16x16x32xf32>
    %cst_7 = arith.constant 1.000000e+00 : f32
    %7 = vector.broadcast %cst_7 : f32 to vector<16x16x32xf32>
    %8 = arith.addf %7, %6 : vector<16x16x32xf32>
    %9 = tpu.reciprocal %8 {approx = true} : vector<16x16x32xf32> -> vector<16x16x32xf32>
    %10 = arith.mulf %1, %9 : vector<16x16x32xf32>
    %11 = vector.shape_cast %10 : vector<16x16x32xf32> to vector<256x32xf32>
    %12 = arith.truncf %11 : vector<256x32xf32> to vector<256x32xbf16>
    %c0_8 = arith.constant 0 : index
    %c0_9 = arith.constant 0 : index
    %c0_10 = arith.constant 0 : index
    %13 = vector.load %arg2[%c0_8, %c0_9, %c0_10] : memref<1x32x16xbf16, #tpu.memory_space<vmem>>, vector<1x32x16xbf16>
    %14 = vector.shape_cast %13 : vector<1x32x16xbf16> to vector<32x16xbf16>
    %cst_11 = arith.constant dense<0.000000e+00> : vector<256x16xf32>
    %15 = tpu.matmul %12, %14, %cst_11 {dimension_numbers = #tpu.dot_dimension_numbers<[1], [0], [0], [1], [0, 0, 1, 1], [], []>} : vector<256x32xbf16>, vector<32x16xbf16>, vector<256x16xf32> -> vector<256x16xf32>
    %c0_12 = arith.constant 0 : index
    %c0_13 = arith.constant 0 : index
    %16 = vector.load %arg3[%c0_12, %c0_13] : memref<1x16xf32, #tpu.memory_space<vmem>>, vector<1x16xf32>
    %17 = vector.broadcast %16 : vector<1x16xf32> to vector<256x16xf32>
    %18 = arith.addf %15, %17 : vector<256x16xf32>
    %19 = vector.shape_cast %18 : vector<256x16xf32> to vector<16x16x16xf32>
    %cst_14 = arith.constant 0.000000e+00 : f32
    %20 = vector.broadcast %cst_14 : f32 to vector<16x16x16xf32>
    %21 = arith.subf %20, %19 : vector<16x16x16xf32>
    %22 = math.exp %21 : vector<16x16x16xf32>
    %cst_15 = arith.constant 1.000000e+00 : f32
    %23 = vector.broadcast %cst_15 : f32 to vector<16x16x16xf32>
    %24 = arith.addf %23, %22 : vector<16x16x16xf32>
    %25 = tpu.reciprocal %24 {approx = true} : vector<16x16x16xf32> -> vector<16x16x16xf32>
    %26 = arith.mulf %19, %25 : vector<16x16x16xf32>
    %c1 = arith.constant 1 : index
    %c8 = arith.constant 8 : index
    %c0_16 = arith.constant 0 : index
    %27 = vector.load %arg11[%c1, %c8, %c0_16] : memref<18x32x16xf32, #tpu.memory_space<vmem>>, vector<16x16x16xf32>
    tpu.vector_store %arg11[%c1, %c8, %c0_16], %26 {strides = array<i32>} : memref<18x32x16xf32, #tpu.memory_space<vmem>>, vector<16x16x16xf32>,
    %cst_17 = arith.constant 0.000000e+00 : f32
    %28 = vector.broadcast %cst_17 : f32 to vector<256x16xf32>
    %c0_18 = arith.constant 0 : index
    %c7 = arith.constant 7 : index
    %c0_19 = arith.constant 0 : index
    %29 = vector.load %arg11[%c0_18, %c7, %c0_19] : memref<18x32x16xf32, #tpu.memory_space<vmem>>, vector<16x16x16xf32>
    %30 = vector.shape_cast %29 : vector<16x16x16xf32> to vector<256x16xf32>
    %31 = arith.truncf %30 : vector<256x16xf32> to vector<256x16xbf16>
    %c0_20 = arith.constant 0 : index
    %c0_21 = arith.constant 0 : index
    %c0_22 = arith.constant 0 : index
    %32 = vector.load %arg4[%c0_20, %c0_21, %c0_22] : memref<9x16x16xbf16, #tpu.memory_space<vmem>>, vector<1x16x16xbf16>
    %33 = vector.shape_cast %32 : vector<1x16x16xbf16> to vector<16x16xbf16>
    %cst_23 = arith.constant dense<0.000000e+00> : vector<256x16xf32>
    %34 = tpu.matmul %31, %33, %cst_23 {dimension_numbers = #tpu.dot_dimension_numbers<[1], [0], [0], [1], [0, 0, 1, 1], [], []>} : vector<256x16xbf16>, vector<16x16xbf16>, vector<256x16xf32> -> vector<256x16xf32>
    %35 = arith.addf %28, %34 : vector<256x16xf32>
    %c0_24 = arith.constant 0 : index
    %c8_25 = arith.constant 8 : index
    %c0_26 = arith.constant 0 : index
    %36 = vector.load %arg11[%c0_24, %c8_25, %c0_26] : memref<18x32x16xf32, #tpu.memory_space<vmem>>, vector<16x16x16xf32>
    %37 = vector.shape_cast %36 : vector<16x16x16xf32> to vector<256x16xf32>
    %38 = arith.truncf %37 : vector<256x16xf32> to vector<256x16xbf16>
    %c1_27 = arith.constant 1 : index
    %c0_28 = arith.constant 0 : index
    %c0_29 = arith.constant 0 : index
    %39 = vector.load %arg4[%c1_27, %c0_28, %c0_29] : memref<9x16x16xbf16, #tpu.memory_space<vmem>>, vector<1x16x16xbf16>
    %40 = vector.shape_cast %39 : vector<1x16x16xbf16> to vector<16x16xbf16>
    %cst_30 = arith.constant dense<0.000000e+00> : vector<256x16xf32>
    %41 = tpu.matmul %38, %40, %cst_30 {dimension_numbers = #tpu.dot_dimension_numbers<[1], [0], [0], [1], [0, 0, 1, 1], [], []>} : vector<256x16xbf16>, vector<16x16xbf16>, vector<256x16xf32> -> vector<256x16xf32>
    %42 = arith.addf %35, %41 : vector<256x16xf32>
    %c0_31 = arith.constant 0 : index
    %c9 = arith.constant 9 : index
    %c0_32 = arith.constant 0 : index
    %43 = vector.load %arg11[%c0_31, %c9, %c0_32] : memref<18x32x16xf32, #tpu.memory_space<vmem>>, vector<16x16x16xf32>
    %44 = vector.shape_cast %43 : vector<16x16x16xf32> to vector<256x16xf32>
    %45 = arith.truncf %44 : vector<256x16xf32> to vector<256x16xbf16>
    %c2 = arith.constant 2 : index
    %c0_33 = arith.constant 0 : index
    %c0_34 = arith.constant 0 : index
    %46 = vector.load %arg4[%c2, %c0_33, %c0_34] : memref<9x16x16xbf16, #tpu.memory_space<vmem>>, vector<1x16x16xbf16>
    %47 = vector.shape_cast %46 : vector<1x16x16xbf16> to vector<16x16xbf16>
    %cst_35 = arith.constant dense<0.000000e+00> : vector<256x16xf32>
    %48 = tpu.matmul %45, %47, %cst_35 {dimension_numbers = #tpu.dot_dimension_numbers<[1], [0], [0], [1], [0, 0, 1, 1], [], []>} : vector<256x16xbf16>, vector<16x16xbf16>, vector<256x16xf32> -> vector<256x16xf32>
    %49 = arith.addf %42, %48 : vector<256x16xf32>
    %c1_36 = arith.constant 1 : index
    %c7_37 = arith.constant 7 : index
    %c0_38 = arith.constant 0 : index
    %50 = vector.load %arg11[%c1_36, %c7_37, %c0_38] : memref<18x32x16xf32, #tpu.memory_space<vmem>>, vector<16x16x16xf32>
    %51 = vector.shape_cast %50 : vector<16x16x16xf32> to vector<256x16xf32>
    %52 = arith.truncf %51 : vector<256x16xf32> to vector<256x16xbf16>
    %c3 = arith.constant 3 : index
    %c0_39 = arith.constant 0 : index
    %c0_40 = arith.constant 0 : index
    %53 = vector.load %arg4[%c3, %c0_39, %c0_40] : memref<9x16x16xbf16, #tpu.memory_space<vmem>>, vector<1x16x16xbf16>
    %54 = vector.shape_cast %53 : vector<1x16x16xbf16> to vector<16x16xbf16>
    %cst_41 = arith.constant dense<0.000000e+00> : vector<256x16xf32>
    %55 = tpu.matmul %52, %54, %cst_41 {dimension_numbers = #tpu.dot_dimension_numbers<[1], [0], [0], [1], [0, 0, 1, 1], [], []>} : vector<256x16xbf16>, vector<16x16xbf16>, vector<256x16xf32> -> vector<256x16xf32>
    %56 = arith.addf %49, %55 : vector<256x16xf32>
    %c1_42 = arith.constant 1 : index
    %c8_43 = arith.constant 8 : index
    %c0_44 = arith.constant 0 : index
    %57 = vector.load %arg11[%c1_42, %c8_43, %c0_44] : memref<18x32x16xf32, #tpu.memory_space<vmem>>, vector<16x16x16xf32>
    %58 = vector.shape_cast %57 : vector<16x16x16xf32> to vector<256x16xf32>
    %59 = arith.truncf %58 : vector<256x16xf32> to vector<256x16xbf16>
    %c4 = arith.constant 4 : index
    %c0_45 = arith.constant 0 : index
    %c0_46 = arith.constant 0 : index
    %60 = vector.load %arg4[%c4, %c0_45, %c0_46] : memref<9x16x16xbf16, #tpu.memory_space<vmem>>, vector<1x16x16xbf16>
    %61 = vector.shape_cast %60 : vector<1x16x16xbf16> to vector<16x16xbf16>
    %cst_47 = arith.constant dense<0.000000e+00> : vector<256x16xf32>
    %62 = tpu.matmul %59, %61, %cst_47 {dimension_numbers = #tpu.dot_dimension_numbers<[1], [0], [0], [1], [0, 0, 1, 1], [], []>} : vector<256x16xbf16>, vector<16x16xbf16>, vector<256x16xf32> -> vector<256x16xf32>
    %63 = arith.addf %56, %62 : vector<256x16xf32>
    %c1_48 = arith.constant 1 : index
    %c9_49 = arith.constant 9 : index
    %c0_50 = arith.constant 0 : index
    %64 = vector.load %arg11[%c1_48, %c9_49, %c0_50] : memref<18x32x16xf32, #tpu.memory_space<vmem>>, vector<16x16x16xf32>
    %65 = vector.shape_cast %64 : vector<16x16x16xf32> to vector<256x16xf32>
    %66 = arith.truncf %65 : vector<256x16xf32> to vector<256x16xbf16>
    %c5 = arith.constant 5 : index
    %c0_51 = arith.constant 0 : index
    %c0_52 = arith.constant 0 : index
    %67 = vector.load %arg4[%c5, %c0_51, %c0_52] : memref<9x16x16xbf16, #tpu.memory_space<vmem>>, vector<1x16x16xbf16>
    %68 = vector.shape_cast %67 : vector<1x16x16xbf16> to vector<16x16xbf16>
    %cst_53 = arith.constant dense<0.000000e+00> : vector<256x16xf32>
    %69 = tpu.matmul %66, %68, %cst_53 {dimension_numbers = #tpu.dot_dimension_numbers<[1], [0], [0], [1], [0, 0, 1, 1], [], []>} : vector<256x16xbf16>, vector<16x16xbf16>, vector<256x16xf32> -> vector<256x16xf32>
    %70 = arith.addf %63, %69 : vector<256x16xf32>
    %c2_54 = arith.constant 2 : index
    %c7_55 = arith.constant 7 : index
    %c0_56 = arith.constant 0 : index
    %71 = vector.load %arg11[%c2_54, %c7_55, %c0_56] : memref<18x32x16xf32, #tpu.memory_space<vmem>>, vector<16x16x16xf32>
    %72 = vector.shape_cast %71 : vector<16x16x16xf32> to vector<256x16xf32>
    %73 = arith.truncf %72 : vector<256x16xf32> to vector<256x16xbf16>
    %c6 = arith.constant 6 : index
    %c0_57 = arith.constant 0 : index
    %c0_58 = arith.constant 0 : index
    %74 = vector.load %arg4[%c6, %c0_57, %c0_58] : memref<9x16x16xbf16, #tpu.memory_space<vmem>>, vector<1x16x16xbf16>
    %75 = vector.shape_cast %74 : vector<1x16x16xbf16> to vector<16x16xbf16>
    %cst_59 = arith.constant dense<0.000000e+00> : vector<256x16xf32>
    %76 = tpu.matmul %73, %75, %cst_59 {dimension_numbers = #tpu.dot_dimension_numbers<[1], [0], [0], [1], [0, 0, 1, 1], [], []>} : vector<256x16xbf16>, vector<16x16xbf16>, vector<256x16xf32> -> vector<256x16xf32>
    %77 = arith.addf %70, %76 : vector<256x16xf32>
    %c2_60 = arith.constant 2 : index
    %c8_61 = arith.constant 8 : index
    %c0_62 = arith.constant 0 : index
    %78 = vector.load %arg11[%c2_60, %c8_61, %c0_62] : memref<18x32x16xf32, #tpu.memory_space<vmem>>, vector<16x16x16xf32>
    %79 = vector.shape_cast %78 : vector<16x16x16xf32> to vector<256x16xf32>
    %80 = arith.truncf %79 : vector<256x16xf32> to vector<256x16xbf16>
    %c7_63 = arith.constant 7 : index
    %c0_64 = arith.constant 0 : index
    %c0_65 = arith.constant 0 : index
    %81 = vector.load %arg4[%c7_63, %c0_64, %c0_65] : memref<9x16x16xbf16, #tpu.memory_space<vmem>>, vector<1x16x16xbf16>
    %82 = vector.shape_cast %81 : vector<1x16x16xbf16> to vector<16x16xbf16>
    %cst_66 = arith.constant dense<0.000000e+00> : vector<256x16xf32>
    %83 = tpu.matmul %80, %82, %cst_66 {dimension_numbers = #tpu.dot_dimension_numbers<[1], [0], [0], [1], [0, 0, 1, 1], [], []>} : vector<256x16xbf16>, vector<16x16xbf16>, vector<256x16xf32> -> vector<256x16xf32>
    %84 = arith.addf %77, %83 : vector<256x16xf32>
    %c2_67 = arith.constant 2 : index
    %c9_68 = arith.constant 9 : index
    %c0_69 = arith.constant 0 : index
    %85 = vector.load %arg11[%c2_67, %c9_68, %c0_69] : memref<18x32x16xf32, #tpu.memory_space<vmem>>, vector<16x16x16xf32>
    %86 = vector.shape_cast %85 : vector<16x16x16xf32> to vector<256x16xf32>
    %87 = arith.truncf %86 : vector<256x16xf32> to vector<256x16xbf16>
    %c8_70 = arith.constant 8 : index
    %c0_71 = arith.constant 0 : index
    %c0_72 = arith.constant 0 : index
    %88 = vector.load %arg4[%c8_70, %c0_71, %c0_72] : memref<9x16x16xbf16, #tpu.memory_space<vmem>>, vector<1x16x16xbf16>
    %89 = vector.shape_cast %88 : vector<1x16x16xbf16> to vector<16x16xbf16>
    %cst_73 = arith.constant dense<0.000000e+00> : vector<256x16xf32>
    %90 = tpu.matmul %87, %89, %cst_73 {dimension_numbers = #tpu.dot_dimension_numbers<[1], [0], [0], [1], [0, 0, 1, 1], [], []>} : vector<256x16xbf16>, vector<16x16xbf16>, vector<256x16xf32> -> vector<256x16xf32>
    %91 = arith.addf %84, %90 : vector<256x16xf32>
    %c0_74 = arith.constant 0 : index
    %c0_75 = arith.constant 0 : index
    %92 = vector.load %arg5[%c0_74, %c0_75] : memref<1x16xf32, #tpu.memory_space<vmem>>, vector<1x16xf32>
    %93 = vector.broadcast %92 : vector<1x16xf32> to vector<256x16xf32>
    %94 = arith.addf %91, %93 : vector<256x16xf32>
    %95 = vector.shape_cast %94 : vector<256x16xf32> to vector<16x16x16xf32>
    %cst_76 = arith.constant 0.000000e+00 : f32
    %96 = vector.broadcast %cst_76 : f32 to vector<16x16x16xf32>
    %97 = arith.subf %96, %95 : vector<16x16x16xf32>
    %98 = math.exp %97 : vector<16x16x16xf32>
    %cst_77 = arith.constant 1.000000e+00 : f32
    %99 = vector.broadcast %cst_77 : f32 to vector<16x16x16xf32>
    %100 = arith.addf %99, %98 : vector<16x16x16xf32>
    %101 = tpu.reciprocal %100 {approx = true} : vector<16x16x16xf32> -> vector<16x16x16xf32>
    %102 = arith.mulf %95, %101 : vector<16x16x16xf32>
    %c1_78 = arith.constant 1 : index
    %c8_79 = arith.constant 8 : index
    %c0_80 = arith.constant 0 : index
    %103 = vector.load %arg11[%c1_78, %c8_79, %c0_80] : memref<18x32x16xf32, #tpu.memory_space<vmem>>, vector<16x16x16xf32>
    tpu.vector_store %arg11[%c1_78, %c8_79, %c0_80], %102 {strides = array<i32>} : memref<18x32x16xf32, #tpu.memory_space<vmem>>, vector<16x16x16xf32>,
    %cst_81 = arith.constant 0.000000e+00 : f32
    %104 = vector.broadcast %cst_81 : f32 to vector<256x16xf32>
    %c0_82 = arith.constant 0 : index
    %c7_83 = arith.constant 7 : index
    %c0_84 = arith.constant 0 : index
    %105 = vector.load %arg11[%c0_82, %c7_83, %c0_84] : memref<18x32x16xf32, #tpu.memory_space<vmem>>, vector<16x16x16xf32>
    %106 = vector.shape_cast %105 : vector<16x16x16xf32> to vector<256x16xf32>
    %107 = arith.truncf %106 : vector<256x16xf32> to vector<256x16xbf16>
    %c0_85 = arith.constant 0 : index
    %c0_86 = arith.constant 0 : index
    %c0_87 = arith.constant 0 : index
    %108 = vector.load %arg6[%c0_85, %c0_86, %c0_87] : memref<9x16x16xbf16, #tpu.memory_space<vmem>>, vector<1x16x16xbf16>
    %109 = vector.shape_cast %108 : vector<1x16x16xbf16> to vector<16x16xbf16>
    %cst_88 = arith.constant dense<0.000000e+00> : vector<256x16xf32>
    %110 = tpu.matmul %107, %109, %cst_88 {dimension_numbers = #tpu.dot_dimension_numbers<[1], [0], [0], [1], [0, 0, 1, 1], [], []>} : vector<256x16xbf16>, vector<16x16xbf16>, vector<256x16xf32> -> vector<256x16xf32>
    %111 = arith.addf %104, %110 : vector<256x16xf32>
    %c0_89 = arith.constant 0 : index
    %c8_90 = arith.constant 8 : index
    %c0_91 = arith.constant 0 : index
    %112 = vector.load %arg11[%c0_89, %c8_90, %c0_91] : memref<18x32x16xf32, #tpu.memory_space<vmem>>, vector<16x16x16xf32>
    %113 = vector.shape_cast %112 : vector<16x16x16xf32> to vector<256x16xf32>
    %114 = arith.truncf %113 : vector<256x16xf32> to vector<256x16xbf16>
    %c1_92 = arith.constant 1 : index
    %c0_93 = arith.constant 0 : index
    %c0_94 = arith.constant 0 : index
    %115 = vector.load %arg6[%c1_92, %c0_93, %c0_94] : memref<9x16x16xbf16, #tpu.memory_space<vmem>>, vector<1x16x16xbf16>
    %116 = vector.shape_cast %115 : vector<1x16x16xbf16> to vector<16x16xbf16>
    %cst_95 = arith.constant dense<0.000000e+00> : vector<256x16xf32>
    %117 = tpu.matmul %114, %116, %cst_95 {dimension_numbers = #tpu.dot_dimension_numbers<[1], [0], [0], [1], [0, 0, 1, 1], [], []>} : vector<256x16xbf16>, vector<16x16xbf16>, vector<256x16xf32> -> vector<256x16xf32>
    %118 = arith.addf %111, %117 : vector<256x16xf32>
    %c0_96 = arith.constant 0 : index
    %c9_97 = arith.constant 9 : index
    %c0_98 = arith.constant 0 : index
    %119 = vector.load %arg11[%c0_96, %c9_97, %c0_98] : memref<18x32x16xf32, #tpu.memory_space<vmem>>, vector<16x16x16xf32>
    %120 = vector.shape_cast %119 : vector<16x16x16xf32> to vector<256x16xf32>
    %121 = arith.truncf %120 : vector<256x16xf32> to vector<256x16xbf16>
    %c2_99 = arith.constant 2 : index
    %c0_100 = arith.constant 0 : index
    %c0_101 = arith.constant 0 : index
    %122 = vector.load %arg6[%c2_99, %c0_100, %c0_101] : memref<9x16x16xbf16, #tpu.memory_space<vmem>>, vector<1x16x16xbf16>
    %123 = vector.shape_cast %122 : vector<1x16x16xbf16> to vector<16x16xbf16>
    %cst_102 = arith.constant dense<0.000000e+00> : vector<256x16xf32>
    %124 = tpu.matmul %121, %123, %cst_102 {dimension_numbers = #tpu.dot_dimension_numbers<[1], [0], [0], [1], [0, 0, 1, 1], [], []>} : vector<256x16xbf16>, vector<16x16xbf16>, vector<256x16xf32> -> vector<256x16xf32>
    %125 = arith.addf %118, %124 : vector<256x16xf32>
    %c1_103 = arith.constant 1 : index
    %c7_104 = arith.constant 7 : index
    %c0_105 = arith.constant 0 : index
    %126 = vector.load %arg11[%c1_103, %c7_104, %c0_105] : memref<18x32x16xf32, #tpu.memory_space<vmem>>, vector<16x16x16xf32>
    %127 = vector.shape_cast %126 : vector<16x16x16xf32> to vector<256x16xf32>
    %128 = arith.truncf %127 : vector<256x16xf32> to vector<256x16xbf16>
    %c3_106 = arith.constant 3 : index
    %c0_107 = arith.constant 0 : index
    %c0_108 = arith.constant 0 : index
    %129 = vector.load %arg6[%c3_106, %c0_107, %c0_108] : memref<9x16x16xbf16, #tpu.memory_space<vmem>>, vector<1x16x16xbf16>
    %130 = vector.shape_cast %129 : vector<1x16x16xbf16> to vector<16x16xbf16>
    %cst_109 = arith.constant dense<0.000000e+00> : vector<256x16xf32>
    %131 = tpu.matmul %128, %130, %cst_109 {dimension_numbers = #tpu.dot_dimension_numbers<[1], [0], [0], [1], [0, 0, 1, 1], [], []>} : vector<256x16xbf16>, vector<16x16xbf16>, vector<256x16xf32> -> vector<256x16xf32>
    %132 = arith.addf %125, %131 : vector<256x16xf32>
    %c1_110 = arith.constant 1 : index
    %c8_111 = arith.constant 8 : index
    %c0_112 = arith.constant 0 : index
    %133 = vector.load %arg11[%c1_110, %c8_111, %c0_112] : memref<18x32x16xf32, #tpu.memory_space<vmem>>, vector<16x16x16xf32>
    %134 = vector.shape_cast %133 : vector<16x16x16xf32> to vector<256x16xf32>
    %135 = arith.truncf %134 : vector<256x16xf32> to vector<256x16xbf16>
    %c4_113 = arith.constant 4 : index
    %c0_114 = arith.constant 0 : index
    %c0_115 = arith.constant 0 : index
    %136 = vector.load %arg6[%c4_113, %c0_114, %c0_115] : memref<9x16x16xbf16, #tpu.memory_space<vmem>>, vector<1x16x16xbf16>
    %137 = vector.shape_cast %136 : vector<1x16x16xbf16> to vector<16x16xbf16>
    %cst_116 = arith.constant dense<0.000000e+00> : vector<256x16xf32>
    %138 = tpu.matmul %135, %137, %cst_116 {dimension_numbers = #tpu.dot_dimension_numbers<[1], [0], [0], [1], [0, 0, 1, 1], [], []>} : vector<256x16xbf16>, vector<16x16xbf16>, vector<256x16xf32> -> vector<256x16xf32>
    %139 = arith.addf %132, %138 : vector<256x16xf32>
    %c1_117 = arith.constant 1 : index
    %c9_118 = arith.constant 9 : index
    %c0_119 = arith.constant 0 : index
    %140 = vector.load %arg11[%c1_117, %c9_118, %c0_119] : memref<18x32x16xf32, #tpu.memory_space<vmem>>, vector<16x16x16xf32>
    %141 = vector.shape_cast %140 : vector<16x16x16xf32> to vector<256x16xf32>
    %142 = arith.truncf %141 : vector<256x16xf32> to vector<256x16xbf16>
    %c5_120 = arith.constant 5 : index
    %c0_121 = arith.constant 0 : index
    %c0_122 = arith.constant 0 : index
    %143 = vector.load %arg6[%c5_120, %c0_121, %c0_122] : memref<9x16x16xbf16, #tpu.memory_space<vmem>>, vector<1x16x16xbf16>
    %144 = vector.shape_cast %143 : vector<1x16x16xbf16> to vector<16x16xbf16>
    %cst_123 = arith.constant dense<0.000000e+00> : vector<256x16xf32>
    %145 = tpu.matmul %142, %144, %cst_123 {dimension_numbers = #tpu.dot_dimension_numbers<[1], [0], [0], [1], [0, 0, 1, 1], [], []>} : vector<256x16xbf16>, vector<16x16xbf16>, vector<256x16xf32> -> vector<256x16xf32>
    %146 = arith.addf %139, %145 : vector<256x16xf32>
    %c2_124 = arith.constant 2 : index
    %c7_125 = arith.constant 7 : index
    %c0_126 = arith.constant 0 : index
    %147 = vector.load %arg11[%c2_124, %c7_125, %c0_126] : memref<18x32x16xf32, #tpu.memory_space<vmem>>, vector<16x16x16xf32>
    %148 = vector.shape_cast %147 : vector<16x16x16xf32> to vector<256x16xf32>
    %149 = arith.truncf %148 : vector<256x16xf32> to vector<256x16xbf16>
    %c6_127 = arith.constant 6 : index
    %c0_128 = arith.constant 0 : index
    %c0_129 = arith.constant 0 : index
    %150 = vector.load %arg6[%c6_127, %c0_128, %c0_129] : memref<9x16x16xbf16, #tpu.memory_space<vmem>>, vector<1x16x16xbf16>
    %151 = vector.shape_cast %150 : vector<1x16x16xbf16> to vector<16x16xbf16>
    %cst_130 = arith.constant dense<0.000000e+00> : vector<256x16xf32>
    %152 = tpu.matmul %149, %151, %cst_130 {dimension_numbers = #tpu.dot_dimension_numbers<[1], [0], [0], [1], [0, 0, 1, 1], [], []>} : vector<256x16xbf16>, vector<16x16xbf16>, vector<256x16xf32> -> vector<256x16xf32>
    %153 = arith.addf %146, %152 : vector<256x16xf32>
    %c2_131 = arith.constant 2 : index
    %c8_132 = arith.constant 8 : index
    %c0_133 = arith.constant 0 : index
    %154 = vector.load %arg11[%c2_131, %c8_132, %c0_133] : memref<18x32x16xf32, #tpu.memory_space<vmem>>, vector<16x16x16xf32>
    %155 = vector.shape_cast %154 : vector<16x16x16xf32> to vector<256x16xf32>
    %156 = arith.truncf %155 : vector<256x16xf32> to vector<256x16xbf16>
    %c7_134 = arith.constant 7 : index
    %c0_135 = arith.constant 0 : index
    %c0_136 = arith.constant 0 : index
    %157 = vector.load %arg6[%c7_134, %c0_135, %c0_136] : memref<9x16x16xbf16, #tpu.memory_space<vmem>>, vector<1x16x16xbf16>
    %158 = vector.shape_cast %157 : vector<1x16x16xbf16> to vector<16x16xbf16>
    %cst_137 = arith.constant dense<0.000000e+00> : vector<256x16xf32>
    %159 = tpu.matmul %156, %158, %cst_137 {dimension_numbers = #tpu.dot_dimension_numbers<[1], [0], [0], [1], [0, 0, 1, 1], [], []>} : vector<256x16xbf16>, vector<16x16xbf16>, vector<256x16xf32> -> vector<256x16xf32>
    %160 = arith.addf %153, %159 : vector<256x16xf32>
    %c2_138 = arith.constant 2 : index
    %c9_139 = arith.constant 9 : index
    %c0_140 = arith.constant 0 : index
    %161 = vector.load %arg11[%c2_138, %c9_139, %c0_140] : memref<18x32x16xf32, #tpu.memory_space<vmem>>, vector<16x16x16xf32>
    %162 = vector.shape_cast %161 : vector<16x16x16xf32> to vector<256x16xf32>
    %163 = arith.truncf %162 : vector<256x16xf32> to vector<256x16xbf16>
    %c8_141 = arith.constant 8 : index
    %c0_142 = arith.constant 0 : index
    %c0_143 = arith.constant 0 : index
    %164 = vector.load %arg6[%c8_141, %c0_142, %c0_143] : memref<9x16x16xbf16, #tpu.memory_space<vmem>>, vector<1x16x16xbf16>
    %165 = vector.shape_cast %164 : vector<1x16x16xbf16> to vector<16x16xbf16>
    %cst_144 = arith.constant dense<0.000000e+00> : vector<256x16xf32>
    %166 = tpu.matmul %163, %165, %cst_144 {dimension_numbers = #tpu.dot_dimension_numbers<[1], [0], [0], [1], [0, 0, 1, 1], [], []>} : vector<256x16xbf16>, vector<16x16xbf16>, vector<256x16xf32> -> vector<256x16xf32>
    %167 = arith.addf %160, %166 : vector<256x16xf32>
    %c0_145 = arith.constant 0 : index
    %c0_146 = arith.constant 0 : index
    %168 = vector.load %arg7[%c0_145, %c0_146] : memref<1x16xf32, #tpu.memory_space<vmem>>, vector<1x16xf32>
    %169 = vector.broadcast %168 : vector<1x16xf32> to vector<256x16xf32>
    %170 = arith.addf %167, %169 : vector<256x16xf32>
    %171 = vector.shape_cast %170 : vector<256x16xf32> to vector<16x16x16xf32>
    %cst_147 = arith.constant 0.000000e+00 : f32
    %172 = vector.broadcast %cst_147 : f32 to vector<16x16x16xf32>
    %173 = arith.subf %172, %171 : vector<16x16x16xf32>
    %174 = math.exp %173 : vector<16x16x16xf32>
    %cst_148 = arith.constant 1.000000e+00 : f32
    %175 = vector.broadcast %cst_148 : f32 to vector<16x16x16xf32>
    %176 = arith.addf %175, %174 : vector<16x16x16xf32>
    %177 = tpu.reciprocal %176 {approx = true} : vector<16x16x16xf32> -> vector<16x16x16xf32>
    %178 = arith.mulf %171, %177 : vector<16x16x16xf32>
    %179 = vector.shape_cast %178 : vector<16x16x16xf32> to vector<256x16xf32>
    %180 = arith.truncf %179 : vector<256x16xf32> to vector<256x16xbf16>
    %c0_149 = arith.constant 0 : index
    %c0_150 = arith.constant 0 : index
    %c0_151 = arith.constant 0 : index
    %181 = vector.load %arg8[%c0_149, %c0_150, %c0_151] : memref<1x16x32xbf16, #tpu.memory_space<vmem>>, vector<1x16x32xbf16>
    %182 = vector.shape_cast %181 : vector<1x16x32xbf16> to vector<16x32xbf16>
    %cst_152 = arith.constant dense<0.000000e+00> : vector<256x32xf32>
    %183 = tpu.matmul %180, %182, %cst_152 {dimension_numbers = #tpu.dot_dimension_numbers<[1], [0], [0], [1], [0, 0, 1, 1], [], []>} : vector<256x16xbf16>, vector<16x32xbf16>, vector<256x32xf32> -> vector<256x32xf32>
    %c0_153 = arith.constant 0 : index
    %c0_154 = arith.constant 0 : index
    %184 = vector.load %arg9[%c0_153, %c0_154] : memref<1x32xf32, #tpu.memory_space<vmem>>, vector<1x32xf32>
    %185 = vector.broadcast %184 : vector<1x32xf32> to vector<256x32xf32>
    %186 = arith.addf %183, %185 : vector<256x32xf32>
    %187 = vector.shape_cast %186 : vector<256x32xf32> to vector<16x16x32xf32>
    %188 = vector.shape_cast %187 : vector<16x16x32xf32> to vector<256x32xf32>
    %189 = vector.shape_cast %1 : vector<16x16x32xf32> to vector<256x32xf32>
    %190 = arith.addf %188, %189 : vector<256x32xf32>
    %c0_155 = arith.constant 0 : index
    %c0_156 = arith.constant 0 : index
    %c0_157 = arith.constant 0 : index
    %191 = vector.load %arg10[%c0_155, %c0_156, %c0_157] : memref<1x256x32xf32, #tpu.memory_space<vmem>>, vector<1x256x32xf32>
    %192 = vector.shape_cast %191 : vector<1x256x32xf32> to vector<256x32xf32>
    %193 = vector.shape_cast %190 : vector<256x32xf32> to vector<1x256x32xf32>
    tpu.vector_store %arg10[%c0_155, %c0_156, %c0_157], %193 {strides = array<i32>} : memref<1x256x32xf32, #tpu.memory_space<vmem>>, vector<1x256x32xf32>,
    return
  }
  func.func @transform_0(%arg0: i32) -> (i32, i32, i32, i32) {
    %c0_i32 = arith.constant 0 : i32
    %c0_i32_0 = arith.constant 0 : i32
    %c0_i32_1 = arith.constant 0 : i32
    %c0_i32_2 = arith.constant 0 : i32
    return %arg0, %c0_i32, %c0_i32_0, %c0_i32_1 : i32, i32, i32, i32
  }
  func.func @transform_1(%arg0: i32) -> (i32, i32, i32) {
    %c0_i32 = arith.constant 0 : i32
    %c0_i32_0 = arith.constant 0 : i32
    %c0_i32_1 = arith.constant 0 : i32
    %c0_i32_2 = arith.constant 0 : i32
    return %c0_i32, %c0_i32_0, %c0_i32_1 : i32, i32, i32
  }
  func.func @transform_2(%arg0: i32) -> (i32, i32) {
    %c0_i32 = arith.constant 0 : i32
    %c0_i32_0 = arith.constant 0 : i32
    %c0_i32_1 = arith.constant 0 : i32
    return %c0_i32, %c0_i32_0 : i32, i32
  }
  func.func @transform_3(%arg0: i32) -> (i32, i32, i32) {
    %c0_i32 = arith.constant 0 : i32
    %c0_i32_0 = arith.constant 0 : i32
    %c0_i32_1 = arith.constant 0 : i32
    %c0_i32_2 = arith.constant 0 : i32
    return %c0_i32, %c0_i32_0, %c0_i32_1 : i32, i32, i32
  }
  func.func @transform_4(%arg0: i32) -> (i32, i32) {
    %c0_i32 = arith.constant 0 : i32
    %c0_i32_0 = arith.constant 0 : i32
    %c0_i32_1 = arith.constant 0 : i32
    return %c0_i32, %c0_i32_0 : i32, i32
  }
  func.func @transform_5(%arg0: i32) -> (i32, i32, i32) {
    %c0_i32 = arith.constant 0 : i32
    %c0_i32_0 = arith.constant 0 : i32
    %c0_i32_1 = arith.constant 0 : i32
    %c0_i32_2 = arith.constant 0 : i32
    return %c0_i32, %c0_i32_0, %c0_i32_1 : i32, i32, i32
  }
  func.func @transform_6(%arg0: i32) -> (i32, i32) {
    %c0_i32 = arith.constant 0 : i32
    %c0_i32_0 = arith.constant 0 : i32
    %c0_i32_1 = arith.constant 0 : i32
    return %c0_i32, %c0_i32_0 : i32, i32
  }
  func.func @transform_7(%arg0: i32) -> (i32, i32, i32) {
    %c0_i32 = arith.constant 0 : i32
    %c0_i32_0 = arith.constant 0 : i32
    %c0_i32_1 = arith.constant 0 : i32
    %c0_i32_2 = arith.constant 0 : i32
    return %c0_i32, %c0_i32_0, %c0_i32_1 : i32, i32, i32
  }
  func.func @transform_8(%arg0: i32) -> (i32, i32) {
    %c0_i32 = arith.constant 0 : i32
    %c0_i32_0 = arith.constant 0 : i32
    %c0_i32_1 = arith.constant 0 : i32
    return %c0_i32, %c0_i32_0 : i32, i32
  }
  func.func @transform_9(%arg0: i32) -> (i32, i32, i32) {
    %c0_i32 = arith.constant 0 : i32
    %c0_i32_0 = arith.constant 0 : i32
    %c0_i32_1 = arith.constant 0 : i32
    return %arg0, %c0_i32, %c0_i32_0 : i32, i32, i32
  }
}

</mosaic_0001>

<llo_original>
// kernel: _lambda_.1
$region0: #{_lambda_.1}
  #allocation0 [shape = 'u32[]', space=smem, size = 0x4, offset = 0x4, fixed_abs, tag = 'smem constant byte address 0x4 - core index']
  #allocation1 [shape = 'u32[144,128]{1,0:T(1,128)}', space=vmem, size = 0x12000, scoped, tag = 'internal scratch']
  #allocation2 [shape = 'f32[18,32,16]{2,1,0:T(8,128)}', space=vmem, size = 0x48000, scoped, tag = 'scratch operand']
  %s0 = inlined_call_operand.vmem [shape: f32[2,16,16,32], index: 0, kind: input, shape index: {}]
  %s1 = inlined_call_operand.vmem [shape: bf16[1,32,16], index: 1, kind: input, shape index: {}]
  %s2 = inlined_call_operand.vmem [shape: f32[1,16], index: 2, kind: input, shape index: {}]
  %s3 = inlined_call_operand.vmem [shape: bf16[9,16,16], index: 3, kind: input, shape index: {}]
  %s4 = inlined_call_operand.vmem [shape: f32[1,16], index: 4, kind: input, shape index: {}]
  %s5 = inlined_call_operand.vmem [shape: bf16[9,16,16], index: 5, kind: input, shape index: {}]
  %s6 = inlined_call_operand.vmem [shape: f32[1,16], index: 6, kind: input, shape index: {}]
  %s7 = inlined_call_operand.vmem [shape: bf16[1,16,32], index: 7, kind: input, shape index: {}]
  %s8 = inlined_call_operand.vmem [shape: f32[1,32], index: 8, kind: input, shape index: {}]
  %s9 = inlined_call_operand.hbm [shape: f32[2,256,32], index: 9, kind: output, shape index: {}]
  %s10 = sld [smem:[#allocation0]]
  $region69: #{_lambda_.1} parent=0
    _
  %s12 = ssub.s32 1, %s10
  %s13 = scalar_select 0, %s12, %s10
  $region1: #{_lambda_.1} parent=0
    #allocation3 [shape = 'u8[262144]{0}', space=vmem, size = 0x40000, scoped, tag = 'output window, operand 0']
    #allocation4 [shape = 's32[2]{0}', space=sflag, size = 0x8, scoped, tag = 'scoped memory for _lambda_.1']
    %14 = vsyncpa [#allocation4], 0
    %s15 = scalar_lea.sflag [#allocation4], 1
    %16 = vsyncpa %s15, 0
    loop: start=0, step=1, limit=4
    $region2: #{_lambda_.1} parent=1 // loop_pre_header
      _
    $region3: #{_lambda_.1} parent=1 // loop_header
      %s18 = sphi 0, %s22
      %p19 = scmp.ge.s32.totalorder %s18, 4
      %s28 = sphi 0, %s30
      %s31 = sphi 0, %s28
      %s32 = sphi 0, %s31
      %s48 = sphi 0, %s32
      %s52 = sphi 0, %s52
      %s54 = sphi 0, %s52
      %s55 = sphi 0, %s54
      %s69 = sphi 0, %s55
      %s73 = sphi 0, %s73
      %s75 = sphi 0, %s73
      %s76 = sphi 0, %s75
      %s90 = sphi 0, %s76
      %s94 = sphi 0, %s94
      %s96 = sphi 0, %s94
      %s97 = sphi 0, %s96
      %s111 = sphi 0, %s97
      %s115 = sphi 0, %s115
      %s117 = sphi 0, %s115
      %s118 = sphi 0, %s117
      %s132 = sphi 0, %s118
      %s136 = sphi 0, %s136
      %s138 = sphi 0, %s136
      %s139 = sphi 0, %s138
      %s153 = sphi 0, %s139
      %s157 = sphi 0, %s157
      %s159 = sphi 0, %s157
      %s160 = sphi 0, %s159
      %s174 = sphi 0, %s160
      %s178 = sphi 0, %s178
      %s180 = sphi 0, %s178
      %s181 = sphi 0, %s180
      %s195 = sphi 0, %s181
      %s199 = sphi 0, %s199
      %s201 = sphi 0, %s199
      %s202 = sphi 0, %s201
      %s216 = sphi 0, %s202
      %s222 = sphi 0, %s224
      %s225 = sphi 0, %s222
      %s226 = sphi 0, %s225
      %s242 = sphi 0, %s226
    $region4: #{_lambda_.1} parent=1 // loop_header_branch
      %21 = sbr.rel (%p19) target = $region8
    $region5: #{_lambda_.1} parent=1 // loop_body
      %s23 = ssub.s32 %s18, 1
      %s24 = ssub.s32 %s18, 2
      %s25 = sadd.s32 %s18, 1
      %s26 = ssub.s32 %s18, %s25
      %p27 = scmp.eq.s32.totalorder %s26, 0
      %s29 = sadd.s32 %s28, 1
      %s30 = scalar_select %p27, %s28, %s29
      %p33 = pneg %p27
      %p34 = scmp.eq.s32.totalorder %s18, 1
      %p35 = por %p33, %p34
      %p36 = scmp.ne.s32.totalorder %s28, %s31
      %p37 = scmp.eq.s32.totalorder %s18, 0
      %p38 = por %p36, %p37
      %p39 = scmp.ne.s32.totalorder %s28, %s31
      %p40 = scmp.eq.s32.totalorder %s23, 1
      %p41 = por %p39, %p40
      %p42 = scmp.ne.s32.totalorder %s31, %s32
      %p43 = scmp.eq.s32.totalorder %s23, 0
      %p44 = por %p42, %p43
      %p45 = scmp.ne.s32.totalorder %s31, %s32
      %p46 = scmp.eq.s32.totalorder %s24, 1
      %p47 = por %p45, %p46
      %p49 = scmp.ne.s32.totalorder %s32, %s48
      %p50 = scmp.eq.s32.totalorder %s24, 0
      %p51 = por %p49, %p50
      %s53 = sadd.s32 %s52, 1
      %p56 = scmp.eq.s32.totalorder %s18, 1
      %p57 = scmp.ne.s32.totalorder %s52, %s54
      %p58 = scmp.eq.s32.totalorder %s18, 0
      %p59 = por %p57, %p58
      %p60 = scmp.ne.s32.totalorder %s52, %s54
      %p61 = scmp.eq.s32.totalorder %s23, 1
      %p62 = por %p60, %p61
      %p63 = scmp.ne.s32.totalorder %s54, %s55
      %p64 = scmp.eq.s32.totalorder %s23, 0
      %p65 = por %p63, %p64
      %p66 = scmp.ne.s32.totalorder %s54, %s55
      %p67 = scmp.eq.s32.totalorder %s24, 1
      %p68 = por %p66, %p67
      %p70 = scmp.ne.s32.totalorder %s55, %s69
      %p71 = scmp.eq.s32.totalorder %s24, 0
      %p72 = por %p70, %p71
      %s74 = sadd.s32 %s73, 1
      %p77 = scmp.eq.s32.totalorder %s18, 1
      %p78 = scmp.ne.s32.totalorder %s73, %s75
      %p79 = scmp.eq.s32.totalorder %s18, 0
      %p80 = por %p78, %p79
      %p81 = scmp.ne.s32.totalorder %s73, %s75
      %p82 = scmp.eq.s32.totalorder %s23, 1
      %p83 = por %p81, %p82
      %p84 = scmp.ne.s32.totalorder %s75, %s76
      %p85 = scmp.eq.s32.totalorder %s23, 0
      %p86 = por %p84, %p85
      %p87 = scmp.ne.s32.totalorder %s75, %s76
      %p88 = scmp.eq.s32.totalorder %s24, 1
      %p89 = por %p87, %p88
      %p91 = scmp.ne.s32.totalorder %s76, %s90
      %p92 = scmp.eq.s32.totalorder %s24, 0
      %p93 = por %p91, %p92
      %s95 = sadd.s32 %s94, 1
      %p98 = scmp.eq.s32.totalorder %s18, 1
      %p99 = scmp.ne.s32.totalorder %s94, %s96
      %p100 = scmp.eq.s32.totalorder %s18, 0
      %p101 = por %p99, %p100
      %p102 = scmp.ne.s32.totalorder %s94, %s96
      %p103 = scmp.eq.s32.totalorder %s23, 1
      %p104 = por %p102, %p103
      %p105 = scmp.ne.s32.totalorder %s96, %s97
      %p106 = scmp.eq.s32.totalorder %s23, 0
      %p107 = por %p105, %p106
      %p108 = scmp.ne.s32.totalorder %s96, %s97
      %p109 = scmp.eq.s32.totalorder %s24, 1
      %p110 = por %p108, %p109
      %p112 = scmp.ne.s32.totalorder %s97, %s111
      %p113 = scmp.eq.s32.totalorder %s24, 0
      %p114 = por %p112, %p113
      %s116 = sadd.s32 %s115, 1
      %p119 = scmp.eq.s32.totalorder %s18, 1
      %p120 = scmp.ne.s32.totalorder %s115, %s117
      %p121 = scmp.eq.s32.totalorder %s18, 0
      %p122 = por %p120, %p121
      %p123 = scmp.ne.s32.totalorder %s115, %s117
      %p124 = scmp.eq.s32.totalorder %s23, 1
      %p125 = por %p123, %p124
      %p126 = scmp.ne.s32.totalorder %s117, %s118
      %p127 = scmp.eq.s32.totalorder %s23, 0
      %p128 = por %p126, %p127
      %p129 = scmp.ne.s32.totalorder %s117, %s118
      %p130 = scmp.eq.s32.totalorder %s24, 1
      %p131 = por %p129, %p130
      %p133 = scmp.ne.s32.totalorder %s118, %s132
      %p134 = scmp.eq.s32.totalorder %s24, 0
      %p135 = por %p133, %p134
      %s137 = sadd.s32 %s136, 1
      %p140 = scmp.eq.s32.totalorder %s18, 1
      %p141 = scmp.ne.s32.totalorder %s136, %s138
      %p142 = scmp.eq.s32.totalorder %s18, 0
      %p143 = por %p141, %p142
      %p144 = scmp.ne.s32.totalorder %s136, %s138
      %p145 = scmp.eq.s32.totalorder %s23, 1
      %p146 = por %p144, %p145
      %p147 = scmp.ne.s32.totalorder %s138, %s139
      %p148 = scmp.eq.s32.totalorder %s23, 0
      %p149 = por %p147, %p148
      %p150 = scmp.ne.s32.totalorder %s138, %s139
      %p151 = scmp.eq.s32.totalorder %s24, 1
      %p152 = por %p150, %p151
      %p154 = scmp.ne.s32.totalorder %s139, %s153
      %p155 = scmp.eq.s32.totalorder %s24, 0
      %p156 = por %p154, %p155
      %s158 = sadd.s32 %s157, 1
      %p161 = scmp.eq.s32.totalorder %s18, 1
      %p162 = scmp.ne.s32.totalorder %s157, %s159
      %p163 = scmp.eq.s32.totalorder %s18, 0
      %p164 = por %p162, %p163
      %p165 = scmp.ne.s32.totalorder %s157, %s159
      %p166 = scmp.eq.s32.totalorder %s23, 1
      %p167 = por %p165, %p166
      %p168 = scmp.ne.s32.totalorder %s159, %s160
      %p169 = scmp.eq.s32.totalorder %s23, 0
      %p170 = por %p168, %p169
      %p171 = scmp.ne.s32.totalorder %s159, %s160
      %p172 = scmp.eq.s32.totalorder %s24, 1
      %p173 = por %p171, %p172
      %p175 = scmp.ne.s32.totalorder %s160, %s174
      %p176 = scmp.eq.s32.totalorder %s24, 0
      %p177 = por %p175, %p176
      %s179 = sadd.s32 %s178, 1
      %p182 = scmp.eq.s32.totalorder %s18, 1
      %p183 = scmp.ne.s32.totalorder %s178, %s180
      %p184 = scmp.eq.s32.totalorder %s18, 0
      %p185 = por %p183, %p184
      %p186 = scmp.ne.s32.totalorder %s178, %s180
      %p187 = scmp.eq.s32.totalorder %s23, 1
      %p188 = por %p186, %p187
      %p189 = scmp.ne.s32.totalorder %s180, %s181
      %p190 = scmp.eq.s32.totalorder %s23, 0
      %p191 = por %p189, %p190
      %p192 = scmp.ne.s32.totalorder %s180, %s181
      %p193 = scmp.eq.s32.totalorder %s24, 1
      %p194 = por %p192, %p193
      %p196 = scmp.ne.s32.totalorder %s181, %s195
      %p197 = scmp.eq.s32.totalorder %s24, 0
      %p198 = por %p196, %p197
      %s200 = sadd.s32 %s199, 1
      %p203 = scmp.eq.s32.totalorder %s18, 1
      %p204 = scmp.ne.s32.totalorder %s199, %s201
      %p205 = scmp.eq.s32.totalorder %s18, 0
      %p206 = por %p204, %p205
      %p207 = scmp.ne.s32.totalorder %s199, %s201
      %p208 = scmp.eq.s32.totalorder %s23, 1
      %p209 = por %p207, %p208
      %p210 = scmp.ne.s32.totalorder %s201, %s202
      %p211 = scmp.eq.s32.totalorder %s23, 0
      %p212 = por %p210, %p211
      %p213 = scmp.ne.s32.totalorder %s201, %s202
      %p214 = scmp.eq.s32.totalorder %s24, 1
      %p215 = por %p213, %p214
      %p217 = scmp.ne.s32.totalorder %s202, %s216
      %p218 = scmp.eq.s32.totalorder %s24, 0
      %p219 = por %p217, %p218
      %s220 = ssub.s32 %s18, %s25
      %p221 = scmp.eq.s32.totalorder %s220, 0
      %s223 = sadd.s32 %s222, 1
      %s224 = scalar_select %p221, %s222, %s223
      %p227 = pneg %p221
      %p228 = scmp.eq.s32.totalorder %s18, 1
      %p229 = por %p227, %p228
      %p230 = scmp.ne.s32.totalorder %s222, %s225
      %p231 = scmp.eq.s32.totalorder %s18, 0
      %p232 = por %p230, %p231
      %p233 = scmp.ne.s32.totalorder %s222, %s225
      %p234 = scmp.eq.s32.totalorder %s23, 1
      %p235 = por %p233, %p234
      %p236 = scmp.ne.s32.totalorder %s225, %s226
      %p237 = scmp.eq.s32.totalorder %s23, 0
      %p238 = por %p236, %p237
      %p239 = scmp.ne.s32.totalorder %s225, %s226
      %p240 = scmp.eq.s32.totalorder %s24, 1
      %p241 = por %p239, %p240
      %p243 = scmp.ne.s32.totalorder %s226, %s242
      %p244 = scmp.eq.s32.totalorder %s24, 0
      %p245 = por %p243, %p244
      %p246 = scmp.le.s32.totalorder 1, %s18
      %p247 = scmp.lt.s32.totalorder %s18, 3
      %p248 = pnand %p246, %p247
      %p249 = pneg %p248
      // Predicated region
      $region9: #{_lambda_.1} parent=5 // pred_check
        _
      $region10: #{_lambda_.1} parent=5 // pred_check_branch
        %251 = sbr.rel (%p248) target = $region12
      $region11: #{_lambda_.1} parent=5 // pred_region
        %s252 = ssub.s32 %s18, 1
        // Predicated region
        $region13: #{_lambda_.1} parent=11 // pred_check
          %p253 = pneg %p65
        $region14: #{_lambda_.1} parent=11 // pred_check_branch
          %255 = sbr.rel (%p253) target = $region16
        $region15: #{_lambda_.1} parent=11 // pred_region
          _
        $region16: #{_lambda_.1} parent=11 // pred_fallthru
          _
        // Predicated region
        $region17: #{_lambda_.1} parent=11 // pred_check
          %p256 = pneg %p86
        $region18: #{_lambda_.1} parent=11 // pred_check_branch
          %258 = sbr.rel (%p256) target = $region20
        $region19: #{_lambda_.1} parent=11 // pred_region
          _
        $region20: #{_lambda_.1} parent=11 // pred_fallthru
          _
        // Predicated region
        $region21: #{_lambda_.1} parent=11 // pred_check
          %p259 = pneg %p107
        $region22: #{_lambda_.1} parent=11 // pred_check_branch
          %261 = sbr.rel (%p259) target = $region24
        $region23: #{_lambda_.1} parent=11 // pred_region
          _
        $region24: #{_lambda_.1} parent=11 // pred_fallthru
          _
        // Predicated region
        $region25: #{_lambda_.1} parent=11 // pred_check
          %p262 = pneg %p128
        $region26: #{_lambda_.1} parent=11 // pred_check_branch
          %264 = sbr.rel (%p262) target = $region28
        $region27: #{_lambda_.1} parent=11 // pred_region
          _
        $region28: #{_lambda_.1} parent=11 // pred_fallthru
          _
        // Predicated region
        $region29: #{_lambda_.1} parent=11 // pred_check
          %p265 = pneg %p149
        $region30: #{_lambda_.1} parent=11 // pred_check_branch
          %267 = sbr.rel (%p265) target = $region32
        $region31: #{_lambda_.1} parent=11 // pred_region
          _
        $region32: #{_lambda_.1} parent=11 // pred_fallthru
          _
        // Predicated region
        $region33: #{_lambda_.1} parent=11 // pred_check
          %p268 = pneg %p170
        $region34: #{_lambda_.1} parent=11 // pred_check_branch
          %270 = sbr.rel (%p268) target = $region36
        $region35: #{_lambda_.1} parent=11 // pred_region
          _
        $region36: #{_lambda_.1} parent=11 // pred_fallthru
          _
        // Predicated region
        $region37: #{_lambda_.1} parent=11 // pred_check
          %p271 = pneg %p191
        $region38: #{_lambda_.1} parent=11 // pred_check_branch
          %273 = sbr.rel (%p271) target = $region40
        $region39: #{_lambda_.1} parent=11 // pred_region
          _
        $region40: #{_lambda_.1} parent=11 // pred_fallthru
          _
        // Predicated region
        $region41: #{_lambda_.1} parent=11 // pred_check
          %p274 = pneg %p212
        $region42: #{_lambda_.1} parent=11 // pred_check_branch
          %276 = sbr.rel (%p274) target = $region44
        $region43: #{_lambda_.1} parent=11 // pred_region
          _
        $region44: #{_lambda_.1} parent=11 // pred_fallthru
          _
      $region12: #{_lambda_.1} parent=5 // pred_fallthru
        _
      %p277 = scmp.lt.s32.totalorder %s18, 2
      // Predicated region
      $region45: #{_lambda_.1} parent=5 // pred_check
        %p278 = pneg %p277
      $region46: #{_lambda_.1} parent=5 // pred_check_branch
        %280 = sbr.rel (%p278) target = $region48
      $region47: #{_lambda_.1} parent=5 // pred_region
        // Predicated region
        $region49: #{_lambda_.1} parent=47 // pred_check
          %p281 = pneg %p38
        $region50: #{_lambda_.1} parent=47 // pred_check_branch
          %283 = sbr.rel (%p281) target = $region52
        $region51: #{_lambda_.1} parent=47 // pred_region
          %p284 = scmp.lt.s32.totalorder %s18, 1
          %s285 = scalar_select %p284, %s18, 1
          %s286 = smul.addr %s285, 32
          %s287 = smul.addr %s286, 8
          %s288 = scalar_lea.vmem %s0, %s287
        $region52: #{_lambda_.1} parent=47 // pred_fallthru
          _
      $region48: #{_lambda_.1} parent=5 // pred_fallthru
        _
      %p289 = scmp.le.s32.totalorder 1, %s18
      %p290 = scmp.lt.s32.totalorder %s18, 3
      %p291 = pnand %p289, %p290
      %p292 = pneg %p291
      // Predicated region
      $region53: #{_lambda_.1} parent=5 // pred_check
        _
      $region54: #{_lambda_.1} parent=5 // pred_check_branch
        %294 = sbr.rel (%p291) target = $region56
      $region55: #{_lambda_.1} parent=5 // pred_region
        %s295 = ssub.s32 %s18, 1
        %p296 = scmp.lt.s32.totalorder %s23, 1
        %s297 = scalar_select %p296, %s23, 1
        %s298 = smul.addr %s297, 32
        %s299 = smul.addr %s298, 8
        %s300 = scalar_lea.vmem %s0, %s299
        %p301 = pneg %p44
        %p302 = pneg %p41
        %p303 = pneg %p65
        %p304 = pneg %p62
        %p305 = pneg %p86
        %p306 = pneg %p83
        %p307 = pneg %p107
        %p308 = pneg %p104
        %p309 = pneg %p128
        %p310 = pneg %p125
        %p311 = pneg %p149
        %p312 = pneg %p146
        %p313 = pneg %p170
        %p314 = pneg %p167
        %p315 = pneg %p191
        %p316 = pneg %p188
        %p317 = pneg %p212
        %p318 = pneg %p209
        %p319 = pneg %p238
        %p320 = pneg %p235
        %s321 = sand.u32 %s225, 1
        %s322 = scalar_lea.sflag [#allocation4], %s321
        %s323 = sand.u32 %s225, 1
        %s324 = smul.addr %s323, 256
        %s325 = scalar_lea.vmem [#allocation3], %s324
        %p326 = scmp.lt.s32.totalorder %s23, 1
        %s327 = scalar_select %p326, %s23, 1
        %s328 = smul.addr %s327, 32
        %s329 = smul.addr %s328, 8
        %s330 = scalar_lea.vmem %s0, %s329
        %v332 = vld [vmem:[%s330] sm:$0xff]
        %v333 = vld [vmem:[%s330 + $0x8] sm:$0xff]
        %v334 = vld [vmem:[%s330 + $0x10] sm:$0xff]
        %v335 = vld [vmem:[%s330 + $0x18] sm:$0xff]
        %v336 = vld [vmem:[%s330 + $0x20] sm:$0xff]
        %v337 = vld [vmem:[%s330 + $0x28] sm:$0xff]
        %v338 = vld [vmem:[%s330 + $0x30] sm:$0xff]
        %v339 = vld [vmem:[%s330 + $0x38] sm:$0xff]
        %v340 = vld [vmem:[%s330 + $0x40] sm:$0xff]
        %v341 = vld [vmem:[%s330 + $0x48] sm:$0xff]
        %v342 = vld [vmem:[%s330 + $0x50] sm:$0xff]
        %v343 = vld [vmem:[%s330 + $0x58] sm:$0xff]
        %v344 = vld [vmem:[%s330 + $0x60] sm:$0xff]
        %v345 = vld [vmem:[%s330 + $0x68] sm:$0xff]
        %v346 = vld [vmem:[%s330 + $0x70] sm:$0xff]
        %v347 = vld [vmem:[%s330 + $0x78] sm:$0xff]
        %v348 = vld [vmem:[%s330 + $0x80] sm:$0xff]
        %v349 = vld [vmem:[%s330 + $0x88] sm:$0xff]
        %v350 = vld [vmem:[%s330 + $0x90] sm:$0xff]
        %v351 = vld [vmem:[%s330 + $0x98] sm:$0xff]
        %v352 = vld [vmem:[%s330 + $0xa0] sm:$0xff]
        %v353 = vld [vmem:[%s330 + $0xa8] sm:$0xff]
        %v354 = vld [vmem:[%s330 + $0xb0] sm:$0xff]
        %v355 = vld [vmem:[%s330 + $0xb8] sm:$0xff]
        %v356 = vld [vmem:[%s330 + $0xc0] sm:$0xff]
        %v357 = vld [vmem:[%s330 + $0xc8] sm:$0xff]
        %v358 = vld [vmem:[%s330 + $0xd0] sm:$0xff]
        %v359 = vld [vmem:[%s330 + $0xd8] sm:$0xff]
        %v360 = vld [vmem:[%s330 + $0xe0] sm:$0xff]
        %v361 = vld [vmem:[%s330 + $0xe8] sm:$0xff]
        %v362 = vld [vmem:[%s330 + $0xf0] sm:$0xff]
        %v363 = vld [vmem:[%s330 + $0xf8] sm:$0xff]
        %vm364 = vcmask 130048
        %365 = vst.msk [vmem:[#allocation2] sm:$0xff] %vm364, 0.0
        %366 = vst.msk [vmem:[#allocation2 + $0x8] sm:$0xff] %vm364, 0.0
        %367 = vst.msk [vmem:[#allocation2 + $0x10] sm:$0xff] %vm364, 0.0
        %368 = vst.msk [vmem:[#allocation2 + $0x18] sm:$0xff] %vm364, 0.0
        %369 = vst.msk [vmem:[#allocation2 + $0x20] sm:$0xff] %vm364, 0.0
        %370 = vst.msk [vmem:[#allocation2 + $0x28] sm:$0xff] %vm364, 0.0
        %371 = vst.msk [vmem:[#allocation2 + $0x30] sm:$0xff] %vm364, 0.0
        %372 = vst.msk [vmem:[#allocation2 + $0x38] sm:$0xff] %vm364, 0.0
        %373 = vst.msk [vmem:[#allocation2 + $0x40] sm:$0xff] %vm364, 0.0
        %374 = vst.msk [vmem:[#allocation2 + $0x48] sm:$0xff] %vm364, 0.0
        %375 = vst.msk [vmem:[#allocation2 + $0x50] sm:$0xff] %vm364, 0.0
        %376 = vst.msk [vmem:[#allocation2 + $0x58] sm:$0xff] %vm364, 0.0
        %377 = vst.msk [vmem:[#allocation2 + $0x60] sm:$0xff] %vm364, 0.0
        %378 = vst.msk [vmem:[#allocation2 + $0x68] sm:$0xff] %vm364, 0.0
        %379 = vst.msk [vmem:[#allocation2 + $0x70] sm:$0xff] %vm364, 0.0
        %380 = vst.msk [vmem:[#allocation2 + $0x78] sm:$0xff] %vm364, 0.0
        %381 = vst.msk [vmem:[#allocation2 + $0x80] sm:$0xff] %vm364, 0.0
        %382 = vst.msk [vmem:[#allocation2 + $0x88] sm:$0xff] %vm364, 0.0
        %383 = vst.msk [vmem:[#allocation2 + $0x90] sm:$0xff] %vm364, 0.0
        %384 = vst.msk [vmem:[#allocation2 + $0x98] sm:$0xff] %vm364, 0.0
        %385 = vst.msk [vmem:[#allocation2 + $0xa0] sm:$0xff] %vm364, 0.0
        %386 = vst.msk [vmem:[#allocation2 + $0xa8] sm:$0xff] %vm364, 0.0
        %387 = vst.msk [vmem:[#allocation2 + $0xb0] sm:$0xff] %vm364, 0.0
        %388 = vst.msk [vmem:[#allocation2 + $0xb8] sm:$0xff] %vm364, 0.0
        %389 = vst.msk [vmem:[#allocation2 + $0xc0] sm:$0xff] %vm364, 0.0
        %390 = vst.msk [vmem:[#allocation2 + $0xc8] sm:$0xff] %vm364, 0.0
        %391 = vst.msk [vmem:[#allocation2 + $0xd0] sm:$0xff] %vm364, 0.0
        %392 = vst.msk [vmem:[#allocation2 + $0xd8] sm:$0xff] %vm364, 0.0
        %393 = vst.msk [vmem:[#allocation2 + $0xe0] sm:$0xff] %vm364, 0.0
        %394 = vst.msk [vmem:[#allocation2 + $0xe8] sm:$0xff] %vm364, 0.0
        %395 = vst.msk [vmem:[#allocation2 + $0xf0] sm:$0xff] %vm364, 0.0
        %396 = vst.msk [vmem:[#allocation2 + $0xf8] sm:$0xff] %vm364, 0.0
        %397 = vst.msk [vmem:[#allocation2 + $0x100] sm:$0xff] %vm364, 0.0
        %398 = vst.msk [vmem:[#allocation2 + $0x108] sm:$0xff] %vm364, 0.0
        %399 = vst.msk [vmem:[#allocation2 + $0x110] sm:$0xff] %vm364, 0.0
        %400 = vst.msk [vmem:[#allocation2 + $0x118] sm:$0xff] %vm364, 0.0
        %401 = vst.msk [vmem:[#allocation2 + $0x120] sm:$0xff] %vm364, 0.0
        %402 = vst.msk [vmem:[#allocation2 + $0x128] sm:$0xff] %vm364, 0.0
        %403 = vst.msk [vmem:[#allocation2 + $0x130] sm:$0xff] %vm364, 0.0
        %404 = vst.msk [vmem:[#allocation2 + $0x138] sm:$0xff] %vm364, 0.0
        %405 = vst.msk [vmem:[#allocation2 + $0x140] sm:$0xff] %vm364, 0.0
        %406 = vst.msk [vmem:[#allocation2 + $0x148] sm:$0xff] %vm364, 0.0
        %407 = vst.msk [vmem:[#allocation2 + $0x150] sm:$0xff] %vm364, 0.0
        %408 = vst.msk [vmem:[#allocation2 + $0x158] sm:$0xff] %vm364, 0.0
        %409 = vst.msk [vmem:[#allocation2 + $0x160] sm:$0xff] %vm364, 0.0
        %410 = vst.msk [vmem:[#allocation2 + $0x168] sm:$0xff] %vm364, 0.0
        %411 = vst.msk [vmem:[#allocation2 + $0x170] sm:$0xff] %vm364, 0.0
        %412 = vst.msk [vmem:[#allocation2 + $0x178] sm:$0xff] %vm364, 0.0
        %413 = vst.msk [vmem:[#allocation2 + $0x180] sm:$0xff] %vm364, 0.0
        %414 = vst.msk [vmem:[#allocation2 + $0x188] sm:$0xff] %vm364, 0.0
        %415 = vst.msk [vmem:[#allocation2 + $0x190] sm:$0xff] %vm364, 0.0
        %416 = vst.msk [vmem:[#allocation2 + $0x198] sm:$0xff] %vm364, 0.0
        %417 = vst.msk [vmem:[#allocation2 + $0x1a0] sm:$0xff] %vm364, 0.0
        %418 = vst.msk [vmem:[#allocation2 + $0x1a8] sm:$0xff] %vm364, 0.0
        %419 = vst.msk [vmem:[#allocation2 + $0x1b0] sm:$0xff] %vm364, 0.0
        %420 = vst.msk [vmem:[#allocation2 + $0x1b8] sm:$0xff] %vm364, 0.0
        %421 = vst.msk [vmem:[#allocation2 + $0x1c0] sm:$0xff] %vm364, 0.0
        %422 = vst.msk [vmem:[#allocation2 + $0x1c8] sm:$0xff] %vm364, 0.0
        %423 = vst.msk [vmem:[#allocation2 + $0x1d0] sm:$0xff] %vm364, 0.0
        %424 = vst.msk [vmem:[#allocation2 + $0x1d8] sm:$0xff] %vm364, 0.0
        %425 = vst.msk [vmem:[#allocation2 + $0x1e0] sm:$0xff] %vm364, 0.0
        %426 = vst.msk [vmem:[#allocation2 + $0x1e8] sm:$0xff] %vm364, 0.0
        %427 = vst.msk [vmem:[#allocation2 + $0x1f0] sm:$0xff] %vm364, 0.0
        %428 = vst.msk [vmem:[#allocation2 + $0x1f8] sm:$0xff] %vm364, 0.0
        %429 = vst.msk [vmem:[#allocation2 + $0x200] sm:$0xff] %vm364, 0.0
        %430 = vst.msk [vmem:[#allocation2 + $0x208] sm:$0xff] %vm364, 0.0
        %431 = vst.msk [vmem:[#allocation2 + $0x210] sm:$0xff] %vm364, 0.0
        %432 = vst.msk [vmem:[#allocation2 + $0x218] sm:$0xff] %vm364, 0.0
        %433 = vst.msk [vmem:[#allocation2 + $0x220] sm:$0xff] %vm364, 0.0
        %434 = vst.msk [vmem:[#allocation2 + $0x228] sm:$0xff] %vm364, 0.0
        %435 = vst.msk [vmem:[#allocation2 + $0x230] sm:$0xff] %vm364, 0.0
        %436 = vst.msk [vmem:[#allocation2 + $0x238] sm:$0xff] %vm364, 0.0
        %v437 = vsub.f32 0.0, %v332
        %v438 = vsub.f32 0.0, %v333
        %v439 = vsub.f32 0.0, %v334
        %v440 = vsub.f32 0.0, %v335
        %v441 = vsub.f32 0.0, %v336
        %v442 = vsub.f32 0.0, %v337
        %v443 = vsub.f32 0.0, %v338
        %v444 = vsub.f32 0.0, %v339
        %v445 = vsub.f32 0.0, %v340
        %v446 = vsub.f32 0.0, %v341
        %v447 = vsub.f32 0.0, %v342
        %v448 = vsub.f32 0.0, %v343
        %v449 = vsub.f32 0.0, %v344
        %v450 = vsub.f32 0.0, %v345
        %v451 = vsub.f32 0.0, %v346
        %v452 = vsub.f32 0.0, %v347
        %v453 = vsub.f32 0.0, %v348
        %v454 = vsub.f32 0.0, %v349
        %v455 = vsub.f32 0.0, %v350
        %v456 = vsub.f32 0.0, %v351
        %v457 = vsub.f32 0.0, %v352
        %v458 = vsub.f32 0.0, %v353
        %v459 = vsub.f32 0.0, %v354
        %v460 = vsub.f32 0.0, %v355
        %v461 = vsub.f32 0.0, %v356
        %v462 = vsub.f32 0.0, %v357
        %v463 = vsub.f32 0.0, %v358
        %v464 = vsub.f32 0.0, %v359
        %v465 = vsub.f32 0.0, %v360
        %v466 = vsub.f32 0.0, %v361
        %v467 = vsub.f32 0.0, %v362
        %v468 = vsub.f32 0.0, %v363
        %v469 = vmul.f32 %v437, 1.442695
        %v470 = vpow.pop %v469
        %v471 = vmul.f32 %v438, 1.442695
        %v472 = vpow.pop %v471
        %v473 = vmul.f32 %v439, 1.442695
        %v474 = vpow.pop %v473
        %v475 = vmul.f32 %v440, 1.442695
        %v476 = vpow.pop %v475
        %v477 = vmul.f32 %v441, 1.442695
        %v478 = vpow.pop %v477
        %v479 = vmul.f32 %v442, 1.442695
        %v480 = vpow.pop %v479
        %v481 = vmul.f32 %v443, 1.442695
        %v482 = vpow.pop %v481
        %v483 = vmul.f32 %v444, 1.442695
        %v484 = vpow.pop %v483
        %v485 = vmul.f32 %v445, 1.442695
        %v486 = vpow.pop %v485
        %v487 = vmul.f32 %v446, 1.442695
        %v488 = vpow.pop %v487
        %v489 = vmul.f32 %v447, 1.442695
        %v490 = vpow.pop %v489
        %v491 = vmul.f32 %v448, 1.442695
        %v492 = vpow.pop %v491
        %v493 = vmul.f32 %v449, 1.442695
        %v494 = vpow.pop %v493
        %v495 = vmul.f32 %v450, 1.442695
        %v496 = vpow.pop %v495
        %v497 = vmul.f32 %v451, 1.442695
        %v498 = vpow.pop %v497
        %v499 = vmul.f32 %v452, 1.442695
        %v500 = vpow.pop %v499
        %v501 = vmul.f32 %v453, 1.442695
        %v502 = vpow.pop %v501
        %v503 = vmul.f32 %v454, 1.442695
        %v504 = vpow.pop %v503
        %v505 = vmul.f32 %v455, 1.442695
        %v506 = vpow.pop %v505
        %v507 = vmul.f32 %v456, 1.442695
        %v508 = vpow.pop %v507
        %v509 = vmul.f32 %v457, 1.442695
        %v510 = vpow.pop %v509
        %v511 = vmul.f32 %v458, 1.442695
        %v512 = vpow.pop %v511
        %v513 = vmul.f32 %v459, 1.442695
        %v514 = vpow.pop %v513
        %v515 = vmul.f32 %v460, 1.442695
        %v516 = vpow.pop %v515
        %v517 = vmul.f32 %v461, 1.442695
        %v518 = vpow.pop %v517
        %v519 = vmul.f32 %v462, 1.442695
        %v520 = vpow.pop %v519
        %v521 = vmul.f32 %v463, 1.442695
        %v522 = vpow.pop %v521
        %v523 = vmul.f32 %v464, 1.442695
        %v524 = vpow.pop %v523
        %v525 = vmul.f32 %v465, 1.442695
        %v526 = vpow.pop %v525
        %v527 = vmul.f32 %v466, 1.442695
        %v528 = vpow.pop %v527
        %v529 = vmul.f32 %v467, 1.442695
        %v530 = vpow.pop %v529
        %v531 = vmul.f32 %v468, 1.442695
        %v532 = vpow.pop %v531
        %v533 = vadd.f32 %v470, 1.0
        %v534 = vadd.f32 %v472, 1.0
        %v535 = vadd.f32 %v474, 1.0
        %v536 = vadd.f32 %v476, 1.0
        %v537 = vadd.f32 %v478, 1.0
        %v538 = vadd.f32 %v480, 1.0
        %v539 = vadd.f32 %v482, 1.0
        %v540 = vadd.f32 %v484, 1.0
        %v541 = vadd.f32 %v486, 1.0
        %v542 = vadd.f32 %v488, 1.0
        %v543 = vadd.f32 %v490, 1.0
        %v544 = vadd.f32 %v492, 1.0
        %v545 = vadd.f32 %v494, 1.0
        %v546 = vadd.f32 %v496, 1.0
        %v547 = vadd.f32 %v498, 1.0
        %v548 = vadd.f32 %v500, 1.0
        %v549 = vadd.f32 %v502, 1.0
        %v550 = vadd.f32 %v504, 1.0
        %v551 = vadd.f32 %v506, 1.0
        %v552 = vadd.f32 %v508, 1.0
        %v553 = vadd.f32 %v510, 1.0
        %v554 = vadd.f32 %v512, 1.0
        %v555 = vadd.f32 %v514, 1.0
        %v556 = vadd.f32 %v516, 1.0
        %v557 = vadd.f32 %v518, 1.0
        %v558 = vadd.f32 %v520, 1.0
        %v559 = vadd.f32 %v522, 1.0
        %v560 = vadd.f32 %v524, 1.0
        %v561 = vadd.f32 %v526, 1.0
        %v562 = vadd.f32 %v528, 1.0
        %v563 = vadd.f32 %v530, 1.0
        %v564 = vadd.f32 %v532, 1.0
        %v565 = vrcp.pop %v533
        %v566 = vrcp.pop %v534
        %v567 = vrcp.pop %v535
        %v568 = vrcp.pop %v536
        %v569 = vrcp.pop %v537
        %v570 = vrcp.pop %v538
        %v571 = vrcp.pop %v539
        %v572 = vrcp.pop %v540
        %v573 = vrcp.pop %v541
        %v574 = vrcp.pop %v542
        %v575 = vrcp.pop %v543
        %v576 = vrcp.pop %v544
        %v577 = vrcp.pop %v545
        %v578 = vrcp.pop %v546
        %v579 = vrcp.pop %v547
        %v580 = vrcp.pop %v548
        %v581 = vrcp.pop %v549
        %v582 = vrcp.pop %v550
        %v583 = vrcp.pop %v551
        %v584 = vrcp.pop %v552
        %v585 = vrcp.pop %v553
        %v586 = vrcp.pop %v554
        %v587 = vrcp.pop %v555
        %v588 = vrcp.pop %v556
        %v589 = vrcp.pop %v557
        %v590 = vrcp.pop %v558
        %v591 = vrcp.pop %v559
        %v592 = vrcp.pop %v560
        %v593 = vrcp.pop %v561
        %v594 = vrcp.pop %v562
        %v595 = vrcp.pop %v563
        %v596 = vrcp.pop %v564
        %v597 = vmul.f32 %v332, %v565
        %v598 = vmul.f32 %v333, %v566
        %v599 = vmul.f32 %v334, %v567
        %v600 = vmul.f32 %v335, %v568
        %v601 = vmul.f32 %v336, %v569
        %v602 = vmul.f32 %v337, %v570
        %v603 = vmul.f32 %v338, %v571
        %v604 = vmul.f32 %v339, %v572
        %v605 = vmul.f32 %v340, %v573
        %v606 = vmul.f32 %v341, %v574
        %v607 = vmul.f32 %v342, %v575
        %v608 = vmul.f32 %v343, %v576
        %v609 = vmul.f32 %v344, %v577
        %v610 = vmul.f32 %v345, %v578
        %v611 = vmul.f32 %v346, %v579
        %v612 = vmul.f32 %v347, %v580
        %v613 = vmul.f32 %v348, %v581
        %v614 = vmul.f32 %v349, %v582
        %v615 = vmul.f32 %v350, %v583
        %v616 = vmul.f32 %v351, %v584
        %v617 = vmul.f32 %v352, %v585
        %v618 = vmul.f32 %v353, %v586
        %v619 = vmul.f32 %v354, %v587
        %v620 = vmul.f32 %v355, %v588
        %v621 = vmul.f32 %v356, %v589
        %v622 = vmul.f32 %v357, %v590
        %v623 = vmul.f32 %v358, %v591
        %v624 = vmul.f32 %v359, %v592
        %v625 = vmul.f32 %v360, %v593
        %v626 = vmul.f32 %v361, %v594
        %v627 = vmul.f32 %v362, %v595
        %v628 = vmul.f32 %v363, %v596
        %v629 = vpack.c.bf16 %v598, %v597
        %v630 = vpack.c.bf16 %v600, %v599
        %v631 = vpack.c.bf16 %v602, %v601
        %v632 = vpack.c.bf16 %v604, %v603
        %v633 = vpack.c.bf16 %v606, %v605
        %v634 = vpack.c.bf16 %v608, %v607
        %v635 = vpack.c.bf16 %v610, %v609
        %v636 = vpack.c.bf16 %v612, %v611
        %v637 = vpack.c.bf16 %v614, %v613
        %v638 = vpack.c.bf16 %v616, %v615
        %v639 = vpack.c.bf16 %v618, %v617
        %v640 = vpack.c.bf16 %v620, %v619
        %v641 = vpack.c.bf16 %v622, %v621
        %v642 = vpack.c.bf16 %v624, %v623
        %v643 = vpack.c.bf16 %v626, %v625
        %v644 = vpack.c.bf16 %v628, %v627
        %v645 = vld [vmem:[%s1] sm:$0xf]
        %v646 = vld [vmem:[%s1 + $0x4] sm:$0xf]
        %v647 = vld [vmem:[%s1 + $0x8] sm:$0xf]
        %v648 = vld [vmem:[%s1 + $0xc] sm:$0xf]
        %v649 = vld [vmem:[%s2] sm:$0x1]
        %v651 = vlaneseq
        %v652 = vshrl.u32 %v651, 7
        %v653 = vsub.s32 0, %v652
        %v654 = vrot.slane %v649, %v653
        %v660 = vunpack.c.l.b16 %v645
        %v661 = vunpack.c.l.b16 %v646
        %v662 = vunpack.c.l.b16 %v647
        %v663 = vunpack.c.l.b16 %v648
        %v664 = vpack.c.b16 %v661, %v660
        %v665 = vpack.c.b16 %v663, %v662
        %vm668 = vcmask 261120
        %v670 = vsel %vm668, %v629, 0
        %v673 = vsel %vm668, %v630, 0
        %v676 = vsel %vm668, %v631, 0
        %v679 = vsel %vm668, %v632, 0
        %v682 = vsel %vm668, %v633, 0
        %v685 = vsel %vm668, %v634, 0
        %v688 = vsel %vm668, %v635, 0
        %v691 = vsel %vm668, %v636, 0
        %v694 = vsel %vm668, %v637, 0
        %v697 = vsel %vm668, %v638, 0
        %v700 = vsel %vm668, %v639, 0
        %v703 = vsel %vm668, %v640, 0
        %v706 = vsel %vm668, %v641, 0
        %v709 = vsel %vm668, %v642, 0
        %v712 = vsel %vm668, %v643, 0
        %v715 = vsel %vm668, %v644, 0
        %717 = vmatprep.subr.bf16.mxu0 0
        %718 = vmatpush1.bf16.msra.mxu0 %v664
        %719 = vmatprep.subr.bf16.mxu0 0
        %720 = vmatpush1.bf16.msra.mxu0 %v665
        %721 = vmatprep.subr.bf16.mxu0 0
        %722 = vmatpush1.bf16.msra.mxu0 0
        %723 = vmatprep.subr.bf16.mxu0 0
        %724 = vmatpush1.bf16.msra.mxu0 0
        %725 = vmatprep.subr.bf16.mxu0 0
        %726 = vmatpush1.bf16.msra.mxu0 0
        %727 = vmatprep.subr.bf16.mxu0 0
        %728 = vmatpush1.bf16.msra.mxu0 0
        %729 = vmatprep.subr.bf16.mxu0 0
        %730 = vmatpush1.bf16.msra.mxu0 0
        %731 = vmatprep.subr.bf16.mxu0 0
        %732 = vmatpush1.bf16.msra.mxu0 0
        %733 = vmatprep.subr.bf16.mxu0 0
        %734 = vmatpush1.bf16.msra.mxu0 0
        %735 = vmatprep.subr.bf16.mxu0 0
        %736 = vmatpush1.bf16.msra.mxu0 0
        %737 = vmatprep.subr.bf16.mxu0 0
        %738 = vmatpush1.bf16.msra.mxu0 0
        %739 = vmatprep.subr.bf16.mxu0 0
        %740 = vmatpush1.bf16.msra.mxu0 0
        %741 = vmatprep.subr.bf16.mxu0 0
        %742 = vmatpush1.bf16.msra.mxu0 0
        %743 = vmatprep.subr.bf16.mxu0 0
        %744 = vmatpush1.bf16.msra.mxu0 0
        %745 = vmatprep.subr.bf16.mxu0 0
        %746 = vmatpush1.bf16.msra.mxu0 0
        %747 = vmatprep.subr.bf16.mxu0 0
        %748 = vmatpush1.bf16.msra.mxu0 0
        %749 = vmatprep.mubr.bf16.mxu0 0
        %750 = vmatmul.mubr.bf16.gmra.mrb[0].mxu0 %v670
        %v751 = vpop.f32.mrb[0].mxu0
        %v752 = vadd.f32 %v654, %v751
        %v753 = vpop.f32.mrb[0].mxu0
        %v754 = vpop.f32.mrb[0].mxu0
        %v755 = vadd.f32 %v654, %v754
        %v756 = vpop.f32.mrb[0].mxu0
        %757 = vmatprep.mubr.bf16.mxu0 0
        %758 = vmatmul.mubr.bf16.gmra.mrb[0].mxu0 %v673
        %v759 = vpop.f32.mrb[0].mxu0
        %v760 = vadd.f32 %v654, %v759
        %v761 = vpop.f32.mrb[0].mxu0
        %v762 = vpop.f32.mrb[0].mxu0
        %v763 = vadd.f32 %v654, %v762
        %v764 = vpop.f32.mrb[0].mxu0
        %765 = vmatprep.mubr.bf16.mxu0 0
        %766 = vmatmul.mubr.bf16.gmra.mrb[0].mxu0 %v676
        %v767 = vpop.f32.mrb[0].mxu0
        %v768 = vadd.f32 %v654, %v767
        %v769 = vpop.f32.mrb[0].mxu0
        %v770 = vpop.f32.mrb[0].mxu0
        %v771 = vadd.f32 %v654, %v770
        %v772 = vpop.f32.mrb[0].mxu0
        %773 = vmatprep.mubr.bf16.mxu0 0
        %774 = vmatmul.mubr.bf16.gmra.mrb[0].mxu0 %v679
        %v775 = vpop.f32.mrb[0].mxu0
        %v776 = vadd.f32 %v654, %v775
        %v777 = vpop.f32.mrb[0].mxu0
        %v778 = vpop.f32.mrb[0].mxu0
        %v779 = vadd.f32 %v654, %v778
        %v780 = vpop.f32.mrb[0].mxu0
        %781 = vmatprep.mubr.bf16.mxu0 0
        %782 = vmatmul.mubr.bf16.gmra.mrb[0].mxu0 %v682
        %v783 = vpop.f32.mrb[0].mxu0
        %v784 = vadd.f32 %v654, %v783
        %v785 = vpop.f32.mrb[0].mxu0
        %v786 = vpop.f32.mrb[0].mxu0
        %v787 = vadd.f32 %v654, %v786
        %v788 = vpop.f32.mrb[0].mxu0
        %789 = vmatprep.mubr.bf16.mxu0 0
        %790 = vmatmul.mubr.bf16.gmra.mrb[0].mxu0 %v685
        %v791 = vpop.f32.mrb[0].mxu0
        %v792 = vadd.f32 %v654, %v791
        %v793 = vpop.f32.mrb[0].mxu0
        %v794 = vpop.f32.mrb[0].mxu0
        %v795 = vadd.f32 %v654, %v794
        %v796 = vpop.f32.mrb[0].mxu0
        %797 = vmatprep.mubr.bf16.mxu0 0
        %798 = vmatmul.mubr.bf16.gmra.mrb[0].mxu0 %v688
        %v799 = vpop.f32.mrb[0].mxu0
        %v800 = vadd.f32 %v654, %v799
        %v801 = vpop.f32.mrb[0].mxu0
        %v802 = vpop.f32.mrb[0].mxu0
        %v803 = vadd.f32 %v654, %v802
        %v804 = vpop.f32.mrb[0].mxu0
        %805 = vmatprep.mubr.bf16.mxu0 0
        %806 = vmatmul.mubr.bf16.gmra.mrb[0].mxu0 %v691
        %v807 = vpop.f32.mrb[0].mxu0
        %v808 = vadd.f32 %v654, %v807
        %v809 = vpop.f32.mrb[0].mxu0
        %v810 = vpop.f32.mrb[0].mxu0
        %v811 = vadd.f32 %v654, %v810
        %v812 = vpop.f32.mrb[0].mxu0
        %813 = vmatprep.mubr.bf16.mxu0 0
        %814 = vmatmul.mubr.bf16.gmra.mrb[0].mxu0 %v694
        %v815 = vpop.f32.mrb[0].mxu0
        %v816 = vadd.f32 %v654, %v815
        %v817 = vpop.f32.mrb[0].mxu0
        %v818 = vpop.f32.mrb[0].mxu0
        %v819 = vadd.f32 %v654, %v818
        %v820 = vpop.f32.mrb[0].mxu0
        %821 = vmatprep.mubr.bf16.mxu0 0
        %822 = vmatmul.mubr.bf16.gmra.mrb[0].mxu0 %v697
        %v823 = vpop.f32.mrb[0].mxu0
        %v824 = vadd.f32 %v654, %v823
        %v825 = vpop.f32.mrb[0].mxu0
        %v826 = vpop.f32.mrb[0].mxu0
        %v827 = vadd.f32 %v654, %v826
        %v828 = vpop.f32.mrb[0].mxu0
        %829 = vmatprep.mubr.bf16.mxu0 0
        %830 = vmatmul.mubr.bf16.gmra.mrb[0].mxu0 %v700
        %v831 = vpop.f32.mrb[0].mxu0
        %v832 = vadd.f32 %v654, %v831
        %v833 = vpop.f32.mrb[0].mxu0
        %v834 = vpop.f32.mrb[0].mxu0
        %v835 = vadd.f32 %v654, %v834
        %v836 = vpop.f32.mrb[0].mxu0
        %837 = vmatprep.mubr.bf16.mxu0 0
        %838 = vmatmul.mubr.bf16.gmra.mrb[0].mxu0 %v703
        %v839 = vpop.f32.mrb[0].mxu0
        %v840 = vadd.f32 %v654, %v839
        %v841 = vpop.f32.mrb[0].mxu0
        %v842 = vpop.f32.mrb[0].mxu0
        %v843 = vadd.f32 %v654, %v842
        %v844 = vpop.f32.mrb[0].mxu0
        %845 = vmatprep.mubr.bf16.mxu0 0
        %846 = vmatmul.mubr.bf16.gmra.mrb[0].mxu0 %v706
        %v847 = vpop.f32.mrb[0].mxu0
        %v848 = vadd.f32 %v654, %v847
        %v849 = vpop.f32.mrb[0].mxu0
        %v850 = vpop.f32.mrb[0].mxu0
        %v851 = vadd.f32 %v654, %v850
        %v852 = vpop.f32.mrb[0].mxu0
        %853 = vmatprep.mubr.bf16.mxu0 0
        %854 = vmatmul.mubr.bf16.gmra.mrb[0].mxu0 %v709
        %v855 = vpop.f32.mrb[0].mxu0
        %v856 = vadd.f32 %v654, %v855
        %v857 = vpop.f32.mrb[0].mxu0
        %v858 = vpop.f32.mrb[0].mxu0
        %v859 = vadd.f32 %v654, %v858
        %v860 = vpop.f32.mrb[0].mxu0
        %861 = vmatprep.mubr.bf16.mxu0 0
        %862 = vmatmul.mubr.bf16.gmra.mrb[0].mxu0 %v712
        %v863 = vpop.f32.mrb[0].mxu0
        %v864 = vadd.f32 %v654, %v863
        %v865 = vpop.f32.mrb[0].mxu0
        %v866 = vpop.f32.mrb[0].mxu0
        %v867 = vadd.f32 %v654, %v866
        %v868 = vpop.f32.mrb[0].mxu0
        %869 = vmatprep.mubr.bf16.mxu0 0
        %870 = vmatmul.mubr.bf16.gmra.mrb[0].mxu0 %v715
        %v871 = vpop.f32.mrb[0].mxu0
        %v872 = vadd.f32 %v654, %v871
        %v873 = vpop.f32.mrb[0].mxu0
        %v874 = vpop.f32.mrb[0].mxu0
        %v875 = vadd.f32 %v654, %v874
        %v876 = vpop.f32.mrb[0].mxu0
        %877 = vdwg.mxu0
        %v878 = vsub.f32 0.0, %v752
        %v879 = vsub.f32 0.0, %v755
        %v880 = vsub.f32 0.0, %v760
        %v881 = vsub.f32 0.0, %v763
        %v882 = vsub.f32 0.0, %v768
        %v883 = vsub.f32 0.0, %v771
        %v884 = vsub.f32 0.0, %v776
        %v885 = vsub.f32 0.0, %v779
        %v886 = vsub.f32 0.0, %v784
        %v887 = vsub.f32 0.0, %v787
        %v888 = vsub.f32 0.0, %v792
        %v889 = vsub.f32 0.0, %v795
        %v890 = vsub.f32 0.0, %v800
        %v891 = vsub.f32 0.0, %v803
        %v892 = vsub.f32 0.0, %v808
        %v893 = vsub.f32 0.0, %v811
        %v894 = vsub.f32 0.0, %v816
        %v895 = vsub.f32 0.0, %v819
        %v896 = vsub.f32 0.0, %v824
        %v897 = vsub.f32 0.0, %v827
        %v898 = vsub.f32 0.0, %v832
        %v899 = vsub.f32 0.0, %v835
        %v900 = vsub.f32 0.0, %v840
        %v901 = vsub.f32 0.0, %v843
        %v902 = vsub.f32 0.0, %v848
        %v903 = vsub.f32 0.0, %v851
        %v904 = vsub.f32 0.0, %v856
        %v905 = vsub.f32 0.0, %v859
        %v906 = vsub.f32 0.0, %v864
        %v907 = vsub.f32 0.0, %v867
        %v908 = vsub.f32 0.0, %v872
        %v909 = vsub.f32 0.0, %v875
        %v910 = vmul.f32 %v878, 1.442695
        %v911 = vpow.pop %v910
        %v912 = vmul.f32 %v879, 1.442695
        %v913 = vpow.pop %v912
        %v914 = vmul.f32 %v880, 1.442695
        %v915 = vpow.pop %v914
        %v916 = vmul.f32 %v881, 1.442695
        %v917 = vpow.pop %v916
        %v918 = vmul.f32 %v882, 1.442695
        %v919 = vpow.pop %v918
        %v920 = vmul.f32 %v883, 1.442695
        %v921 = vpow.pop %v920
        %v922 = vmul.f32 %v884, 1.442695
        %v923 = vpow.pop %v922
        %v924 = vmul.f32 %v885, 1.442695
        %v925 = vpow.pop %v924
        %v926 = vmul.f32 %v886, 1.442695
        %v927 = vpow.pop %v926
        %v928 = vmul.f32 %v887, 1.442695
        %v929 = vpow.pop %v928
        %v930 = vmul.f32 %v888, 1.442695
        %v931 = vpow.pop %v930
        %v932 = vmul.f32 %v889, 1.442695
        %v933 = vpow.pop %v932
        %v934 = vmul.f32 %v890, 1.442695
        %v935 = vpow.pop %v934
        %v936 = vmul.f32 %v891, 1.442695
        %v937 = vpow.pop %v936
        %v938 = vmul.f32 %v892, 1.442695
        %v939 = vpow.pop %v938
        %v940 = vmul.f32 %v893, 1.442695
        %v941 = vpow.pop %v940
        %v942 = vmul.f32 %v894, 1.442695
        %v943 = vpow.pop %v942
        %v944 = vmul.f32 %v895, 1.442695
        %v945 = vpow.pop %v944
        %v946 = vmul.f32 %v896, 1.442695
        %v947 = vpow.pop %v946
        %v948 = vmul.f32 %v897, 1.442695
        %v949 = vpow.pop %v948
        %v950 = vmul.f32 %v898, 1.442695
        %v951 = vpow.pop %v950
        %v952 = vmul.f32 %v899, 1.442695
        %v953 = vpow.pop %v952
        %v954 = vmul.f32 %v900, 1.442695
        %v955 = vpow.pop %v954
        %v956 = vmul.f32 %v901, 1.442695
        %v957 = vpow.pop %v956
        %v958 = vmul.f32 %v902, 1.442695
        %v959 = vpow.pop %v958
        %v960 = vmul.f32 %v903, 1.442695
        %v961 = vpow.pop %v960
        %v962 = vmul.f32 %v904, 1.442695
        %v963 = vpow.pop %v962
        %v964 = vmul.f32 %v905, 1.442695
        %v965 = vpow.pop %v964
        %v966 = vmul.f32 %v906, 1.442695
        %v967 = vpow.pop %v966
        %v968 = vmul.f32 %v907, 1.442695
        %v969 = vpow.pop %v968
        %v970 = vmul.f32 %v908, 1.442695
        %v971 = vpow.pop %v970
        %v972 = vmul.f32 %v909, 1.442695
        %v973 = vpow.pop %v972
        %v974 = vadd.f32 %v911, 1.0
        %v975 = vadd.f32 %v913, 1.0
        %v976 = vadd.f32 %v915, 1.0
        %v977 = vadd.f32 %v917, 1.0
        %v978 = vadd.f32 %v919, 1.0
        %v979 = vadd.f32 %v921, 1.0
        %v980 = vadd.f32 %v923, 1.0
        %v981 = vadd.f32 %v925, 1.0
        %v982 = vadd.f32 %v927, 1.0
        %v983 = vadd.f32 %v929, 1.0
        %v984 = vadd.f32 %v931, 1.0
        %v985 = vadd.f32 %v933, 1.0
        %v986 = vadd.f32 %v935, 1.0
        %v987 = vadd.f32 %v937, 1.0
        %v988 = vadd.f32 %v939, 1.0
        %v989 = vadd.f32 %v941, 1.0
        %v990 = vadd.f32 %v943, 1.0
        %v991 = vadd.f32 %v945, 1.0
        %v992 = vadd.f32 %v947, 1.0
        %v993 = vadd.f32 %v949, 1.0
        %v994 = vadd.f32 %v951, 1.0
        %v995 = vadd.f32 %v953, 1.0
        %v996 = vadd.f32 %v955, 1.0
        %v997 = vadd.f32 %v957, 1.0
        %v998 = vadd.f32 %v959, 1.0
        %v999 = vadd.f32 %v961, 1.0
        %v1000 = vadd.f32 %v963, 1.0
        %v1001 = vadd.f32 %v965, 1.0
        %v1002 = vadd.f32 %v967, 1.0
        %v1003 = vadd.f32 %v969, 1.0
        %v1004 = vadd.f32 %v971, 1.0
        %v1005 = vadd.f32 %v973, 1.0
        %v1006 = vrcp.pop %v974
        %v1007 = vrcp.pop %v975
        %v1008 = vrcp.pop %v976
        %v1009 = vrcp.pop %v977
        %v1010 = vrcp.pop %v978
        %v1011 = vrcp.pop %v979
        %v1012 = vrcp.pop %v980
        %v1013 = vrcp.pop %v981
        %v1014 = vrcp.pop %v982
        %v1015 = vrcp.pop %v983
        %v1016 = vrcp.pop %v984
        %v1017 = vrcp.pop %v985
        %v1018 = vrcp.pop %v986
        %v1019 = vrcp.pop %v987
        %v1020 = vrcp.pop %v988
        %v1021 = vrcp.pop %v989
        %v1022 = vrcp.pop %v990
        %v1023 = vrcp.pop %v991
        %v1024 = vrcp.pop %v992
        %v1025 = vrcp.pop %v993
        %v1026 = vrcp.pop %v994
        %v1027 = vrcp.pop %v995
        %v1028 = vrcp.pop %v996
        %v1029 = vrcp.pop %v997
        %v1030 = vrcp.pop %v998
        %v1031 = vrcp.pop %v999
        %v1032 = vrcp.pop %v1000
        %v1033 = vrcp.pop %v1001
        %v1034 = vrcp.pop %v1002
        %v1035 = vrcp.pop %v1003
        %v1036 = vrcp.pop %v1004
        %v1037 = vrcp.pop %v1005
        %v1038 = vmul.f32 %v752, %v1006
        %v1039 = vmul.f32 %v755, %v1007
        %v1040 = vmul.f32 %v760, %v1008
        %v1041 = vmul.f32 %v763, %v1009
        %v1042 = vmul.f32 %v768, %v1010
        %v1043 = vmul.f32 %v771, %v1011
        %v1044 = vmul.f32 %v776, %v1012
        %v1045 = vmul.f32 %v779, %v1013
        %v1046 = vmul.f32 %v784, %v1014
        %v1047 = vmul.f32 %v787, %v1015
        %v1048 = vmul.f32 %v792, %v1016
        %v1049 = vmul.f32 %v795, %v1017
        %v1050 = vmul.f32 %v800, %v1018
        %v1051 = vmul.f32 %v803, %v1019
        %v1052 = vmul.f32 %v808, %v1020
        %v1053 = vmul.f32 %v811, %v1021
        %v1054 = vmul.f32 %v816, %v1022
        %v1055 = vmul.f32 %v819, %v1023
        %v1056 = vmul.f32 %v824, %v1024
        %v1057 = vmul.f32 %v827, %v1025
        %v1058 = vmul.f32 %v832, %v1026
        %v1059 = vmul.f32 %v835, %v1027
        %v1060 = vmul.f32 %v840, %v1028
        %v1061 = vmul.f32 %v843, %v1029
        %v1062 = vmul.f32 %v848, %v1030
        %v1063 = vmul.f32 %v851, %v1031
        %v1064 = vmul.f32 %v856, %v1032
        %v1065 = vmul.f32 %v859, %v1033
        %v1066 = vmul.f32 %v864, %v1034
        %v1067 = vmul.f32 %v867, %v1035
        %v1068 = vmul.f32 %v872, %v1036
        %v1069 = vmul.f32 %v875, %v1037
        %s1070 = scalar_lea.vmem [#allocation2], 32
        %1071 = vst.msk [vmem:[%s1070 + $0x8] sm:$0xff] %vm364, %v1038
        %1072 = vst.msk [vmem:[%s1070 + $0x10] sm:$0xff] %vm364, %v1039
        %1073 = vst.msk [vmem:[%s1070 + $0x28] sm:$0xff] %vm364, %v1040
        %1074 = vst.msk [vmem:[%s1070 + $0x30] sm:$0xff] %vm364, %v1041
        %1075 = vst.msk [vmem:[%s1070 + $0x48] sm:$0xff] %vm364, %v1042
        %1076 = vst.msk [vmem:[%s1070 + $0x50] sm:$0xff] %vm364, %v1043
        %1077 = vst.msk [vmem:[%s1070 + $0x68] sm:$0xff] %vm364, %v1044
        %1078 = vst.msk [vmem:[%s1070 + $0x70] sm:$0xff] %vm364, %v1045
        %1079 = vst.msk [vmem:[%s1070 + $0x88] sm:$0xff] %vm364, %v1046
        %1080 = vst.msk [vmem:[%s1070 + $0x90] sm:$0xff] %vm364, %v1047
        %1081 = vst.msk [vmem:[%s1070 + $0xa8] sm:$0xff] %vm364, %v1048
        %1082 = vst.msk [vmem:[%s1070 + $0xb0] sm:$0xff] %vm364, %v1049
        %1083 = vst.msk [vmem:[%s1070 + $0xc8] sm:$0xff] %vm364, %v1050
        %1084 = vst.msk [vmem:[%s1070 + $0xd0] sm:$0xff] %vm364, %v1051
        %1085 = vst.msk [vmem:[%s1070 + $0xe8] sm:$0xff] %vm364, %v1052
        %1086 = vst.msk [vmem:[%s1070 + $0xf0] sm:$0xff] %vm364, %v1053
        %1087 = vst.msk [vmem:[%s1070 + $0x108] sm:$0xff] %vm364, %v1054
        %1088 = vst.msk [vmem:[%s1070 + $0x110] sm:$0xff] %vm364, %v1055
        %1089 = vst.msk [vmem:[%s1070 + $0x128] sm:$0xff] %vm364, %v1056
        %1090 = vst.msk [vmem:[%s1070 + $0x130] sm:$0xff] %vm364, %v1057
        %1091 = vst.msk [vmem:[%s1070 + $0x148] sm:$0xff] %vm364, %v1058
        %1092 = vst.msk [vmem:[%s1070 + $0x150] sm:$0xff] %vm364, %v1059
        %1093 = vst.msk [vmem:[%s1070 + $0x168] sm:$0xff] %vm364, %v1060
        %1094 = vst.msk [vmem:[%s1070 + $0x170] sm:$0xff] %vm364, %v1061
        %1095 = vst.msk [vmem:[%s1070 + $0x188] sm:$0xff] %vm364, %v1062
        %1096 = vst.msk [vmem:[%s1070 + $0x190] sm:$0xff] %vm364, %v1063
        %1097 = vst.msk [vmem:[%s1070 + $0x1a8] sm:$0xff] %vm364, %v1064
        %1098 = vst.msk [vmem:[%s1070 + $0x1b0] sm:$0xff] %vm364, %v1065
        %1099 = vst.msk [vmem:[%s1070 + $0x1c8] sm:$0xff] %vm364, %v1066
        %1100 = vst.msk [vmem:[%s1070 + $0x1d0] sm:$0xff] %vm364, %v1067
        %1101 = vst.msk [vmem:[%s1070 + $0x1e8] sm:$0xff] %vm364, %v1068
        %1102 = vst.msk [vmem:[%s1070 + $0x1f0] sm:$0xff] %vm364, %v1069
        %v1103 = vld [vmem:[#allocation2 + $0x7] sm:$0xff]
        %v1104 = vld [vmem:[#allocation2 + $0xf] sm:$0xff]
        %v1105 = vld [vmem:[#allocation2 + $0x27] sm:$0xff]
        %v1106 = vld [vmem:[#allocation2 + $0x2f] sm:$0xff]
        %v1107 = vld [vmem:[#allocation2 + $0x47] sm:$0xff]
        %v1108 = vld [vmem:[#allocation2 + $0x4f] sm:$0xff]
        %v1109 = vld [vmem:[#allocation2 + $0x67] sm:$0xff]
        %v1110 = vld [vmem:[#allocation2 + $0x6f] sm:$0xff]
        %v1111 = vld [vmem:[#allocation2 + $0x87] sm:$0xff]
        %v1112 = vld [vmem:[#allocation2 + $0x8f] sm:$0xff]
        %v1113 = vld [vmem:[#allocation2 + $0xa7] sm:$0xff]
        %v1114 = vld [vmem:[#allocation2 + $0xaf] sm:$0xff]
        %v1115 = vld [vmem:[#allocation2 + $0xc7] sm:$0xff]
        %v1116 = vld [vmem:[#allocation2 + $0xcf] sm:$0xff]
        %v1117 = vld [vmem:[#allocation2 + $0xe7] sm:$0xff]
        %v1118 = vld [vmem:[#allocation2 + $0xef] sm:$0xff]
        %v1119 = vld [vmem:[#allocation2 + $0x107] sm:$0xff]
        %v1120 = vld [vmem:[#allocation2 + $0x10f] sm:$0xff]
        %v1121 = vld [vmem:[#allocation2 + $0x127] sm:$0xff]
        %v1122 = vld [vmem:[#allocation2 + $0x12f] sm:$0xff]
        %v1123 = vld [vmem:[#allocation2 + $0x147] sm:$0xff]
        %v1124 = vld [vmem:[#allocation2 + $0x14f] sm:$0xff]
        %v1125 = vld [vmem:[#allocation2 + $0x167] sm:$0xff]
        %v1126 = vld [vmem:[#allocation2 + $0x16f] sm:$0xff]
        %v1127 = vld [vmem:[#allocation2 + $0x187] sm:$0xff]
        %v1128 = vld [vmem:[#allocation2 + $0x18f] sm:$0xff]
        %v1129 = vld [vmem:[#allocation2 + $0x1a7] sm:$0xff]
        %v1130 = vld [vmem:[#allocation2 + $0x1af] sm:$0xff]
        %v1131 = vld [vmem:[#allocation2 + $0x1c7] sm:$0xff]
        %v1132 = vld [vmem:[#allocation2 + $0x1cf] sm:$0xff]
        %v1133 = vld [vmem:[#allocation2 + $0x1e7] sm:$0xff]
        %v1134 = vld [vmem:[#allocation2 + $0x1ef] sm:$0xff]
        %v1135 = vpack.c.bf16 %v1104, %v1103
        %v1136 = vpack.c.bf16 %v1106, %v1105
        %v1137 = vpack.c.bf16 %v1108, %v1107
        %v1138 = vpack.c.bf16 %v1110, %v1109
        %v1139 = vpack.c.bf16 %v1112, %v1111
        %v1140 = vpack.c.bf16 %v1114, %v1113
        %v1141 = vpack.c.bf16 %v1116, %v1115
        %v1142 = vpack.c.bf16 %v1118, %v1117
        %v1143 = vpack.c.bf16 %v1120, %v1119
        %v1144 = vpack.c.bf16 %v1122, %v1121
        %v1145 = vpack.c.bf16 %v1124, %v1123
        %v1146 = vpack.c.bf16 %v1126, %v1125
        %v1147 = vpack.c.bf16 %v1128, %v1127
        %v1148 = vpack.c.bf16 %v1130, %v1129
        %v1149 = vpack.c.bf16 %v1132, %v1131
        %v1150 = vpack.c.bf16 %v1134, %v1133
        %v1151 = vld [vmem:[%s3] sm:$0xf]
        %v1152 = vld [vmem:[%s3 + $0x4] sm:$0xf]
        %v1153 = vld [vmem:[#allocation2 + $0x8] sm:$0xff]
        %v1154 = vld [vmem:[#allocation2 + $0x10] sm:$0xff]
        %v1155 = vld [vmem:[#allocation2 + $0x28] sm:$0xff]
        %v1156 = vld [vmem:[#allocation2 + $0x30] sm:$0xff]
        %v1157 = vld [vmem:[#allocation2 + $0x48] sm:$0xff]
        %v1158 = vld [vmem:[#allocation2 + $0x50] sm:$0xff]
        %v1159 = vld [vmem:[#allocation2 + $0x68] sm:$0xff]
        %v1160 = vld [vmem:[#allocation2 + $0x70] sm:$0xff]
        %v1161 = vld [vmem:[#allocation2 + $0x88] sm:$0xff]
        %v1162 = vld [vmem:[#allocation2 + $0x90] sm:$0xff]
        %v1163 = vld [vmem:[#allocation2 + $0xa8] sm:$0xff]
        %v1164 = vld [vmem:[#allocation2 + $0xb0] sm:$0xff]
        %v1165 = vld [vmem:[#allocation2 + $0xc8] sm:$0xff]
        %v1166 = vld [vmem:[#allocation2 + $0xd0] sm:$0xff]
        %v1167 = vld [vmem:[#allocation2 + $0xe8] sm:$0xff]
        %v1168 = vld [vmem:[#allocation2 + $0xf0] sm:$0xff]
        %v1169 = vld [vmem:[#allocation2 + $0x108] sm:$0xff]
        %v1170 = vld [vmem:[#allocation2 + $0x110] sm:$0xff]
        %v1171 = vld [vmem:[#allocation2 + $0x128] sm:$0xff]
        %v1172 = vld [vmem:[#allocation2 + $0x130] sm:$0xff]
        %v1173 = vld [vmem:[#allocation2 + $0x148] sm:$0xff]
        %v1174 = vld [vmem:[#allocation2 + $0x150] sm:$0xff]
        %v1175 = vld [vmem:[#allocation2 + $0x168] sm:$0xff]
        %v1176 = vld [vmem:[#allocation2 + $0x170] sm:$0xff]
        %v1177 = vld [vmem:[#allocation2 + $0x188] sm:$0xff]
        %v1178 = vld [vmem:[#allocation2 + $0x190] sm:$0xff]
        %v1179 = vld [vmem:[#allocation2 + $0x1a8] sm:$0xff]
        %v1180 = vld [vmem:[#allocation2 + $0x1b0] sm:$0xff]
        %v1181 = vld [vmem:[#allocation2 + $0x1c8] sm:$0xff]
        %v1182 = vld [vmem:[#allocation2 + $0x1d0] sm:$0xff]
        %v1183 = vld [vmem:[#allocation2 + $0x1e8] sm:$0xff]
        %v1184 = vld [vmem:[#allocation2 + $0x1f0] sm:$0xff]
        %v1185 = vpack.c.bf16 %v1154, %v1153
        %v1186 = vpack.c.bf16 %v1156, %v1155
        %v1187 = vpack.c.bf16 %v1158, %v1157
        %v1188 = vpack.c.bf16 %v1160, %v1159
        %v1189 = vpack.c.bf16 %v1162, %v1161
        %v1190 = vpack.c.bf16 %v1164, %v1163
        %v1191 = vpack.c.bf16 %v1166, %v1165
        %v1192 = vpack.c.bf16 %v1168, %v1167
        %v1193 = vpack.c.bf16 %v1170, %v1169
        %v1194 = vpack.c.bf16 %v1172, %v1171
        %v1195 = vpack.c.bf16 %v1174, %v1173
        %v1196 = vpack.c.bf16 %v1176, %v1175
        %v1197 = vpack.c.bf16 %v1178, %v1177
        %v1198 = vpack.c.bf16 %v1180, %v1179
        %v1199 = vpack.c.bf16 %v1182, %v1181
        %v1200 = vpack.c.bf16 %v1184, %v1183
        %s1201 = scalar_lea.vmem %s3, 8
        %v1202 = vld [vmem:[%s1201] sm:$0xf]
        %v1203 = vld [vmem:[%s1201 + $0x4] sm:$0xf]
        %v1206 = vunpack.c.l.b16 %v1202
        %v1207 = vunpack.c.l.b16 %v1203
        %v1208 = vpack.c.b16 %v1207, %v1206
        %v1211 = vsel %vm364, %v1185, 0
        %v1214 = vsel %vm364, %v1186, 0
        %v1217 = vsel %vm364, %v1187, 0
        %v1220 = vsel %vm364, %v1188, 0
        %v1223 = vsel %vm364, %v1189, 0
        %v1226 = vsel %vm364, %v1190, 0
        %v1229 = vsel %vm364, %v1191, 0
        %v1232 = vsel %vm364, %v1192, 0
        %v1235 = vsel %vm364, %v1193, 0
        %v1238 = vsel %vm364, %v1194, 0
        %v1241 = vsel %vm364, %v1195, 0
        %v1244 = vsel %vm364, %v1196, 0
        %v1247 = vsel %vm364, %v1197, 0
        %v1250 = vsel %vm364, %v1198, 0
        %v1253 = vsel %vm364, %v1199, 0
        %v1256 = vsel %vm364, %v1200, 0
        %1258 = vmatprep.subr.bf16.mxu0 0
        %1259 = vmatpush1.bf16.msra.mxu0 %v1208
        %1260 = vmatprep.subr.bf16.mxu0 0
        %1261 = vmatpush1.bf16.msra.mxu0 0
        %1262 = vmatprep.subr.bf16.mxu0 0
        %1263 = vmatpush1.bf16.msra.mxu0 0
        %1264 = vmatprep.subr.bf16.mxu0 0
        %1265 = vmatpush1.bf16.msra.mxu0 0
        %1266 = vmatprep.subr.bf16.mxu0 0
        %1267 = vmatpush1.bf16.msra.mxu0 0
        %1268 = vmatprep.subr.bf16.mxu0 0
        %1269 = vmatpush1.bf16.msra.mxu0 0
        %1270 = vmatprep.subr.bf16.mxu0 0
        %1271 = vmatpush1.bf16.msra.mxu0 0
        %1272 = vmatprep.subr.bf16.mxu0 0
        %1273 = vmatpush1.bf16.msra.mxu0 0
        %1274 = vmatprep.subr.bf16.mxu0 0
        %1275 = vmatpush1.bf16.msra.mxu0 0
        %1276 = vmatprep.subr.bf16.mxu0 0
        %1277 = vmatpush1.bf16.msra.mxu0 0
        %1278 = vmatprep.subr.bf16.mxu0 0
        %1279 = vmatpush1.bf16.msra.mxu0 0
        %1280 = vmatprep.subr.bf16.mxu0 0
        %1281 = vmatpush1.bf16.msra.mxu0 0
        %1282 = vmatprep.subr.bf16.mxu0 0
        %1283 = vmatpush1.bf16.msra.mxu0 0
        %1284 = vmatprep.subr.bf16.mxu0 0
        %1285 = vmatpush1.bf16.msra.mxu0 0
        %1286 = vmatprep.subr.bf16.mxu0 0
        %1287 = vmatpush1.bf16.msra.mxu0 0
        %1288 = vmatprep.subr.bf16.mxu0 0
        %1289 = vmatpush1.bf16.msra.mxu0 0
        %1290 = vmatprep.mubr.bf16.mxu0 0
        %1291 = vmatmul.mubr.bf16.gmra.mrb[0].mxu0 %v1211
        %v1292 = vpop.f32.mrb[0].mxu0
        %v1293 = vadd.f32 0.0, %v1292
        %v1294 = vpop.f32.mrb[0].mxu0
        %v1295 = vpop.f32.mrb[0].mxu0
        %v1296 = vadd.f32 0.0, %v1295
        %v1297 = vpop.f32.mrb[0].mxu0
        %1298 = vmatprep.mubr.bf16.mxu0 0
        %1299 = vmatmul.mubr.bf16.gmra.mrb[0].mxu0 %v1214
        %v1300 = vpop.f32.mrb[0].mxu0
        %v1301 = vadd.f32 0.0, %v1300
        %v1302 = vpop.f32.mrb[0].mxu0
        %v1303 = vpop.f32.mrb[0].mxu0
        %v1304 = vadd.f32 0.0, %v1303
        %v1305 = vpop.f32.mrb[0].mxu0
        %1306 = vmatprep.mubr.bf16.mxu0 0
        %1307 = vmatmul.mubr.bf16.gmra.mrb[0].mxu0 %v1217
        %v1308 = vpop.f32.mrb[0].mxu0
        %v1309 = vadd.f32 0.0, %v1308
        %v1310 = vpop.f32.mrb[0].mxu0
        %v1311 = vpop.f32.mrb[0].mxu0
        %v1312 = vadd.f32 0.0, %v1311
        %v1313 = vpop.f32.mrb[0].mxu0
        %1314 = vmatprep.mubr.bf16.mxu0 0
        %1315 = vmatmul.mubr.bf16.gmra.mrb[0].mxu0 %v1220
        %v1316 = vpop.f32.mrb[0].mxu0
        %v1317 = vadd.f32 0.0, %v1316
        %v1318 = vpop.f32.mrb[0].mxu0
        %v1319 = vpop.f32.mrb[0].mxu0
        %v1320 = vadd.f32 0.0, %v1319
        %v1321 = vpop.f32.mrb[0].mxu0
        %1322 = vmatprep.mubr.bf16.mxu0 0
        %1323 = vmatmul.mubr.bf16.gmra.mrb[0].mxu0 %v1223
        %v1324 = vpop.f32.mrb[0].mxu0
        %v1325 = vadd.f32 0.0, %v1324
        %v1326 = vpop.f32.mrb[0].mxu0
        %v1327 = vpop.f32.mrb[0].mxu0
        %v1328 = vadd.f32 0.0, %v1327
        %v1329 = vpop.f32.mrb[0].mxu0
        %1330 = vmatprep.mubr.bf16.mxu0 0
        %1331 = vmatmul.mubr.bf16.gmra.mrb[0].mxu0 %v1226
        %v1332 = vpop.f32.mrb[0].mxu0
        %v1333 = vadd.f32 0.0, %v1332
        %v1334 = vpop.f32.mrb[0].mxu0
        %v1335 = vpop.f32.mrb[0].mxu0
        %v1336 = vadd.f32 0.0, %v1335
        %v1337 = vpop.f32.mrb[0].mxu0
        %1338 = vmatprep.mubr.bf16.mxu0 0
        %1339 = vmatmul.mubr.bf16.gmra.mrb[0].mxu0 %v1229
        %v1340 = vpop.f32.mrb[0].mxu0
        %v1341 = vadd.f32 0.0, %v1340
        %v1342 = vpop.f32.mrb[0].mxu0
        %v1343 = vpop.f32.mrb[0].mxu0
        %v1344 = vadd.f32 0.0, %v1343
        %v1345 = vpop.f32.mrb[0].mxu0
        %1346 = vmatprep.mubr.bf16.mxu0 0
        %1347 = vmatmul.mubr.bf16.gmra.mrb[0].mxu0 %v1232
        %v1348 = vpop.f32.mrb[0].mxu0
        %v1349 = vadd.f32 0.0, %v1348
        %v1350 = vpop.f32.mrb[0].mxu0
        %v1351 = vpop.f32.mrb[0].mxu0
        %v1352 = vadd.f32 0.0, %v1351
        %v1353 = vpop.f32.mrb[0].mxu0
        %1354 = vmatprep.mubr.bf16.mxu0 0
        %1355 = vmatmul.mubr.bf16.gmra.mrb[0].mxu0 %v1235
        %v1356 = vpop.f32.mrb[0].mxu0
        %v1357 = vadd.f32 0.0, %v1356
        %v1358 = vpop.f32.mrb[0].mxu0
        %v1359 = vpop.f32.mrb[0].mxu0
        %v1360 = vadd.f32 0.0, %v1359
        %v1361 = vpop.f32.mrb[0].mxu0
        %1362 = vmatprep.mubr.bf16.mxu0 0
        %1363 = vmatmul.mubr.bf16.gmra.mrb[0].mxu0 %v1238
        %v1364 = vpop.f32.mrb[0].mxu0
        %v1365 = vadd.f32 0.0, %v1364
        %v1366 = vpop.f32.mrb[0].mxu0
        %v1367 = vpop.f32.mrb[0].mxu0
        %v1368 = vadd.f32 0.0, %v1367
        %v1369 = vpop.f32.mrb[0].mxu0
        %1370 = vmatprep.mubr.bf16.mxu0 0
        %1371 = vmatmul.mubr.bf16.gmra.mrb[0].mxu0 %v1241
        %v1372 = vpop.f32.mrb[0].mxu0
        %v1373 = vadd.f32 0.0, %v1372
        %v1374 = vpop.f32.mrb[0].mxu0
        %v1375 = vpop.f32.mrb[0].mxu0
        %v1376 = vadd.f32 0.0, %v1375
        %v1377 = vpop.f32.mrb[0].mxu0
        %1378 = vmatprep.mubr.bf16.mxu0 0
        %1379 = vmatmul.mubr.bf16.gmra.mrb[0].mxu0 %v1244
        %v1380 = vpop.f32.mrb[0].mxu0
        %v1381 = vadd.f32 0.0, %v1380
        %v1382 = vpop.f32.mrb[0].mxu0
        %v1383 = vpop.f32.mrb[0].mxu0
        %v1384 = vadd.f32 0.0, %v1383
        %v1385 = vpop.f32.mrb[0].mxu0
        %1386 = vmatprep.mubr.bf16.mxu0 0
        %1387 = vmatmul.mubr.bf16.gmra.mrb[0].mxu0 %v1247
        %v1388 = vpop.f32.mrb[0].mxu0
        %v1389 = vadd.f32 0.0, %v1388
        %v1390 = vpop.f32.mrb[0].mxu0
        %v1391 = vpop.f32.mrb[0].mxu0
        %v1392 = vadd.f32 0.0, %v1391
        %v1393 = vpop.f32.mrb[0].mxu0
        %1394 = vmatprep.mubr.bf16.mxu0 0
        %1395 = vmatmul.mubr.bf16.gmra.mrb[0].mxu0 %v1250
        %v1396 = vpop.f32.mrb[0].mxu0
        %v1397 = vadd.f32 0.0, %v1396
        %v1398 = vpop.f32.mrb[0].mxu0
        %v1399 = vpop.f32.mrb[0].mxu0
        %v1400 = vadd.f32 0.0, %v1399
        %v1401 = vpop.f32.mrb[0].mxu0
        %1402 = vmatprep.mubr.bf16.mxu0 0
        %1403 = vmatmul.mubr.bf16.gmra.mrb[0].mxu0 %v1253
        %v1404 = vpop.f32.mrb[0].mxu0
        %v1405 = vadd.f32 0.0, %v1404
        %v1406 = vpop.f32.mrb[0].mxu0
        %v1407 = vpop.f32.mrb[0].mxu0
        %v1408 = vadd.f32 0.0, %v1407
        %v1409 = vpop.f32.mrb[0].mxu0
        %1410 = vmatprep.mubr.bf16.mxu0 0
        %1411 = vmatmul.mubr.bf16.gmra.mrb[0].mxu0 %v1256
        %v1412 = vpop.f32.mrb[0].mxu0
        %v1413 = vadd.f32 0.0, %v1412
        %v1414 = vpop.f32.mrb[0].mxu0
        %v1415 = vpop.f32.mrb[0].mxu0
        %v1416 = vadd.f32 0.0, %v1415
        %v1417 = vpop.f32.mrb[0].mxu0
        %1418 = vdwg.mxu0
        %v1421 = vunpack.c.l.b16 %v1151
        %v1422 = vunpack.c.l.b16 %v1152
        %v1423 = vpack.c.b16 %v1422, %v1421
        %v1426 = vsel %vm364, %v1135, 0
        %v1429 = vsel %vm364, %v1136, 0
        %v1432 = vsel %vm364, %v1137, 0
        %v1435 = vsel %vm364, %v1138, 0
        %v1438 = vsel %vm364, %v1139, 0
        %v1441 = vsel %vm364, %v1140, 0
        %v1444 = vsel %vm364, %v1141, 0
        %v1447 = vsel %vm364, %v1142, 0
        %v1450 = vsel %vm364, %v1143, 0
        %v1453 = vsel %vm364, %v1144, 0
        %v1456 = vsel %vm364, %v1145, 0
        %v1459 = vsel %vm364, %v1146, 0
        %v1462 = vsel %vm364, %v1147, 0
        %v1465 = vsel %vm364, %v1148, 0
        %v1468 = vsel %vm364, %v1149, 0
        %v1471 = vsel %vm364, %v1150, 0
        %1473 = vmatprep.subr.bf16.mxu0 0
        %1474 = vmatpush1.bf16.msra.mxu0 %v1423
        %1475 = vmatprep.subr.bf16.mxu0 0
        %1476 = vmatpush1.bf16.msra.mxu0 0
        %1477 = vmatprep.subr.bf16.mxu0 0
        %1478 = vmatpush1.bf16.msra.mxu0 0
        %1479 = vmatprep.subr.bf16.mxu0 0
        %1480 = vmatpush1.bf16.msra.mxu0 0
        %1481 = vmatprep.subr.bf16.mxu0 0
        %1482 = vmatpush1.bf16.msra.mxu0 0
        %1483 = vmatprep.subr.bf16.mxu0 0
        %1484 = vmatpush1.bf16.msra.mxu0 0
        %1485 = vmatprep.subr.bf16.mxu0 0
        %1486 = vmatpush1.bf16.msra.mxu0 0
        %1487 = vmatprep.subr.bf16.mxu0 0
        %1488 = vmatpush1.bf16.msra.mxu0 0
        %1489 = vmatprep.subr.bf16.mxu0 0
        %1490 = vmatpush1.bf16.msra.mxu0 0
        %1491 = vmatprep.subr.bf16.mxu0 0
        %1492 = vmatpush1.bf16.msra.mxu0 0
        %1493 = vmatprep.subr.bf16.mxu0 0
        %1494 = vmatpush1.bf16.msra.mxu0 0
        %1495 = vmatprep.subr.bf16.mxu0 0
        %1496 = vmatpush1.bf16.msra.mxu0 0
        %1497 = vmatprep.subr.bf16.mxu0 0
        %1498 = vmatpush1.bf16.msra.mxu0 0
        %1499 = vmatprep.subr.bf16.mxu0 0
        %1500 = vmatpush1.bf16.msra.mxu0 0
        %1501 = vmatprep.subr.bf16.mxu0 0
        %1502 = vmatpush1.bf16.msra.mxu0 0
        %1503 = vmatprep.subr.bf16.mxu0 0
        %1504 = vmatpush1.bf16.msra.mxu0 0
        %1505 = vmatprep.mubr.bf16.mxu0 0
        %1506 = vmatmul.mubr.bf16.gmra.mrb[0].mxu0 %v1426
        %v1507 = vpop.f32.mrb[0].mxu0
        %v1508 = vadd.f32 %v1293, %v1507
        %v1509 = vpop.f32.mrb[0].mxu0
        %v1510 = vpop.f32.mrb[0].mxu0
        %v1511 = vadd.f32 %v1296, %v1510
        %v1512 = vpop.f32.mrb[0].mxu0
        %1513 = vmatprep.mubr.bf16.mxu0 0
        %1514 = vmatmul.mubr.bf16.gmra.mrb[0].mxu0 %v1429
        %v1515 = vpop.f32.mrb[0].mxu0
        %v1516 = vadd.f32 %v1301, %v1515
        %v1517 = vpop.f32.mrb[0].mxu0
        %v1518 = vpop.f32.mrb[0].mxu0
        %v1519 = vadd.f32 %v1304, %v1518
        %v1520 = vpop.f32.mrb[0].mxu0
        %1521 = vmatprep.mubr.bf16.mxu0 0
        %1522 = vmatmul.mubr.bf16.gmra.mrb[0].mxu0 %v1432
        %v1523 = vpop.f32.mrb[0].mxu0
        %v1524 = vadd.f32 %v1309, %v1523
        %v1525 = vpop.f32.mrb[0].mxu0
        %v1526 = vpop.f32.mrb[0].mxu0
        %v1527 = vadd.f32 %v1312, %v1526
        %v1528 = vpop.f32.mrb[0].mxu0
        %1529 = vmatprep.mubr.bf16.mxu0 0
        %1530 = vmatmul.mubr.bf16.gmra.mrb[0].mxu0 %v1435
        %v1531 = vpop.f32.mrb[0].mxu0
        %v1532 = vadd.f32 %v1317, %v1531
        %v1533 = vpop.f32.mrb[0].mxu0
        %v1534 = vpop.f32.mrb[0].mxu0
        %v1535 = vadd.f32 %v1320, %v1534
        %v1536 = vpop.f32.mrb[0].mxu0
        %1537 = vmatprep.mubr.bf16.mxu0 0
        %1538 = vmatmul.mubr.bf16.gmra.mrb[0].mxu0 %v1438
        %v1539 = vpop.f32.mrb[0].mxu0
        %v1540 = vadd.f32 %v1325, %v1539
        %v1541 = vpop.f32.mrb[0].mxu0
        %v1542 = vpop.f32.mrb[0].mxu0
        %v1543 = vadd.f32 %v1328, %v1542
        %v1544 = vpop.f32.mrb[0].mxu0
        %1545 = vmatprep.mubr.bf16.mxu0 0
        %1546 = vmatmul.mubr.bf16.gmra.mrb[0].mxu0 %v1441
        %v1547 = vpop.f32.mrb[0].mxu0
        %v1548 = vadd.f32 %v1333, %v1547
        %v1549 = vpop.f32.mrb[0].mxu0
        %v1550 = vpop.f32.mrb[0].mxu0
        %v1551 = vadd.f32 %v1336, %v1550
        %v1552 = vpop.f32.mrb[0].mxu0
        %1553 = vmatprep.mubr.bf16.mxu0 0
        %1554 = vmatmul.mubr.bf16.gmra.mrb[0].mxu0 %v1444
        %v1555 = vpop.f32.mrb[0].mxu0
        %v1556 = vadd.f32 %v1341, %v1555
        %v1557 = vpop.f32.mrb[0].mxu0
        %v1558 = vpop.f32.mrb[0].mxu0
        %v1559 = vadd.f32 %v1344, %v1558
        %v1560 = vpop.f32.mrb[0].mxu0
        %1561 = vmatprep.mubr.bf16.mxu0 0
        %1562 = vmatmul.mubr.bf16.gmra.mrb[0].mxu0 %v1447
        %v1563 = vpop.f32.mrb[0].mxu0
        %v1564 = vadd.f32 %v1349, %v1563
        %v1565 = vpop.f32.mrb[0].mxu0
        %v1566 = vpop.f32.mrb[0].mxu0
        %v1567 = vadd.f32 %v1352, %v1566
        %v1568 = vpop.f32.mrb[0].mxu0
        %1569 = vmatprep.mubr.bf16.mxu0 0
        %1570 = vmatmul.mubr.bf16.gmra.mrb[0].mxu0 %v1450
        %v1571 = vpop.f32.mrb[0].mxu0
        %v1572 = vadd.f32 %v1357, %v1571
        %v1573 = vpop.f32.mrb[0].mxu0
        %v1574 = vpop.f32.mrb[0].mxu0
        %v1575 = vadd.f32 %v1360, %v1574
        %v1576 = vpop.f32.mrb[0].mxu0
        %1577 = vmatprep.mubr.bf16.mxu0 0
        %1578 = vmatmul.mubr.bf16.gmra.mrb[0].mxu0 %v1453
        %v1579 = vpop.f32.mrb[0].mxu0
        %v1580 = vadd.f32 %v1365, %v1579
        %v1581 = vpop.f32.mrb[0].mxu0
        %v1582 = vpop.f32.mrb[0].mxu0
        %v1583 = vadd.f32 %v1368, %v1582
        %v1584 = vpop.f32.mrb[0].mxu0
        %1585 = vmatprep.mubr.bf16.mxu0 0
        %1586 = vmatmul.mubr.bf16.gmra.mrb[0].mxu0 %v1456
        %v1587 = vpop.f32.mrb[0].mxu0
        %v1588 = vadd.f32 %v1373, %v1587
        %v1589 = vpop.f32.mrb[0].mxu0
        %v1590 = vpop.f32.mrb[0].mxu0
        %v1591 = vadd.f32 %v1376, %v1590
        %v1592 = vpop.f32.mrb[0].mxu0
        %1593 = vmatprep.mubr.bf16.mxu0 0
        %1594 = vmatmul.mubr.bf16.gmra.mrb[0].mxu0 %v1459
        %v1595 = vpop.f32.mrb[0].mxu0
        %v1596 = vadd.f32 %v1381, %v1595
        %v1597 = vpop.f32.mrb[0].mxu0
        %v1598 = vpop.f32.mrb[0].mxu0
        %v1599 = vadd.f32 %v1384, %v1598
        %v1600 = vpop.f32.mrb[0].mxu0
        %1601 = vmatprep.mubr.bf16.mxu0 0
        %1602 = vmatmul.mubr.bf16.gmra.mrb[0].mxu0 %v1462
        %v1603 = vpop.f32.mrb[0].mxu0
        %v1604 = vadd.f32 %v1389, %v1603
        %v1605 = vpop.f32.mrb[0].mxu0
        %v1606 = vpop.f32.mrb[0].mxu0
        %v1607 = vadd.f32 %v1392, %v1606
        %v1608 = vpop.f32.mrb[0].mxu0
        %1609 = vmatprep.mubr.bf16.mxu0 0
        %1610 = vmatmul.mubr.bf16.gmra.mrb[0].mxu0 %v1465
        %v1611 = vpop.f32.mrb[0].mxu0
        %v1612 = vadd.f32 %v1397, %v1611
        %v1613 = vpop.f32.mrb[0].mxu0
        %v1614 = vpop.f32.mrb[0].mxu0
        %v1615 = vadd.f32 %v1400, %v1614
        %v1616 = vpop.f32.mrb[0].mxu0
        %1617 = vmatprep.mubr.bf16.mxu0 0
        %1618 = vmatmul.mubr.bf16.gmra.mrb[0].mxu0 %v1468
        %v1619 = vpop.f32.mrb[0].mxu0
        %v1620 = vadd.f32 %v1405, %v1619
        %v1621 = vpop.f32.mrb[0].mxu0
        %v1622 = vpop.f32.mrb[0].mxu0
        %v1623 = vadd.f32 %v1408, %v1622
        %v1624 = vpop.f32.mrb[0].mxu0
        %1625 = vmatprep.mubr.bf16.mxu0 0
        %1626 = vmatmul.mubr.bf16.gmra.mrb[0].mxu0 %v1471
        %v1627 = vpop.f32.mrb[0].mxu0
        %v1628 = vadd.f32 %v1413, %v1627
        %v1629 = vpop.f32.mrb[0].mxu0
        %v1630 = vpop.f32.mrb[0].mxu0
        %v1631 = vadd.f32 %v1416, %v1630
        %v1632 = vpop.f32.mrb[0].mxu0
        %1633 = vdwg.mxu0
        %v1634 = vld [vmem:[#allocation2 + $0x9] sm:$0xff]
        %v1635 = vld [vmem:[#allocation2 + $0x11] sm:$0xff]
        %v1636 = vld [vmem:[#allocation2 + $0x29] sm:$0xff]
        %v1637 = vld [vmem:[#allocation2 + $0x31] sm:$0xff]
        %v1638 = vld [vmem:[#allocation2 + $0x49] sm:$0xff]
        %v1639 = vld [vmem:[#allocation2 + $0x51] sm:$0xff]
        %v1640 = vld [vmem:[#allocation2 + $0x69] sm:$0xff]
        %v1641 = vld [vmem:[#allocation2 + $0x71] sm:$0xff]
        %v1642 = vld [vmem:[#allocation2 + $0x89] sm:$0xff]
        %v1643 = vld [vmem:[#allocation2 + $0x91] sm:$0xff]
        %v1644 = vld [vmem:[#allocation2 + $0xa9] sm:$0xff]
        %v1645 = vld [vmem:[#allocation2 + $0xb1] sm:$0xff]
        %v1646 = vld [vmem:[#allocation2 + $0xc9] sm:$0xff]
        %v1647 = vld [vmem:[#allocation2 + $0xd1] sm:$0xff]
        %v1648 = vld [vmem:[#allocation2 + $0xe9] sm:$0xff]
        %v1649 = vld [vmem:[#allocation2 + $0xf1] sm:$0xff]
        %v1650 = vld [vmem:[#allocation2 + $0x109] sm:$0xff]
        %v1651 = vld [vmem:[#allocation2 + $0x111] sm:$0xff]
        %v1652 = vld [vmem:[#allocation2 + $0x129] sm:$0xff]
        %v1653 = vld [vmem:[#allocation2 + $0x131] sm:$0xff]
        %v1654 = vld [vmem:[#allocation2 + $0x149] sm:$0xff]
        %v1655 = vld [vmem:[#allocation2 + $0x151] sm:$0xff]
        %v1656 = vld [vmem:[#allocation2 + $0x169] sm:$0xff]
        %v1657 = vld [vmem:[#allocation2 + $0x171] sm:$0xff]
        %v1658 = vld [vmem:[#allocation2 + $0x189] sm:$0xff]
        %v1659 = vld [vmem:[#allocation2 + $0x191] sm:$0xff]
        %v1660 = vld [vmem:[#allocation2 + $0x1a9] sm:$0xff]
        %v1661 = vld [vmem:[#allocation2 + $0x1b1] sm:$0xff]
        %v1662 = vld [vmem:[#allocation2 + $0x1c9] sm:$0xff]
        %v1663 = vld [vmem:[#allocation2 + $0x1d1] sm:$0xff]
        %v1664 = vld [vmem:[#allocation2 + $0x1e9] sm:$0xff]
        %v1665 = vld [vmem:[#allocation2 + $0x1f1] sm:$0xff]
        %v1666 = vpack.c.bf16 %v1635, %v1634
        %v1667 = vpack.c.bf16 %v1637, %v1636
        %v1668 = vpack.c.bf16 %v1639, %v1638
        %v1669 = vpack.c.bf16 %v1641, %v1640
        %v1670 = vpack.c.bf16 %v1643, %v1642
        %v1671 = vpack.c.bf16 %v1645, %v1644
        %v1672 = vpack.c.bf16 %v1647, %v1646
        %v1673 = vpack.c.bf16 %v1649, %v1648
        %v1674 = vpack.c.bf16 %v1651, %v1650
        %v1675 = vpack.c.bf16 %v1653, %v1652
        %v1676 = vpack.c.bf16 %v1655, %v1654
        %v1677 = vpack.c.bf16 %v1657, %v1656
        %v1678 = vpack.c.bf16 %v1659, %v1658
        %v1679 = vpack.c.bf16 %v1661, %v1660
        %v1680 = vpack.c.bf16 %v1663, %v1662
        %v1681 = vpack.c.bf16 %v1665, %v1664
        %s1682 = scalar_lea.vmem %s3, 16
        %v1683 = vld [vmem:[%s1682] sm:$0xf]
        %v1684 = vld [vmem:[%s1682 + $0x4] sm:$0xf]
        %v1687 = vunpack.c.l.b16 %v1683
        %v1688 = vunpack.c.l.b16 %v1684
        %v1689 = vpack.c.b16 %v1688, %v1687
        %v1692 = vsel %vm364, %v1666, 0
        %v1695 = vsel %vm364, %v1667, 0
        %v1698 = vsel %vm364, %v1668, 0
        %v1701 = vsel %vm364, %v1669, 0
        %v1704 = vsel %vm364, %v1670, 0
        %v1707 = vsel %vm364, %v1671, 0
        %v1710 = vsel %vm364, %v1672, 0
        %v1713 = vsel %vm364, %v1673, 0
        %v1716 = vsel %vm364, %v1674, 0
        %v1719 = vsel %vm364, %v1675, 0
        %v1722 = vsel %vm364, %v1676, 0
        %v1725 = vsel %vm364, %v1677, 0
        %v1728 = vsel %vm364, %v1678, 0
        %v1731 = vsel %vm364, %v1679, 0
        %v1734 = vsel %vm364, %v1680, 0
        %v1737 = vsel %vm364, %v1681, 0
        %1739 = vmatprep.subr.bf16.mxu0 0
        %1740 = vmatpush1.bf16.msra.mxu0 %v1689
        %1741 = vmatprep.subr.bf16.mxu0 0
        %1742 = vmatpush1.bf16.msra.mxu0 0
        %1743 = vmatprep.subr.bf16.mxu0 0
        %1744 = vmatpush1.bf16.msra.mxu0 0
        %1745 = vmatprep.subr.bf16.mxu0 0
        %1746 = vmatpush1.bf16.msra.mxu0 0
        %1747 = vmatprep.subr.bf16.mxu0 0
        %1748 = vmatpush1.bf16.msra.mxu0 0
        %1749 = vmatprep.subr.bf16.mxu0 0
        %1750 = vmatpush1.bf16.msra.mxu0 0
        %1751 = vmatprep.subr.bf16.mxu0 0
        %1752 = vmatpush1.bf16.msra.mxu0 0
        %1753 = vmatprep.subr.bf16.mxu0 0
        %1754 = vmatpush1.bf16.msra.mxu0 0
        %1755 = vmatprep.subr.bf16.mxu0 0
        %1756 = vmatpush1.bf16.msra.mxu0 0
        %1757 = vmatprep.subr.bf16.mxu0 0
        %1758 = vmatpush1.bf16.msra.mxu0 0
        %1759 = vmatprep.subr.bf16.mxu0 0
        %1760 = vmatpush1.bf16.msra.mxu0 0
        %1761 = vmatprep.subr.bf16.mxu0 0
        %1762 = vmatpush1.bf16.msra.mxu0 0
        %1763 = vmatprep.subr.bf16.mxu0 0
        %1764 = vmatpush1.bf16.msra.mxu0 0
        %1765 = vmatprep.subr.bf16.mxu0 0
        %1766 = vmatpush1.bf16.msra.mxu0 0
        %1767 = vmatprep.subr.bf16.mxu0 0
        %1768 = vmatpush1.bf16.msra.mxu0 0
        %1769 = vmatprep.subr.bf16.mxu0 0
        %1770 = vmatpush1.bf16.msra.mxu0 0
        %1771 = vmatprep.mubr.bf16.mxu0 0
        %1772 = vmatmul.mubr.bf16.gmra.mrb[0].mxu0 %v1692
        %v1773 = vpop.f32.mrb[0].mxu0
        %v1774 = vadd.f32 0.0, %v1773
        %v1775 = vpop.f32.mrb[0].mxu0
        %v1776 = vpop.f32.mrb[0].mxu0
        %v1777 = vadd.f32 0.0, %v1776
        %v1778 = vpop.f32.mrb[0].mxu0
        %1779 = vmatprep.mubr.bf16.mxu0 0
        %1780 = vmatmul.mubr.bf16.gmra.mrb[0].mxu0 %v1695
        %v1781 = vpop.f32.mrb[0].mxu0
        %v1782 = vadd.f32 0.0, %v1781
        %v1783 = vpop.f32.mrb[0].mxu0
        %v1784 = vpop.f32.mrb[0].mxu0
        %v1785 = vadd.f32 0.0, %v1784
        %v1786 = vpop.f32.mrb[0].mxu0
        %1787 = vmatprep.mubr.bf16.mxu0 0
        %1788 = vmatmul.mubr.bf16.gmra.mrb[0].mxu0 %v1698
        %v1789 = vpop.f32.mrb[0].mxu0
        %v1790 = vadd.f32 0.0, %v1789
        %v1791 = vpop.f32.mrb[0].mxu0
        %v1792 = vpop.f32.mrb[0].mxu0
        %v1793 = vadd.f32 0.0, %v1792
        %v1794 = vpop.f32.mrb[0].mxu0
        %1795 = vmatprep.mubr.bf16.mxu0 0
        %1796 = vmatmul.mubr.bf16.gmra.mrb[0].mxu0 %v1701
        %v1797 = vpop.f32.mrb[0].mxu0
        %v1798 = vadd.f32 0.0, %v1797
        %v1799 = vpop.f32.mrb[0].mxu0
        %v1800 = vpop.f32.mrb[0].mxu0
        %v1801 = vadd.f32 0.0, %v1800
        %v1802 = vpop.f32.mrb[0].mxu0
        %1803 = vmatprep.mubr.bf16.mxu0 0
        %1804 = vmatmul.mubr.bf16.gmra.mrb[0].mxu0 %v1704
        %v1805 = vpop.f32.mrb[0].mxu0
        %v1806 = vadd.f32 0.0, %v1805
        %v1807 = vpop.f32.mrb[0].mxu0
        %v1808 = vpop.f32.mrb[0].mxu0
        %v1809 = vadd.f32 0.0, %v1808
        %v1810 = vpop.f32.mrb[0].mxu0
        %1811 = vmatprep.mubr.bf16.mxu0 0
        %1812 = vmatmul.mubr.bf16.gmra.mrb[0].mxu0 %v1707
        %v1813 = vpop.f32.mrb[0].mxu0
        %v1814 = vadd.f32 0.0, %v1813
        %v1815 = vpop.f32.mrb[0].mxu0
        %v1816 = vpop.f32.mrb[0].mxu0
        %v1817 = vadd.f32 0.0, %v1816
        %v1818 = vpop.f32.mrb[0].mxu0
        %1819 = vmatprep.mubr.bf16.mxu0 0
        %1820 = vmatmul.mubr.bf16.gmra.mrb[0].mxu0 %v1710
        %v1821 = vpop.f32.mrb[0].mxu0
        %v1822 = vadd.f32 0.0, %v1821
        %v1823 = vpop.f32.mrb[0].mxu0
        %v1824 = vpop.f32.mrb[0].mxu0
        %v1825 = vadd.f32 0.0, %v1824
        %v1826 = vpop.f32.mrb[0].mxu0
        %1827 = vmatprep.mubr.bf16.mxu0 0
        %1828 = vmatmul.mubr.bf16.gmra.mrb[0].mxu0 %v1713
        %v1829 = vpop.f32.mrb[0].mxu0
        %v1830 = vadd.f32 0.0, %v1829
        %v1831 = vpop.f32.mrb[0].mxu0
        %v1832 = vpop.f32.mrb[0].mxu0
        %v1833 = vadd.f32 0.0, %v1832
        %v1834 = vpop.f32.mrb[0].mxu0
        %1835 = vmatprep.mubr.bf16.mxu0 0
        %1836 = vmatmul.mubr.bf16.gmra.mrb[0].mxu0 %v1716
        %v1837 = vpop.f32.mrb[0].mxu0
        %v1838 = vadd.f32 0.0, %v1837
        %v1839 = vpop.f32.mrb[0].mxu0
        %v1840 = vpop.f32.mrb[0].mxu0
        %v1841 = vadd.f32 0.0, %v1840
        %v1842 = vpop.f32.mrb[0].mxu0
        %1843 = vmatprep.mubr.bf16.mxu0 0
        %1844 = vmatmul.mubr.bf16.gmra.mrb[0].mxu0 %v1719
        %v1845 = vpop.f32.mrb[0].mxu0
        %v1846 = vadd.f32 0.0, %v1845
        %v1847 = vpop.f32.mrb[0].mxu0
        %v1848 = vpop.f32.mrb[0].mxu0
        %v1849 = vadd.f32 0.0, %v1848
        %v1850 = vpop.f32.mrb[0].mxu0
        %1851 = vmatprep.mubr.bf16.mxu0 0
        %1852 = vmatmul.mubr.bf16.gmra.mrb[0].mxu0 %v1722
        %v1853 = vpop.f32.mrb[0].mxu0
        %v1854 = vadd.f32 0.0, %v1853
        %v1855 = vpop.f32.mrb[0].mxu0
        %v1856 = vpop.f32.mrb[0].mxu0
        %v1857 = vadd.f32 0.0, %v1856
        %v1858 = vpop.f32.mrb[0].mxu0
        %1859 = vmatprep.mubr.bf16.mxu0 0
        %1860 = vmatmul.mubr.bf16.gmra.mrb[0].mxu0 %v1725
        %v1861 = vpop.f32.mrb[0].mxu0
        %v1862 = vadd.f32 0.0, %v1861
        %v1863 = vpop.f32.mrb[0].mxu0
        %v1864 = vpop.f32.mrb[0].mxu0
        %v1865 = vadd.f32 0.0, %v1864
        %v1866 = vpop.f32.mrb[0].mxu0
        %1867 = vmatprep.mubr.bf16.mxu0 0
        %1868 = vmatmul.mubr.bf16.gmra.mrb[0].mxu0 %v1728
        %v1869 = vpop.f32.mrb[0].mxu0
        %v1870 = vadd.f32 0.0, %v1869
        %v1871 = vpop.f32.mrb[0].mxu0
        %v1872 = vpop.f32.mrb[0].mxu0
        %v1873 = vadd.f32 0.0, %v1872
        %v1874 = vpop.f32.mrb[0].mxu0
        %1875 = vmatprep.mubr.bf16.mxu0 0
        %1876 = vmatmul.mubr.bf16.gmra.mrb[0].mxu0 %v1731
        %v1877 = vpop.f32.mrb[0].mxu0
        %v1878 = vadd.f32 0.0, %v1877
        %v1879 = vpop.f32.mrb[0].mxu0
        %v1880 = vpop.f32.mrb[0].mxu0
        %v1881 = vadd.f32 0.0, %v1880
        %v1882 = vpop.f32.mrb[0].mxu0
        %1883 = vmatprep.mubr.bf16.mxu0 0
        %1884 = vmatmul.mubr.bf16.gmra.mrb[0].mxu0 %v1734
        %v1885 = vpop.f32.mrb[0].mxu0
        %v1886 = vadd.f32 0.0, %v1885
        %v1887 = vpop.f32.mrb[0].mxu0
        %v1888 = vpop.f32.mrb[0].mxu0
        %v1889 = vadd.f32 0.0, %v1888
        %v1890 = vpop.f32.mrb[0].mxu0
        %1891 = vmatprep.mubr.bf16.mxu0 0
        %1892 = vmatmul.mubr.bf16.gmra.mrb[0].mxu0 %v1737
        %v1893 = vpop.f32.mrb[0].mxu0
        %v1894 = vadd.f32 0.0, %v1893
        %v1895 = vpop.f32.mrb[0].mxu0
        %v1896 = vpop.f32.mrb[0].mxu0
        %v1897 = vadd.f32 0.0, %v1896
        %v1898 = vpop.f32.mrb[0].mxu0
        %1899 = vdwg.mxu0
        %v1900 = vadd.f32 %v1508, %v1774
        %v1901 = vadd.f32 %v1511, %v1777
        %v1902 = vadd.f32 %v1516, %v1782
        %v1903 = vadd.f32 %v1519, %v1785
        %v1904 = vadd.f32 %v1524, %v1790
        %v1905 = vadd.f32 %v1527, %v1793
        %v1906 = vadd.f32 %v1532, %v1798
        %v1907 = vadd.f32 %v1535, %v1801
        %v1908 = vadd.f32 %v1540, %v1806
        %v1909 = vadd.f32 %v1543, %v1809
        %v1910 = vadd.f32 %v1548, %v1814
        %v1911 = vadd.f32 %v1551, %v1817
        %v1912 = vadd.f32 %v1556, %v1822
        %v1913 = vadd.f32 %v1559, %v1825
        %v1914 = vadd.f32 %v1564, %v1830
        %v1915 = vadd.f32 %v1567, %v1833
        %v1916 = vadd.f32 %v1572, %v1838
        %v1917 = vadd.f32 %v1575, %v1841
        %v1918 = vadd.f32 %v1580, %v1846
        %v1919 = vadd.f32 %v1583, %v1849
        %v1920 = vadd.f32 %v1588, %v1854
        %v1921 = vadd.f32 %v1591, %v1857
        %v1922 = vadd.f32 %v1596, %v1862
        %v1923 = vadd.f32 %v1599, %v1865
        %v1924 = vadd.f32 %v1604, %v1870
        %v1925 = vadd.f32 %v1607, %v1873
        %v1926 = vadd.f32 %v1612, %v1878
        %v1927 = vadd.f32 %v1615, %v1881
        %v1928 = vadd.f32 %v1620, %v1886
        %v1929 = vadd.f32 %v1623, %v1889
        %v1930 = vadd.f32 %v1628, %v1894
        %v1931 = vadd.f32 %v1631, %v1897
        %v1932 = vld [vmem:[%s1070 + $0x7] sm:$0xff]
        %v1933 = vld [vmem:[%s1070 + $0xf] sm:$0xff]
        %v1934 = vld [vmem:[%s1070 + $0x27] sm:$0xff]
        %v1935 = vld [vmem:[%s1070 + $0x2f] sm:$0xff]
        %v1936 = vld [vmem:[%s1070 + $0x47] sm:$0xff]
        %v1937 = vld [vmem:[%s1070 + $0x4f] sm:$0xff]
        %v1938 = vld [vmem:[%s1070 + $0x67] sm:$0xff]
        %v1939 = vld [vmem:[%s1070 + $0x6f] sm:$0xff]
        %v1940 = vld [vmem:[%s1070 + $0x87] sm:$0xff]
        %v1941 = vld [vmem:[%s1070 + $0x8f] sm:$0xff]
        %v1942 = vld [vmem:[%s1070 + $0xa7] sm:$0xff]
        %v1943 = vld [vmem:[%s1070 + $0xaf] sm:$0xff]
        %v1944 = vld [vmem:[%s1070 + $0xc7] sm:$0xff]
        %v1945 = vld [vmem:[%s1070 + $0xcf] sm:$0xff]
        %v1946 = vld [vmem:[%s1070 + $0xe7] sm:$0xff]
        %v1947 = vld [vmem:[%s1070 + $0xef] sm:$0xff]
        %v1948 = vld [vmem:[%s1070 + $0x107] sm:$0xff]
        %v1949 = vld [vmem:[%s1070 + $0x10f] sm:$0xff]
        %v1950 = vld [vmem:[%s1070 + $0x127] sm:$0xff]
        %v1951 = vld [vmem:[%s1070 + $0x12f] sm:$0xff]
        %v1952 = vld [vmem:[%s1070 + $0x147] sm:$0xff]
        %v1953 = vld [vmem:[%s1070 + $0x14f] sm:$0xff]
        %v1954 = vld [vmem:[%s1070 + $0x167] sm:$0xff]
        %v1955 = vld [vmem:[%s1070 + $0x16f] sm:$0xff]
        %v1956 = vld [vmem:[%s1070 + $0x187] sm:$0xff]
        %v1957 = vld [vmem:[%s1070 + $0x18f] sm:$0xff]
        %v1958 = vld [vmem:[%s1070 + $0x1a7] sm:$0xff]
        %v1959 = vld [vmem:[%s1070 + $0x1af] sm:$0xff]
        %v1960 = vld [vmem:[%s1070 + $0x1c7] sm:$0xff]
        %v1961 = vld [vmem:[%s1070 + $0x1cf] sm:$0xff]
        %v1962 = vld [vmem:[%s1070 + $0x1e7] sm:$0xff]
        %v1963 = vld [vmem:[%s1070 + $0x1ef] sm:$0xff]
        %v1964 = vpack.c.bf16 %v1933, %v1932
        %v1965 = vpack.c.bf16 %v1935, %v1934
        %v1966 = vpack.c.bf16 %v1937, %v1936
        %v1967 = vpack.c.bf16 %v1939, %v1938
        %v1968 = vpack.c.bf16 %v1941, %v1940
        %v1969 = vpack.c.bf16 %v1943, %v1942
        %v1970 = vpack.c.bf16 %v1945, %v1944
        %v1971 = vpack.c.bf16 %v1947, %v1946
        %v1972 = vpack.c.bf16 %v1949, %v1948
        %v1973 = vpack.c.bf16 %v1951, %v1950
        %v1974 = vpack.c.bf16 %v1953, %v1952
        %v1975 = vpack.c.bf16 %v1955, %v1954
        %v1976 = vpack.c.bf16 %v1957, %v1956
        %v1977 = vpack.c.bf16 %v1959, %v1958
        %v1978 = vpack.c.bf16 %v1961, %v1960
        %v1979 = vpack.c.bf16 %v1963, %v1962
        %s1980 = scalar_lea.vmem %s3, 24
        %v1981 = vld [vmem:[%s1980] sm:$0xf]
        %v1982 = vld [vmem:[%s1980 + $0x4] sm:$0xf]
        %v1985 = vunpack.c.l.b16 %v1981
        %v1986 = vunpack.c.l.b16 %v1982
        %v1987 = vpack.c.b16 %v1986, %v1985
        %v1990 = vsel %vm364, %v1964, 0
        %v1993 = vsel %vm364, %v1965, 0
        %v1996 = vsel %vm364, %v1966, 0
        %v1999 = vsel %vm364, %v1967, 0
        %v2002 = vsel %vm364, %v1968, 0
        %v2005 = vsel %vm364, %v1969, 0
        %v2008 = vsel %vm364, %v1970, 0
        %v2011 = vsel %vm364, %v1971, 0
        %v2014 = vsel %vm364, %v1972, 0
        %v2017 = vsel %vm364, %v1973, 0
        %v2020 = vsel %vm364, %v1974, 0
        %v2023 = vsel %vm364, %v1975, 0
        %v2026 = vsel %vm364, %v1976, 0
        %v2029 = vsel %vm364, %v1977, 0
        %v2032 = vsel %vm364, %v1978, 0
        %v2035 = vsel %vm364, %v1979, 0
        %2037 = vmatprep.subr.bf16.mxu0 0
        %2038 = vmatpush1.bf16.msra.mxu0 %v1987
        %2039 = vmatprep.subr.bf16.mxu0 0
        %2040 = vmatpush1.bf16.msra.mxu0 0
        %2041 = vmatprep.subr.bf16.mxu0 0
        %2042 = vmatpush1.bf16.msra.mxu0 0
        %2043 = vmatprep.subr.bf16.mxu0 0
        %2044 = vmatpush1.bf16.msra.mxu0 0
        %2045 = vmatprep.subr.bf16.mxu0 0
        %2046 = vmatpush1.bf16.msra.mxu0 0
        %2047 = vmatprep.subr.bf16.mxu0 0
        %2048 = vmatpush1.bf16.msra.mxu0 0
        %2049 = vmatprep.subr.bf16.mxu0 0
        %2050 = vmatpush1.bf16.msra.mxu0 0
        %2051 = vmatprep.subr.bf16.mxu0 0
        %2052 = vmatpush1.bf16.msra.mxu0 0
        %2053 = vmatprep.subr.bf16.mxu0 0
        %2054 = vmatpush1.bf16.msra.mxu0 0
        %2055 = vmatprep.subr.bf16.mxu0 0
        %2056 = vmatpush1.bf16.msra.mxu0 0
        %2057 = vmatprep.subr.bf16.mxu0 0
        %2058 = vmatpush1.bf16.msra.mxu0 0
        %2059 = vmatprep.subr.bf16.mxu0 0
        %2060 = vmatpush1.bf16.msra.mxu0 0
        %2061 = vmatprep.subr.bf16.mxu0 0
        %2062 = vmatpush1.bf16.msra.mxu0 0
        %2063 = vmatprep.subr.bf16.mxu0 0
        %2064 = vmatpush1.bf16.msra.mxu0 0
        %2065 = vmatprep.subr.bf16.mxu0 0
        %2066 = vmatpush1.bf16.msra.mxu0 0
        %2067 = vmatprep.subr.bf16.mxu0 0
        %2068 = vmatpush1.bf16.msra.mxu0 0
        %2069 = vmatprep.mubr.bf16.mxu0 0
        %2070 = vmatmul.mubr.bf16.gmra.mrb[0].mxu0 %v1990
        %v2071 = vpop.f32.mrb[0].mxu0
        %v2072 = vadd.f32 0.0, %v2071
        %v2073 = vpop.f32.mrb[0].mxu0
        %v2074 = vpop.f32.mrb[0].mxu0
        %v2075 = vadd.f32 0.0, %v2074
        %v2076 = vpop.f32.mrb[0].mxu0
        %2077 = vmatprep.mubr.bf16.mxu0 0
        %2078 = vmatmul.mubr.bf16.gmra.mrb[0].mxu0 %v1993
        %v2079 = vpop.f32.mrb[0].mxu0
        %v2080 = vadd.f32 0.0, %v2079
        %v2081 = vpop.f32.mrb[0].mxu0
        %v2082 = vpop.f32.mrb[0].mxu0
        %v2083 = vadd.f32 0.0, %v2082
        %v2084 = vpop.f32.mrb[0].mxu0
        %2085 = vmatprep.mubr.bf16.mxu0 0
        %2086 = vmatmul.mubr.bf16.gmra.mrb[0].mxu0 %v1996
        %v2087 = vpop.f32.mrb[0].mxu0
        %v2088 = vadd.f32 0.0, %v2087
        %v2089 = vpop.f32.mrb[0].mxu0
        %v2090 = vpop.f32.mrb[0].mxu0
        %v2091 = vadd.f32 0.0, %v2090
        %v2092 = vpop.f32.mrb[0].mxu0
        %2093 = vmatprep.mubr.bf16.mxu0 0
        %2094 = vmatmul.mubr.bf16.gmra.mrb[0].mxu0 %v1999
        %v2095 = vpop.f32.mrb[0].mxu0
        %v2096 = vadd.f32 0.0, %v2095
        %v2097 = vpop.f32.mrb[0].mxu0
        %v2098 = vpop.f32.mrb[0].mxu0
        %v2099 = vadd.f32 0.0, %v2098
        %v2100 = vpop.f32.mrb[0].mxu0
        %2101 = vmatprep.mubr.bf16.mxu0 0
        %2102 = vmatmul.mubr.bf16.gmra.mrb[0].mxu0 %v2002
        %v2103 = vpop.f32.mrb[0].mxu0
        %v2104 = vadd.f32 0.0, %v2103
        %v2105 = vpop.f32.mrb[0].mxu0
        %v2106 = vpop.f32.mrb[0].mxu0
        %v2107 = vadd.f32 0.0, %v2106
        %v2108 = vpop.f32.mrb[0].mxu0
        %2109 = vmatprep.mubr.bf16.mxu0 0
        %2110 = vmatmul.mubr.bf16.gmra.mrb[0].mxu0 %v2005
        %v2111 = vpop.f32.mrb[0].mxu0
        %v2112 = vadd.f32 0.0, %v2111
        %v2113 = vpop.f32.mrb[0].mxu0
        %v2114 = vpop.f32.mrb[0].mxu0
        %v2115 = vadd.f32 0.0, %v2114
        %v2116 = vpop.f32.mrb[0].mxu0
        %2117 = vmatprep.mubr.bf16.mxu0 0
        %2118 = vmatmul.mubr.bf16.gmra.mrb[0].mxu0 %v2008
        %v2119 = vpop.f32.mrb[0].mxu0
        %v2120 = vadd.f32 0.0, %v2119
        %v2121 = vpop.f32.mrb[0].mxu0
        %v2122 = vpop.f32.mrb[0].mxu0
        %v2123 = vadd.f32 0.0, %v2122
        %v2124 = vpop.f32.mrb[0].mxu0
        %2125 = vmatprep.mubr.bf16.mxu0 0
        %2126 = vmatmul.mubr.bf16.gmra.mrb[0].mxu0 %v2011
        %v2127 = vpop.f32.mrb[0].mxu0
        %v2128 = vadd.f32 0.0, %v2127
        %v2129 = vpop.f32.mrb[0].mxu0
        %v2130 = vpop.f32.mrb[0].mxu0
        %v2131 = vadd.f32 0.0, %v2130
        %v2132 = vpop.f32.mrb[0].mxu0
        %2133 = vmatprep.mubr.bf16.mxu0 0
        %2134 = vmatmul.mubr.bf16.gmra.mrb[0].mxu0 %v2014
        %v2135 = vpop.f32.mrb[0].mxu0
        %v2136 = vadd.f32 0.0, %v2135
        %v2137 = vpop.f32.mrb[0].mxu0
        %v2138 = vpop.f32.mrb[0].mxu0
        %v2139 = vadd.f32 0.0, %v2138
        %v2140 = vpop.f32.mrb[0].mxu0
        %2141 = vmatprep.mubr.bf16.mxu0 0
        %2142 = vmatmul.mubr.bf16.gmra.mrb[0].mxu0 %v2017
        %v2143 = vpop.f32.mrb[0].mxu0
        %v2144 = vadd.f32 0.0, %v2143
        %v2145 = vpop.f32.mrb[0].mxu0
        %v2146 = vpop.f32.mrb[0].mxu0
        %v2147 = vadd.f32 0.0, %v2146
        %v2148 = vpop.f32.mrb[0].mxu0
        %2149 = vmatprep.mubr.bf16.mxu0 0
        %2150 = vmatmul.mubr.bf16.gmra.mrb[0].mxu0 %v2020
        %v2151 = vpop.f32.mrb[0].mxu0
        %v2152 = vadd.f32 0.0, %v2151
        %v2153 = vpop.f32.mrb[0].mxu0
        %v2154 = vpop.f32.mrb[0].mxu0
        %v2155 = vadd.f32 0.0, %v2154
        %v2156 = vpop.f32.mrb[0].mxu0
        %2157 = vmatprep.mubr.bf16.mxu0 0
        %2158 = vmatmul.mubr.bf16.gmra.mrb[0].mxu0 %v2023
        %v2159 = vpop.f32.mrb[0].mxu0
        %v2160 = vadd.f32 0.0, %v2159
        %v2161 = vpop.f32.mrb[0].mxu0
        %v2162 = vpop.f32.mrb[0].mxu0
        %v2163 = vadd.f32 0.0, %v2162
        %v2164 = vpop.f32.mrb[0].mxu0
        %2165 = vmatprep.mubr.bf16.mxu0 0
        %2166 = vmatmul.mubr.bf16.gmra.mrb[0].mxu0 %v2026
        %v2167 = vpop.f32.mrb[0].mxu0
        %v2168 = vadd.f32 0.0, %v2167
        %v2169 = vpop.f32.mrb[0].mxu0
        %v2170 = vpop.f32.mrb[0].mxu0
        %v2171 = vadd.f32 0.0, %v2170
        %v2172 = vpop.f32.mrb[0].mxu0
        %2173 = vmatprep.mubr.bf16.mxu0 0
        %2174 = vmatmul.mubr.bf16.gmra.mrb[0].mxu0 %v2029
        %v2175 = vpop.f32.mrb[0].mxu0
        %v2176 = vadd.f32 0.0, %v2175
        %v2177 = vpop.f32.mrb[0].mxu0
        %v2178 = vpop.f32.mrb[0].mxu0
        %v2179 = vadd.f32 0.0, %v2178
        %v2180 = vpop.f32.mrb[0].mxu0
        %2181 = vmatprep.mubr.bf16.mxu0 0
        %2182 = vmatmul.mubr.bf16.gmra.mrb[0].mxu0 %v2032
        %v2183 = vpop.f32.mrb[0].mxu0
        %v2184 = vadd.f32 0.0, %v2183
        %v2185 = vpop.f32.mrb[0].mxu0
        %v2186 = vpop.f32.mrb[0].mxu0
        %v2187 = vadd.f32 0.0, %v2186
        %v2188 = vpop.f32.mrb[0].mxu0
        %2189 = vmatprep.mubr.bf16.mxu0 0
        %2190 = vmatmul.mubr.bf16.gmra.mrb[0].mxu0 %v2035
        %v2191 = vpop.f32.mrb[0].mxu0
        %v2192 = vadd.f32 0.0, %v2191
        %v2193 = vpop.f32.mrb[0].mxu0
        %v2194 = vpop.f32.mrb[0].mxu0
        %v2195 = vadd.f32 0.0, %v2194
        %v2196 = vpop.f32.mrb[0].mxu0
        %2197 = vdwg.mxu0
        %v2198 = vadd.f32 %v1900, %v2072
        %v2199 = vadd.f32 %v1901, %v2075
        %v2200 = vadd.f32 %v1902, %v2080
        %v2201 = vadd.f32 %v1903, %v2083
        %v2202 = vadd.f32 %v1904, %v2088
        %v2203 = vadd.f32 %v1905, %v2091
        %v2204 = vadd.f32 %v1906, %v2096
        %v2205 = vadd.f32 %v1907, %v2099
        %v2206 = vadd.f32 %v1908, %v2104
        %v2207 = vadd.f32 %v1909, %v2107
        %v2208 = vadd.f32 %v1910, %v2112
        %v2209 = vadd.f32 %v1911, %v2115
        %v2210 = vadd.f32 %v1912, %v2120
        %v2211 = vadd.f32 %v1913, %v2123
        %v2212 = vadd.f32 %v1914, %v2128
        %v2213 = vadd.f32 %v1915, %v2131
        %v2214 = vadd.f32 %v1916, %v2136
        %v2215 = vadd.f32 %v1917, %v2139
        %v2216 = vadd.f32 %v1918, %v2144
        %v2217 = vadd.f32 %v1919, %v2147
        %v2218 = vadd.f32 %v1920, %v2152
        %v2219 = vadd.f32 %v1921, %v2155
        %v2220 = vadd.f32 %v1922, %v2160
        %v2221 = vadd.f32 %v1923, %v2163
        %v2222 = vadd.f32 %v1924, %v2168
        %v2223 = vadd.f32 %v1925, %v2171
        %v2224 = vadd.f32 %v1926, %v2176
        %v2225 = vadd.f32 %v1927, %v2179
        %v2226 = vadd.f32 %v1928, %v2184
        %v2227 = vadd.f32 %v1929, %v2187
        %v2228 = vadd.f32 %v1930, %v2192
        %v2229 = vadd.f32 %v1931, %v2195
        %v2230 = vld [vmem:[%s1070 + $0x8] sm:$0xff]
        %v2231 = vld [vmem:[%s1070 + $0x10] sm:$0xff]
        %v2232 = vld [vmem:[%s1070 + $0x28] sm:$0xff]
        %v2233 = vld [vmem:[%s1070 + $0x30] sm:$0xff]
        %v2234 = vld [vmem:[%s1070 + $0x48] sm:$0xff]
        %v2235 = vld [vmem:[%s1070 + $0x50] sm:$0xff]
        %v2236 = vld [vmem:[%s1070 + $0x68] sm:$0xff]
        %v2237 = vld [vmem:[%s1070 + $0x70] sm:$0xff]
        %v2238 = vld [vmem:[%s1070 + $0x88] sm:$0xff]
        %v2239 = vld [vmem:[%s1070 + $0x90] sm:$0xff]
        %v2240 = vld [vmem:[%s1070 + $0xa8] sm:$0xff]
        %v2241 = vld [vmem:[%s1070 + $0xb0] sm:$0xff]
        %v2242 = vld [vmem:[%s1070 + $0xc8] sm:$0xff]
        %v2243 = vld [vmem:[%s1070 + $0xd0] sm:$0xff]
        %v2244 = vld [vmem:[%s1070 + $0xe8] sm:$0xff]
        %v2245 = vld [vmem:[%s1070 + $0xf0] sm:$0xff]
        %v2246 = vld [vmem:[%s1070 + $0x108] sm:$0xff]
        %v2247 = vld [vmem:[%s1070 + $0x110] sm:$0xff]
        %v2248 = vld [vmem:[%s1070 + $0x128] sm:$0xff]
        %v2249 = vld [vmem:[%s1070 + $0x130] sm:$0xff]
        %v2250 = vld [vmem:[%s1070 + $0x148] sm:$0xff]
        %v2251 = vld [vmem:[%s1070 + $0x150] sm:$0xff]
        %v2252 = vld [vmem:[%s1070 + $0x168] sm:$0xff]
        %v2253 = vld [vmem:[%s1070 + $0x170] sm:$0xff]
        %v2254 = vld [vmem:[%s1070 + $0x188] sm:$0xff]
        %v2255 = vld [vmem:[%s1070 + $0x190] sm:$0xff]
        %v2256 = vld [vmem:[%s1070 + $0x1a8] sm:$0xff]
        %v2257 = vld [vmem:[%s1070 + $0x1b0] sm:$0xff]
        %v2258 = vld [vmem:[%s1070 + $0x1c8] sm:$0xff]
        %v2259 = vld [vmem:[%s1070 + $0x1d0] sm:$0xff]
        %v2260 = vld [vmem:[%s1070 + $0x1e8] sm:$0xff]
        %v2261 = vld [vmem:[%s1070 + $0x1f0] sm:$0xff]
        %v2262 = vpack.c.bf16 %v2231, %v2230
        %v2263 = vpack.c.bf16 %v2233, %v2232
        %v2264 = vpack.c.bf16 %v2235, %v2234
        %v2265 = vpack.c.bf16 %v2237, %v2236
        %v2266 = vpack.c.bf16 %v2239, %v2238
        %v2267 = vpack.c.bf16 %v2241, %v2240
        %v2268 = vpack.c.bf16 %v2243, %v2242
        %v2269 = vpack.c.bf16 %v2245, %v2244
        %v2270 = vpack.c.bf16 %v2247, %v2246
        %v2271 = vpack.c.bf16 %v2249, %v2248
        %v2272 = vpack.c.bf16 %v2251, %v2250
        %v2273 = vpack.c.bf16 %v2253, %v2252
        %v2274 = vpack.c.bf16 %v2255, %v2254
        %v2275 = vpack.c.bf16 %v2257, %v2256
        %v2276 = vpack.c.bf16 %v2259, %v2258
        %v2277 = vpack.c.bf16 %v2261, %v2260
        %s2278 = scalar_lea.vmem %s3, 32
        %v2279 = vld [vmem:[%s2278] sm:$0xf]
        %v2280 = vld [vmem:[%s2278 + $0x4] sm:$0xf]
        %v2283 = vunpack.c.l.b16 %v2279
        %v2284 = vunpack.c.l.b16 %v2280
        %v2285 = vpack.c.b16 %v2284, %v2283
        %v2288 = vsel %vm364, %v2262, 0
        %v2291 = vsel %vm364, %v2263, 0
        %v2294 = vsel %vm364, %v2264, 0
        %v2297 = vsel %vm364, %v2265, 0
        %v2300 = vsel %vm364, %v2266, 0
        %v2303 = vsel %vm364, %v2267, 0
        %v2306 = vsel %vm364, %v2268, 0
        %v2309 = vsel %vm364, %v2269, 0
        %v2312 = vsel %vm364, %v2270, 0
        %v2315 = vsel %vm364, %v2271, 0
        %v2318 = vsel %vm364, %v2272, 0
        %v2321 = vsel %vm364, %v2273, 0
        %v2324 = vsel %vm364, %v2274, 0
        %v2327 = vsel %vm364, %v2275, 0
        %v2330 = vsel %vm364, %v2276, 0
        %v2333 = vsel %vm364, %v2277, 0
        %2335 = vmatprep.subr.bf16.mxu0 0
        %2336 = vmatpush1.bf16.msra.mxu0 %v2285
        %2337 = vmatprep.subr.bf16.mxu0 0
        %2338 = vmatpush1.bf16.msra.mxu0 0
        %2339 = vmatprep.subr.bf16.mxu0 0
        %2340 = vmatpush1.bf16.msra.mxu0 0
        %2341 = vmatprep.subr.bf16.mxu0 0
        %2342 = vmatpush1.bf16.msra.mxu0 0
        %2343 = vmatprep.subr.bf16.mxu0 0
        %2344 = vmatpush1.bf16.msra.mxu0 0
        %2345 = vmatprep.subr.bf16.mxu0 0
        %2346 = vmatpush1.bf16.msra.mxu0 0
        %2347 = vmatprep.subr.bf16.mxu0 0
        %2348 = vmatpush1.bf16.msra.mxu0 0
        %2349 = vmatprep.subr.bf16.mxu0 0
        %2350 = vmatpush1.bf16.msra.mxu0 0
        %2351 = vmatprep.subr.bf16.mxu0 0
        %2352 = vmatpush1.bf16.msra.mxu0 0
        %2353 = vmatprep.subr.bf16.mxu0 0
        %2354 = vmatpush1.bf16.msra.mxu0 0
        %2355 = vmatprep.subr.bf16.mxu0 0
        %2356 = vmatpush1.bf16.msra.mxu0 0
        %2357 = vmatprep.subr.bf16.mxu0 0
        %2358 = vmatpush1.bf16.msra.mxu0 0
        %2359 = vmatprep.subr.bf16.mxu0 0
        %2360 = vmatpush1.bf16.msra.mxu0 0
        %2361 = vmatprep.subr.bf16.mxu0 0
        %2362 = vmatpush1.bf16.msra.mxu0 0
        %2363 = vmatprep.subr.bf16.mxu0 0
        %2364 = vmatpush1.bf16.msra.mxu0 0
        %2365 = vmatprep.subr.bf16.mxu0 0
        %2366 = vmatpush1.bf16.msra.mxu0 0
        %2367 = vmatprep.mubr.bf16.mxu0 0
        %2368 = vmatmul.mubr.bf16.gmra.mrb[0].mxu0 %v2288
        %v2369 = vpop.f32.mrb[0].mxu0
        %v2370 = vadd.f32 0.0, %v2369
        %v2371 = vpop.f32.mrb[0].mxu0
        %v2372 = vpop.f32.mrb[0].mxu0
        %v2373 = vadd.f32 0.0, %v2372
        %v2374 = vpop.f32.mrb[0].mxu0
        %2375 = vmatprep.mubr.bf16.mxu0 0
        %2376 = vmatmul.mubr.bf16.gmra.mrb[0].mxu0 %v2291
        %v2377 = vpop.f32.mrb[0].mxu0
        %v2378 = vadd.f32 0.0, %v2377
        %v2379 = vpop.f32.mrb[0].mxu0
        %v2380 = vpop.f32.mrb[0].mxu0
        %v2381 = vadd.f32 0.0, %v2380
        %v2382 = vpop.f32.mrb[0].mxu0
        %2383 = vmatprep.mubr.bf16.mxu0 0
        %2384 = vmatmul.mubr.bf16.gmra.mrb[0].mxu0 %v2294
        %v2385 = vpop.f32.mrb[0].mxu0
        %v2386 = vadd.f32 0.0, %v2385
        %v2387 = vpop.f32.mrb[0].mxu0
        %v2388 = vpop.f32.mrb[0].mxu0
        %v2389 = vadd.f32 0.0, %v2388
        %v2390 = vpop.f32.mrb[0].mxu0
        %2391 = vmatprep.mubr.bf16.mxu0 0
        %2392 = vmatmul.mubr.bf16.gmra.mrb[0].mxu0 %v2297
        %v2393 = vpop.f32.mrb[0].mxu0
        %v2394 = vadd.f32 0.0, %v2393
        %v2395 = vpop.f32.mrb[0].mxu0
        %v2396 = vpop.f32.mrb[0].mxu0
        %v2397 = vadd.f32 0.0, %v2396
        %v2398 = vpop.f32.mrb[0].mxu0
        %2399 = vmatprep.mubr.bf16.mxu0 0
        %2400 = vmatmul.mubr.bf16.gmra.mrb[0].mxu0 %v2300
        %v2401 = vpop.f32.mrb[0].mxu0
        %v2402 = vadd.f32 0.0, %v2401
        %v2403 = vpop.f32.mrb[0].mxu0
        %v2404 = vpop.f32.mrb[0].mxu0
        %v2405 = vadd.f32 0.0, %v2404
        %v2406 = vpop.f32.mrb[0].mxu0
        %2407 = vmatprep.mubr.bf16.mxu0 0
        %2408 = vmatmul.mubr.bf16.gmra.mrb[0].mxu0 %v2303
        %v2409 = vpop.f32.mrb[0].mxu0
        %v2410 = vadd.f32 0.0, %v2409
        %v2411 = vpop.f32.mrb[0].mxu0
        %v2412 = vpop.f32.mrb[0].mxu0
        %v2413 = vadd.f32 0.0, %v2412
        %v2414 = vpop.f32.mrb[0].mxu0
        %2415 = vmatprep.mubr.bf16.mxu0 0
        %2416 = vmatmul.mubr.bf16.gmra.mrb[0].mxu0 %v2306
        %v2417 = vpop.f32.mrb[0].mxu0
        %v2418 = vadd.f32 0.0, %v2417
        %v2419 = vpop.f32.mrb[0].mxu0
        %v2420 = vpop.f32.mrb[0].mxu0
        %v2421 = vadd.f32 0.0, %v2420
        %v2422 = vpop.f32.mrb[0].mxu0
        %2423 = vmatprep.mubr.bf16.mxu0 0
        %2424 = vmatmul.mubr.bf16.gmra.mrb[0].mxu0 %v2309
        %v2425 = vpop.f32.mrb[0].mxu0
        %v2426 = vadd.f32 0.0, %v2425
        %v2427 = vpop.f32.mrb[0].mxu0
        %v2428 = vpop.f32.mrb[0].mxu0
        %v2429 = vadd.f32 0.0, %v2428
        %v2430 = vpop.f32.mrb[0].mxu0
        %2431 = vmatprep.mubr.bf16.mxu0 0
        %2432 = vmatmul.mubr.bf16.gmra.mrb[0].mxu0 %v2312
        %v2433 = vpop.f32.mrb[0].mxu0
        %v2434 = vadd.f32 0.0, %v2433
        %v2435 = vpop.f32.mrb[0].mxu0
        %v2436 = vpop.f32.mrb[0].mxu0
        %v2437 = vadd.f32 0.0, %v2436
        %v2438 = vpop.f32.mrb[0].mxu0
        %2439 = vmatprep.mubr.bf16.mxu0 0
        %2440 = vmatmul.mubr.bf16.gmra.mrb[0].mxu0 %v2315
        %v2441 = vpop.f32.mrb[0].mxu0
        %v2442 = vadd.f32 0.0, %v2441
        %v2443 = vpop.f32.mrb[0].mxu0
        %v2444 = vpop.f32.mrb[0].mxu0
        %v2445 = vadd.f32 0.0, %v2444
        %v2446 = vpop.f32.mrb[0].mxu0
        %2447 = vmatprep.mubr.bf16.mxu0 0
        %2448 = vmatmul.mubr.bf16.gmra.mrb[0].mxu0 %v2318
        %v2449 = vpop.f32.mrb[0].mxu0
        %v2450 = vadd.f32 0.0, %v2449
        %v2451 = vpop.f32.mrb[0].mxu0
        %v2452 = vpop.f32.mrb[0].mxu0
        %v2453 = vadd.f32 0.0, %v2452
        %v2454 = vpop.f32.mrb[0].mxu0
        %2455 = vmatprep.mubr.bf16.mxu0 0
        %2456 = vmatmul.mubr.bf16.gmra.mrb[0].mxu0 %v2321
        %v2457 = vpop.f32.mrb[0].mxu0
        %v2458 = vadd.f32 0.0, %v2457
        %v2459 = vpop.f32.mrb[0].mxu0
        %v2460 = vpop.f32.mrb[0].mxu0
        %v2461 = vadd.f32 0.0, %v2460
        %v2462 = vpop.f32.mrb[0].mxu0
        %2463 = vmatprep.mubr.bf16.mxu0 0
        %2464 = vmatmul.mubr.bf16.gmra.mrb[0].mxu0 %v2324
        %v2465 = vpop.f32.mrb[0].mxu0
        %v2466 = vadd.f32 0.0, %v2465
        %v2467 = vpop.f32.mrb[0].mxu0
        %v2468 = vpop.f32.mrb[0].mxu0
        %v2469 = vadd.f32 0.0, %v2468
        %v2470 = vpop.f32.mrb[0].mxu0
        %2471 = vmatprep.mubr.bf16.mxu0 0
        %2472 = vmatmul.mubr.bf16.gmra.mrb[0].mxu0 %v2327
        %v2473 = vpop.f32.mrb[0].mxu0
        %v2474 = vadd.f32 0.0, %v2473
        %v2475 = vpop.f32.mrb[0].mxu0
        %v2476 = vpop.f32.mrb[0].mxu0
        %v2477 = vadd.f32 0.0, %v2476
        %v2478 = vpop.f32.mrb[0].mxu0
        %2479 = vmatprep.mubr.bf16.mxu0 0
        %2480 = vmatmul.mubr.bf16.gmra.mrb[0].mxu0 %v2330
        %v2481 = vpop.f32.mrb[0].mxu0
        %v2482 = vadd.f32 0.0, %v2481
        %v2483 = vpop.f32.mrb[0].mxu0
        %v2484 = vpop.f32.mrb[0].mxu0
        %v2485 = vadd.f32 0.0, %v2484
        %v2486 = vpop.f32.mrb[0].mxu0
        %2487 = vmatprep.mubr.bf16.mxu0 0
        %2488 = vmatmul.mubr.bf16.gmra.mrb[0].mxu0 %v2333
        %v2489 = vpop.f32.mrb[0].mxu0
        %v2490 = vadd.f32 0.0, %v2489
        %v2491 = vpop.f32.mrb[0].mxu0
        %v2492 = vpop.f32.mrb[0].mxu0
        %v2493 = vadd.f32 0.0, %v2492
        %v2494 = vpop.f32.mrb[0].mxu0
        %2495 = vdwg.mxu0
        %v2496 = vadd.f32 %v2198, %v2370
        %v2497 = vadd.f32 %v2199, %v2373
        %v2498 = vadd.f32 %v2200, %v2378
        %v2499 = vadd.f32 %v2201, %v2381
        %v2500 = vadd.f32 %v2202, %v2386
        %v2501 = vadd.f32 %v2203, %v2389
        %v2502 = vadd.f32 %v2204, %v2394
        %v2503 = vadd.f32 %v2205, %v2397
        %v2504 = vadd.f32 %v2206, %v2402
        %v2505 = vadd.f32 %v2207, %v2405
        %v2506 = vadd.f32 %v2208, %v2410
        %v2507 = vadd.f32 %v2209, %v2413
        %v2508 = vadd.f32 %v2210, %v2418
        %v2509 = vadd.f32 %v2211, %v2421
        %v2510 = vadd.f32 %v2212, %v2426
        %v2511 = vadd.f32 %v2213, %v2429
        %v2512 = vadd.f32 %v2214, %v2434
        %v2513 = vadd.f32 %v2215, %v2437
        %v2514 = vadd.f32 %v2216, %v2442
        %v2515 = vadd.f32 %v2217, %v2445
        %v2516 = vadd.f32 %v2218, %v2450
        %v2517 = vadd.f32 %v2219, %v2453
        %v2518 = vadd.f32 %v2220, %v2458
        %v2519 = vadd.f32 %v2221, %v2461
        %v2520 = vadd.f32 %v2222, %v2466
        %v2521 = vadd.f32 %v2223, %v2469
        %v2522 = vadd.f32 %v2224, %v2474
        %v2523 = vadd.f32 %v2225, %v2477
        %v2524 = vadd.f32 %v2226, %v2482
        %v2525 = vadd.f32 %v2227, %v2485
        %v2526 = vadd.f32 %v2228, %v2490
        %v2527 = vadd.f32 %v2229, %v2493
        %v2528 = vld [vmem:[%s1070 + $0x9] sm:$0xff]
        %v2529 = vld [vmem:[%s1070 + $0x11] sm:$0xff]
        %v2530 = vld [vmem:[%s1070 + $0x29] sm:$0xff]
        %v2531 = vld [vmem:[%s1070 + $0x31] sm:$0xff]
        %v2532 = vld [vmem:[%s1070 + $0x49] sm:$0xff]
        %v2533 = vld [vmem:[%s1070 + $0x51] sm:$0xff]
        %v2534 = vld [vmem:[%s1070 + $0x69] sm:$0xff]
        %v2535 = vld [vmem:[%s1070 + $0x71] sm:$0xff]
        %v2536 = vld [vmem:[%s1070 + $0x89] sm:$0xff]
        %v2537 = vld [vmem:[%s1070 + $0x91] sm:$0xff]
        %v2538 = vld [vmem:[%s1070 + $0xa9] sm:$0xff]
        %v2539 = vld [vmem:[%s1070 + $0xb1] sm:$0xff]
        %v2540 = vld [vmem:[%s1070 + $0xc9] sm:$0xff]
        %v2541 = vld [vmem:[%s1070 + $0xd1] sm:$0xff]
        %v2542 = vld [vmem:[%s1070 + $0xe9] sm:$0xff]
        %v2543 = vld [vmem:[%s1070 + $0xf1] sm:$0xff]
        %v2544 = vld [vmem:[%s1070 + $0x109] sm:$0xff]
        %v2545 = vld [vmem:[%s1070 + $0x111] sm:$0xff]
        %v2546 = vld [vmem:[%s1070 + $0x129] sm:$0xff]
        %v2547 = vld [vmem:[%s1070 + $0x131] sm:$0xff]
        %v2548 = vld [vmem:[%s1070 + $0x149] sm:$0xff]
        %v2549 = vld [vmem:[%s1070 + $0x151] sm:$0xff]
        %v2550 = vld [vmem:[%s1070 + $0x169] sm:$0xff]
        %v2551 = vld [vmem:[%s1070 + $0x171] sm:$0xff]
        %v2552 = vld [vmem:[%s1070 + $0x189] sm:$0xff]
        %v2553 = vld [vmem:[%s1070 + $0x191] sm:$0xff]
        %v2554 = vld [vmem:[%s1070 + $0x1a9] sm:$0xff]
        %v2555 = vld [vmem:[%s1070 + $0x1b1] sm:$0xff]
        %v2556 = vld [vmem:[%s1070 + $0x1c9] sm:$0xff]
        %v2557 = vld [vmem:[%s1070 + $0x1d1] sm:$0xff]
        %v2558 = vld [vmem:[%s1070 + $0x1e9] sm:$0xff]
        %v2559 = vld [vmem:[%s1070 + $0x1f1] sm:$0xff]
        %v2560 = vpack.c.bf16 %v2529, %v2528
        %v2561 = vpack.c.bf16 %v2531, %v2530
        %v2562 = vpack.c.bf16 %v2533, %v2532
        %v2563 = vpack.c.bf16 %v2535, %v2534
        %v2564 = vpack.c.bf16 %v2537, %v2536
        %v2565 = vpack.c.bf16 %v2539, %v2538
        %v2566 = vpack.c.bf16 %v2541, %v2540
        %v2567 = vpack.c.bf16 %v2543, %v2542
        %v2568 = vpack.c.bf16 %v2545, %v2544
        %v2569 = vpack.c.bf16 %v2547, %v2546
        %v2570 = vpack.c.bf16 %v2549, %v2548
        %v2571 = vpack.c.bf16 %v2551, %v2550
        %v2572 = vpack.c.bf16 %v2553, %v2552
        %v2573 = vpack.c.bf16 %v2555, %v2554
        %v2574 = vpack.c.bf16 %v2557, %v2556
        %v2575 = vpack.c.bf16 %v2559, %v2558
        %s2576 = scalar_lea.vmem %s3, 40
        %v2577 = vld [vmem:[%s2576] sm:$0xf]
        %v2578 = vld [vmem:[%s2576 + $0x4] sm:$0xf]
        %v2581 = vunpack.c.l.b16 %v2577
        %v2582 = vunpack.c.l.b16 %v2578
        %v2583 = vpack.c.b16 %v2582, %v2581
        %v2586 = vsel %vm364, %v2560, 0
        %v2589 = vsel %vm364, %v2561, 0
        %v2592 = vsel %vm364, %v2562, 0
        %v2595 = vsel %vm364, %v2563, 0
        %v2598 = vsel %vm364, %v2564, 0
        %v2601 = vsel %vm364, %v2565, 0
        %v2604 = vsel %vm364, %v2566, 0
        %v2607 = vsel %vm364, %v2567, 0
        %v2610 = vsel %vm364, %v2568, 0
        %v2613 = vsel %vm364, %v2569, 0
        %v2616 = vsel %vm364, %v2570, 0
        %v2619 = vsel %vm364, %v2571, 0
        %v2622 = vsel %vm364, %v2572, 0
        %v2625 = vsel %vm364, %v2573, 0
        %v2628 = vsel %vm364, %v2574, 0
        %v2631 = vsel %vm364, %v2575, 0
        %2633 = vmatprep.subr.bf16.mxu0 0
        %2634 = vmatpush1.bf16.msra.mxu0 %v2583
        %2635 = vmatprep.subr.bf16.mxu0 0
        %2636 = vmatpush1.bf16.msra.mxu0 0
        %2637 = vmatprep.subr.bf16.mxu0 0
        %2638 = vmatpush1.bf16.msra.mxu0 0
        %2639 = vmatprep.subr.bf16.mxu0 0
        %2640 = vmatpush1.bf16.msra.mxu0 0
        %2641 = vmatprep.subr.bf16.mxu0 0
        %2642 = vmatpush1.bf16.msra.mxu0 0
        %2643 = vmatprep.subr.bf16.mxu0 0
        %2644 = vmatpush1.bf16.msra.mxu0 0
        %2645 = vmatprep.subr.bf16.mxu0 0
        %2646 = vmatpush1.bf16.msra.mxu0 0
        %2647 = vmatprep.subr.bf16.mxu0 0
        %2648 = vmatpush1.bf16.msra.mxu0 0
        %2649 = vmatprep.subr.bf16.mxu0 0
        %2650 = vmatpush1.bf16.msra.mxu0 0
        %2651 = vmatprep.subr.bf16.mxu0 0
        %2652 = vmatpush1.bf16.msra.mxu0 0
        %2653 = vmatprep.subr.bf16.mxu0 0
        %2654 = vmatpush1.bf16.msra.mxu0 0
        %2655 = vmatprep.subr.bf16.mxu0 0
        %2656 = vmatpush1.bf16.msra.mxu0 0
        %2657 = vmatprep.subr.bf16.mxu0 0
        %2658 = vmatpush1.bf16.msra.mxu0 0
        %2659 = vmatprep.subr.bf16.mxu0 0
        %2660 = vmatpush1.bf16.msra.mxu0 0
        %2661 = vmatprep.subr.bf16.mxu0 0
        %2662 = vmatpush1.bf16.msra.mxu0 0
        %2663 = vmatprep.subr.bf16.mxu0 0
        %2664 = vmatpush1.bf16.msra.mxu0 0
        %2665 = vmatprep.mubr.bf16.mxu0 0
        %2666 = vmatmul.mubr.bf16.gmra.mrb[0].mxu0 %v2586
        %v2667 = vpop.f32.mrb[0].mxu0
        %v2668 = vadd.f32 0.0, %v2667
        %v2669 = vpop.f32.mrb[0].mxu0
        %v2670 = vpop.f32.mrb[0].mxu0
        %v2671 = vadd.f32 0.0, %v2670
        %v2672 = vpop.f32.mrb[0].mxu0
        %2673 = vmatprep.mubr.bf16.mxu0 0
        %2674 = vmatmul.mubr.bf16.gmra.mrb[0].mxu0 %v2589
        %v2675 = vpop.f32.mrb[0].mxu0
        %v2676 = vadd.f32 0.0, %v2675
        %v2677 = vpop.f32.mrb[0].mxu0
        %v2678 = vpop.f32.mrb[0].mxu0
        %v2679 = vadd.f32 0.0, %v2678
        %v2680 = vpop.f32.mrb[0].mxu0
        %2681 = vmatprep.mubr.bf16.mxu0 0
        %2682 = vmatmul.mubr.bf16.gmra.mrb[0].mxu0 %v2592
        %v2683 = vpop.f32.mrb[0].mxu0
        %v2684 = vadd.f32 0.0, %v2683
        %v2685 = vpop.f32.mrb[0].mxu0
        %v2686 = vpop.f32.mrb[0].mxu0
        %v2687 = vadd.f32 0.0, %v2686
        %v2688 = vpop.f32.mrb[0].mxu0
        %2689 = vmatprep.mubr.bf16.mxu0 0
        %2690 = vmatmul.mubr.bf16.gmra.mrb[0].mxu0 %v2595
        %v2691 = vpop.f32.mrb[0].mxu0
        %v2692 = vadd.f32 0.0, %v2691
        %v2693 = vpop.f32.mrb[0].mxu0
        %v2694 = vpop.f32.mrb[0].mxu0
        %v2695 = vadd.f32 0.0, %v2694
        %v2696 = vpop.f32.mrb[0].mxu0
        %2697 = vmatprep.mubr.bf16.mxu0 0
        %2698 = vmatmul.mubr.bf16.gmra.mrb[0].mxu0 %v2598
        %v2699 = vpop.f32.mrb[0].mxu0
        %v2700 = vadd.f32 0.0, %v2699
        %v2701 = vpop.f32.mrb[0].mxu0
        %v2702 = vpop.f32.mrb[0].mxu0
        %v2703 = vadd.f32 0.0, %v2702
        %v2704 = vpop.f32.mrb[0].mxu0
        %2705 = vmatprep.mubr.bf16.mxu0 0
        %2706 = vmatmul.mubr.bf16.gmra.mrb[0].mxu0 %v2601
        %v2707 = vpop.f32.mrb[0].mxu0
        %v2708 = vadd.f32 0.0, %v2707
        %v2709 = vpop.f32.mrb[0].mxu0
        %v2710 = vpop.f32.mrb[0].mxu0
        %v2711 = vadd.f32 0.0, %v2710
        %v2712 = vpop.f32.mrb[0].mxu0
        %2713 = vmatprep.mubr.bf16.mxu0 0
        %2714 = vmatmul.mubr.bf16.gmra.mrb[0].mxu0 %v2604
        %v2715 = vpop.f32.mrb[0].mxu0
        %v2716 = vadd.f32 0.0, %v2715
        %v2717 = vpop.f32.mrb[0].mxu0
        %v2718 = vpop.f32.mrb[0].mxu0
        %v2719 = vadd.f32 0.0, %v2718
        %v2720 = vpop.f32.mrb[0].mxu0
        %2721 = vmatprep.mubr.bf16.mxu0 0
        %2722 = vmatmul.mubr.bf16.gmra.mrb[0].mxu0 %v2607
        %v2723 = vpop.f32.mrb[0].mxu0
        %v2724 = vadd.f32 0.0, %v2723
        %v2725 = vpop.f32.mrb[0].mxu0
        %v2726 = vpop.f32.mrb[0].mxu0
        %v2727 = vadd.f32 0.0, %v2726
        %v2728 = vpop.f32.mrb[0].mxu0
        %2729 = vmatprep.mubr.bf16.mxu0 0
        %2730 = vmatmul.mubr.bf16.gmra.mrb[0].mxu0 %v2610
        %v2731 = vpop.f32.mrb[0].mxu0
        %v2732 = vadd.f32 0.0, %v2731
        %v2733 = vpop.f32.mrb[0].mxu0
        %v2734 = vpop.f32.mrb[0].mxu0
        %v2735 = vadd.f32 0.0, %v2734
        %v2736 = vpop.f32.mrb[0].mxu0
        %2737 = vmatprep.mubr.bf16.mxu0 0
        %2738 = vmatmul.mubr.bf16.gmra.mrb[0].mxu0 %v2613
        %v2739 = vpop.f32.mrb[0].mxu0
        %v2740 = vadd.f32 0.0, %v2739
        %v2741 = vpop.f32.mrb[0].mxu0
        %v2742 = vpop.f32.mrb[0].mxu0
        %v2743 = vadd.f32 0.0, %v2742
        %v2744 = vpop.f32.mrb[0].mxu0
        %2745 = vmatprep.mubr.bf16.mxu0 0
        %2746 = vmatmul.mubr.bf16.gmra.mrb[0].mxu0 %v2616
        %v2747 = vpop.f32.mrb[0].mxu0
        %v2748 = vadd.f32 0.0, %v2747
        %v2749 = vpop.f32.mrb[0].mxu0
        %v2750 = vpop.f32.mrb[0].mxu0
        %v2751 = vadd.f32 0.0, %v2750
        %v2752 = vpop.f32.mrb[0].mxu0
        %2753 = vmatprep.mubr.bf16.mxu0 0
        %2754 = vmatmul.mubr.bf16.gmra.mrb[0].mxu0 %v2619
        %v2755 = vpop.f32.mrb[0].mxu0
        %v2756 = vadd.f32 0.0, %v2755
        %v2757 = vpop.f32.mrb[0].mxu0
        %v2758 = vpop.f32.mrb[0].mxu0
        %v2759 = vadd.f32 0.0, %v2758
        %v2760 = vpop.f32.mrb[0].mxu0
        %2761 = vmatprep.mubr.bf16.mxu0 0
        %2762 = vmatmul.mubr.bf16.gmra.mrb[0].mxu0 %v2622
        %v2763 = vpop.f32.mrb[0].mxu0
        %v2764 = vadd.f32 0.0, %v2763
        %v2765 = vpop.f32.mrb[0].mxu0
        %v2766 = vpop.f32.mrb[0].mxu0
        %v2767 = vadd.f32 0.0, %v2766
        %v2768 = vpop.f32.mrb[0].mxu0
        %2769 = vmatprep.mubr.bf16.mxu0 0
        %2770 = vmatmul.mubr.bf16.gmra.mrb[0].mxu0 %v2625
        %v2771 = vpop.f32.mrb[0].mxu0
        %v2772 = vadd.f32 0.0, %v2771
        %v2773 = vpop.f32.mrb[0].mxu0
        %v2774 = vpop.f32.mrb[0].mxu0
        %v2775 = vadd.f32 0.0, %v2774
        %v2776 = vpop.f32.mrb[0].mxu0
        %2777 = vmatprep.mubr.bf16.mxu0 0
        %2778 = vmatmul.mubr.bf16.gmra.mrb[0].mxu0 %v2628
        %v2779 = vpop.f32.mrb[0].mxu0
        %v2780 = vadd.f32 0.0, %v2779
        %v2781 = vpop.f32.mrb[0].mxu0
        %v2782 = vpop.f32.mrb[0].mxu0
        %v2783 = vadd.f32 0.0, %v2782
        %v2784 = vpop.f32.mrb[0].mxu0
        %2785 = vmatprep.mubr.bf16.mxu0 0
        %2786 = vmatmul.mubr.bf16.gmra.mrb[0].mxu0 %v2631
        %v2787 = vpop.f32.mrb[0].mxu0
        %v2788 = vadd.f32 0.0, %v2787
        %v2789 = vpop.f32.mrb[0].mxu0
        %v2790 = vpop.f32.mrb[0].mxu0
        %v2791 = vadd.f32 0.0, %v2790
        %v2792 = vpop.f32.mrb[0].mxu0
        %2793 = vdwg.mxu0
        %v2794 = vadd.f32 %v2496, %v2668
        %v2795 = vadd.f32 %v2497, %v2671
        %v2796 = vadd.f32 %v2498, %v2676
        %v2797 = vadd.f32 %v2499, %v2679
        %v2798 = vadd.f32 %v2500, %v2684
        %v2799 = vadd.f32 %v2501, %v2687
        %v2800 = vadd.f32 %v2502, %v2692
        %v2801 = vadd.f32 %v2503, %v2695
        %v2802 = vadd.f32 %v2504, %v2700
        %v2803 = vadd.f32 %v2505, %v2703
        %v2804 = vadd.f32 %v2506, %v2708
        %v2805 = vadd.f32 %v2507, %v2711
        %v2806 = vadd.f32 %v2508, %v2716
        %v2807 = vadd.f32 %v2509, %v2719
        %v2808 = vadd.f32 %v2510, %v2724
        %v2809 = vadd.f32 %v2511, %v2727
        %v2810 = vadd.f32 %v2512, %v2732
        %v2811 = vadd.f32 %v2513, %v2735
        %v2812 = vadd.f32 %v2514, %v2740
        %v2813 = vadd.f32 %v2515, %v2743
        %v2814 = vadd.f32 %v2516, %v2748
        %v2815 = vadd.f32 %v2517, %v2751
        %v2816 = vadd.f32 %v2518, %v2756
        %v2817 = vadd.f32 %v2519, %v2759
        %v2818 = vadd.f32 %v2520, %v2764
        %v2819 = vadd.f32 %v2521, %v2767
        %v2820 = vadd.f32 %v2522, %v2772
        %v2821 = vadd.f32 %v2523, %v2775
        %v2822 = vadd.f32 %v2524, %v2780
        %v2823 = vadd.f32 %v2525, %v2783
        %v2824 = vadd.f32 %v2526, %v2788
        %v2825 = vadd.f32 %v2527, %v2791
        %s2826 = scalar_lea.vmem [#allocation2], 64
        %v2827 = vld [vmem:[%s2826 + $0x7] sm:$0xff]
        %v2828 = vld [vmem:[%s2826 + $0xf] sm:$0xff]
        %v2829 = vld [vmem:[%s2826 + $0x27] sm:$0xff]
        %v2830 = vld [vmem:[%s2826 + $0x2f] sm:$0xff]
        %v2831 = vld [vmem:[%s2826 + $0x47] sm:$0xff]
        %v2832 = vld [vmem:[%s2826 + $0x4f] sm:$0xff]
        %v2833 = vld [vmem:[%s2826 + $0x67] sm:$0xff]
        %v2834 = vld [vmem:[%s2826 + $0x6f] sm:$0xff]
        %v2835 = vld [vmem:[%s2826 + $0x87] sm:$0xff]
        %v2836 = vld [vmem:[%s2826 + $0x8f] sm:$0xff]
        %v2837 = vld [vmem:[%s2826 + $0xa7] sm:$0xff]
        %v2838 = vld [vmem:[%s2826 + $0xaf] sm:$0xff]
        %v2839 = vld [vmem:[%s2826 + $0xc7] sm:$0xff]
        %v2840 = vld [vmem:[%s2826 + $0xcf] sm:$0xff]
        %v2841 = vld [vmem:[%s2826 + $0xe7] sm:$0xff]
        %v2842 = vld [vmem:[%s2826 + $0xef] sm:$0xff]
        %v2843 = vld [vmem:[%s2826 + $0x107] sm:$0xff]
        %v2844 = vld [vmem:[%s2826 + $0x10f] sm:$0xff]
        %v2845 = vld [vmem:[%s2826 + $0x127] sm:$0xff]
        %v2846 = vld [vmem:[%s2826 + $0x12f] sm:$0xff]
        %v2847 = vld [vmem:[%s2826 + $0x147] sm:$0xff]
        %v2848 = vld [vmem:[%s2826 + $0x14f] sm:$0xff]
        %v2849 = vld [vmem:[%s2826 + $0x167] sm:$0xff]
        %v2850 = vld [vmem:[%s2826 + $0x16f] sm:$0xff]
        %v2851 = vld [vmem:[%s2826 + $0x187] sm:$0xff]
        %v2852 = vld [vmem:[%s2826 + $0x18f] sm:$0xff]
        %v2853 = vld [vmem:[%s2826 + $0x1a7] sm:$0xff]
        %v2854 = vld [vmem:[%s2826 + $0x1af] sm:$0xff]
        %v2855 = vld [vmem:[%s2826 + $0x1c7] sm:$0xff]
        %v2856 = vld [vmem:[%s2826 + $0x1cf] sm:$0xff]
        %v2857 = vld [vmem:[%s2826 + $0x1e7] sm:$0xff]
        %v2858 = vld [vmem:[%s2826 + $0x1ef] sm:$0xff]
        %v2859 = vpack.c.bf16 %v2828, %v2827
        %v2860 = vpack.c.bf16 %v2830, %v2829
        %v2861 = vpack.c.bf16 %v2832, %v2831
        %v2862 = vpack.c.bf16 %v2834, %v2833
        %v2863 = vpack.c.bf16 %v2836, %v2835
        %v2864 = vpack.c.bf16 %v2838, %v2837
        %v2865 = vpack.c.bf16 %v2840, %v2839
        %v2866 = vpack.c.bf16 %v2842, %v2841
        %v2867 = vpack.c.bf16 %v2844, %v2843
        %v2868 = vpack.c.bf16 %v2846, %v2845
        %v2869 = vpack.c.bf16 %v2848, %v2847
        %v2870 = vpack.c.bf16 %v2850, %v2849
        %v2871 = vpack.c.bf16 %v2852, %v2851
        %v2872 = vpack.c.bf16 %v2854, %v2853
        %v2873 = vpack.c.bf16 %v2856, %v2855
        %v2874 = vpack.c.bf16 %v2858, %v2857
        %s2875 = scalar_lea.vmem %s3, 48
        %v2876 = vld [vmem:[%s2875] sm:$0xf]
        %v2877 = vld [vmem:[%s2875 + $0x4] sm:$0xf]
        %v2880 = vunpack.c.l.b16 %v2876
        %v2881 = vunpack.c.l.b16 %v2877
        %v2882 = vpack.c.b16 %v2881, %v2880
        %v2885 = vsel %vm364, %v2859, 0
        %v2888 = vsel %vm364, %v2860, 0
        %v2891 = vsel %vm364, %v2861, 0
        %v2894 = vsel %vm364, %v2862, 0
        %v2897 = vsel %vm364, %v2863, 0
        %v2900 = vsel %vm364, %v2864, 0
        %v2903 = vsel %vm364, %v2865, 0
        %v2906 = vsel %vm364, %v2866, 0
        %v2909 = vsel %vm364, %v2867, 0
        %v2912 = vsel %vm364, %v2868, 0
        %v2915 = vsel %vm364, %v2869, 0
        %v2918 = vsel %vm364, %v2870, 0
        %v2921 = vsel %vm364, %v2871, 0
        %v2924 = vsel %vm364, %v2872, 0
        %v2927 = vsel %vm364, %v2873, 0
        %v2930 = vsel %vm364, %v2874, 0
        %2932 = vmatprep.subr.bf16.mxu0 0
        %2933 = vmatpush1.bf16.msra.mxu0 %v2882
        %2934 = vmatprep.subr.bf16.mxu0 0
        %2935 = vmatpush1.bf16.msra.mxu0 0
        %2936 = vmatprep.subr.bf16.mxu0 0
        %2937 = vmatpush1.bf16.msra.mxu0 0
        %2938 = vmatprep.subr.bf16.mxu0 0
        %2939 = vmatpush1.bf16.msra.mxu0 0
        %2940 = vmatprep.subr.bf16.mxu0 0
        %2941 = vmatpush1.bf16.msra.mxu0 0
        %2942 = vmatprep.subr.bf16.mxu0 0
        %2943 = vmatpush1.bf16.msra.mxu0 0
        %2944 = vmatprep.subr.bf16.mxu0 0
        %2945 = vmatpush1.bf16.msra.mxu0 0
        %2946 = vmatprep.subr.bf16.mxu0 0
        %2947 = vmatpush1.bf16.msra.mxu0 0
        %2948 = vmatprep.subr.bf16.mxu0 0
        %2949 = vmatpush1.bf16.msra.mxu0 0
        %2950 = vmatprep.subr.bf16.mxu0 0
        %2951 = vmatpush1.bf16.msra.mxu0 0
        %2952 = vmatprep.subr.bf16.mxu0 0
        %2953 = vmatpush1.bf16.msra.mxu0 0
        %2954 = vmatprep.subr.bf16.mxu0 0
        %2955 = vmatpush1.bf16.msra.mxu0 0
        %2956 = vmatprep.subr.bf16.mxu0 0
        %2957 = vmatpush1.bf16.msra.mxu0 0
        %2958 = vmatprep.subr.bf16.mxu0 0
        %2959 = vmatpush1.bf16.msra.mxu0 0
        %2960 = vmatprep.subr.bf16.mxu0 0
        %2961 = vmatpush1.bf16.msra.mxu0 0
        %2962 = vmatprep.subr.bf16.mxu0 0
        %2963 = vmatpush1.bf16.msra.mxu0 0
        %2964 = vmatprep.mubr.bf16.mxu0 0
        %2965 = vmatmul.mubr.bf16.gmra.mrb[0].mxu0 %v2885
        %v2966 = vpop.f32.mrb[0].mxu0
        %v2967 = vadd.f32 0.0, %v2966
        %v2968 = vpop.f32.mrb[0].mxu0
        %v2969 = vpop.f32.mrb[0].mxu0
        %v2970 = vadd.f32 0.0, %v2969
        %v2971 = vpop.f32.mrb[0].mxu0
        %2972 = vmatprep.mubr.bf16.mxu0 0
        %2973 = vmatmul.mubr.bf16.gmra.mrb[0].mxu0 %v2888
        %v2974 = vpop.f32.mrb[0].mxu0
        %v2975 = vadd.f32 0.0, %v2974
        %v2976 = vpop.f32.mrb[0].mxu0
        %v2977 = vpop.f32.mrb[0].mxu0
        %v2978 = vadd.f32 0.0, %v2977
        %v2979 = vpop.f32.mrb[0].mxu0
        %2980 = vmatprep.mubr.bf16.mxu0 0
        %2981 = vmatmul.mubr.bf16.gmra.mrb[0].mxu0 %v2891
        %v2982 = vpop.f32.mrb[0].mxu0
        %v2983 = vadd.f32 0.0, %v2982
        %v2984 = vpop.f32.mrb[0].mxu0
        %v2985 = vpop.f32.mrb[0].mxu0
        %v2986 = vadd.f32 0.0, %v2985
        %v2987 = vpop.f32.mrb[0].mxu0
        %2988 = vmatprep.mubr.bf16.mxu0 0
        %2989 = vmatmul.mubr.bf16.gmra.mrb[0].mxu0 %v2894
        %v2990 = vpop.f32.mrb[0].mxu0
        %v2991 = vadd.f32 0.0, %v2990
        %v2992 = vpop.f32.mrb[0].mxu0
        %v2993 = vpop.f32.mrb[0].mxu0
        %v2994 = vadd.f32 0.0, %v2993
        %v2995 = vpop.f32.mrb[0].mxu0
        %2996 = vmatprep.mubr.bf16.mxu0 0
        %2997 = vmatmul.mubr.bf16.gmra.mrb[0].mxu0 %v2897
        %v2998 = vpop.f32.mrb[0].mxu0
        %v2999 = vadd.f32 0.0, %v2998
        %v3000 = vpop.f32.mrb[0].mxu0
        %v3001 = vpop.f32.mrb[0].mxu0
        %v3002 = vadd.f32 0.0, %v3001
        %v3003 = vpop.f32.mrb[0].mxu0
        %3004 = vmatprep.mubr.bf16.mxu0 0
        %3005 = vmatmul.mubr.bf16.gmra.mrb[0].mxu0 %v2900
        %v3006 = vpop.f32.mrb[0].mxu0
        %v3007 = vadd.f32 0.0, %v3006
        %v3008 = vpop.f32.mrb[0].mxu0
        %v3009 = vpop.f32.mrb[0].mxu0
        %v3010 = vadd.f32 0.0, %v3009
        %v3011 = vpop.f32.mrb[0].mxu0
        %3012 = vmatprep.mubr.bf16.mxu0 0
        %3013 = vmatmul.mubr.bf16.gmra.mrb[0].mxu0 %v2903
        %v3014 = vpop.f32.mrb[0].mxu0
        %v3015 = vadd.f32 0.0, %v3014
        %v3016 = vpop.f32.mrb[0].mxu0
        %v3017 = vpop.f32.mrb[0].mxu0
        %v3018 = vadd.f32 0.0, %v3017
        %v3019 = vpop.f32.mrb[0].mxu0
        %3020 = vmatprep.mubr.bf16.mxu0 0
        %3021 = vmatmul.mubr.bf16.gmra.mrb[0].mxu0 %v2906
        %v3022 = vpop.f32.mrb[0].mxu0
        %v3023 = vadd.f32 0.0, %v3022
        %v3024 = vpop.f32.mrb[0].mxu0
        %v3025 = vpop.f32.mrb[0].mxu0
        %v3026 = vadd.f32 0.0, %v3025
        %v3027 = vpop.f32.mrb[0].mxu0
        %3028 = vmatprep.mubr.bf16.mxu0 0
        %3029 = vmatmul.mubr.bf16.gmra.mrb[0].mxu0 %v2909
        %v3030 = vpop.f32.mrb[0].mxu0
        %v3031 = vadd.f32 0.0, %v3030
        %v3032 = vpop.f32.mrb[0].mxu0
        %v3033 = vpop.f32.mrb[0].mxu0
        %v3034 = vadd.f32 0.0, %v3033
        %v3035 = vpop.f32.mrb[0].mxu0
        %3036 = vmatprep.mubr.bf16.mxu0 0
        %3037 = vmatmul.mubr.bf16.gmra.mrb[0].mxu0 %v2912
        %v3038 = vpop.f32.mrb[0].mxu0
        %v3039 = vadd.f32 0.0, %v3038
        %v3040 = vpop.f32.mrb[0].mxu0
        %v3041 = vpop.f32.mrb[0].mxu0
        %v3042 = vadd.f32 0.0, %v3041
        %v3043 = vpop.f32.mrb[0].mxu0
        %3044 = vmatprep.mubr.bf16.mxu0 0
        %3045 = vmatmul.mubr.bf16.gmra.mrb[0].mxu0 %v2915
        %v3046 = vpop.f32.mrb[0].mxu0
        %v3047 = vadd.f32 0.0, %v3046
        %v3048 = vpop.f32.mrb[0].mxu0
        %v3049 = vpop.f32.mrb[0].mxu0
        %v3050 = vadd.f32 0.0, %v3049
        %v3051 = vpop.f32.mrb[0].mxu0
        %3052 = vmatprep.mubr.bf16.mxu0 0
        %3053 = vmatmul.mubr.bf16.gmra.mrb[0].mxu0 %v2918
        %v3054 = vpop.f32.mrb[0].mxu0
        %v3055 = vadd.f32 0.0, %v3054
        %v3056 = vpop.f32.mrb[0].mxu0
        %v3057 = vpop.f32.mrb[0].mxu0
        %v3058 = vadd.f32 0.0, %v3057
        %v3059 = vpop.f32.mrb[0].mxu0
        %3060 = vmatprep.mubr.bf16.mxu0 0
        %3061 = vmatmul.mubr.bf16.gmra.mrb[0].mxu0 %v2921
        %v3062 = vpop.f32.mrb[0].mxu0
        %v3063 = vadd.f32 0.0, %v3062
        %v3064 = vpop.f32.mrb[0].mxu0
        %v3065 = vpop.f32.mrb[0].mxu0
        %v3066 = vadd.f32 0.0, %v3065
        %v3067 = vpop.f32.mrb[0].mxu0
        %3068 = vmatprep.mubr.bf16.mxu0 0
        %3069 = vmatmul.mubr.bf16.gmra.mrb[0].mxu0 %v2924
        %v3070 = vpop.f32.mrb[0].mxu0
        %v3071 = vadd.f32 0.0, %v3070
        %v3072 = vpop.f32.mrb[0].mxu0
        %v3073 = vpop.f32.mrb[0].mxu0
        %v3074 = vadd.f32 0.0, %v3073
        %v3075 = vpop.f32.mrb[0].mxu0
        %3076 = vmatprep.mubr.bf16.mxu0 0
        %3077 = vmatmul.mubr.bf16.gmra.mrb[0].mxu0 %v2927
        %v3078 = vpop.f32.mrb[0].mxu0
        %v3079 = vadd.f32 0.0, %v3078
        %v3080 = vpop.f32.mrb[0].mxu0
        %v3081 = vpop.f32.mrb[0].mxu0
        %v3082 = vadd.f32 0.0, %v3081
        %v3083 = vpop.f32.mrb[0].mxu0
        %3084 = vmatprep.mubr.bf16.mxu0 0
        %3085 = vmatmul.mubr.bf16.gmra.mrb[0].mxu0 %v2930
        %v3086 = vpop.f32.mrb[0].mxu0
        %v3087 = vadd.f32 0.0, %v3086
        %v3088 = vpop.f32.mrb[0].mxu0
        %v3089 = vpop.f32.mrb[0].mxu0
        %v3090 = vadd.f32 0.0, %v3089
        %v3091 = vpop.f32.mrb[0].mxu0
        %3092 = vdwg.mxu0
        %v3093 = vadd.f32 %v2794, %v2967
        %v3094 = vadd.f32 %v2795, %v2970
        %v3095 = vadd.f32 %v2796, %v2975
        %v3096 = vadd.f32 %v2797, %v2978
        %v3097 = vadd.f32 %v2798, %v2983
        %v3098 = vadd.f32 %v2799, %v2986
        %v3099 = vadd.f32 %v2800, %v2991
        %v3100 = vadd.f32 %v2801, %v2994
        %v3101 = vadd.f32 %v2802, %v2999
        %v3102 = vadd.f32 %v2803, %v3002
        %v3103 = vadd.f32 %v2804, %v3007
        %v3104 = vadd.f32 %v2805, %v3010
        %v3105 = vadd.f32 %v2806, %v3015
        %v3106 = vadd.f32 %v2807, %v3018
        %v3107 = vadd.f32 %v2808, %v3023
        %v3108 = vadd.f32 %v2809, %v3026
        %v3109 = vadd.f32 %v2810, %v3031
        %v3110 = vadd.f32 %v2811, %v3034
        %v3111 = vadd.f32 %v2812, %v3039
        %v3112 = vadd.f32 %v2813, %v3042
        %v3113 = vadd.f32 %v2814, %v3047
        %v3114 = vadd.f32 %v2815, %v3050
        %v3115 = vadd.f32 %v2816, %v3055
        %v3116 = vadd.f32 %v2817, %v3058
        %v3117 = vadd.f32 %v2818, %v3063
        %v3118 = vadd.f32 %v2819, %v3066
        %v3119 = vadd.f32 %v2820, %v3071
        %v3120 = vadd.f32 %v2821, %v3074
        %v3121 = vadd.f32 %v2822, %v3079
        %v3122 = vadd.f32 %v2823, %v3082
        %v3123 = vadd.f32 %v2824, %v3087
        %v3124 = vadd.f32 %v2825, %v3090
        %v3125 = vld [vmem:[%s2826 + $0x8] sm:$0xff]
        %v3126 = vld [vmem:[%s2826 + $0x10] sm:$0xff]
        %v3127 = vld [vmem:[%s2826 + $0x28] sm:$0xff]
        %v3128 = vld [vmem:[%s2826 + $0x30] sm:$0xff]
        %v3129 = vld [vmem:[%s2826 + $0x48] sm:$0xff]
        %v3130 = vld [vmem:[%s2826 + $0x50] sm:$0xff]
        %v3131 = vld [vmem:[%s2826 + $0x68] sm:$0xff]
        %v3132 = vld [vmem:[%s2826 + $0x70] sm:$0xff]
        %v3133 = vld [vmem:[%s2826 + $0x88] sm:$0xff]
        %v3134 = vld [vmem:[%s2826 + $0x90] sm:$0xff]
        %v3135 = vld [vmem:[%s2826 + $0xa8] sm:$0xff]
        %v3136 = vld [vmem:[%s2826 + $0xb0] sm:$0xff]
        %v3137 = vld [vmem:[%s2826 + $0xc8] sm:$0xff]
        %v3138 = vld [vmem:[%s2826 + $0xd0] sm:$0xff]
        %v3139 = vld [vmem:[%s2826 + $0xe8] sm:$0xff]
        %v3140 = vld [vmem:[%s2826 + $0xf0] sm:$0xff]
        %v3141 = vld [vmem:[%s2826 + $0x108] sm:$0xff]
        %v3142 = vld [vmem:[%s2826 + $0x110] sm:$0xff]
        %v3143 = vld [vmem:[%s2826 + $0x128] sm:$0xff]
        %v3144 = vld [vmem:[%s2826 + $0x130] sm:$0xff]
        %v3145 = vld [vmem:[%s2826 + $0x148] sm:$0xff]
        %v3146 = vld [vmem:[%s2826 + $0x150] sm:$0xff]
        %v3147 = vld [vmem:[%s2826 + $0x168] sm:$0xff]
        %v3148 = vld [vmem:[%s2826 + $0x170] sm:$0xff]
        %v3149 = vld [vmem:[%s2826 + $0x188] sm:$0xff]
        %v3150 = vld [vmem:[%s2826 + $0x190] sm:$0xff]
        %v3151 = vld [vmem:[%s2826 + $0x1a8] sm:$0xff]
        %v3152 = vld [vmem:[%s2826 + $0x1b0] sm:$0xff]
        %v3153 = vld [vmem:[%s2826 + $0x1c8] sm:$0xff]
        %v3154 = vld [vmem:[%s2826 + $0x1d0] sm:$0xff]
        %v3155 = vld [vmem:[%s2826 + $0x1e8] sm:$0xff]
        %v3156 = vld [vmem:[%s2826 + $0x1f0] sm:$0xff]
        %v3157 = vpack.c.bf16 %v3126, %v3125
        %v3158 = vpack.c.bf16 %v3128, %v3127
        %v3159 = vpack.c.bf16 %v3130, %v3129
        %v3160 = vpack.c.bf16 %v3132, %v3131
        %v3161 = vpack.c.bf16 %v3134, %v3133
        %v3162 = vpack.c.bf16 %v3136, %v3135
        %v3163 = vpack.c.bf16 %v3138, %v3137
        %v3164 = vpack.c.bf16 %v3140, %v3139
        %v3165 = vpack.c.bf16 %v3142, %v3141
        %v3166 = vpack.c.bf16 %v3144, %v3143
        %v3167 = vpack.c.bf16 %v3146, %v3145
        %v3168 = vpack.c.bf16 %v3148, %v3147
        %v3169 = vpack.c.bf16 %v3150, %v3149
        %v3170 = vpack.c.bf16 %v3152, %v3151
        %v3171 = vpack.c.bf16 %v3154, %v3153
        %v3172 = vpack.c.bf16 %v3156, %v3155
        %s3173 = scalar_lea.vmem %s3, 56
        %v3174 = vld [vmem:[%s3173] sm:$0xf]
        %v3175 = vld [vmem:[%s3173 + $0x4] sm:$0xf]
        %v3178 = vunpack.c.l.b16 %v3174
        %v3179 = vunpack.c.l.b16 %v3175
        %v3180 = vpack.c.b16 %v3179, %v3178
        %v3183 = vsel %vm364, %v3157, 0
        %v3186 = vsel %vm364, %v3158, 0
        %v3189 = vsel %vm364, %v3159, 0
        %v3192 = vsel %vm364, %v3160, 0
        %v3195 = vsel %vm364, %v3161, 0
        %v3198 = vsel %vm364, %v3162, 0
        %v3201 = vsel %vm364, %v3163, 0
        %v3204 = vsel %vm364, %v3164, 0
        %v3207 = vsel %vm364, %v3165, 0
        %v3210 = vsel %vm364, %v3166, 0
        %v3213 = vsel %vm364, %v3167, 0
        %v3216 = vsel %vm364, %v3168, 0
        %v3219 = vsel %vm364, %v3169, 0
        %v3222 = vsel %vm364, %v3170, 0
        %v3225 = vsel %vm364, %v3171, 0
        %v3228 = vsel %vm364, %v3172, 0
        %3230 = vmatprep.subr.bf16.mxu0 0
        %3231 = vmatpush1.bf16.msra.mxu0 %v3180
        %3232 = vmatprep.subr.bf16.mxu0 0
        %3233 = vmatpush1.bf16.msra.mxu0 0
        %3234 = vmatprep.subr.bf16.mxu0 0
        %3235 = vmatpush1.bf16.msra.mxu0 0
        %3236 = vmatprep.subr.bf16.mxu0 0
        %3237 = vmatpush1.bf16.msra.mxu0 0
        %3238 = vmatprep.subr.bf16.mxu0 0
        %3239 = vmatpush1.bf16.msra.mxu0 0
        %3240 = vmatprep.subr.bf16.mxu0 0
        %3241 = vmatpush1.bf16.msra.mxu0 0
        %3242 = vmatprep.subr.bf16.mxu0 0
        %3243 = vmatpush1.bf16.msra.mxu0 0
        %3244 = vmatprep.subr.bf16.mxu0 0
        %3245 = vmatpush1.bf16.msra.mxu0 0
        %3246 = vmatprep.subr.bf16.mxu0 0
        %3247 = vmatpush1.bf16.msra.mxu0 0
        %3248 = vmatprep.subr.bf16.mxu0 0
        %3249 = vmatpush1.bf16.msra.mxu0 0
        %3250 = vmatprep.subr.bf16.mxu0 0
        %3251 = vmatpush1.bf16.msra.mxu0 0
        %3252 = vmatprep.subr.bf16.mxu0 0
        %3253 = vmatpush1.bf16.msra.mxu0 0
        %3254 = vmatprep.subr.bf16.mxu0 0
        %3255 = vmatpush1.bf16.msra.mxu0 0
        %3256 = vmatprep.subr.bf16.mxu0 0
        %3257 = vmatpush1.bf16.msra.mxu0 0
        %3258 = vmatprep.subr.bf16.mxu0 0
        %3259 = vmatpush1.bf16.msra.mxu0 0
        %3260 = vmatprep.subr.bf16.mxu0 0
        %3261 = vmatpush1.bf16.msra.mxu0 0
        %3262 = vmatprep.mubr.bf16.mxu0 0
        %3263 = vmatmul.mubr.bf16.gmra.mrb[0].mxu0 %v3183
        %v3264 = vpop.f32.mrb[0].mxu0
        %v3265 = vadd.f32 0.0, %v3264
        %v3266 = vpop.f32.mrb[0].mxu0
        %v3267 = vpop.f32.mrb[0].mxu0
        %v3268 = vadd.f32 0.0, %v3267
        %v3269 = vpop.f32.mrb[0].mxu0
        %3270 = vmatprep.mubr.bf16.mxu0 0
        %3271 = vmatmul.mubr.bf16.gmra.mrb[0].mxu0 %v3186
        %v3272 = vpop.f32.mrb[0].mxu0
        %v3273 = vadd.f32 0.0, %v3272
        %v3274 = vpop.f32.mrb[0].mxu0
        %v3275 = vpop.f32.mrb[0].mxu0
        %v3276 = vadd.f32 0.0, %v3275
        %v3277 = vpop.f32.mrb[0].mxu0
        %3278 = vmatprep.mubr.bf16.mxu0 0
        %3279 = vmatmul.mubr.bf16.gmra.mrb[0].mxu0 %v3189
        %v3280 = vpop.f32.mrb[0].mxu0
        %v3281 = vadd.f32 0.0, %v3280
        %v3282 = vpop.f32.mrb[0].mxu0
        %v3283 = vpop.f32.mrb[0].mxu0
        %v3284 = vadd.f32 0.0, %v3283
        %v3285 = vpop.f32.mrb[0].mxu0
        %3286 = vmatprep.mubr.bf16.mxu0 0
        %3287 = vmatmul.mubr.bf16.gmra.mrb[0].mxu0 %v3192
        %v3288 = vpop.f32.mrb[0].mxu0
        %v3289 = vadd.f32 0.0, %v3288
        %v3290 = vpop.f32.mrb[0].mxu0
        %v3291 = vpop.f32.mrb[0].mxu0
        %v3292 = vadd.f32 0.0, %v3291
        %v3293 = vpop.f32.mrb[0].mxu0
        %3294 = vmatprep.mubr.bf16.mxu0 0
        %3295 = vmatmul.mubr.bf16.gmra.mrb[0].mxu0 %v3195
        %v3296 = vpop.f32.mrb[0].mxu0
        %v3297 = vadd.f32 0.0, %v3296
        %v3298 = vpop.f32.mrb[0].mxu0
        %v3299 = vpop.f32.mrb[0].mxu0
        %v3300 = vadd.f32 0.0, %v3299
        %v3301 = vpop.f32.mrb[0].mxu0
        %3302 = vmatprep.mubr.bf16.mxu0 0
        %3303 = vmatmul.mubr.bf16.gmra.mrb[0].mxu0 %v3198
        %v3304 = vpop.f32.mrb[0].mxu0
        %v3305 = vadd.f32 0.0, %v3304
        %v3306 = vpop.f32.mrb[0].mxu0
        %v3307 = vpop.f32.mrb[0].mxu0
        %v3308 = vadd.f32 0.0, %v3307
        %v3309 = vpop.f32.mrb[0].mxu0
        %3310 = vmatprep.mubr.bf16.mxu0 0
        %3311 = vmatmul.mubr.bf16.gmra.mrb[0].mxu0 %v3201
        %v3312 = vpop.f32.mrb[0].mxu0
        %v3313 = vadd.f32 0.0, %v3312
        %v3314 = vpop.f32.mrb[0].mxu0
        %v3315 = vpop.f32.mrb[0].mxu0
        %v3316 = vadd.f32 0.0, %v3315
        %v3317 = vpop.f32.mrb[0].mxu0
        %3318 = vmatprep.mubr.bf16.mxu0 0
        %3319 = vmatmul.mubr.bf16.gmra.mrb[0].mxu0 %v3204
        %v3320 = vpop.f32.mrb[0].mxu0
        %v3321 = vadd.f32 0.0, %v3320
        %v3322 = vpop.f32.mrb[0].mxu0
        %v3323 = vpop.f32.mrb[0].mxu0
        %v3324 = vadd.f32 0.0, %v3323
        %v3325 = vpop.f32.mrb[0].mxu0
        %3326 = vmatprep.mubr.bf16.mxu0 0
        %3327 = vmatmul.mubr.bf16.gmra.mrb[0].mxu0 %v3207
        %v3328 = vpop.f32.mrb[0].mxu0
        %v3329 = vadd.f32 0.0, %v3328
        %v3330 = vpop.f32.mrb[0].mxu0
        %v3331 = vpop.f32.mrb[0].mxu0
        %v3332 = vadd.f32 0.0, %v3331
        %v3333 = vpop.f32.mrb[0].mxu0
        %3334 = vmatprep.mubr.bf16.mxu0 0
        %3335 = vmatmul.mubr.bf16.gmra.mrb[0].mxu0 %v3210
        %v3336 = vpop.f32.mrb[0].mxu0
        %v3337 = vadd.f32 0.0, %v3336
        %v3338 = vpop.f32.mrb[0].mxu0
        %v3339 = vpop.f32.mrb[0].mxu0
        %v3340 = vadd.f32 0.0, %v3339
        %v3341 = vpop.f32.mrb[0].mxu0
        %3342 = vmatprep.mubr.bf16.mxu0 0
        %3343 = vmatmul.mubr.bf16.gmra.mrb[0].mxu0 %v3213
        %v3344 = vpop.f32.mrb[0].mxu0
        %v3345 = vadd.f32 0.0, %v3344
        %v3346 = vpop.f32.mrb[0].mxu0
        %v3347 = vpop.f32.mrb[0].mxu0
        %v3348 = vadd.f32 0.0, %v3347
        %v3349 = vpop.f32.mrb[0].mxu0
        %3350 = vmatprep.mubr.bf16.mxu0 0
        %3351 = vmatmul.mubr.bf16.gmra.mrb[0].mxu0 %v3216
        %v3352 = vpop.f32.mrb[0].mxu0
        %v3353 = vadd.f32 0.0, %v3352
        %v3354 = vpop.f32.mrb[0].mxu0
        %v3355 = vpop.f32.mrb[0].mxu0
        %v3356 = vadd.f32 0.0, %v3355
        %v3357 = vpop.f32.mrb[0].mxu0
        %3358 = vmatprep.mubr.bf16.mxu0 0
        %3359 = vmatmul.mubr.bf16.gmra.mrb[0].mxu0 %v3219
        %v3360 = vpop.f32.mrb[0].mxu0
        %v3361 = vadd.f32 0.0, %v3360
        %v3362 = vpop.f32.mrb[0].mxu0
        %v3363 = vpop.f32.mrb[0].mxu0
        %v3364 = vadd.f32 0.0, %v3363
        %v3365 = vpop.f32.mrb[0].mxu0
        %3366 = vmatprep.mubr.bf16.mxu0 0
        %3367 = vmatmul.mubr.bf16.gmra.mrb[0].mxu0 %v3222
        %v3368 = vpop.f32.mrb[0].mxu0
        %v3369 = vadd.f32 0.0, %v3368
        %v3370 = vpop.f32.mrb[0].mxu0
        %v3371 = vpop.f32.mrb[0].mxu0
        %v3372 = vadd.f32 0.0, %v3371
        %v3373 = vpop.f32.mrb[0].mxu0
        %3374 = vmatprep.mubr.bf16.mxu0 0
        %3375 = vmatmul.mubr.bf16.gmra.mrb[0].mxu0 %v3225
        %v3376 = vpop.f32.mrb[0].mxu0
        %v3377 = vadd.f32 0.0, %v3376
        %v3378 = vpop.f32.mrb[0].mxu0
        %v3379 = vpop.f32.mrb[0].mxu0
        %v3380 = vadd.f32 0.0, %v3379
        %v3381 = vpop.f32.mrb[0].mxu0
        %3382 = vmatprep.mubr.bf16.mxu0 0
        %3383 = vmatmul.mubr.bf16.gmra.mrb[0].mxu0 %v3228
        %v3384 = vpop.f32.mrb[0].mxu0
        %v3385 = vadd.f32 0.0, %v3384
        %v3386 = vpop.f32.mrb[0].mxu0
        %v3387 = vpop.f32.mrb[0].mxu0
        %v3388 = vadd.f32 0.0, %v3387
        %v3389 = vpop.f32.mrb[0].mxu0
        %3390 = vdwg.mxu0
        %v3391 = vadd.f32 %v3093, %v3265
        %v3392 = vadd.f32 %v3094, %v3268
        %v3393 = vadd.f32 %v3095, %v3273
        %v3394 = vadd.f32 %v3096, %v3276
        %v3395 = vadd.f32 %v3097, %v3281
        %v3396 = vadd.f32 %v3098, %v3284
        %v3397 = vadd.f32 %v3099, %v3289
        %v3398 = vadd.f32 %v3100, %v3292
        %v3399 = vadd.f32 %v3101, %v3297
        %v3400 = vadd.f32 %v3102, %v3300
        %v3401 = vadd.f32 %v3103, %v3305
        %v3402 = vadd.f32 %v3104, %v3308
        %v3403 = vadd.f32 %v3105, %v3313
        %v3404 = vadd.f32 %v3106, %v3316
        %v3405 = vadd.f32 %v3107, %v3321
        %v3406 = vadd.f32 %v3108, %v3324
        %v3407 = vadd.f32 %v3109, %v3329
        %v3408 = vadd.f32 %v3110, %v3332
        %v3409 = vadd.f32 %v3111, %v3337
        %v3410 = vadd.f32 %v3112, %v3340
        %v3411 = vadd.f32 %v3113, %v3345
        %v3412 = vadd.f32 %v3114, %v3348
        %v3413 = vadd.f32 %v3115, %v3353
        %v3414 = vadd.f32 %v3116, %v3356
        %v3415 = vadd.f32 %v3117, %v3361
        %v3416 = vadd.f32 %v3118, %v3364
        %v3417 = vadd.f32 %v3119, %v3369
        %v3418 = vadd.f32 %v3120, %v3372
        %v3419 = vadd.f32 %v3121, %v3377
        %v3420 = vadd.f32 %v3122, %v3380
        %v3421 = vadd.f32 %v3123, %v3385
        %v3422 = vadd.f32 %v3124, %v3388
        %v3423 = vld [vmem:[%s2826 + $0x9] sm:$0xff]
        %v3424 = vld [vmem:[%s2826 + $0x11] sm:$0xff]
        %v3425 = vld [vmem:[%s2826 + $0x29] sm:$0xff]
        %v3426 = vld [vmem:[%s2826 + $0x31] sm:$0xff]
        %v3427 = vld [vmem:[%s2826 + $0x49] sm:$0xff]
        %v3428 = vld [vmem:[%s2826 + $0x51] sm:$0xff]
        %v3429 = vld [vmem:[%s2826 + $0x69] sm:$0xff]
        %v3430 = vld [vmem:[%s2826 + $0x71] sm:$0xff]
        %v3431 = vld [vmem:[%s2826 + $0x89] sm:$0xff]
        %v3432 = vld [vmem:[%s2826 + $0x91] sm:$0xff]
        %v3433 = vld [vmem:[%s2826 + $0xa9] sm:$0xff]
        %v3434 = vld [vmem:[%s2826 + $0xb1] sm:$0xff]
        %v3435 = vld [vmem:[%s2826 + $0xc9] sm:$0xff]
        %v3436 = vld [vmem:[%s2826 + $0xd1] sm:$0xff]
        %v3437 = vld [vmem:[%s2826 + $0xe9] sm:$0xff]
        %v3438 = vld [vmem:[%s2826 + $0xf1] sm:$0xff]
        %v3439 = vld [vmem:[%s2826 + $0x109] sm:$0xff]
        %v3440 = vld [vmem:[%s2826 + $0x111] sm:$0xff]
        %v3441 = vld [vmem:[%s2826 + $0x129] sm:$0xff]
        %v3442 = vld [vmem:[%s2826 + $0x131] sm:$0xff]
        %v3443 = vld [vmem:[%s2826 + $0x149] sm:$0xff]
        %v3444 = vld [vmem:[%s2826 + $0x151] sm:$0xff]
        %v3445 = vld [vmem:[%s2826 + $0x169] sm:$0xff]
        %v3446 = vld [vmem:[%s2826 + $0x171] sm:$0xff]
        %v3447 = vld [vmem:[%s2826 + $0x189] sm:$0xff]
        %v3448 = vld [vmem:[%s2826 + $0x191] sm:$0xff]
        %v3449 = vld [vmem:[%s2826 + $0x1a9] sm:$0xff]
        %v3450 = vld [vmem:[%s2826 + $0x1b1] sm:$0xff]
        %v3451 = vld [vmem:[%s2826 + $0x1c9] sm:$0xff]
        %v3452 = vld [vmem:[%s2826 + $0x1d1] sm:$0xff]
        %v3453 = vld [vmem:[%s2826 + $0x1e9] sm:$0xff]
        %v3454 = vld [vmem:[%s2826 + $0x1f1] sm:$0xff]
        %v3455 = vpack.c.bf16 %v3424, %v3423
        %v3456 = vpack.c.bf16 %v3426, %v3425
        %v3457 = vpack.c.bf16 %v3428, %v3427
        %v3458 = vpack.c.bf16 %v3430, %v3429
        %v3459 = vpack.c.bf16 %v3432, %v3431
        %v3460 = vpack.c.bf16 %v3434, %v3433
        %v3461 = vpack.c.bf16 %v3436, %v3435
        %v3462 = vpack.c.bf16 %v3438, %v3437
        %v3463 = vpack.c.bf16 %v3440, %v3439
        %v3464 = vpack.c.bf16 %v3442, %v3441
        %v3465 = vpack.c.bf16 %v3444, %v3443
        %v3466 = vpack.c.bf16 %v3446, %v3445
        %v3467 = vpack.c.bf16 %v3448, %v3447
        %v3468 = vpack.c.bf16 %v3450, %v3449
        %v3469 = vpack.c.bf16 %v3452, %v3451
        %v3470 = vpack.c.bf16 %v3454, %v3453
        %s3471 = scalar_lea.vmem %s3, 64
        %v3472 = vld [vmem:[%s3471] sm:$0xf]
        %v3473 = vld [vmem:[%s3471 + $0x4] sm:$0xf]
        %v3476 = vunpack.c.l.b16 %v3472
        %v3477 = vunpack.c.l.b16 %v3473
        %v3478 = vpack.c.b16 %v3477, %v3476
        %v3481 = vsel %vm364, %v3455, 0
        %v3484 = vsel %vm364, %v3456, 0
        %v3487 = vsel %vm364, %v3457, 0
        %v3490 = vsel %vm364, %v3458, 0
        %v3493 = vsel %vm364, %v3459, 0
        %v3496 = vsel %vm364, %v3460, 0
        %v3499 = vsel %vm364, %v3461, 0
        %v3502 = vsel %vm364, %v3462, 0
        %v3505 = vsel %vm364, %v3463, 0
        %v3508 = vsel %vm364, %v3464, 0
        %v3511 = vsel %vm364, %v3465, 0
        %v3514 = vsel %vm364, %v3466, 0
        %v3517 = vsel %vm364, %v3467, 0
        %v3520 = vsel %vm364, %v3468, 0
        %v3523 = vsel %vm364, %v3469, 0
        %v3526 = vsel %vm364, %v3470, 0
        %3528 = vmatprep.subr.bf16.mxu0 0
        %3529 = vmatpush1.bf16.msra.mxu0 %v3478
        %3530 = vmatprep.subr.bf16.mxu0 0
        %3531 = vmatpush1.bf16.msra.mxu0 0
        %3532 = vmatprep.subr.bf16.mxu0 0
        %3533 = vmatpush1.bf16.msra.mxu0 0
        %3534 = vmatprep.subr.bf16.mxu0 0
        %3535 = vmatpush1.bf16.msra.mxu0 0
        %3536 = vmatprep.subr.bf16.mxu0 0
        %3537 = vmatpush1.bf16.msra.mxu0 0
        %3538 = vmatprep.subr.bf16.mxu0 0
        %3539 = vmatpush1.bf16.msra.mxu0 0
        %3540 = vmatprep.subr.bf16.mxu0 0
        %3541 = vmatpush1.bf16.msra.mxu0 0
        %3542 = vmatprep.subr.bf16.mxu0 0
        %3543 = vmatpush1.bf16.msra.mxu0 0
        %3544 = vmatprep.subr.bf16.mxu0 0
        %3545 = vmatpush1.bf16.msra.mxu0 0
        %3546 = vmatprep.subr.bf16.mxu0 0
        %3547 = vmatpush1.bf16.msra.mxu0 0
        %3548 = vmatprep.subr.bf16.mxu0 0
        %3549 = vmatpush1.bf16.msra.mxu0 0
        %3550 = vmatprep.subr.bf16.mxu0 0
        %3551 = vmatpush1.bf16.msra.mxu0 0
        %3552 = vmatprep.subr.bf16.mxu0 0
        %3553 = vmatpush1.bf16.msra.mxu0 0
        %3554 = vmatprep.subr.bf16.mxu0 0
        %3555 = vmatpush1.bf16.msra.mxu0 0
        %3556 = vmatprep.subr.bf16.mxu0 0
        %3557 = vmatpush1.bf16.msra.mxu0 0
        %3558 = vmatprep.subr.bf16.mxu0 0
        %3559 = vmatpush1.bf16.msra.mxu0 0
        %3560 = vmatprep.mubr.bf16.mxu0 0
        %3561 = vmatmul.mubr.bf16.gmra.mrb[0].mxu0 %v3481
        %v3562 = vpop.f32.mrb[0].mxu0
        %v3563 = vadd.f32 0.0, %v3562
        %v3564 = vpop.f32.mrb[0].mxu0
        %v3565 = vpop.f32.mrb[0].mxu0
        %v3566 = vadd.f32 0.0, %v3565
        %v3567 = vpop.f32.mrb[0].mxu0
        %3568 = vmatprep.mubr.bf16.mxu0 0
        %3569 = vmatmul.mubr.bf16.gmra.mrb[0].mxu0 %v3484
        %v3570 = vpop.f32.mrb[0].mxu0
        %v3571 = vadd.f32 0.0, %v3570
        %v3572 = vpop.f32.mrb[0].mxu0
        %v3573 = vpop.f32.mrb[0].mxu0
        %v3574 = vadd.f32 0.0, %v3573
        %v3575 = vpop.f32.mrb[0].mxu0
        %3576 = vmatprep.mubr.bf16.mxu0 0
        %3577 = vmatmul.mubr.bf16.gmra.mrb[0].mxu0 %v3487
        %v3578 = vpop.f32.mrb[0].mxu0
        %v3579 = vadd.f32 0.0, %v3578
        %v3580 = vpop.f32.mrb[0].mxu0
        %v3581 = vpop.f32.mrb[0].mxu0
        %v3582 = vadd.f32 0.0, %v3581
        %v3583 = vpop.f32.mrb[0].mxu0
        %3584 = vmatprep.mubr.bf16.mxu0 0
        %3585 = vmatmul.mubr.bf16.gmra.mrb[0].mxu0 %v3490
        %v3586 = vpop.f32.mrb[0].mxu0
        %v3587 = vadd.f32 0.0, %v3586
        %v3588 = vpop.f32.mrb[0].mxu0
        %v3589 = vpop.f32.mrb[0].mxu0
        %v3590 = vadd.f32 0.0, %v3589
        %v3591 = vpop.f32.mrb[0].mxu0
        %3592 = vmatprep.mubr.bf16.mxu0 0
        %3593 = vmatmul.mubr.bf16.gmra.mrb[0].mxu0 %v3493
        %v3594 = vpop.f32.mrb[0].mxu0
        %v3595 = vadd.f32 0.0, %v3594
        %v3596 = vpop.f32.mrb[0].mxu0
        %v3597 = vpop.f32.mrb[0].mxu0
        %v3598 = vadd.f32 0.0, %v3597
        %v3599 = vpop.f32.mrb[0].mxu0
        %3600 = vmatprep.mubr.bf16.mxu0 0
        %3601 = vmatmul.mubr.bf16.gmra.mrb[0].mxu0 %v3496
        %v3602 = vpop.f32.mrb[0].mxu0
        %v3603 = vadd.f32 0.0, %v3602
        %v3604 = vpop.f32.mrb[0].mxu0
        %v3605 = vpop.f32.mrb[0].mxu0
        %v3606 = vadd.f32 0.0, %v3605
        %v3607 = vpop.f32.mrb[0].mxu0
        %3608 = vmatprep.mubr.bf16.mxu0 0
        %3609 = vmatmul.mubr.bf16.gmra.mrb[0].mxu0 %v3499
        %v3610 = vpop.f32.mrb[0].mxu0
        %v3611 = vadd.f32 0.0, %v3610
        %v3612 = vpop.f32.mrb[0].mxu0
        %v3613 = vpop.f32.mrb[0].mxu0
        %v3614 = vadd.f32 0.0, %v3613
        %v3615 = vpop.f32.mrb[0].mxu0
        %3616 = vmatprep.mubr.bf16.mxu0 0
        %3617 = vmatmul.mubr.bf16.gmra.mrb[0].mxu0 %v3502
        %v3618 = vpop.f32.mrb[0].mxu0
        %v3619 = vadd.f32 0.0, %v3618
        %v3620 = vpop.f32.mrb[0].mxu0
        %v3621 = vpop.f32.mrb[0].mxu0
        %v3622 = vadd.f32 0.0, %v3621
        %v3623 = vpop.f32.mrb[0].mxu0
        %3624 = vmatprep.mubr.bf16.mxu0 0
        %3625 = vmatmul.mubr.bf16.gmra.mrb[0].mxu0 %v3505
        %v3626 = vpop.f32.mrb[0].mxu0
        %v3627 = vadd.f32 0.0, %v3626
        %v3628 = vpop.f32.mrb[0].mxu0
        %v3629 = vpop.f32.mrb[0].mxu0
        %v3630 = vadd.f32 0.0, %v3629
        %v3631 = vpop.f32.mrb[0].mxu0
        %3632 = vmatprep.mubr.bf16.mxu0 0
        %3633 = vmatmul.mubr.bf16.gmra.mrb[0].mxu0 %v3508
        %v3634 = vpop.f32.mrb[0].mxu0
        %v3635 = vadd.f32 0.0, %v3634
        %v3636 = vpop.f32.mrb[0].mxu0
        %v3637 = vpop.f32.mrb[0].mxu0
        %v3638 = vadd.f32 0.0, %v3637
        %v3639 = vpop.f32.mrb[0].mxu0
        %3640 = vmatprep.mubr.bf16.mxu0 0
        %3641 = vmatmul.mubr.bf16.gmra.mrb[0].mxu0 %v3511
        %v3642 = vpop.f32.mrb[0].mxu0
        %v3643 = vadd.f32 0.0, %v3642
        %v3644 = vpop.f32.mrb[0].mxu0
        %v3645 = vpop.f32.mrb[0].mxu0
        %v3646 = vadd.f32 0.0, %v3645
        %v3647 = vpop.f32.mrb[0].mxu0
        %3648 = vmatprep.mubr.bf16.mxu0 0
        %3649 = vmatmul.mubr.bf16.gmra.mrb[0].mxu0 %v3514
        %v3650 = vpop.f32.mrb[0].mxu0
        %v3651 = vadd.f32 0.0, %v3650
        %v3652 = vpop.f32.mrb[0].mxu0
        %v3653 = vpop.f32.mrb[0].mxu0
        %v3654 = vadd.f32 0.0, %v3653
        %v3655 = vpop.f32.mrb[0].mxu0
        %3656 = vmatprep.mubr.bf16.mxu0 0
        %3657 = vmatmul.mubr.bf16.gmra.mrb[0].mxu0 %v3517
        %v3658 = vpop.f32.mrb[0].mxu0
        %v3659 = vadd.f32 0.0, %v3658
        %v3660 = vpop.f32.mrb[0].mxu0
        %v3661 = vpop.f32.mrb[0].mxu0
        %v3662 = vadd.f32 0.0, %v3661
        %v3663 = vpop.f32.mrb[0].mxu0
        %3664 = vmatprep.mubr.bf16.mxu0 0
        %3665 = vmatmul.mubr.bf16.gmra.mrb[0].mxu0 %v3520
        %v3666 = vpop.f32.mrb[0].mxu0
        %v3667 = vadd.f32 0.0, %v3666
        %v3668 = vpop.f32.mrb[0].mxu0
        %v3669 = vpop.f32.mrb[0].mxu0
        %v3670 = vadd.f32 0.0, %v3669
        %v3671 = vpop.f32.mrb[0].mxu0
        %3672 = vmatprep.mubr.bf16.mxu0 0
        %3673 = vmatmul.mubr.bf16.gmra.mrb[0].mxu0 %v3523
        %v3674 = vpop.f32.mrb[0].mxu0
        %v3675 = vadd.f32 0.0, %v3674
        %v3676 = vpop.f32.mrb[0].mxu0
        %v3677 = vpop.f32.mrb[0].mxu0
        %v3678 = vadd.f32 0.0, %v3677
        %v3679 = vpop.f32.mrb[0].mxu0
        %3680 = vmatprep.mubr.bf16.mxu0 0
        %3681 = vmatmul.mubr.bf16.gmra.mrb[0].mxu0 %v3526
        %v3682 = vpop.f32.mrb[0].mxu0
        %v3683 = vadd.f32 0.0, %v3682
        %v3684 = vpop.f32.mrb[0].mxu0
        %v3685 = vpop.f32.mrb[0].mxu0
        %v3686 = vadd.f32 0.0, %v3685
        %v3687 = vpop.f32.mrb[0].mxu0
        %3688 = vdwg.mxu0
        %v3689 = vadd.f32 %v3391, %v3563
        %v3690 = vadd.f32 %v3392, %v3566
        %v3691 = vadd.f32 %v3393, %v3571
        %v3692 = vadd.f32 %v3394, %v3574
        %v3693 = vadd.f32 %v3395, %v3579
        %v3694 = vadd.f32 %v3396, %v3582
        %v3695 = vadd.f32 %v3397, %v3587
        %v3696 = vadd.f32 %v3398, %v3590
        %v3697 = vadd.f32 %v3399, %v3595
        %v3698 = vadd.f32 %v3400, %v3598
        %v3699 = vadd.f32 %v3401, %v3603
        %v3700 = vadd.f32 %v3402, %v3606
        %v3701 = vadd.f32 %v3403, %v3611
        %v3702 = vadd.f32 %v3404, %v3614
        %v3703 = vadd.f32 %v3405, %v3619
        %v3704 = vadd.f32 %v3406, %v3622
        %v3705 = vadd.f32 %v3407, %v3627
        %v3706 = vadd.f32 %v3408, %v3630
        %v3707 = vadd.f32 %v3409, %v3635
        %v3708 = vadd.f32 %v3410, %v3638
        %v3709 = vadd.f32 %v3411, %v3643
        %v3710 = vadd.f32 %v3412, %v3646
        %v3711 = vadd.f32 %v3413, %v3651
        %v3712 = vadd.f32 %v3414, %v3654
        %v3713 = vadd.f32 %v3415, %v3659
        %v3714 = vadd.f32 %v3416, %v3662
        %v3715 = vadd.f32 %v3417, %v3667
        %v3716 = vadd.f32 %v3418, %v3670
        %v3717 = vadd.f32 %v3419, %v3675
        %v3718 = vadd.f32 %v3420, %v3678
        %v3719 = vadd.f32 %v3421, %v3683
        %v3720 = vadd.f32 %v3422, %v3686
        %v3721 = vld [vmem:[%s4] sm:$0x1]
        %v3723 = vlaneseq
        %v3724 = vshrl.u32 %v3723, 7
        %v3725 = vsub.s32 0, %v3724
        %v3726 = vrot.slane %v3721, %v3725
        %v3728 = vadd.f32 %v3689, %v3726
        %v3729 = vadd.f32 %v3690, %v3726
        %v3730 = vadd.f32 %v3691, %v3726
        %v3731 = vadd.f32 %v3692, %v3726
        %v3732 = vadd.f32 %v3693, %v3726
        %v3733 = vadd.f32 %v3694, %v3726
        %v3734 = vadd.f32 %v3695, %v3726
        %v3735 = vadd.f32 %v3696, %v3726
        %v3736 = vadd.f32 %v3697, %v3726
        %v3737 = vadd.f32 %v3698, %v3726
        %v3738 = vadd.f32 %v3699, %v3726
        %v3739 = vadd.f32 %v3700, %v3726
        %v3740 = vadd.f32 %v3701, %v3726
        %v3741 = vadd.f32 %v3702, %v3726
        %v3742 = vadd.f32 %v3703, %v3726
        %v3743 = vadd.f32 %v3704, %v3726
        %v3744 = vadd.f32 %v3705, %v3726
        %v3745 = vadd.f32 %v3706, %v3726
        %v3746 = vadd.f32 %v3707, %v3726
        %v3747 = vadd.f32 %v3708, %v3726
        %v3748 = vadd.f32 %v3709, %v3726
        %v3749 = vadd.f32 %v3710, %v3726
        %v3750 = vadd.f32 %v3711, %v3726
        %v3751 = vadd.f32 %v3712, %v3726
        %v3752 = vadd.f32 %v3713, %v3726
        %v3753 = vadd.f32 %v3714, %v3726
        %v3754 = vadd.f32 %v3715, %v3726
        %v3755 = vadd.f32 %v3716, %v3726
        %v3756 = vadd.f32 %v3717, %v3726
        %v3757 = vadd.f32 %v3718, %v3726
        %v3758 = vadd.f32 %v3719, %v3726
        %v3759 = vadd.f32 %v3720, %v3726
        %v3760 = vsub.f32 0.0, %v3728
        %v3761 = vsub.f32 0.0, %v3729
        %v3762 = vsub.f32 0.0, %v3730
        %v3763 = vsub.f32 0.0, %v3731
        %v3764 = vsub.f32 0.0, %v3732
        %v3765 = vsub.f32 0.0, %v3733
        %v3766 = vsub.f32 0.0, %v3734
        %v3767 = vsub.f32 0.0, %v3735
        %v3768 = vsub.f32 0.0, %v3736
        %v3769 = vsub.f32 0.0, %v3737
        %v3770 = vsub.f32 0.0, %v3738
        %v3771 = vsub.f32 0.0, %v3739
        %v3772 = vsub.f32 0.0, %v3740
        %v3773 = vsub.f32 0.0, %v3741
        %v3774 = vsub.f32 0.0, %v3742
        %v3775 = vsub.f32 0.0, %v3743
        %v3776 = vsub.f32 0.0, %v3744
        %v3777 = vsub.f32 0.0, %v3745
        %v3778 = vsub.f32 0.0, %v3746
        %v3779 = vsub.f32 0.0, %v3747
        %v3780 = vsub.f32 0.0, %v3748
        %v3781 = vsub.f32 0.0, %v3749
        %v3782 = vsub.f32 0.0, %v3750
        %v3783 = vsub.f32 0.0, %v3751
        %v3784 = vsub.f32 0.0, %v3752
        %v3785 = vsub.f32 0.0, %v3753
        %v3786 = vsub.f32 0.0, %v3754
        %v3787 = vsub.f32 0.0, %v3755
        %v3788 = vsub.f32 0.0, %v3756
        %v3789 = vsub.f32 0.0, %v3757
        %v3790 = vsub.f32 0.0, %v3758
        %v3791 = vsub.f32 0.0, %v3759
        %v3792 = vmul.f32 %v3760, 1.442695
        %v3793 = vpow.pop %v3792
        %v3794 = vmul.f32 %v3761, 1.442695
        %v3795 = vpow.pop %v3794
        %v3796 = vmul.f32 %v3762, 1.442695
        %v3797 = vpow.pop %v3796
        %v3798 = vmul.f32 %v3763, 1.442695
        %v3799 = vpow.pop %v3798
        %v3800 = vmul.f32 %v3764, 1.442695
        %v3801 = vpow.pop %v3800
        %v3802 = vmul.f32 %v3765, 1.442695
        %v3803 = vpow.pop %v3802
        %v3804 = vmul.f32 %v3766, 1.442695
        %v3805 = vpow.pop %v3804
        %v3806 = vmul.f32 %v3767, 1.442695
        %v3807 = vpow.pop %v3806
        %v3808 = vmul.f32 %v3768, 1.442695
        %v3809 = vpow.pop %v3808
        %v3810 = vmul.f32 %v3769, 1.442695
        %v3811 = vpow.pop %v3810
        %v3812 = vmul.f32 %v3770, 1.442695
        %v3813 = vpow.pop %v3812
        %v3814 = vmul.f32 %v3771, 1.442695
        %v3815 = vpow.pop %v3814
        %v3816 = vmul.f32 %v3772, 1.442695
        %v3817 = vpow.pop %v3816
        %v3818 = vmul.f32 %v3773, 1.442695
        %v3819 = vpow.pop %v3818
        %v3820 = vmul.f32 %v3774, 1.442695
        %v3821 = vpow.pop %v3820
        %v3822 = vmul.f32 %v3775, 1.442695
        %v3823 = vpow.pop %v3822
        %v3824 = vmul.f32 %v3776, 1.442695
        %v3825 = vpow.pop %v3824
        %v3826 = vmul.f32 %v3777, 1.442695
        %v3827 = vpow.pop %v3826
        %v3828 = vmul.f32 %v3778, 1.442695
        %v3829 = vpow.pop %v3828
        %v3830 = vmul.f32 %v3779, 1.442695
        %v3831 = vpow.pop %v3830
        %v3832 = vmul.f32 %v3780, 1.442695
        %v3833 = vpow.pop %v3832
        %v3834 = vmul.f32 %v3781, 1.442695
        %v3835 = vpow.pop %v3834
        %v3836 = vmul.f32 %v3782, 1.442695
        %v3837 = vpow.pop %v3836
        %v3838 = vmul.f32 %v3783, 1.442695
        %v3839 = vpow.pop %v3838
        %v3840 = vmul.f32 %v3784, 1.442695
        %v3841 = vpow.pop %v3840
        %v3842 = vmul.f32 %v3785, 1.442695
        %v3843 = vpow.pop %v3842
        %v3844 = vmul.f32 %v3786, 1.442695
        %v3845 = vpow.pop %v3844
        %v3846 = vmul.f32 %v3787, 1.442695
        %v3847 = vpow.pop %v3846
        %v3848 = vmul.f32 %v3788, 1.442695
        %v3849 = vpow.pop %v3848
        %v3850 = vmul.f32 %v3789, 1.442695
        %v3851 = vpow.pop %v3850
        %v3852 = vmul.f32 %v3790, 1.442695
        %v3853 = vpow.pop %v3852
        %v3854 = vmul.f32 %v3791, 1.442695
        %v3855 = vpow.pop %v3854
        %v3856 = vadd.f32 %v3793, 1.0
        %v3857 = vadd.f32 %v3795, 1.0
        %v3858 = vadd.f32 %v3797, 1.0
        %v3859 = vadd.f32 %v3799, 1.0
        %v3860 = vadd.f32 %v3801, 1.0
        %v3861 = vadd.f32 %v3803, 1.0
        %v3862 = vadd.f32 %v3805, 1.0
        %v3863 = vadd.f32 %v3807, 1.0
        %v3864 = vadd.f32 %v3809, 1.0
        %v3865 = vadd.f32 %v3811, 1.0
        %v3866 = vadd.f32 %v3813, 1.0
        %v3867 = vadd.f32 %v3815, 1.0
        %v3868 = vadd.f32 %v3817, 1.0
        %v3869 = vadd.f32 %v3819, 1.0
        %v3870 = vadd.f32 %v3821, 1.0
        %v3871 = vadd.f32 %v3823, 1.0
        %v3872 = vadd.f32 %v3825, 1.0
        %v3873 = vadd.f32 %v3827, 1.0
        %v3874 = vadd.f32 %v3829, 1.0
        %v3875 = vadd.f32 %v3831, 1.0
        %v3876 = vadd.f32 %v3833, 1.0
        %v3877 = vadd.f32 %v3835, 1.0
        %v3878 = vadd.f32 %v3837, 1.0
        %v3879 = vadd.f32 %v3839, 1.0
        %v3880 = vadd.f32 %v3841, 1.0
        %v3881 = vadd.f32 %v3843, 1.0
        %v3882 = vadd.f32 %v3845, 1.0
        %v3883 = vadd.f32 %v3847, 1.0
        %v3884 = vadd.f32 %v3849, 1.0
        %v3885 = vadd.f32 %v3851, 1.0
        %v3886 = vadd.f32 %v3853, 1.0
        %v3887 = vadd.f32 %v3855, 1.0
        %v3888 = vrcp.pop %v3856
        %v3889 = vrcp.pop %v3857
        %v3890 = vrcp.pop %v3858
        %v3891 = vrcp.pop %v3859
        %v3892 = vrcp.pop %v3860
        %v3893 = vrcp.pop %v3861
        %v3894 = vrcp.pop %v3862
        %v3895 = vrcp.pop %v3863
        %v3896 = vrcp.pop %v3864
        %v3897 = vrcp.pop %v3865
        %v3898 = vrcp.pop %v3866
        %v3899 = vrcp.pop %v3867
        %v3900 = vrcp.pop %v3868
        %v3901 = vrcp.pop %v3869
        %v3902 = vrcp.pop %v3870
        %v3903 = vrcp.pop %v3871
        %v3904 = vrcp.pop %v3872
        %v3905 = vrcp.pop %v3873
        %v3906 = vrcp.pop %v3874
        %v3907 = vrcp.pop %v3875
        %v3908 = vrcp.pop %v3876
        %v3909 = vrcp.pop %v3877
        %v3910 = vrcp.pop %v3878
        %v3911 = vrcp.pop %v3879
        %v3912 = vrcp.pop %v3880
        %v3913 = vrcp.pop %v3881
        %v3914 = vrcp.pop %v3882
        %v3915 = vrcp.pop %v3883
        %v3916 = vrcp.pop %v3884
        %v3917 = vrcp.pop %v3885
        %v3918 = vrcp.pop %v3886
        %v3919 = vrcp.pop %v3887
        %v3920 = vmul.f32 %v3728, %v3888
        %v3921 = vmul.f32 %v3729, %v3889
        %v3922 = vmul.f32 %v3730, %v3890
        %v3923 = vmul.f32 %v3731, %v3891
        %v3924 = vmul.f32 %v3732, %v3892
        %v3925 = vmul.f32 %v3733, %v3893
        %v3926 = vmul.f32 %v3734, %v3894
        %v3927 = vmul.f32 %v3735, %v3895
        %v3928 = vmul.f32 %v3736, %v3896
        %v3929 = vmul.f32 %v3737, %v3897
        %v3930 = vmul.f32 %v3738, %v3898
        %v3931 = vmul.f32 %v3739, %v3899
        %v3932 = vmul.f32 %v3740, %v3900
        %v3933 = vmul.f32 %v3741, %v3901
        %v3934 = vmul.f32 %v3742, %v3902
        %v3935 = vmul.f32 %v3743, %v3903
        %v3936 = vmul.f32 %v3744, %v3904
        %v3937 = vmul.f32 %v3745, %v3905
        %v3938 = vmul.f32 %v3746, %v3906
        %v3939 = vmul.f32 %v3747, %v3907
        %v3940 = vmul.f32 %v3748, %v3908
        %v3941 = vmul.f32 %v3749, %v3909
        %v3942 = vmul.f32 %v3750, %v3910
        %v3943 = vmul.f32 %v3751, %v3911
        %v3944 = vmul.f32 %v3752, %v3912
        %v3945 = vmul.f32 %v3753, %v3913
        %v3946 = vmul.f32 %v3754, %v3914
        %v3947 = vmul.f32 %v3755, %v3915
        %v3948 = vmul.f32 %v3756, %v3916
        %v3949 = vmul.f32 %v3757, %v3917
        %v3950 = vmul.f32 %v3758, %v3918
        %v3951 = vmul.f32 %v3759, %v3919
        %3952 = vst.msk [vmem:[%s1070 + $0x8] sm:$0xff] %vm364, %v3920
        %3953 = vst.msk [vmem:[%s1070 + $0x10] sm:$0xff] %vm364, %v3921
        %3954 = vst.msk [vmem:[%s1070 + $0x28] sm:$0xff] %vm364, %v3922
        %3955 = vst.msk [vmem:[%s1070 + $0x30] sm:$0xff] %vm364, %v3923
        %3956 = vst.msk [vmem:[%s1070 + $0x48] sm:$0xff] %vm364, %v3924
        %3957 = vst.msk [vmem:[%s1070 + $0x50] sm:$0xff] %vm364, %v3925
        %3958 = vst.msk [vmem:[%s1070 + $0x68] sm:$0xff] %vm364, %v3926
        %3959 = vst.msk [vmem:[%s1070 + $0x70] sm:$0xff] %vm364, %v3927
        %3960 = vst.msk [vmem:[%s1070 + $0x88] sm:$0xff] %vm364, %v3928
        %3961 = vst.msk [vmem:[%s1070 + $0x90] sm:$0xff] %vm364, %v3929
        %3962 = vst.msk [vmem:[%s1070 + $0xa8] sm:$0xff] %vm364, %v3930
        %3963 = vst.msk [vmem:[%s1070 + $0xb0] sm:$0xff] %vm364, %v3931
        %3964 = vst.msk [vmem:[%s1070 + $0xc8] sm:$0xff] %vm364, %v3932
        %3965 = vst.msk [vmem:[%s1070 + $0xd0] sm:$0xff] %vm364, %v3933
        %3966 = vst.msk [vmem:[%s1070 + $0xe8] sm:$0xff] %vm364, %v3934
        %3967 = vst.msk [vmem:[%s1070 + $0xf0] sm:$0xff] %vm364, %v3935
        %3968 = vst.msk [vmem:[%s1070 + $0x108] sm:$0xff] %vm364, %v3936
        %3969 = vst.msk [vmem:[%s1070 + $0x110] sm:$0xff] %vm364, %v3937
        %3970 = vst.msk [vmem:[%s1070 + $0x128] sm:$0xff] %vm364, %v3938
        %3971 = vst.msk [vmem:[%s1070 + $0x130] sm:$0xff] %vm364, %v3939
        %3972 = vst.msk [vmem:[%s1070 + $0x148] sm:$0xff] %vm364, %v3940
        %3973 = vst.msk [vmem:[%s1070 + $0x150] sm:$0xff] %vm364, %v3941
        %3974 = vst.msk [vmem:[%s1070 + $0x168] sm:$0xff] %vm364, %v3942
        %3975 = vst.msk [vmem:[%s1070 + $0x170] sm:$0xff] %vm364, %v3943
        %3976 = vst.msk [vmem:[%s1070 + $0x188] sm:$0xff] %vm364, %v3944
        %3977 = vst.msk [vmem:[%s1070 + $0x190] sm:$0xff] %vm364, %v3945
        %3978 = vst.msk [vmem:[%s1070 + $0x1a8] sm:$0xff] %vm364, %v3946
        %3979 = vst.msk [vmem:[%s1070 + $0x1b0] sm:$0xff] %vm364, %v3947
        %3980 = vst.msk [vmem:[%s1070 + $0x1c8] sm:$0xff] %vm364, %v3948
        %3981 = vst.msk [vmem:[%s1070 + $0x1d0] sm:$0xff] %vm364, %v3949
        %3982 = vst.msk [vmem:[%s1070 + $0x1e8] sm:$0xff] %vm364, %v3950
        %3983 = vst.msk [vmem:[%s1070 + $0x1f0] sm:$0xff] %vm364, %v3951
        %v3984 = vld [vmem:[#allocation2 + $0x7] sm:$0xff]
        %v3985 = vld [vmem:[#allocation2 + $0xf] sm:$0xff]
        %v3986 = vld [vmem:[#allocation2 + $0x27] sm:$0xff]
        %v3987 = vld [vmem:[#allocation2 + $0x2f] sm:$0xff]
        %v3988 = vld [vmem:[#allocation2 + $0x47] sm:$0xff]
        %v3989 = vld [vmem:[#allocation2 + $0x4f] sm:$0xff]
        %v3990 = vld [vmem:[#allocation2 + $0x67] sm:$0xff]
        %v3991 = vld [vmem:[#allocation2 + $0x6f] sm:$0xff]
        %v3992 = vld [vmem:[#allocation2 + $0x87] sm:$0xff]
        %v3993 = vld [vmem:[#allocation2 + $0x8f] sm:$0xff]
        %v3994 = vld [vmem:[#allocation2 + $0xa7] sm:$0xff]
        %v3995 = vld [vmem:[#allocation2 + $0xaf] sm:$0xff]
        %v3996 = vld [vmem:[#allocation2 + $0xc7] sm:$0xff]
        %v3997 = vld [vmem:[#allocation2 + $0xcf] sm:$0xff]
        %v3998 = vld [vmem:[#allocation2 + $0xe7] sm:$0xff]
        %v3999 = vld [vmem:[#allocation2 + $0xef] sm:$0xff]
        %v4000 = vld [vmem:[#allocation2 + $0x107] sm:$0xff]
        %v4001 = vld [vmem:[#allocation2 + $0x10f] sm:$0xff]
        %v4002 = vld [vmem:[#allocation2 + $0x127] sm:$0xff]
        %v4003 = vld [vmem:[#allocation2 + $0x12f] sm:$0xff]
        %v4004 = vld [vmem:[#allocation2 + $0x147] sm:$0xff]
        %v4005 = vld [vmem:[#allocation2 + $0x14f] sm:$0xff]
        %v4006 = vld [vmem:[#allocation2 + $0x167] sm:$0xff]
        %v4007 = vld [vmem:[#allocation2 + $0x16f] sm:$0xff]
        %v4008 = vld [vmem:[#allocation2 + $0x187] sm:$0xff]
        %v4009 = vld [vmem:[#allocation2 + $0x18f] sm:$0xff]
        %v4010 = vld [vmem:[#allocation2 + $0x1a7] sm:$0xff]
        %v4011 = vld [vmem:[#allocation2 + $0x1af] sm:$0xff]
        %v4012 = vld [vmem:[#allocation2 + $0x1c7] sm:$0xff]
        %v4013 = vld [vmem:[#allocation2 + $0x1cf] sm:$0xff]
        %v4014 = vld [vmem:[#allocation2 + $0x1e7] sm:$0xff]
        %v4015 = vld [vmem:[#allocation2 + $0x1ef] sm:$0xff]
        %v4016 = vpack.c.bf16 %v3985, %v3984
        %v4017 = vpack.c.bf16 %v3987, %v3986
        %v4018 = vpack.c.bf16 %v3989, %v3988
        %v4019 = vpack.c.bf16 %v3991, %v3990
        %v4020 = vpack.c.bf16 %v3993, %v3992
        %v4021 = vpack.c.bf16 %v3995, %v3994
        %v4022 = vpack.c.bf16 %v3997, %v3996
        %v4023 = vpack.c.bf16 %v3999, %v3998
        %v4024 = vpack.c.bf16 %v4001, %v4000
        %v4025 = vpack.c.bf16 %v4003, %v4002
        %v4026 = vpack.c.bf16 %v4005, %v4004
        %v4027 = vpack.c.bf16 %v4007, %v4006
        %v4028 = vpack.c.bf16 %v4009, %v4008
        %v4029 = vpack.c.bf16 %v4011, %v4010
        %v4030 = vpack.c.bf16 %v4013, %v4012
        %v4031 = vpack.c.bf16 %v4015, %v4014
        %v4032 = vld [vmem:[%s5] sm:$0xf]
        %v4033 = vld [vmem:[%s5 + $0x4] sm:$0xf]
        %v4034 = vld [vmem:[#allocation2 + $0x8] sm:$0xff]
        %v4035 = vld [vmem:[#allocation2 + $0x10] sm:$0xff]
        %v4036 = vld [vmem:[#allocation2 + $0x28] sm:$0xff]
        %v4037 = vld [vmem:[#allocation2 + $0x30] sm:$0xff]
        %v4038 = vld [vmem:[#allocation2 + $0x48] sm:$0xff]
        %v4039 = vld [vmem:[#allocation2 + $0x50] sm:$0xff]
        %v4040 = vld [vmem:[#allocation2 + $0x68] sm:$0xff]
        %v4041 = vld [vmem:[#allocation2 + $0x70] sm:$0xff]
        %v4042 = vld [vmem:[#allocation2 + $0x88] sm:$0xff]
        %v4043 = vld [vmem:[#allocation2 + $0x90] sm:$0xff]
        %v4044 = vld [vmem:[#allocation2 + $0xa8] sm:$0xff]
        %v4045 = vld [vmem:[#allocation2 + $0xb0] sm:$0xff]
        %v4046 = vld [vmem:[#allocation2 + $0xc8] sm:$0xff]
        %v4047 = vld [vmem:[#allocation2 + $0xd0] sm:$0xff]
        %v4048 = vld [vmem:[#allocation2 + $0xe8] sm:$0xff]
        %v4049 = vld [vmem:[#allocation2 + $0xf0] sm:$0xff]
        %v4050 = vld [vmem:[#allocation2 + $0x108] sm:$0xff]
        %v4051 = vld [vmem:[#allocation2 + $0x110] sm:$0xff]
        %v4052 = vld [vmem:[#allocation2 + $0x128] sm:$0xff]
        %v4053 = vld [vmem:[#allocation2 + $0x130] sm:$0xff]
        %v4054 = vld [vmem:[#allocation2 + $0x148] sm:$0xff]
        %v4055 = vld [vmem:[#allocation2 + $0x150] sm:$0xff]
        %v4056 = vld [vmem:[#allocation2 + $0x168] sm:$0xff]
        %v4057 = vld [vmem:[#allocation2 + $0x170] sm:$0xff]
        %v4058 = vld [vmem:[#allocation2 + $0x188] sm:$0xff]
        %v4059 = vld [vmem:[#allocation2 + $0x190] sm:$0xff]
        %v4060 = vld [vmem:[#allocation2 + $0x1a8] sm:$0xff]
        %v4061 = vld [vmem:[#allocation2 + $0x1b0] sm:$0xff]
        %v4062 = vld [vmem:[#allocation2 + $0x1c8] sm:$0xff]
        %v4063 = vld [vmem:[#allocation2 + $0x1d0] sm:$0xff]
        %v4064 = vld [vmem:[#allocation2 + $0x1e8] sm:$0xff]
        %v4065 = vld [vmem:[#allocation2 + $0x1f0] sm:$0xff]
        %v4066 = vpack.c.bf16 %v4035, %v4034
        %v4067 = vpack.c.bf16 %v4037, %v4036
        %v4068 = vpack.c.bf16 %v4039, %v4038
        %v4069 = vpack.c.bf16 %v4041, %v4040
        %v4070 = vpack.c.bf16 %v4043, %v4042
        %v4071 = vpack.c.bf16 %v4045, %v4044
        %v4072 = vpack.c.bf16 %v4047, %v4046
        %v4073 = vpack.c.bf16 %v4049, %v4048
        %v4074 = vpack.c.bf16 %v4051, %v4050
        %v4075 = vpack.c.bf16 %v4053, %v4052
        %v4076 = vpack.c.bf16 %v4055, %v4054
        %v4077 = vpack.c.bf16 %v4057, %v4056
        %v4078 = vpack.c.bf16 %v4059, %v4058
        %v4079 = vpack.c.bf16 %v4061, %v4060
        %v4080 = vpack.c.bf16 %v4063, %v4062
        %v4081 = vpack.c.bf16 %v4065, %v4064
        %s4082 = scalar_lea.vmem %s5, 8
        %v4083 = vld [vmem:[%s4082] sm:$0xf]
        %v4084 = vld [vmem:[%s4082 + $0x4] sm:$0xf]
        %v4087 = vunpack.c.l.b16 %v4083
        %v4088 = vunpack.c.l.b16 %v4084
        %v4089 = vpack.c.b16 %v4088, %v4087
        %v4092 = vsel %vm364, %v4066, 0
        %v4095 = vsel %vm364, %v4067, 0
        %v4098 = vsel %vm364, %v4068, 0
        %v4101 = vsel %vm364, %v4069, 0
        %v4104 = vsel %vm364, %v4070, 0
        %v4107 = vsel %vm364, %v4071, 0
        %v4110 = vsel %vm364, %v4072, 0
        %v4113 = vsel %vm364, %v4073, 0
        %v4116 = vsel %vm364, %v4074, 0
        %v4119 = vsel %vm364, %v4075, 0
        %v4122 = vsel %vm364, %v4076, 0
        %v4125 = vsel %vm364, %v4077, 0
        %v4128 = vsel %vm364, %v4078, 0
        %v4131 = vsel %vm364, %v4079, 0
        %v4134 = vsel %vm364, %v4080, 0
        %v4137 = vsel %vm364, %v4081, 0
        %4139 = vmatprep.subr.bf16.mxu0 0
        %4140 = vmatpush1.bf16.msra.mxu0 %v4089
        %4141 = vmatprep.subr.bf16.mxu0 0
        %4142 = vmatpush1.bf16.msra.mxu0 0
        %4143 = vmatprep.subr.bf16.mxu0 0
        %4144 = vmatpush1.bf16.msra.mxu0 0
        %4145 = vmatprep.subr.bf16.mxu0 0
        %4146 = vmatpush1.bf16.msra.mxu0 0
        %4147 = vmatprep.subr.bf16.mxu0 0
        %4148 = vmatpush1.bf16.msra.mxu0 0
        %4149 = vmatprep.subr.bf16.mxu0 0
        %4150 = vmatpush1.bf16.msra.mxu0 0
        %4151 = vmatprep.subr.bf16.mxu0 0
        %4152 = vmatpush1.bf16.msra.mxu0 0
        %4153 = vmatprep.subr.bf16.mxu0 0
        %4154 = vmatpush1.bf16.msra.mxu0 0
        %4155 = vmatprep.subr.bf16.mxu0 0
        %4156 = vmatpush1.bf16.msra.mxu0 0
        %4157 = vmatprep.subr.bf16.mxu0 0
        %4158 = vmatpush1.bf16.msra.mxu0 0
        %4159 = vmatprep.subr.bf16.mxu0 0
        %4160 = vmatpush1.bf16.msra.mxu0 0
        %4161 = vmatprep.subr.bf16.mxu0 0
        %4162 = vmatpush1.bf16.msra.mxu0 0
        %4163 = vmatprep.subr.bf16.mxu0 0
        %4164 = vmatpush1.bf16.msra.mxu0 0
        %4165 = vmatprep.subr.bf16.mxu0 0
        %4166 = vmatpush1.bf16.msra.mxu0 0
        %4167 = vmatprep.subr.bf16.mxu0 0
        %4168 = vmatpush1.bf16.msra.mxu0 0
        %4169 = vmatprep.subr.bf16.mxu0 0
        %4170 = vmatpush1.bf16.msra.mxu0 0
        %4171 = vmatprep.mubr.bf16.mxu0 0
        %4172 = vmatmul.mubr.bf16.gmra.mrb[0].mxu0 %v4092
        %v4173 = vpop.f32.mrb[0].mxu0
        %v4174 = vadd.f32 0.0, %v4173
        %v4175 = vpop.f32.mrb[0].mxu0
        %v4176 = vpop.f32.mrb[0].mxu0
        %v4177 = vadd.f32 0.0, %v4176
        %v4178 = vpop.f32.mrb[0].mxu0
        %4179 = vmatprep.mubr.bf16.mxu0 0
        %4180 = vmatmul.mubr.bf16.gmra.mrb[0].mxu0 %v4095
        %v4181 = vpop.f32.mrb[0].mxu0
        %v4182 = vadd.f32 0.0, %v4181
        %v4183 = vpop.f32.mrb[0].mxu0
        %v4184 = vpop.f32.mrb[0].mxu0
        %v4185 = vadd.f32 0.0, %v4184
        %v4186 = vpop.f32.mrb[0].mxu0
        %4187 = vmatprep.mubr.bf16.mxu0 0
        %4188 = vmatmul.mubr.bf16.gmra.mrb[0].mxu0 %v4098
        %v4189 = vpop.f32.mrb[0].mxu0
        %v4190 = vadd.f32 0.0, %v4189
        %v4191 = vpop.f32.mrb[0].mxu0
        %v4192 = vpop.f32.mrb[0].mxu0
        %v4193 = vadd.f32 0.0, %v4192
        %v4194 = vpop.f32.mrb[0].mxu0
        %4195 = vmatprep.mubr.bf16.mxu0 0
        %4196 = vmatmul.mubr.bf16.gmra.mrb[0].mxu0 %v4101
        %v4197 = vpop.f32.mrb[0].mxu0
        %v4198 = vadd.f32 0.0, %v4197
        %v4199 = vpop.f32.mrb[0].mxu0
        %v4200 = vpop.f32.mrb[0].mxu0
        %v4201 = vadd.f32 0.0, %v4200
        %v4202 = vpop.f32.mrb[0].mxu0
        %4203 = vmatprep.mubr.bf16.mxu0 0
        %4204 = vmatmul.mubr.bf16.gmra.mrb[0].mxu0 %v4104
        %v4205 = vpop.f32.mrb[0].mxu0
        %v4206 = vadd.f32 0.0, %v4205
        %v4207 = vpop.f32.mrb[0].mxu0
        %v4208 = vpop.f32.mrb[0].mxu0
        %v4209 = vadd.f32 0.0, %v4208
        %v4210 = vpop.f32.mrb[0].mxu0
        %4211 = vmatprep.mubr.bf16.mxu0 0
        %4212 = vmatmul.mubr.bf16.gmra.mrb[0].mxu0 %v4107
        %v4213 = vpop.f32.mrb[0].mxu0
        %v4214 = vadd.f32 0.0, %v4213
        %v4215 = vpop.f32.mrb[0].mxu0
        %v4216 = vpop.f32.mrb[0].mxu0
        %v4217 = vadd.f32 0.0, %v4216
        %v4218 = vpop.f32.mrb[0].mxu0
        %4219 = vmatprep.mubr.bf16.mxu0 0
        %4220 = vmatmul.mubr.bf16.gmra.mrb[0].mxu0 %v4110
        %v4221 = vpop.f32.mrb[0].mxu0
        %v4222 = vadd.f32 0.0, %v4221
        %v4223 = vpop.f32.mrb[0].mxu0
        %v4224 = vpop.f32.mrb[0].mxu0
        %v4225 = vadd.f32 0.0, %v4224
        %v4226 = vpop.f32.mrb[0].mxu0
        %4227 = vmatprep.mubr.bf16.mxu0 0
        %4228 = vmatmul.mubr.bf16.gmra.mrb[0].mxu0 %v4113
        %v4229 = vpop.f32.mrb[0].mxu0
        %v4230 = vadd.f32 0.0, %v4229
        %v4231 = vpop.f32.mrb[0].mxu0
        %v4232 = vpop.f32.mrb[0].mxu0
        %v4233 = vadd.f32 0.0, %v4232
        %v4234 = vpop.f32.mrb[0].mxu0
        %4235 = vmatprep.mubr.bf16.mxu0 0
        %4236 = vmatmul.mubr.bf16.gmra.mrb[0].mxu0 %v4116
        %v4237 = vpop.f32.mrb[0].mxu0
        %v4238 = vadd.f32 0.0, %v4237
        %v4239 = vpop.f32.mrb[0].mxu0
        %v4240 = vpop.f32.mrb[0].mxu0
        %v4241 = vadd.f32 0.0, %v4240
        %v4242 = vpop.f32.mrb[0].mxu0
        %4243 = vmatprep.mubr.bf16.mxu0 0
        %4244 = vmatmul.mubr.bf16.gmra.mrb[0].mxu0 %v4119
        %v4245 = vpop.f32.mrb[0].mxu0
        %v4246 = vadd.f32 0.0, %v4245
        %v4247 = vpop.f32.mrb[0].mxu0
        %v4248 = vpop.f32.mrb[0].mxu0
        %v4249 = vadd.f32 0.0, %v4248
        %v4250 = vpop.f32.mrb[0].mxu0
        %4251 = vmatprep.mubr.bf16.mxu0 0
        %4252 = vmatmul.mubr.bf16.gmra.mrb[0].mxu0 %v4122
        %v4253 = vpop.f32.mrb[0].mxu0
        %v4254 = vadd.f32 0.0, %v4253
        %v4255 = vpop.f32.mrb[0].mxu0
        %v4256 = vpop.f32.mrb[0].mxu0
        %v4257 = vadd.f32 0.0, %v4256
        %v4258 = vpop.f32.mrb[0].mxu0
        %4259 = vmatprep.mubr.bf16.mxu0 0
        %4260 = vmatmul.mubr.bf16.gmra.mrb[0].mxu0 %v4125
        %v4261 = vpop.f32.mrb[0].mxu0
        %v4262 = vadd.f32 0.0, %v4261
        %v4263 = vpop.f32.mrb[0].mxu0
        %v4264 = vpop.f32.mrb[0].mxu0
        %v4265 = vadd.f32 0.0, %v4264
        %v4266 = vpop.f32.mrb[0].mxu0
        %4267 = vmatprep.mubr.bf16.mxu0 0
        %4268 = vmatmul.mubr.bf16.gmra.mrb[0].mxu0 %v4128
        %v4269 = vpop.f32.mrb[0].mxu0
        %v4270 = vadd.f32 0.0, %v4269
        %v4271 = vpop.f32.mrb[0].mxu0
        %v4272 = vpop.f32.mrb[0].mxu0
        %v4273 = vadd.f32 0.0, %v4272
        %v4274 = vpop.f32.mrb[0].mxu0
        %4275 = vmatprep.mubr.bf16.mxu0 0
        %4276 = vmatmul.mubr.bf16.gmra.mrb[0].mxu0 %v4131
        %v4277 = vpop.f32.mrb[0].mxu0
        %v4278 = vadd.f32 0.0, %v4277
        %v4279 = vpop.f32.mrb[0].mxu0
        %v4280 = vpop.f32.mrb[0].mxu0
        %v4281 = vadd.f32 0.0, %v4280
        %v4282 = vpop.f32.mrb[0].mxu0
        %4283 = vmatprep.mubr.bf16.mxu0 0
        %4284 = vmatmul.mubr.bf16.gmra.mrb[0].mxu0 %v4134
        %v4285 = vpop.f32.mrb[0].mxu0
        %v4286 = vadd.f32 0.0, %v4285
        %v4287 = vpop.f32.mrb[0].mxu0
        %v4288 = vpop.f32.mrb[0].mxu0
        %v4289 = vadd.f32 0.0, %v4288
        %v4290 = vpop.f32.mrb[0].mxu0
        %4291 = vmatprep.mubr.bf16.mxu0 0
        %4292 = vmatmul.mubr.bf16.gmra.mrb[0].mxu0 %v4137
        %v4293 = vpop.f32.mrb[0].mxu0
        %v4294 = vadd.f32 0.0, %v4293
        %v4295 = vpop.f32.mrb[0].mxu0
        %v4296 = vpop.f32.mrb[0].mxu0
        %v4297 = vadd.f32 0.0, %v4296
        %v4298 = vpop.f32.mrb[0].mxu0
        %4299 = vdwg.mxu0
        %v4302 = vunpack.c.l.b16 %v4032
        %v4303 = vunpack.c.l.b16 %v4033
        %v4304 = vpack.c.b16 %v4303, %v4302
        %v4307 = vsel %vm364, %v4016, 0
        %v4310 = vsel %vm364, %v4017, 0
        %v4313 = vsel %vm364, %v4018, 0
        %v4316 = vsel %vm364, %v4019, 0
        %v4319 = vsel %vm364, %v4020, 0
        %v4322 = vsel %vm364, %v4021, 0
        %v4325 = vsel %vm364, %v4022, 0
        %v4328 = vsel %vm364, %v4023, 0
        %v4331 = vsel %vm364, %v4024, 0
        %v4334 = vsel %vm364, %v4025, 0
        %v4337 = vsel %vm364, %v4026, 0
        %v4340 = vsel %vm364, %v4027, 0
        %v4343 = vsel %vm364, %v4028, 0
        %v4346 = vsel %vm364, %v4029, 0
        %v4349 = vsel %vm364, %v4030, 0
        %v4352 = vsel %vm364, %v4031, 0
        %4354 = vmatprep.subr.bf16.mxu0 0
        %4355 = vmatpush1.bf16.msra.mxu0 %v4304
        %4356 = vmatprep.subr.bf16.mxu0 0
        %4357 = vmatpush1.bf16.msra.mxu0 0
        %4358 = vmatprep.subr.bf16.mxu0 0
        %4359 = vmatpush1.bf16.msra.mxu0 0
        %4360 = vmatprep.subr.bf16.mxu0 0
        %4361 = vmatpush1.bf16.msra.mxu0 0
        %4362 = vmatprep.subr.bf16.mxu0 0
        %4363 = vmatpush1.bf16.msra.mxu0 0
        %4364 = vmatprep.subr.bf16.mxu0 0
        %4365 = vmatpush1.bf16.msra.mxu0 0
        %4366 = vmatprep.subr.bf16.mxu0 0
        %4367 = vmatpush1.bf16.msra.mxu0 0
        %4368 = vmatprep.subr.bf16.mxu0 0
        %4369 = vmatpush1.bf16.msra.mxu0 0
        %4370 = vmatprep.subr.bf16.mxu0 0
        %4371 = vmatpush1.bf16.msra.mxu0 0
        %4372 = vmatprep.subr.bf16.mxu0 0
        %4373 = vmatpush1.bf16.msra.mxu0 0
        %4374 = vmatprep.subr.bf16.mxu0 0
        %4375 = vmatpush1.bf16.msra.mxu0 0
        %4376 = vmatprep.subr.bf16.mxu0 0
        %4377 = vmatpush1.bf16.msra.mxu0 0
        %4378 = vmatprep.subr.bf16.mxu0 0
        %4379 = vmatpush1.bf16.msra.mxu0 0
        %4380 = vmatprep.subr.bf16.mxu0 0
        %4381 = vmatpush1.bf16.msra.mxu0 0
        %4382 = vmatprep.subr.bf16.mxu0 0
        %4383 = vmatpush1.bf16.msra.mxu0 0
        %4384 = vmatprep.subr.bf16.mxu0 0
        %4385 = vmatpush1.bf16.msra.mxu0 0
        %4386 = vmatprep.mubr.bf16.mxu0 0
        %4387 = vmatmul.mubr.bf16.gmra.mrb[0].mxu0 %v4307
        %v4388 = vpop.f32.mrb[0].mxu0
        %v4389 = vadd.f32 %v4174, %v4388
        %v4390 = vpop.f32.mrb[0].mxu0
        %v4391 = vpop.f32.mrb[0].mxu0
        %v4392 = vadd.f32 %v4177, %v4391
        %v4393 = vpop.f32.mrb[0].mxu0
        %4394 = vmatprep.mubr.bf16.mxu0 0
        %4395 = vmatmul.mubr.bf16.gmra.mrb[0].mxu0 %v4310
        %v4396 = vpop.f32.mrb[0].mxu0
        %v4397 = vadd.f32 %v4182, %v4396
        %v4398 = vpop.f32.mrb[0].mxu0
        %v4399 = vpop.f32.mrb[0].mxu0
        %v4400 = vadd.f32 %v4185, %v4399
        %v4401 = vpop.f32.mrb[0].mxu0
        %4402 = vmatprep.mubr.bf16.mxu0 0
        %4403 = vmatmul.mubr.bf16.gmra.mrb[0].mxu0 %v4313
        %v4404 = vpop.f32.mrb[0].mxu0
        %v4405 = vadd.f32 %v4190, %v4404
        %v4406 = vpop.f32.mrb[0].mxu0
        %v4407 = vpop.f32.mrb[0].mxu0
        %v4408 = vadd.f32 %v4193, %v4407
        %v4409 = vpop.f32.mrb[0].mxu0
        %4410 = vmatprep.mubr.bf16.mxu0 0
        %4411 = vmatmul.mubr.bf16.gmra.mrb[0].mxu0 %v4316
        %v4412 = vpop.f32.mrb[0].mxu0
        %v4413 = vadd.f32 %v4198, %v4412
        %v4414 = vpop.f32.mrb[0].mxu0
        %v4415 = vpop.f32.mrb[0].mxu0
        %v4416 = vadd.f32 %v4201, %v4415
        %v4417 = vpop.f32.mrb[0].mxu0
        %4418 = vmatprep.mubr.bf16.mxu0 0
        %4419 = vmatmul.mubr.bf16.gmra.mrb[0].mxu0 %v4319
        %v4420 = vpop.f32.mrb[0].mxu0
        %v4421 = vadd.f32 %v4206, %v4420
        %v4422 = vpop.f32.mrb[0].mxu0
        %v4423 = vpop.f32.mrb[0].mxu0
        %v4424 = vadd.f32 %v4209, %v4423
        %v4425 = vpop.f32.mrb[0].mxu0
        %4426 = vmatprep.mubr.bf16.mxu0 0
        %4427 = vmatmul.mubr.bf16.gmra.mrb[0].mxu0 %v4322
        %v4428 = vpop.f32.mrb[0].mxu0
        %v4429 = vadd.f32 %v4214, %v4428
        %v4430 = vpop.f32.mrb[0].mxu0
        %v4431 = vpop.f32.mrb[0].mxu0
        %v4432 = vadd.f32 %v4217, %v4431
        %v4433 = vpop.f32.mrb[0].mxu0
        %4434 = vmatprep.mubr.bf16.mxu0 0
        %4435 = vmatmul.mubr.bf16.gmra.mrb[0].mxu0 %v4325
        %v4436 = vpop.f32.mrb[0].mxu0
        %v4437 = vadd.f32 %v4222, %v4436
        %v4438 = vpop.f32.mrb[0].mxu0
        %v4439 = vpop.f32.mrb[0].mxu0
        %v4440 = vadd.f32 %v4225, %v4439
        %v4441 = vpop.f32.mrb[0].mxu0
        %4442 = vmatprep.mubr.bf16.mxu0 0
        %4443 = vmatmul.mubr.bf16.gmra.mrb[0].mxu0 %v4328
        %v4444 = vpop.f32.mrb[0].mxu0
        %v4445 = vadd.f32 %v4230, %v4444
        %v4446 = vpop.f32.mrb[0].mxu0
        %v4447 = vpop.f32.mrb[0].mxu0
        %v4448 = vadd.f32 %v4233, %v4447
        %v4449 = vpop.f32.mrb[0].mxu0
        %4450 = vmatprep.mubr.bf16.mxu0 0
        %4451 = vmatmul.mubr.bf16.gmra.mrb[0].mxu0 %v4331
        %v4452 = vpop.f32.mrb[0].mxu0
        %v4453 = vadd.f32 %v4238, %v4452
        %v4454 = vpop.f32.mrb[0].mxu0
        %v4455 = vpop.f32.mrb[0].mxu0
        %v4456 = vadd.f32 %v4241, %v4455
        %v4457 = vpop.f32.mrb[0].mxu0
        %4458 = vmatprep.mubr.bf16.mxu0 0
        %4459 = vmatmul.mubr.bf16.gmra.mrb[0].mxu0 %v4334
        %v4460 = vpop.f32.mrb[0].mxu0
        %v4461 = vadd.f32 %v4246, %v4460
        %v4462 = vpop.f32.mrb[0].mxu0
        %v4463 = vpop.f32.mrb[0].mxu0
        %v4464 = vadd.f32 %v4249, %v4463
        %v4465 = vpop.f32.mrb[0].mxu0
        %4466 = vmatprep.mubr.bf16.mxu0 0
        %4467 = vmatmul.mubr.bf16.gmra.mrb[0].mxu0 %v4337
        %v4468 = vpop.f32.mrb[0].mxu0
        %v4469 = vadd.f32 %v4254, %v4468
        %v4470 = vpop.f32.mrb[0].mxu0
        %v4471 = vpop.f32.mrb[0].mxu0
        %v4472 = vadd.f32 %v4257, %v4471
        %v4473 = vpop.f32.mrb[0].mxu0
        %4474 = vmatprep.mubr.bf16.mxu0 0
        %4475 = vmatmul.mubr.bf16.gmra.mrb[0].mxu0 %v4340
        %v4476 = vpop.f32.mrb[0].mxu0
        %v4477 = vadd.f32 %v4262, %v4476
        %v4478 = vpop.f32.mrb[0].mxu0
        %v4479 = vpop.f32.mrb[0].mxu0
        %v4480 = vadd.f32 %v4265, %v4479
        %v4481 = vpop.f32.mrb[0].mxu0
        %4482 = vmatprep.mubr.bf16.mxu0 0
        %4483 = vmatmul.mubr.bf16.gmra.mrb[0].mxu0 %v4343
        %v4484 = vpop.f32.mrb[0].mxu0
        %v4485 = vadd.f32 %v4270, %v4484
        %v4486 = vpop.f32.mrb[0].mxu0
        %v4487 = vpop.f32.mrb[0].mxu0
        %v4488 = vadd.f32 %v4273, %v4487
        %v4489 = vpop.f32.mrb[0].mxu0
        %4490 = vmatprep.mubr.bf16.mxu0 0
        %4491 = vmatmul.mubr.bf16.gmra.mrb[0].mxu0 %v4346
        %v4492 = vpop.f32.mrb[0].mxu0
        %v4493 = vadd.f32 %v4278, %v4492
        %v4494 = vpop.f32.mrb[0].mxu0
        %v4495 = vpop.f32.mrb[0].mxu0
        %v4496 = vadd.f32 %v4281, %v4495
        %v4497 = vpop.f32.mrb[0].mxu0
        %4498 = vmatprep.mubr.bf16.mxu0 0
        %4499 = vmatmul.mubr.bf16.gmra.mrb[0].mxu0 %v4349
        %v4500 = vpop.f32.mrb[0].mxu0
        %v4501 = vadd.f32 %v4286, %v4500
        %v4502 = vpop.f32.mrb[0].mxu0
        %v4503 = vpop.f32.mrb[0].mxu0
        %v4504 = vadd.f32 %v4289, %v4503
        %v4505 = vpop.f32.mrb[0].mxu0
        %4506 = vmatprep.mubr.bf16.mxu0 0
        %4507 = vmatmul.mubr.bf16.gmra.mrb[0].mxu0 %v4352
        %v4508 = vpop.f32.mrb[0].mxu0
        %v4509 = vadd.f32 %v4294, %v4508
        %v4510 = vpop.f32.mrb[0].mxu0
        %v4511 = vpop.f32.mrb[0].mxu0
        %v4512 = vadd.f32 %v4297, %v4511
        %v4513 = vpop.f32.mrb[0].mxu0
        %4514 = vdwg.mxu0
        %v4515 = vld [vmem:[#allocation2 + $0x9] sm:$0xff]
        %v4516 = vld [vmem:[#allocation2 + $0x11] sm:$0xff]
        %v4517 = vld [vmem:[#allocation2 + $0x29] sm:$0xff]
        %v4518 = vld [vmem:[#allocation2 + $0x31] sm:$0xff]
        %v4519 = vld [vmem:[#allocation2 + $0x49] sm:$0xff]
        %v4520 = vld [vmem:[#allocation2 + $0x51] sm:$0xff]
        %v4521 = vld [vmem:[#allocation2 + $0x69] sm:$0xff]
        %v4522 = vld [vmem:[#allocation2 + $0x71] sm:$0xff]
        %v4523 = vld [vmem:[#allocation2 + $0x89] sm:$0xff]
        %v4524 = vld [vmem:[#allocation2 + $0x91] sm:$0xff]
        %v4525 = vld [vmem:[#allocation2 + $0xa9] sm:$0xff]
        %v4526 = vld [vmem:[#allocation2 + $0xb1] sm:$0xff]
        %v4527 = vld [vmem:[#allocation2 + $0xc9] sm:$0xff]
        %v4528 = vld [vmem:[#allocation2 + $0xd1] sm:$0xff]
        %v4529 = vld [vmem:[#allocation2 + $0xe9] sm:$0xff]
        %v4530 = vld [vmem:[#allocation2 + $0xf1] sm:$0xff]
        %v4531 = vld [vmem:[#allocation2 + $0x109] sm:$0xff]
        %v4532 = vld [vmem:[#allocation2 + $0x111] sm:$0xff]
        %v4533 = vld [vmem:[#allocation2 + $0x129] sm:$0xff]
        %v4534 = vld [vmem:[#allocation2 + $0x131] sm:$0xff]
        %v4535 = vld [vmem:[#allocation2 + $0x149] sm:$0xff]
        %v4536 = vld [vmem:[#allocation2 + $0x151] sm:$0xff]
        %v4537 = vld [vmem:[#allocation2 + $0x169] sm:$0xff]
        %v4538 = vld [vmem:[#allocation2 + $0x171] sm:$0xff]
        %v4539 = vld [vmem:[#allocation2 + $0x189] sm:$0xff]
        %v4540 = vld [vmem:[#allocation2 + $0x191] sm:$0xff]
        %v4541 = vld [vmem:[#allocation2 + $0x1a9] sm:$0xff]
        %v4542 = vld [vmem:[#allocation2 + $0x1b1] sm:$0xff]
        %v4543 = vld [vmem:[#allocation2 + $0x1c9] sm:$0xff]
        %v4544 = vld [vmem:[#allocation2 + $0x1d1] sm:$0xff]
        %v4545 = vld [vmem:[#allocation2 + $0x1e9] sm:$0xff]
        %v4546 = vld [vmem:[#allocation2 + $0x1f1] sm:$0xff]
        %v4547 = vpack.c.bf16 %v4516, %v4515
        %v4548 = vpack.c.bf16 %v4518, %v4517
        %v4549 = vpack.c.bf16 %v4520, %v4519
        %v4550 = vpack.c.bf16 %v4522, %v4521
        %v4551 = vpack.c.bf16 %v4524, %v4523
        %v4552 = vpack.c.bf16 %v4526, %v4525
        %v4553 = vpack.c.bf16 %v4528, %v4527
        %v4554 = vpack.c.bf16 %v4530, %v4529
        %v4555 = vpack.c.bf16 %v4532, %v4531
        %v4556 = vpack.c.bf16 %v4534, %v4533
        %v4557 = vpack.c.bf16 %v4536, %v4535
        %v4558 = vpack.c.bf16 %v4538, %v4537
        %v4559 = vpack.c.bf16 %v4540, %v4539
        %v4560 = vpack.c.bf16 %v4542, %v4541
        %v4561 = vpack.c.bf16 %v4544, %v4543
        %v4562 = vpack.c.bf16 %v4546, %v4545
        %s4563 = scalar_lea.vmem %s5, 16
        %v4564 = vld [vmem:[%s4563] sm:$0xf]
        %v4565 = vld [vmem:[%s4563 + $0x4] sm:$0xf]
        %v4568 = vunpack.c.l.b16 %v4564
        %v4569 = vunpack.c.l.b16 %v4565
        %v4570 = vpack.c.b16 %v4569, %v4568
        %v4573 = vsel %vm364, %v4547, 0
        %v4576 = vsel %vm364, %v4548, 0
        %v4579 = vsel %vm364, %v4549, 0
        %v4582 = vsel %vm364, %v4550, 0
        %v4585 = vsel %vm364, %v4551, 0
        %v4588 = vsel %vm364, %v4552, 0
        %v4591 = vsel %vm364, %v4553, 0
        %v4594 = vsel %vm364, %v4554, 0
        %v4597 = vsel %vm364, %v4555, 0
        %v4600 = vsel %vm364, %v4556, 0
        %v4603 = vsel %vm364, %v4557, 0
        %v4606 = vsel %vm364, %v4558, 0
        %v4609 = vsel %vm364, %v4559, 0
        %v4612 = vsel %vm364, %v4560, 0
        %v4615 = vsel %vm364, %v4561, 0
        %v4618 = vsel %vm364, %v4562, 0
        %4620 = vmatprep.subr.bf16.mxu0 0
        %4621 = vmatpush1.bf16.msra.mxu0 %v4570
        %4622 = vmatprep.subr.bf16.mxu0 0
        %4623 = vmatpush1.bf16.msra.mxu0 0
        %4624 = vmatprep.subr.bf16.mxu0 0
        %4625 = vmatpush1.bf16.msra.mxu0 0
        %4626 = vmatprep.subr.bf16.mxu0 0
        %4627 = vmatpush1.bf16.msra.mxu0 0
        %4628 = vmatprep.subr.bf16.mxu0 0
        %4629 = vmatpush1.bf16.msra.mxu0 0
        %4630 = vmatprep.subr.bf16.mxu0 0
        %4631 = vmatpush1.bf16.msra.mxu0 0
        %4632 = vmatprep.subr.bf16.mxu0 0
        %4633 = vmatpush1.bf16.msra.mxu0 0
        %4634 = vmatprep.subr.bf16.mxu0 0
        %4635 = vmatpush1.bf16.msra.mxu0 0
        %4636 = vmatprep.subr.bf16.mxu0 0
        %4637 = vmatpush1.bf16.msra.mxu0 0
        %4638 = vmatprep.subr.bf16.mxu0 0
        %4639 = vmatpush1.bf16.msra.mxu0 0
        %4640 = vmatprep.subr.bf16.mxu0 0
        %4641 = vmatpush1.bf16.msra.mxu0 0
        %4642 = vmatprep.subr.bf16.mxu0 0
        %4643 = vmatpush1.bf16.msra.mxu0 0
        %4644 = vmatprep.subr.bf16.mxu0 0
        %4645 = vmatpush1.bf16.msra.mxu0 0
        %4646 = vmatprep.subr.bf16.mxu0 0
        %4647 = vmatpush1.bf16.msra.mxu0 0
        %4648 = vmatprep.subr.bf16.mxu0 0
        %4649 = vmatpush1.bf16.msra.mxu0 0
        %4650 = vmatprep.subr.bf16.mxu0 0
        %4651 = vmatpush1.bf16.msra.mxu0 0
        %4652 = vmatprep.mubr.bf16.mxu0 0
        %4653 = vmatmul.mubr.bf16.gmra.mrb[0].mxu0 %v4573
        %v4654 = vpop.f32.mrb[0].mxu0
        %v4655 = vadd.f32 0.0, %v4654
        %v4656 = vpop.f32.mrb[0].mxu0
        %v4657 = vpop.f32.mrb[0].mxu0
        %v4658 = vadd.f32 0.0, %v4657
        %v4659 = vpop.f32.mrb[0].mxu0
        %4660 = vmatprep.mubr.bf16.mxu0 0
        %4661 = vmatmul.mubr.bf16.gmra.mrb[0].mxu0 %v4576
        %v4662 = vpop.f32.mrb[0].mxu0
        %v4663 = vadd.f32 0.0, %v4662
        %v4664 = vpop.f32.mrb[0].mxu0
        %v4665 = vpop.f32.mrb[0].mxu0
        %v4666 = vadd.f32 0.0, %v4665
        %v4667 = vpop.f32.mrb[0].mxu0
        %4668 = vmatprep.mubr.bf16.mxu0 0
        %4669 = vmatmul.mubr.bf16.gmra.mrb[0].mxu0 %v4579
        %v4670 = vpop.f32.mrb[0].mxu0
        %v4671 = vadd.f32 0.0, %v4670
        %v4672 = vpop.f32.mrb[0].mxu0
        %v4673 = vpop.f32.mrb[0].mxu0
        %v4674 = vadd.f32 0.0, %v4673
        %v4675 = vpop.f32.mrb[0].mxu0
        %4676 = vmatprep.mubr.bf16.mxu0 0
        %4677 = vmatmul.mubr.bf16.gmra.mrb[0].mxu0 %v4582
        %v4678 = vpop.f32.mrb[0].mxu0
        %v4679 = vadd.f32 0.0, %v4678
        %v4680 = vpop.f32.mrb[0].mxu0
        %v4681 = vpop.f32.mrb[0].mxu0
        %v4682 = vadd.f32 0.0, %v4681
        %v4683 = vpop.f32.mrb[0].mxu0
        %4684 = vmatprep.mubr.bf16.mxu0 0
        %4685 = vmatmul.mubr.bf16.gmra.mrb[0].mxu0 %v4585
        %v4686 = vpop.f32.mrb[0].mxu0
        %v4687 = vadd.f32 0.0, %v4686
        %v4688 = vpop.f32.mrb[0].mxu0
        %v4689 = vpop.f32.mrb[0].mxu0
        %v4690 = vadd.f32 0.0, %v4689
        %v4691 = vpop.f32.mrb[0].mxu0
        %4692 = vmatprep.mubr.bf16.mxu0 0
        %4693 = vmatmul.mubr.bf16.gmra.mrb[0].mxu0 %v4588
        %v4694 = vpop.f32.mrb[0].mxu0
        %v4695 = vadd.f32 0.0, %v4694
        %v4696 = vpop.f32.mrb[0].mxu0
        %v4697 = vpop.f32.mrb[0].mxu0
        %v4698 = vadd.f32 0.0, %v4697
        %v4699 = vpop.f32.mrb[0].mxu0
        %4700 = vmatprep.mubr.bf16.mxu0 0
        %4701 = vmatmul.mubr.bf16.gmra.mrb[0].mxu0 %v4591
        %v4702 = vpop.f32.mrb[0].mxu0
        %v4703 = vadd.f32 0.0, %v4702
        %v4704 = vpop.f32.mrb[0].mxu0
        %v4705 = vpop.f32.mrb[0].mxu0
        %v4706 = vadd.f32 0.0, %v4705
        %v4707 = vpop.f32.mrb[0].mxu0
        %4708 = vmatprep.mubr.bf16.mxu0 0
        %4709 = vmatmul.mubr.bf16.gmra.mrb[0].mxu0 %v4594
        %v4710 = vpop.f32.mrb[0].mxu0
        %v4711 = vadd.f32 0.0, %v4710
        %v4712 = vpop.f32.mrb[0].mxu0
        %v4713 = vpop.f32.mrb[0].mxu0
        %v4714 = vadd.f32 0.0, %v4713
        %v4715 = vpop.f32.mrb[0].mxu0
        %4716 = vmatprep.mubr.bf16.mxu0 0
        %4717 = vmatmul.mubr.bf16.gmra.mrb[0].mxu0 %v4597
        %v4718 = vpop.f32.mrb[0].mxu0
        %v4719 = vadd.f32 0.0, %v4718
        %v4720 = vpop.f32.mrb[0].mxu0
        %v4721 = vpop.f32.mrb[0].mxu0
        %v4722 = vadd.f32 0.0, %v4721
        %v4723 = vpop.f32.mrb[0].mxu0
        %4724 = vmatprep.mubr.bf16.mxu0 0
        %4725 = vmatmul.mubr.bf16.gmra.mrb[0].mxu0 %v4600
        %v4726 = vpop.f32.mrb[0].mxu0
        %v4727 = vadd.f32 0.0, %v4726
        %v4728 = vpop.f32.mrb[0].mxu0
        %v4729 = vpop.f32.mrb[0].mxu0
        %v4730 = vadd.f32 0.0, %v4729
        %v4731 = vpop.f32.mrb[0].mxu0
        %4732 = vmatprep.mubr.bf16.mxu0 0
        %4733 = vmatmul.mubr.bf16.gmra.mrb[0].mxu0 %v4603
        %v4734 = vpop.f32.mrb[0].mxu0
        %v4735 = vadd.f32 0.0, %v4734
        %v4736 = vpop.f32.mrb[0].mxu0
        %v4737 = vpop.f32.mrb[0].mxu0
        %v4738 = vadd.f32 0.0, %v4737
        %v4739 = vpop.f32.mrb[0].mxu0
        %4740 = vmatprep.mubr.bf16.mxu0 0
        %4741 = vmatmul.mubr.bf16.gmra.mrb[0].mxu0 %v4606
        %v4742 = vpop.f32.mrb[0].mxu0
        %v4743 = vadd.f32 0.0, %v4742
        %v4744 = vpop.f32.mrb[0].mxu0
        %v4745 = vpop.f32.mrb[0].mxu0
        %v4746 = vadd.f32 0.0, %v4745
        %v4747 = vpop.f32.mrb[0].mxu0
        %4748 = vmatprep.mubr.bf16.mxu0 0
        %4749 = vmatmul.mubr.bf16.gmra.mrb[0].mxu0 %v4609
        %v4750 = vpop.f32.mrb[0].mxu0
        %v4751 = vadd.f32 0.0, %v4750
        %v4752 = vpop.f32.mrb[0].mxu0
        %v4753 = vpop.f32.mrb[0].mxu0
        %v4754 = vadd.f32 0.0, %v4753
        %v4755 = vpop.f32.mrb[0].mxu0
        %4756 = vmatprep.mubr.bf16.mxu0 0
        %4757 = vmatmul.mubr.bf16.gmra.mrb[0].mxu0 %v4612
        %v4758 = vpop.f32.mrb[0].mxu0
        %v4759 = vadd.f32 0.0, %v4758
        %v4760 = vpop.f32.mrb[0].mxu0
        %v4761 = vpop.f32.mrb[0].mxu0
        %v4762 = vadd.f32 0.0, %v4761
        %v4763 = vpop.f32.mrb[0].mxu0
        %4764 = vmatprep.mubr.bf16.mxu0 0
        %4765 = vmatmul.mubr.bf16.gmra.mrb[0].mxu0 %v4615
        %v4766 = vpop.f32.mrb[0].mxu0
        %v4767 = vadd.f32 0.0, %v4766
        %v4768 = vpop.f32.mrb[0].mxu0
        %v4769 = vpop.f32.mrb[0].mxu0
        %v4770 = vadd.f32 0.0, %v4769
        %v4771 = vpop.f32.mrb[0].mxu0
        %4772 = vmatprep.mubr.bf16.mxu0 0
        %4773 = vmatmul.mubr.bf16.gmra.mrb[0].mxu0 %v4618
        %v4774 = vpop.f32.mrb[0].mxu0
        %v4775 = vadd.f32 0.0, %v4774
        %v4776 = vpop.f32.mrb[0].mxu0
        %v4777 = vpop.f32.mrb[0].mxu0
        %v4778 = vadd.f32 0.0, %v4777
        %v4779 = vpop.f32.mrb[0].mxu0
        %4780 = vdwg.mxu0
        %v4781 = vadd.f32 %v4389, %v4655
        %v4782 = vadd.f32 %v4392, %v4658
        %v4783 = vadd.f32 %v4397, %v4663
        %v4784 = vadd.f32 %v4400, %v4666
        %v4785 = vadd.f32 %v4405, %v4671
        %v4786 = vadd.f32 %v4408, %v4674
        %v4787 = vadd.f32 %v4413, %v4679
        %v4788 = vadd.f32 %v4416, %v4682
        %v4789 = vadd.f32 %v4421, %v4687
        %v4790 = vadd.f32 %v4424, %v4690
        %v4791 = vadd.f32 %v4429, %v4695
        %v4792 = vadd.f32 %v4432, %v4698
        %v4793 = vadd.f32 %v4437, %v4703
        %v4794 = vadd.f32 %v4440, %v4706
        %v4795 = vadd.f32 %v4445, %v4711
        %v4796 = vadd.f32 %v4448, %v4714
        %v4797 = vadd.f32 %v4453, %v4719
        %v4798 = vadd.f32 %v4456, %v4722
        %v4799 = vadd.f32 %v4461, %v4727
        %v4800 = vadd.f32 %v4464, %v4730
        %v4801 = vadd.f32 %v4469, %v4735
        %v4802 = vadd.f32 %v4472, %v4738
        %v4803 = vadd.f32 %v4477, %v4743
        %v4804 = vadd.f32 %v4480, %v4746
        %v4805 = vadd.f32 %v4485, %v4751
        %v4806 = vadd.f32 %v4488, %v4754
        %v4807 = vadd.f32 %v4493, %v4759
        %v4808 = vadd.f32 %v4496, %v4762
        %v4809 = vadd.f32 %v4501, %v4767
        %v4810 = vadd.f32 %v4504, %v4770
        %v4811 = vadd.f32 %v4509, %v4775
        %v4812 = vadd.f32 %v4512, %v4778
        %v4813 = vld [vmem:[%s1070 + $0x7] sm:$0xff]
        %v4814 = vld [vmem:[%s1070 + $0xf] sm:$0xff]
        %v4815 = vld [vmem:[%s1070 + $0x27] sm:$0xff]
        %v4816 = vld [vmem:[%s1070 + $0x2f] sm:$0xff]
        %v4817 = vld [vmem:[%s1070 + $0x47] sm:$0xff]
        %v4818 = vld [vmem:[%s1070 + $0x4f] sm:$0xff]
        %v4819 = vld [vmem:[%s1070 + $0x67] sm:$0xff]
        %v4820 = vld [vmem:[%s1070 + $0x6f] sm:$0xff]
        %v4821 = vld [vmem:[%s1070 + $0x87] sm:$0xff]
        %v4822 = vld [vmem:[%s1070 + $0x8f] sm:$0xff]
        %v4823 = vld [vmem:[%s1070 + $0xa7] sm:$0xff]
        %v4824 = vld [vmem:[%s1070 + $0xaf] sm:$0xff]
        %v4825 = vld [vmem:[%s1070 + $0xc7] sm:$0xff]
        %v4826 = vld [vmem:[%s1070 + $0xcf] sm:$0xff]
        %v4827 = vld [vmem:[%s1070 + $0xe7] sm:$0xff]
        %v4828 = vld [vmem:[%s1070 + $0xef] sm:$0xff]
        %v4829 = vld [vmem:[%s1070 + $0x107] sm:$0xff]
        %v4830 = vld [vmem:[%s1070 + $0x10f] sm:$0xff]
        %v4831 = vld [vmem:[%s1070 + $0x127] sm:$0xff]
        %v4832 = vld [vmem:[%s1070 + $0x12f] sm:$0xff]
        %v4833 = vld [vmem:[%s1070 + $0x147] sm:$0xff]
        %v4834 = vld [vmem:[%s1070 + $0x14f] sm:$0xff]
        %v4835 = vld [vmem:[%s1070 + $0x167] sm:$0xff]
        %v4836 = vld [vmem:[%s1070 + $0x16f] sm:$0xff]
        %v4837 = vld [vmem:[%s1070 + $0x187] sm:$0xff]
        %v4838 = vld [vmem:[%s1070 + $0x18f] sm:$0xff]
        %v4839 = vld [vmem:[%s1070 + $0x1a7] sm:$0xff]
        %v4840 = vld [vmem:[%s1070 + $0x1af] sm:$0xff]
        %v4841 = vld [vmem:[%s1070 + $0x1c7] sm:$0xff]
        %v4842 = vld [vmem:[%s1070 + $0x1cf] sm:$0xff]
        %v4843 = vld [vmem:[%s1070 + $0x1e7] sm:$0xff]
        %v4844 = vld [vmem:[%s1070 + $0x1ef] sm:$0xff]
        %v4845 = vpack.c.bf16 %v4814, %v4813
        %v4846 = vpack.c.bf16 %v4816, %v4815
        %v4847 = vpack.c.bf16 %v4818, %v4817
        %v4848 = vpack.c.bf16 %v4820, %v4819
        %v4849 = vpack.c.bf16 %v4822, %v4821
        %v4850 = vpack.c.bf16 %v4824, %v4823
        %v4851 = vpack.c.bf16 %v4826, %v4825
        %v4852 = vpack.c.bf16 %v4828, %v4827
        %v4853 = vpack.c.bf16 %v4830, %v4829
        %v4854 = vpack.c.bf16 %v4832, %v4831
        %v4855 = vpack.c.bf16 %v4834, %v4833
        %v4856 = vpack.c.bf16 %v4836, %v4835
        %v4857 = vpack.c.bf16 %v4838, %v4837
        %v4858 = vpack.c.bf16 %v4840, %v4839
        %v4859 = vpack.c.bf16 %v4842, %v4841
        %v4860 = vpack.c.bf16 %v4844, %v4843
        %s4861 = scalar_lea.vmem %s5, 24
        %v4862 = vld [vmem:[%s4861] sm:$0xf]
        %v4863 = vld [vmem:[%s4861 + $0x4] sm:$0xf]
        %v4866 = vunpack.c.l.b16 %v4862
        %v4867 = vunpack.c.l.b16 %v4863
        %v4868 = vpack.c.b16 %v4867, %v4866
        %v4871 = vsel %vm364, %v4845, 0
        %v4874 = vsel %vm364, %v4846, 0
        %v4877 = vsel %vm364, %v4847, 0
        %v4880 = vsel %vm364, %v4848, 0
        %v4883 = vsel %vm364, %v4849, 0
        %v4886 = vsel %vm364, %v4850, 0
        %v4889 = vsel %vm364, %v4851, 0
        %v4892 = vsel %vm364, %v4852, 0
        %v4895 = vsel %vm364, %v4853, 0
        %v4898 = vsel %vm364, %v4854, 0
        %v4901 = vsel %vm364, %v4855, 0
        %v4904 = vsel %vm364, %v4856, 0
        %v4907 = vsel %vm364, %v4857, 0
        %v4910 = vsel %vm364, %v4858, 0
        %v4913 = vsel %vm364, %v4859, 0
        %v4916 = vsel %vm364, %v4860, 0
        %4918 = vmatprep.subr.bf16.mxu0 0
        %4919 = vmatpush1.bf16.msra.mxu0 %v4868
        %4920 = vmatprep.subr.bf16.mxu0 0
        %4921 = vmatpush1.bf16.msra.mxu0 0
        %4922 = vmatprep.subr.bf16.mxu0 0
        %4923 = vmatpush1.bf16.msra.mxu0 0
        %4924 = vmatprep.subr.bf16.mxu0 0
        %4925 = vmatpush1.bf16.msra.mxu0 0
        %4926 = vmatprep.subr.bf16.mxu0 0
        %4927 = vmatpush1.bf16.msra.mxu0 0
        %4928 = vmatprep.subr.bf16.mxu0 0
        %4929 = vmatpush1.bf16.msra.mxu0 0
        %4930 = vmatprep.subr.bf16.mxu0 0
        %4931 = vmatpush1.bf16.msra.mxu0 0
        %4932 = vmatprep.subr.bf16.mxu0 0
        %4933 = vmatpush1.bf16.msra.mxu0 0
        %4934 = vmatprep.subr.bf16.mxu0 0
        %4935 = vmatpush1.bf16.msra.mxu0 0
        %4936 = vmatprep.subr.bf16.mxu0 0
        %4937 = vmatpush1.bf16.msra.mxu0 0
        %4938 = vmatprep.subr.bf16.mxu0 0
        %4939 = vmatpush1.bf16.msra.mxu0 0
        %4940 = vmatprep.subr.bf16.mxu0 0
        %4941 = vmatpush1.bf16.msra.mxu0 0
        %4942 = vmatprep.subr.bf16.mxu0 0
        %4943 = vmatpush1.bf16.msra.mxu0 0
        %4944 = vmatprep.subr.bf16.mxu0 0
        %4945 = vmatpush1.bf16.msra.mxu0 0
        %4946 = vmatprep.subr.bf16.mxu0 0
        %4947 = vmatpush1.bf16.msra.mxu0 0
        %4948 = vmatprep.subr.bf16.mxu0 0
        %4949 = vmatpush1.bf16.msra.mxu0 0
        %4950 = vmatprep.mubr.bf16.mxu0 0
        %4951 = vmatmul.mubr.bf16.gmra.mrb[0].mxu0 %v4871
        %v4952 = vpop.f32.mrb[0].mxu0
        %v4953 = vadd.f32 0.0, %v4952
        %v4954 = vpop.f32.mrb[0].mxu0
        %v4955 = vpop.f32.mrb[0].mxu0
        %v4956 = vadd.f32 0.0, %v4955
        %v4957 = vpop.f32.mrb[0].mxu0
        %4958 = vmatprep.mubr.bf16.mxu0 0
        %4959 = vmatmul.mubr.bf16.gmra.mrb[0].mxu0 %v4874
        %v4960 = vpop.f32.mrb[0].mxu0
        %v4961 = vadd.f32 0.0, %v4960
        %v4962 = vpop.f32.mrb[0].mxu0
        %v4963 = vpop.f32.mrb[0].mxu0
        %v4964 = vadd.f32 0.0, %v4963
        %v4965 = vpop.f32.mrb[0].mxu0
        %4966 = vmatprep.mubr.bf16.mxu0 0
        %4967 = vmatmul.mubr.bf16.gmra.mrb[0].mxu0 %v4877
        %v4968 = vpop.f32.mrb[0].mxu0
        %v4969 = vadd.f32 0.0, %v4968
        %v4970 = vpop.f32.mrb[0].mxu0
        %v4971 = vpop.f32.mrb[0].mxu0
        %v4972 = vadd.f32 0.0, %v4971
        %v4973 = vpop.f32.mrb[0].mxu0
        %4974 = vmatprep.mubr.bf16.mxu0 0
        %4975 = vmatmul.mubr.bf16.gmra.mrb[0].mxu0 %v4880
        %v4976 = vpop.f32.mrb[0].mxu0
        %v4977 = vadd.f32 0.0, %v4976
        %v4978 = vpop.f32.mrb[0].mxu0
        %v4979 = vpop.f32.mrb[0].mxu0
        %v4980 = vadd.f32 0.0, %v4979
        %v4981 = vpop.f32.mrb[0].mxu0
        %4982 = vmatprep.mubr.bf16.mxu0 0
        %4983 = vmatmul.mubr.bf16.gmra.mrb[0].mxu0 %v4883
        %v4984 = vpop.f32.mrb[0].mxu0
        %v4985 = vadd.f32 0.0, %v4984
        %v4986 = vpop.f32.mrb[0].mxu0
        %v4987 = vpop.f32.mrb[0].mxu0
        %v4988 = vadd.f32 0.0, %v4987
        %v4989 = vpop.f32.mrb[0].mxu0
        %4990 = vmatprep.mubr.bf16.mxu0 0
        %4991 = vmatmul.mubr.bf16.gmra.mrb[0].mxu0 %v4886
        %v4992 = vpop.f32.mrb[0].mxu0
        %v4993 = vadd.f32 0.0, %v4992
        %v4994 = vpop.f32.mrb[0].mxu0
        %v4995 = vpop.f32.mrb[0].mxu0
        %v4996 = vadd.f32 0.0, %v4995
        %v4997 = vpop.f32.mrb[0].mxu0
        %4998 = vmatprep.mubr.bf16.mxu0 0
        %4999 = vmatmul.mubr.bf16.gmra.mrb[0].mxu0 %v4889
        %v5000 = vpop.f32.mrb[0].mxu0
        %v5001 = vadd.f32 0.0, %v5000
        %v5002 = vpop.f32.mrb[0].mxu0
        %v5003 = vpop.f32.mrb[0].mxu0
        %v5004 = vadd.f32 0.0, %v5003
        %v5005 = vpop.f32.mrb[0].mxu0
        %5006 = vmatprep.mubr.bf16.mxu0 0
        %5007 = vmatmul.mubr.bf16.gmra.mrb[0].mxu0 %v4892
        %v5008 = vpop.f32.mrb[0].mxu0
        %v5009 = vadd.f32 0.0, %v5008
        %v5010 = vpop.f32.mrb[0].mxu0
        %v5011 = vpop.f32.mrb[0].mxu0
        %v5012 = vadd.f32 0.0, %v5011
        %v5013 = vpop.f32.mrb[0].mxu0
        %5014 = vmatprep.mubr.bf16.mxu0 0
        %5015 = vmatmul.mubr.bf16.gmra.mrb[0].mxu0 %v4895
        %v5016 = vpop.f32.mrb[0].mxu0
        %v5017 = vadd.f32 0.0, %v5016
        %v5018 = vpop.f32.mrb[0].mxu0
        %v5019 = vpop.f32.mrb[0].mxu0
        %v5020 = vadd.f32 0.0, %v5019
        %v5021 = vpop.f32.mrb[0].mxu0
        %5022 = vmatprep.mubr.bf16.mxu0 0
        %5023 = vmatmul.mubr.bf16.gmra.mrb[0].mxu0 %v4898
        %v5024 = vpop.f32.mrb[0].mxu0
        %v5025 = vadd.f32 0.0, %v5024
        %v5026 = vpop.f32.mrb[0].mxu0
        %v5027 = vpop.f32.mrb[0].mxu0
        %v5028 = vadd.f32 0.0, %v5027
        %v5029 = vpop.f32.mrb[0].mxu0
        %5030 = vmatprep.mubr.bf16.mxu0 0
        %5031 = vmatmul.mubr.bf16.gmra.mrb[0].mxu0 %v4901
        %v5032 = vpop.f32.mrb[0].mxu0
        %v5033 = vadd.f32 0.0, %v5032
        %v5034 = vpop.f32.mrb[0].mxu0
        %v5035 = vpop.f32.mrb[0].mxu0
        %v5036 = vadd.f32 0.0, %v5035
        %v5037 = vpop.f32.mrb[0].mxu0
        %5038 = vmatprep.mubr.bf16.mxu0 0
        %5039 = vmatmul.mubr.bf16.gmra.mrb[0].mxu0 %v4904
        %v5040 = vpop.f32.mrb[0].mxu0
        %v5041 = vadd.f32 0.0, %v5040
        %v5042 = vpop.f32.mrb[0].mxu0
        %v5043 = vpop.f32.mrb[0].mxu0
        %v5044 = vadd.f32 0.0, %v5043
        %v5045 = vpop.f32.mrb[0].mxu0
        %5046 = vmatprep.mubr.bf16.mxu0 0
        %5047 = vmatmul.mubr.bf16.gmra.mrb[0].mxu0 %v4907
        %v5048 = vpop.f32.mrb[0].mxu0
        %v5049 = vadd.f32 0.0, %v5048
        %v5050 = vpop.f32.mrb[0].mxu0
        %v5051 = vpop.f32.mrb[0].mxu0
        %v5052 = vadd.f32 0.0, %v5051
        %v5053 = vpop.f32.mrb[0].mxu0
        %5054 = vmatprep.mubr.bf16.mxu0 0
        %5055 = vmatmul.mubr.bf16.gmra.mrb[0].mxu0 %v4910
        %v5056 = vpop.f32.mrb[0].mxu0
        %v5057 = vadd.f32 0.0, %v5056
        %v5058 = vpop.f32.mrb[0].mxu0
        %v5059 = vpop.f32.mrb[0].mxu0
        %v5060 = vadd.f32 0.0, %v5059
        %v5061 = vpop.f32.mrb[0].mxu0
        %5062 = vmatprep.mubr.bf16.mxu0 0
        %5063 = vmatmul.mubr.bf16.gmra.mrb[0].mxu0 %v4913
        %v5064 = vpop.f32.mrb[0].mxu0
        %v5065 = vadd.f32 0.0, %v5064
        %v5066 = vpop.f32.mrb[0].mxu0
        %v5067 = vpop.f32.mrb[0].mxu0
        %v5068 = vadd.f32 0.0, %v5067
        %v5069 = vpop.f32.mrb[0].mxu0
        %5070 = vmatprep.mubr.bf16.mxu0 0
        %5071 = vmatmul.mubr.bf16.gmra.mrb[0].mxu0 %v4916
        %v5072 = vpop.f32.mrb[0].mxu0
        %v5073 = vadd.f32 0.0, %v5072
        %v5074 = vpop.f32.mrb[0].mxu0
        %v5075 = vpop.f32.mrb[0].mxu0
        %v5076 = vadd.f32 0.0, %v5075
        %v5077 = vpop.f32.mrb[0].mxu0
        %5078 = vdwg.mxu0
        %v5079 = vadd.f32 %v4781, %v4953
        %v5080 = vadd.f32 %v4782, %v4956
        %v5081 = vadd.f32 %v4783, %v4961
        %v5082 = vadd.f32 %v4784, %v4964
        %v5083 = vadd.f32 %v4785, %v4969
        %v5084 = vadd.f32 %v4786, %v4972
        %v5085 = vadd.f32 %v4787, %v4977
        %v5086 = vadd.f32 %v4788, %v4980
        %v5087 = vadd.f32 %v4789, %v4985
        %v5088 = vadd.f32 %v4790, %v4988
        %v5089 = vadd.f32 %v4791, %v4993
        %v5090 = vadd.f32 %v4792, %v4996
        %v5091 = vadd.f32 %v4793, %v5001
        %v5092 = vadd.f32 %v4794, %v5004
        %v5093 = vadd.f32 %v4795, %v5009
        %v5094 = vadd.f32 %v4796, %v5012
        %v5095 = vadd.f32 %v4797, %v5017
        %v5096 = vadd.f32 %v4798, %v5020
        %v5097 = vadd.f32 %v4799, %v5025
        %v5098 = vadd.f32 %v4800, %v5028
        %v5099 = vadd.f32 %v4801, %v5033
        %v5100 = vadd.f32 %v4802, %v5036
        %v5101 = vadd.f32 %v4803, %v5041
        %v5102 = vadd.f32 %v4804, %v5044
        %v5103 = vadd.f32 %v4805, %v5049
        %v5104 = vadd.f32 %v4806, %v5052
        %v5105 = vadd.f32 %v4807, %v5057
        %v5106 = vadd.f32 %v4808, %v5060
        %v5107 = vadd.f32 %v4809, %v5065
        %v5108 = vadd.f32 %v4810, %v5068
        %v5109 = vadd.f32 %v4811, %v5073
        %v5110 = vadd.f32 %v4812, %v5076
        %v5111 = vld [vmem:[%s1070 + $0x8] sm:$0xff]
        %v5112 = vld [vmem:[%s1070 + $0x10] sm:$0xff]
        %v5113 = vld [vmem:[%s1070 + $0x28] sm:$0xff]
        %v5114 = vld [vmem:[%s1070 + $0x30] sm:$0xff]
        %v5115 = vld [vmem:[%s1070 + $0x48] sm:$0xff]
        %v5116 = vld [vmem:[%s1070 + $0x50] sm:$0xff]
        %v5117 = vld [vmem:[%s1070 + $0x68] sm:$0xff]
        %v5118 = vld [vmem:[%s1070 + $0x70] sm:$0xff]
        %v5119 = vld [vmem:[%s1070 + $0x88] sm:$0xff]
        %v5120 = vld [vmem:[%s1070 + $0x90] sm:$0xff]
        %v5121 = vld [vmem:[%s1070 + $0xa8] sm:$0xff]
        %v5122 = vld [vmem:[%s1070 + $0xb0] sm:$0xff]
        %v5123 = vld [vmem:[%s1070 + $0xc8] sm:$0xff]
        %v5124 = vld [vmem:[%s1070 + $0xd0] sm:$0xff]
        %v5125 = vld [vmem:[%s1070 + $0xe8] sm:$0xff]
        %v5126 = vld [vmem:[%s1070 + $0xf0] sm:$0xff]
        %v5127 = vld [vmem:[%s1070 + $0x108] sm:$0xff]
        %v5128 = vld [vmem:[%s1070 + $0x110] sm:$0xff]
        %v5129 = vld [vmem:[%s1070 + $0x128] sm:$0xff]
        %v5130 = vld [vmem:[%s1070 + $0x130] sm:$0xff]
        %v5131 = vld [vmem:[%s1070 + $0x148] sm:$0xff]
        %v5132 = vld [vmem:[%s1070 + $0x150] sm:$0xff]
        %v5133 = vld [vmem:[%s1070 + $0x168] sm:$0xff]
        %v5134 = vld [vmem:[%s1070 + $0x170] sm:$0xff]
        %v5135 = vld [vmem:[%s1070 + $0x188] sm:$0xff]
        %v5136 = vld [vmem:[%s1070 + $0x190] sm:$0xff]
        %v5137 = vld [vmem:[%s1070 + $0x1a8] sm:$0xff]
        %v5138 = vld [vmem:[%s1070 + $0x1b0] sm:$0xff]
        %v5139 = vld [vmem:[%s1070 + $0x1c8] sm:$0xff]
        %v5140 = vld [vmem:[%s1070 + $0x1d0] sm:$0xff]
        %v5141 = vld [vmem:[%s1070 + $0x1e8] sm:$0xff]
        %v5142 = vld [vmem:[%s1070 + $0x1f0] sm:$0xff]
        %v5143 = vpack.c.bf16 %v5112, %v5111
        %v5144 = vpack.c.bf16 %v5114, %v5113
        %v5145 = vpack.c.bf16 %v5116, %v5115
        %v5146 = vpack.c.bf16 %v5118, %v5117
        %v5147 = vpack.c.bf16 %v5120, %v5119
        %v5148 = vpack.c.bf16 %v5122, %v5121
        %v5149 = vpack.c.bf16 %v5124, %v5123
        %v5150 = vpack.c.bf16 %v5126, %v5125
        %v5151 = vpack.c.bf16 %v5128, %v5127
        %v5152 = vpack.c.bf16 %v5130, %v5129
        %v5153 = vpack.c.bf16 %v5132, %v5131
        %v5154 = vpack.c.bf16 %v5134, %v5133
        %v5155 = vpack.c.bf16 %v5136, %v5135
        %v5156 = vpack.c.bf16 %v5138, %v5137
        %v5157 = vpack.c.bf16 %v5140, %v5139
        %v5158 = vpack.c.bf16 %v5142, %v5141
        %s5159 = scalar_lea.vmem %s5, 32
        %v5160 = vld [vmem:[%s5159] sm:$0xf]
        %v5161 = vld [vmem:[%s5159 + $0x4] sm:$0xf]
        %v5164 = vunpack.c.l.b16 %v5160
        %v5165 = vunpack.c.l.b16 %v5161
        %v5166 = vpack.c.b16 %v5165, %v5164
        %v5169 = vsel %vm364, %v5143, 0
        %v5172 = vsel %vm364, %v5144, 0
        %v5175 = vsel %vm364, %v5145, 0
        %v5178 = vsel %vm364, %v5146, 0
        %v5181 = vsel %vm364, %v5147, 0
        %v5184 = vsel %vm364, %v5148, 0
        %v5187 = vsel %vm364, %v5149, 0
        %v5190 = vsel %vm364, %v5150, 0
        %v5193 = vsel %vm364, %v5151, 0
        %v5196 = vsel %vm364, %v5152, 0
        %v5199 = vsel %vm364, %v5153, 0
        %v5202 = vsel %vm364, %v5154, 0
        %v5205 = vsel %vm364, %v5155, 0
        %v5208 = vsel %vm364, %v5156, 0
        %v5211 = vsel %vm364, %v5157, 0
        %v5214 = vsel %vm364, %v5158, 0
        %5216 = vmatprep.subr.bf16.mxu0 0
        %5217 = vmatpush1.bf16.msra.mxu0 %v5166
        %5218 = vmatprep.subr.bf16.mxu0 0
        %5219 = vmatpush1.bf16.msra.mxu0 0
        %5220 = vmatprep.subr.bf16.mxu0 0
        %5221 = vmatpush1.bf16.msra.mxu0 0
        %5222 = vmatprep.subr.bf16.mxu0 0
        %5223 = vmatpush1.bf16.msra.mxu0 0
        %5224 = vmatprep.subr.bf16.mxu0 0
        %5225 = vmatpush1.bf16.msra.mxu0 0
        %5226 = vmatprep.subr.bf16.mxu0 0
        %5227 = vmatpush1.bf16.msra.mxu0 0
        %5228 = vmatprep.subr.bf16.mxu0 0
        %5229 = vmatpush1.bf16.msra.mxu0 0
        %5230 = vmatprep.subr.bf16.mxu0 0
        %5231 = vmatpush1.bf16.msra.mxu0 0
        %5232 = vmatprep.subr.bf16.mxu0 0
        %5233 = vmatpush1.bf16.msra.mxu0 0
        %5234 = vmatprep.subr.bf16.mxu0 0
        %5235 = vmatpush1.bf16.msra.mxu0 0
        %5236 = vmatprep.subr.bf16.mxu0 0
        %5237 = vmatpush1.bf16.msra.mxu0 0
        %5238 = vmatprep.subr.bf16.mxu0 0
        %5239 = vmatpush1.bf16.msra.mxu0 0
        %5240 = vmatprep.subr.bf16.mxu0 0
        %5241 = vmatpush1.bf16.msra.mxu0 0
        %5242 = vmatprep.subr.bf16.mxu0 0
        %5243 = vmatpush1.bf16.msra.mxu0 0
        %5244 = vmatprep.subr.bf16.mxu0 0
        %5245 = vmatpush1.bf16.msra.mxu0 0
        %5246 = vmatprep.subr.bf16.mxu0 0
        %5247 = vmatpush1.bf16.msra.mxu0 0
        %5248 = vmatprep.mubr.bf16.mxu0 0
        %5249 = vmatmul.mubr.bf16.gmra.mrb[0].mxu0 %v5169
        %v5250 = vpop.f32.mrb[0].mxu0
        %v5251 = vadd.f32 0.0, %v5250
        %v5252 = vpop.f32.mrb[0].mxu0
        %v5253 = vpop.f32.mrb[0].mxu0
        %v5254 = vadd.f32 0.0, %v5253
        %v5255 = vpop.f32.mrb[0].mxu0
        %5256 = vmatprep.mubr.bf16.mxu0 0
        %5257 = vmatmul.mubr.bf16.gmra.mrb[0].mxu0 %v5172
        %v5258 = vpop.f32.mrb[0].mxu0
        %v5259 = vadd.f32 0.0, %v5258
        %v5260 = vpop.f32.mrb[0].mxu0
        %v5261 = vpop.f32.mrb[0].mxu0
        %v5262 = vadd.f32 0.0, %v5261
        %v5263 = vpop.f32.mrb[0].mxu0
        %5264 = vmatprep.mubr.bf16.mxu0 0
        %5265 = vmatmul.mubr.bf16.gmra.mrb[0].mxu0 %v5175
        %v5266 = vpop.f32.mrb[0].mxu0
        %v5267 = vadd.f32 0.0, %v5266
        %v5268 = vpop.f32.mrb[0].mxu0
        %v5269 = vpop.f32.mrb[0].mxu0
        %v5270 = vadd.f32 0.0, %v5269
        %v5271 = vpop.f32.mrb[0].mxu0
        %5272 = vmatprep.mubr.bf16.mxu0 0
        %5273 = vmatmul.mubr.bf16.gmra.mrb[0].mxu0 %v5178
        %v5274 = vpop.f32.mrb[0].mxu0
        %v5275 = vadd.f32 0.0, %v5274
        %v5276 = vpop.f32.mrb[0].mxu0
        %v5277 = vpop.f32.mrb[0].mxu0
        %v5278 = vadd.f32 0.0, %v5277
        %v5279 = vpop.f32.mrb[0].mxu0
        %5280 = vmatprep.mubr.bf16.mxu0 0
        %5281 = vmatmul.mubr.bf16.gmra.mrb[0].mxu0 %v5181
        %v5282 = vpop.f32.mrb[0].mxu0
        %v5283 = vadd.f32 0.0, %v5282
        %v5284 = vpop.f32.mrb[0].mxu0
        %v5285 = vpop.f32.mrb[0].mxu0
        %v5286 = vadd.f32 0.0, %v5285
        %v5287 = vpop.f32.mrb[0].mxu0
        %5288 = vmatprep.mubr.bf16.mxu0 0
        %5289 = vmatmul.mubr.bf16.gmra.mrb[0].mxu0 %v5184
        %v5290 = vpop.f32.mrb[0].mxu0
        %v5291 = vadd.f32 0.0, %v5290
        %v5292 = vpop.f32.mrb[0].mxu0
        %v5293 = vpop.f32.mrb[0].mxu0
        %v5294 = vadd.f32 0.0, %v5293
        %v5295 = vpop.f32.mrb[0].mxu0
        %5296 = vmatprep.mubr.bf16.mxu0 0
        %5297 = vmatmul.mubr.bf16.gmra.mrb[0].mxu0 %v5187
        %v5298 = vpop.f32.mrb[0].mxu0
        %v5299 = vadd.f32 0.0, %v5298
        %v5300 = vpop.f32.mrb[0].mxu0
        %v5301 = vpop.f32.mrb[0].mxu0
        %v5302 = vadd.f32 0.0, %v5301
        %v5303 = vpop.f32.mrb[0].mxu0
        %5304 = vmatprep.mubr.bf16.mxu0 0
        %5305 = vmatmul.mubr.bf16.gmra.mrb[0].mxu0 %v5190
        %v5306 = vpop.f32.mrb[0].mxu0
        %v5307 = vadd.f32 0.0, %v5306
        %v5308 = vpop.f32.mrb[0].mxu0
        %v5309 = vpop.f32.mrb[0].mxu0
        %v5310 = vadd.f32 0.0, %v5309
        %v5311 = vpop.f32.mrb[0].mxu0
        %5312 = vmatprep.mubr.bf16.mxu0 0
        %5313 = vmatmul.mubr.bf16.gmra.mrb[0].mxu0 %v5193
        %v5314 = vpop.f32.mrb[0].mxu0
        %v5315 = vadd.f32 0.0, %v5314
        %v5316 = vpop.f32.mrb[0].mxu0
        %v5317 = vpop.f32.mrb[0].mxu0
        %v5318 = vadd.f32 0.0, %v5317
        %v5319 = vpop.f32.mrb[0].mxu0
        %5320 = vmatprep.mubr.bf16.mxu0 0
        %5321 = vmatmul.mubr.bf16.gmra.mrb[0].mxu0 %v5196
        %v5322 = vpop.f32.mrb[0].mxu0
        %v5323 = vadd.f32 0.0, %v5322
        %v5324 = vpop.f32.mrb[0].mxu0
        %v5325 = vpop.f32.mrb[0].mxu0
        %v5326 = vadd.f32 0.0, %v5325
        %v5327 = vpop.f32.mrb[0].mxu0
        %5328 = vmatprep.mubr.bf16.mxu0 0
        %5329 = vmatmul.mubr.bf16.gmra.mrb[0].mxu0 %v5199
        %v5330 = vpop.f32.mrb[0].mxu0
        %v5331 = vadd.f32 0.0, %v5330
        %v5332 = vpop.f32.mrb[0].mxu0
        %v5333 = vpop.f32.mrb[0].mxu0
        %v5334 = vadd.f32 0.0, %v5333
        %v5335 = vpop.f32.mrb[0].mxu0
        %5336 = vmatprep.mubr.bf16.mxu0 0
        %5337 = vmatmul.mubr.bf16.gmra.mrb[0].mxu0 %v5202
        %v5338 = vpop.f32.mrb[0].mxu0
        %v5339 = vadd.f32 0.0, %v5338
        %v5340 = vpop.f32.mrb[0].mxu0
        %v5341 = vpop.f32.mrb[0].mxu0
        %v5342 = vadd.f32 0.0, %v5341
        %v5343 = vpop.f32.mrb[0].mxu0
        %5344 = vmatprep.mubr.bf16.mxu0 0
        %5345 = vmatmul.mubr.bf16.gmra.mrb[0].mxu0 %v5205
        %v5346 = vpop.f32.mrb[0].mxu0
        %v5347 = vadd.f32 0.0, %v5346
        %v5348 = vpop.f32.mrb[0].mxu0
        %v5349 = vpop.f32.mrb[0].mxu0
        %v5350 = vadd.f32 0.0, %v5349
        %v5351 = vpop.f32.mrb[0].mxu0
        %5352 = vmatprep.mubr.bf16.mxu0 0
        %5353 = vmatmul.mubr.bf16.gmra.mrb[0].mxu0 %v5208
        %v5354 = vpop.f32.mrb[0].mxu0
        %v5355 = vadd.f32 0.0, %v5354
        %v5356 = vpop.f32.mrb[0].mxu0
        %v5357 = vpop.f32.mrb[0].mxu0
        %v5358 = vadd.f32 0.0, %v5357
        %v5359 = vpop.f32.mrb[0].mxu0
        %5360 = vmatprep.mubr.bf16.mxu0 0
        %5361 = vmatmul.mubr.bf16.gmra.mrb[0].mxu0 %v5211
        %v5362 = vpop.f32.mrb[0].mxu0
        %v5363 = vadd.f32 0.0, %v5362
        %v5364 = vpop.f32.mrb[0].mxu0
        %v5365 = vpop.f32.mrb[0].mxu0
        %v5366 = vadd.f32 0.0, %v5365
        %v5367 = vpop.f32.mrb[0].mxu0
        %5368 = vmatprep.mubr.bf16.mxu0 0
        %5369 = vmatmul.mubr.bf16.gmra.mrb[0].mxu0 %v5214
        %v5370 = vpop.f32.mrb[0].mxu0
        %v5371 = vadd.f32 0.0, %v5370
        %v5372 = vpop.f32.mrb[0].mxu0
        %v5373 = vpop.f32.mrb[0].mxu0
        %v5374 = vadd.f32 0.0, %v5373
        %v5375 = vpop.f32.mrb[0].mxu0
        %5376 = vdwg.mxu0
        %v5377 = vadd.f32 %v5079, %v5251
        %v5378 = vadd.f32 %v5080, %v5254
        %v5379 = vadd.f32 %v5081, %v5259
        %v5380 = vadd.f32 %v5082, %v5262
        %v5381 = vadd.f32 %v5083, %v5267
        %v5382 = vadd.f32 %v5084, %v5270
        %v5383 = vadd.f32 %v5085, %v5275
        %v5384 = vadd.f32 %v5086, %v5278
        %v5385 = vadd.f32 %v5087, %v5283
        %v5386 = vadd.f32 %v5088, %v5286
        %v5387 = vadd.f32 %v5089, %v5291
        %v5388 = vadd.f32 %v5090, %v5294
        %v5389 = vadd.f32 %v5091, %v5299
        %v5390 = vadd.f32 %v5092, %v5302
        %v5391 = vadd.f32 %v5093, %v5307
        %v5392 = vadd.f32 %v5094, %v5310
        %v5393 = vadd.f32 %v5095, %v5315
        %v5394 = vadd.f32 %v5096, %v5318
        %v5395 = vadd.f32 %v5097, %v5323
        %v5396 = vadd.f32 %v5098, %v5326
        %v5397 = vadd.f32 %v5099, %v5331
        %v5398 = vadd.f32 %v5100, %v5334
        %v5399 = vadd.f32 %v5101, %v5339
        %v5400 = vadd.f32 %v5102, %v5342
        %v5401 = vadd.f32 %v5103, %v5347
        %v5402 = vadd.f32 %v5104, %v5350
        %v5403 = vadd.f32 %v5105, %v5355
        %v5404 = vadd.f32 %v5106, %v5358
        %v5405 = vadd.f32 %v5107, %v5363
        %v5406 = vadd.f32 %v5108, %v5366
        %v5407 = vadd.f32 %v5109, %v5371
        %v5408 = vadd.f32 %v5110, %v5374
        %v5409 = vld [vmem:[%s1070 + $0x9] sm:$0xff]
        %v5410 = vld [vmem:[%s1070 + $0x11] sm:$0xff]
        %v5411 = vld [vmem:[%s1070 + $0x29] sm:$0xff]
        %v5412 = vld [vmem:[%s1070 + $0x31] sm:$0xff]
        %v5413 = vld [vmem:[%s1070 + $0x49] sm:$0xff]
        %v5414 = vld [vmem:[%s1070 + $0x51] sm:$0xff]
        %v5415 = vld [vmem:[%s1070 + $0x69] sm:$0xff]
        %v5416 = vld [vmem:[%s1070 + $0x71] sm:$0xff]
        %v5417 = vld [vmem:[%s1070 + $0x89] sm:$0xff]
        %v5418 = vld [vmem:[%s1070 + $0x91] sm:$0xff]
        %v5419 = vld [vmem:[%s1070 + $0xa9] sm:$0xff]
        %v5420 = vld [vmem:[%s1070 + $0xb1] sm:$0xff]
        %v5421 = vld [vmem:[%s1070 + $0xc9] sm:$0xff]
        %v5422 = vld [vmem:[%s1070 + $0xd1] sm:$0xff]
        %v5423 = vld [vmem:[%s1070 + $0xe9] sm:$0xff]
        %v5424 = vld [vmem:[%s1070 + $0xf1] sm:$0xff]
        %v5425 = vld [vmem:[%s1070 + $0x109] sm:$0xff]
        %v5426 = vld [vmem:[%s1070 + $0x111] sm:$0xff]
        %v5427 = vld [vmem:[%s1070 + $0x129] sm:$0xff]
        %v5428 = vld [vmem:[%s1070 + $0x131] sm:$0xff]
        %v5429 = vld [vmem:[%s1070 + $0x149] sm:$0xff]
        %v5430 = vld [vmem:[%s1070 + $0x151] sm:$0xff]
        %v5431 = vld [vmem:[%s1070 + $0x169] sm:$0xff]
        %v5432 = vld [vmem:[%s1070 + $0x171] sm:$0xff]
        %v5433 = vld [vmem:[%s1070 + $0x189] sm:$0xff]
        %v5434 = vld [vmem:[%s1070 + $0x191] sm:$0xff]
        %v5435 = vld [vmem:[%s1070 + $0x1a9] sm:$0xff]
        %v5436 = vld [vmem:[%s1070 + $0x1b1] sm:$0xff]
        %v5437 = vld [vmem:[%s1070 + $0x1c9] sm:$0xff]
        %v5438 = vld [vmem:[%s1070 + $0x1d1] sm:$0xff]
        %v5439 = vld [vmem:[%s1070 + $0x1e9] sm:$0xff]
        %v5440 = vld [vmem:[%s1070 + $0x1f1] sm:$0xff]
        %v5441 = vpack.c.bf16 %v5410, %v5409
        %v5442 = vpack.c.bf16 %v5412, %v5411
        %v5443 = vpack.c.bf16 %v5414, %v5413
        %v5444 = vpack.c.bf16 %v5416, %v5415
        %v5445 = vpack.c.bf16 %v5418, %v5417
        %v5446 = vpack.c.bf16 %v5420, %v5419
        %v5447 = vpack.c.bf16 %v5422, %v5421
        %v5448 = vpack.c.bf16 %v5424, %v5423
        %v5449 = vpack.c.bf16 %v5426, %v5425
        %v5450 = vpack.c.bf16 %v5428, %v5427
        %v5451 = vpack.c.bf16 %v5430, %v5429
        %v5452 = vpack.c.bf16 %v5432, %v5431
        %v5453 = vpack.c.bf16 %v5434, %v5433
        %v5454 = vpack.c.bf16 %v5436, %v5435
        %v5455 = vpack.c.bf16 %v5438, %v5437
        %v5456 = vpack.c.bf16 %v5440, %v5439
        %s5457 = scalar_lea.vmem %s5, 40
        %v5458 = vld [vmem:[%s5457] sm:$0xf]
        %v5459 = vld [vmem:[%s5457 + $0x4] sm:$0xf]
        %v5462 = vunpack.c.l.b16 %v5458
        %v5463 = vunpack.c.l.b16 %v5459
        %v5464 = vpack.c.b16 %v5463, %v5462
        %v5467 = vsel %vm364, %v5441, 0
        %v5470 = vsel %vm364, %v5442, 0
        %v5473 = vsel %vm364, %v5443, 0
        %v5476 = vsel %vm364, %v5444, 0
        %v5479 = vsel %vm364, %v5445, 0
        %v5482 = vsel %vm364, %v5446, 0
        %v5485 = vsel %vm364, %v5447, 0
        %v5488 = vsel %vm364, %v5448, 0
        %v5491 = vsel %vm364, %v5449, 0
        %v5494 = vsel %vm364, %v5450, 0
        %v5497 = vsel %vm364, %v5451, 0
        %v5500 = vsel %vm364, %v5452, 0
        %v5503 = vsel %vm364, %v5453, 0
        %v5506 = vsel %vm364, %v5454, 0
        %v5509 = vsel %vm364, %v5455, 0
        %v5512 = vsel %vm364, %v5456, 0
        %5514 = vmatprep.subr.bf16.mxu0 0
        %5515 = vmatpush1.bf16.msra.mxu0 %v5464
        %5516 = vmatprep.subr.bf16.mxu0 0
        %5517 = vmatpush1.bf16.msra.mxu0 0
        %5518 = vmatprep.subr.bf16.mxu0 0
        %5519 = vmatpush1.bf16.msra.mxu0 0
        %5520 = vmatprep.subr.bf16.mxu0 0
        %5521 = vmatpush1.bf16.msra.mxu0 0
        %5522 = vmatprep.subr.bf16.mxu0 0
        %5523 = vmatpush1.bf16.msra.mxu0 0
        %5524 = vmatprep.subr.bf16.mxu0 0
        %5525 = vmatpush1.bf16.msra.mxu0 0
        %5526 = vmatprep.subr.bf16.mxu0 0
        %5527 = vmatpush1.bf16.msra.mxu0 0
        %5528 = vmatprep.subr.bf16.mxu0 0
        %5529 = vmatpush1.bf16.msra.mxu0 0
        %5530 = vmatprep.subr.bf16.mxu0 0
        %5531 = vmatpush1.bf16.msra.mxu0 0
        %5532 = vmatprep.subr.bf16.mxu0 0
        %5533 = vmatpush1.bf16.msra.mxu0 0
        %5534 = vmatprep.subr.bf16.mxu0 0
        %5535 = vmatpush1.bf16.msra.mxu0 0
        %5536 = vmatprep.subr.bf16.mxu0 0
        %5537 = vmatpush1.bf16.msra.mxu0 0
        %5538 = vmatprep.subr.bf16.mxu0 0
        %5539 = vmatpush1.bf16.msra.mxu0 0
        %5540 = vmatprep.subr.bf16.mxu0 0
        %5541 = vmatpush1.bf16.msra.mxu0 0
        %5542 = vmatprep.subr.bf16.mxu0 0
        %5543 = vmatpush1.bf16.msra.mxu0 0
        %5544 = vmatprep.subr.bf16.mxu0 0
        %5545 = vmatpush1.bf16.msra.mxu0 0
        %5546 = vmatprep.mubr.bf16.mxu0 0
        %5547 = vmatmul.mubr.bf16.gmra.mrb[0].mxu0 %v5467
        %v5548 = vpop.f32.mrb[0].mxu0
        %v5549 = vadd.f32 0.0, %v5548
        %v5550 = vpop.f32.mrb[0].mxu0
        %v5551 = vpop.f32.mrb[0].mxu0
        %v5552 = vadd.f32 0.0, %v5551
        %v5553 = vpop.f32.mrb[0].mxu0
        %5554 = vmatprep.mubr.bf16.mxu0 0
        %5555 = vmatmul.mubr.bf16.gmra.mrb[0].mxu0 %v5470
        %v5556 = vpop.f32.mrb[0].mxu0
        %v5557 = vadd.f32 0.0, %v5556
        %v5558 = vpop.f32.mrb[0].mxu0
        %v5559 = vpop.f32.mrb[0].mxu0
        %v5560 = vadd.f32 0.0, %v5559
        %v5561 = vpop.f32.mrb[0].mxu0
        %5562 = vmatprep.mubr.bf16.mxu0 0
        %5563 = vmatmul.mubr.bf16.gmra.mrb[0].mxu0 %v5473
        %v5564 = vpop.f32.mrb[0].mxu0
        %v5565 = vadd.f32 0.0, %v5564
        %v5566 = vpop.f32.mrb[0].mxu0
        %v5567 = vpop.f32.mrb[0].mxu0
        %v5568 = vadd.f32 0.0, %v5567
        %v5569 = vpop.f32.mrb[0].mxu0
        %5570 = vmatprep.mubr.bf16.mxu0 0
        %5571 = vmatmul.mubr.bf16.gmra.mrb[0].mxu0 %v5476
        %v5572 = vpop.f32.mrb[0].mxu0
        %v5573 = vadd.f32 0.0, %v5572
        %v5574 = vpop.f32.mrb[0].mxu0
        %v5575 = vpop.f32.mrb[0].mxu0
        %v5576 = vadd.f32 0.0, %v5575
        %v5577 = vpop.f32.mrb[0].mxu0
        %5578 = vmatprep.mubr.bf16.mxu0 0
        %5579 = vmatmul.mubr.bf16.gmra.mrb[0].mxu0 %v5479
        %v5580 = vpop.f32.mrb[0].mxu0
        %v5581 = vadd.f32 0.0, %v5580
        %v5582 = vpop.f32.mrb[0].mxu0
        %v5583 = vpop.f32.mrb[0].mxu0
        %v5584 = vadd.f32 0.0, %v5583
        %v5585 = vpop.f32.mrb[0].mxu0
        %5586 = vmatprep.mubr.bf16.mxu0 0
        %5587 = vmatmul.mubr.bf16.gmra.mrb[0].mxu0 %v5482
        %v5588 = vpop.f32.mrb[0].mxu0
        %v5589 = vadd.f32 0.0, %v5588
        %v5590 = vpop.f32.mrb[0].mxu0
        %v5591 = vpop.f32.mrb[0].mxu0
        %v5592 = vadd.f32 0.0, %v5591
        %v5593 = vpop.f32.mrb[0].mxu0
        %5594 = vmatprep.mubr.bf16.mxu0 0
        %5595 = vmatmul.mubr.bf16.gmra.mrb[0].mxu0 %v5485
        %v5596 = vpop.f32.mrb[0].mxu0
        %v5597 = vadd.f32 0.0, %v5596
        %v5598 = vpop.f32.mrb[0].mxu0
        %v5599 = vpop.f32.mrb[0].mxu0
        %v5600 = vadd.f32 0.0, %v5599
        %v5601 = vpop.f32.mrb[0].mxu0
        %5602 = vmatprep.mubr.bf16.mxu0 0
        %5603 = vmatmul.mubr.bf16.gmra.mrb[0].mxu0 %v5488
        %v5604 = vpop.f32.mrb[0].mxu0
        %v5605 = vadd.f32 0.0, %v5604
        %v5606 = vpop.f32.mrb[0].mxu0
        %v5607 = vpop.f32.mrb[0].mxu0
        %v5608 = vadd.f32 0.0, %v5607
        %v5609 = vpop.f32.mrb[0].mxu0
        %5610 = vmatprep.mubr.bf16.mxu0 0
        %5611 = vmatmul.mubr.bf16.gmra.mrb[0].mxu0 %v5491
        %v5612 = vpop.f32.mrb[0].mxu0
        %v5613 = vadd.f32 0.0, %v5612
        %v5614 = vpop.f32.mrb[0].mxu0
        %v5615 = vpop.f32.mrb[0].mxu0
        %v5616 = vadd.f32 0.0, %v5615
        %v5617 = vpop.f32.mrb[0].mxu0
        %5618 = vmatprep.mubr.bf16.mxu0 0
        %5619 = vmatmul.mubr.bf16.gmra.mrb[0].mxu0 %v5494
        %v5620 = vpop.f32.mrb[0].mxu0
        %v5621 = vadd.f32 0.0, %v5620
        %v5622 = vpop.f32.mrb[0].mxu0
        %v5623 = vpop.f32.mrb[0].mxu0
        %v5624 = vadd.f32 0.0, %v5623
        %v5625 = vpop.f32.mrb[0].mxu0
        %5626 = vmatprep.mubr.bf16.mxu0 0
        %5627 = vmatmul.mubr.bf16.gmra.mrb[0].mxu0 %v5497
        %v5628 = vpop.f32.mrb[0].mxu0
        %v5629 = vadd.f32 0.0, %v5628
        %v5630 = vpop.f32.mrb[0].mxu0
        %v5631 = vpop.f32.mrb[0].mxu0
        %v5632 = vadd.f32 0.0, %v5631
        %v5633 = vpop.f32.mrb[0].mxu0
        %5634 = vmatprep.mubr.bf16.mxu0 0
        %5635 = vmatmul.mubr.bf16.gmra.mrb[0].mxu0 %v5500
        %v5636 = vpop.f32.mrb[0].mxu0
        %v5637 = vadd.f32 0.0, %v5636
        %v5638 = vpop.f32.mrb[0].mxu0
        %v5639 = vpop.f32.mrb[0].mxu0
        %v5640 = vadd.f32 0.0, %v5639
        %v5641 = vpop.f32.mrb[0].mxu0
        %5642 = vmatprep.mubr.bf16.mxu0 0
        %5643 = vmatmul.mubr.bf16.gmra.mrb[0].mxu0 %v5503
        %v5644 = vpop.f32.mrb[0].mxu0
        %v5645 = vadd.f32 0.0, %v5644
        %v5646 = vpop.f32.mrb[0].mxu0
        %v5647 = vpop.f32.mrb[0].mxu0
        %v5648 = vadd.f32 0.0, %v5647
        %v5649 = vpop.f32.mrb[0].mxu0
        %5650 = vmatprep.mubr.bf16.mxu0 0
        %5651 = vmatmul.mubr.bf16.gmra.mrb[0].mxu0 %v5506
        %v5652 = vpop.f32.mrb[0].mxu0
        %v5653 = vadd.f32 0.0, %v5652
        %v5654 = vpop.f32.mrb[0].mxu0
        %v5655 = vpop.f32.mrb[0].mxu0
        %v5656 = vadd.f32 0.0, %v5655
        %v5657 = vpop.f32.mrb[0].mxu0
        %5658 = vmatprep.mubr.bf16.mxu0 0
        %5659 = vmatmul.mubr.bf16.gmra.mrb[0].mxu0 %v5509
        %v5660 = vpop.f32.mrb[0].mxu0
        %v5661 = vadd.f32 0.0, %v5660
        %v5662 = vpop.f32.mrb[0].mxu0
        %v5663 = vpop.f32.mrb[0].mxu0
        %v5664 = vadd.f32 0.0, %v5663
        %v5665 = vpop.f32.mrb[0].mxu0
        %5666 = vmatprep.mubr.bf16.mxu0 0
        %5667 = vmatmul.mubr.bf16.gmra.mrb[0].mxu0 %v5512
        %v5668 = vpop.f32.mrb[0].mxu0
        %v5669 = vadd.f32 0.0, %v5668
        %v5670 = vpop.f32.mrb[0].mxu0
        %v5671 = vpop.f32.mrb[0].mxu0
        %v5672 = vadd.f32 0.0, %v5671
        %v5673 = vpop.f32.mrb[0].mxu0
        %5674 = vdwg.mxu0
        %v5675 = vadd.f32 %v5377, %v5549
        %v5676 = vadd.f32 %v5378, %v5552
        %v5677 = vadd.f32 %v5379, %v5557
        %v5678 = vadd.f32 %v5380, %v5560
        %v5679 = vadd.f32 %v5381, %v5565
        %v5680 = vadd.f32 %v5382, %v5568
        %v5681 = vadd.f32 %v5383, %v5573
        %v5682 = vadd.f32 %v5384, %v5576
        %v5683 = vadd.f32 %v5385, %v5581
        %v5684 = vadd.f32 %v5386, %v5584
        %v5685 = vadd.f32 %v5387, %v5589
        %v5686 = vadd.f32 %v5388, %v5592
        %v5687 = vadd.f32 %v5389, %v5597
        %v5688 = vadd.f32 %v5390, %v5600
        %v5689 = vadd.f32 %v5391, %v5605
        %v5690 = vadd.f32 %v5392, %v5608
        %v5691 = vadd.f32 %v5393, %v5613
        %v5692 = vadd.f32 %v5394, %v5616
        %v5693 = vadd.f32 %v5395, %v5621
        %v5694 = vadd.f32 %v5396, %v5624
        %v5695 = vadd.f32 %v5397, %v5629
        %v5696 = vadd.f32 %v5398, %v5632
        %v5697 = vadd.f32 %v5399, %v5637
        %v5698 = vadd.f32 %v5400, %v5640
        %v5699 = vadd.f32 %v5401, %v5645
        %v5700 = vadd.f32 %v5402, %v5648
        %v5701 = vadd.f32 %v5403, %v5653
        %v5702 = vadd.f32 %v5404, %v5656
        %v5703 = vadd.f32 %v5405, %v5661
        %v5704 = vadd.f32 %v5406, %v5664
        %v5705 = vadd.f32 %v5407, %v5669
        %v5706 = vadd.f32 %v5408, %v5672
        %v5707 = vld [vmem:[%s2826 + $0x7] sm:$0xff]
        %v5708 = vld [vmem:[%s2826 + $0xf] sm:$0xff]
        %v5709 = vld [vmem:[%s2826 + $0x27] sm:$0xff]
        %v5710 = vld [vmem:[%s2826 + $0x2f] sm:$0xff]
        %v5711 = vld [vmem:[%s2826 + $0x47] sm:$0xff]
        %v5712 = vld [vmem:[%s2826 + $0x4f] sm:$0xff]
        %v5713 = vld [vmem:[%s2826 + $0x67] sm:$0xff]
        %v5714 = vld [vmem:[%s2826 + $0x6f] sm:$0xff]
        %v5715 = vld [vmem:[%s2826 + $0x87] sm:$0xff]
        %v5716 = vld [vmem:[%s2826 + $0x8f] sm:$0xff]
        %v5717 = vld [vmem:[%s2826 + $0xa7] sm:$0xff]
        %v5718 = vld [vmem:[%s2826 + $0xaf] sm:$0xff]
        %v5719 = vld [vmem:[%s2826 + $0xc7] sm:$0xff]
        %v5720 = vld [vmem:[%s2826 + $0xcf] sm:$0xff]
        %v5721 = vld [vmem:[%s2826 + $0xe7] sm:$0xff]
        %v5722 = vld [vmem:[%s2826 + $0xef] sm:$0xff]
        %v5723 = vld [vmem:[%s2826 + $0x107] sm:$0xff]
        %v5724 = vld [vmem:[%s2826 + $0x10f] sm:$0xff]
        %v5725 = vld [vmem:[%s2826 + $0x127] sm:$0xff]
        %v5726 = vld [vmem:[%s2826 + $0x12f] sm:$0xff]
        %v5727 = vld [vmem:[%s2826 + $0x147] sm:$0xff]
        %v5728 = vld [vmem:[%s2826 + $0x14f] sm:$0xff]
        %v5729 = vld [vmem:[%s2826 + $0x167] sm:$0xff]
        %v5730 = vld [vmem:[%s2826 + $0x16f] sm:$0xff]
        %v5731 = vld [vmem:[%s2826 + $0x187] sm:$0xff]
        %v5732 = vld [vmem:[%s2826 + $0x18f] sm:$0xff]
        %v5733 = vld [vmem:[%s2826 + $0x1a7] sm:$0xff]
        %v5734 = vld [vmem:[%s2826 + $0x1af] sm:$0xff]
        %v5735 = vld [vmem:[%s2826 + $0x1c7] sm:$0xff]
        %v5736 = vld [vmem:[%s2826 + $0x1cf] sm:$0xff]
        %v5737 = vld [vmem:[%s2826 + $0x1e7] sm:$0xff]
        %v5738 = vld [vmem:[%s2826 + $0x1ef] sm:$0xff]
        %v5739 = vpack.c.bf16 %v5708, %v5707
        %v5740 = vpack.c.bf16 %v5710, %v5709
        %v5741 = vpack.c.bf16 %v5712, %v5711
        %v5742 = vpack.c.bf16 %v5714, %v5713
        %v5743 = vpack.c.bf16 %v5716, %v5715
        %v5744 = vpack.c.bf16 %v5718, %v5717
        %v5745 = vpack.c.bf16 %v5720, %v5719
        %v5746 = vpack.c.bf16 %v5722, %v5721
        %v5747 = vpack.c.bf16 %v5724, %v5723
        %v5748 = vpack.c.bf16 %v5726, %v5725
        %v5749 = vpack.c.bf16 %v5728, %v5727
        %v5750 = vpack.c.bf16 %v5730, %v5729
        %v5751 = vpack.c.bf16 %v5732, %v5731
        %v5752 = vpack.c.bf16 %v5734, %v5733
        %v5753 = vpack.c.bf16 %v5736, %v5735
        %v5754 = vpack.c.bf16 %v5738, %v5737
        %s5755 = scalar_lea.vmem %s5, 48
        %v5756 = vld [vmem:[%s5755] sm:$0xf]
        %v5757 = vld [vmem:[%s5755 + $0x4] sm:$0xf]
        %v5760 = vunpack.c.l.b16 %v5756
        %v5761 = vunpack.c.l.b16 %v5757
        %v5762 = vpack.c.b16 %v5761, %v5760
        %v5765 = vsel %vm364, %v5739, 0
        %v5768 = vsel %vm364, %v5740, 0
        %v5771 = vsel %vm364, %v5741, 0
        %v5774 = vsel %vm364, %v5742, 0
        %v5777 = vsel %vm364, %v5743, 0
        %v5780 = vsel %vm364, %v5744, 0
        %v5783 = vsel %vm364, %v5745, 0
        %v5786 = vsel %vm364, %v5746, 0
        %v5789 = vsel %vm364, %v5747, 0
        %v5792 = vsel %vm364, %v5748, 0
        %v5795 = vsel %vm364, %v5749, 0
        %v5798 = vsel %vm364, %v5750, 0
        %v5801 = vsel %vm364, %v5751, 0
        %v5804 = vsel %vm364, %v5752, 0
        %v5807 = vsel %vm364, %v5753, 0
        %v5810 = vsel %vm364, %v5754, 0
        %5812 = vmatprep.subr.bf16.mxu0 0
        %5813 = vmatpush1.bf16.msra.mxu0 %v5762
        %5814 = vmatprep.subr.bf16.mxu0 0
        %5815 = vmatpush1.bf16.msra.mxu0 0
        %5816 = vmatprep.subr.bf16.mxu0 0
        %5817 = vmatpush1.bf16.msra.mxu0 0
        %5818 = vmatprep.subr.bf16.mxu0 0
        %5819 = vmatpush1.bf16.msra.mxu0 0
        %5820 = vmatprep.subr.bf16.mxu0 0
        %5821 = vmatpush1.bf16.msra.mxu0 0
        %5822 = vmatprep.subr.bf16.mxu0 0
        %5823 = vmatpush1.bf16.msra.mxu0 0
        %5824 = vmatprep.subr.bf16.mxu0 0
        %5825 = vmatpush1.bf16.msra.mxu0 0
        %5826 = vmatprep.subr.bf16.mxu0 0
        %5827 = vmatpush1.bf16.msra.mxu0 0
        %5828 = vmatprep.subr.bf16.mxu0 0
        %5829 = vmatpush1.bf16.msra.mxu0 0
        %5830 = vmatprep.subr.bf16.mxu0 0
        %5831 = vmatpush1.bf16.msra.mxu0 0
        %5832 = vmatprep.subr.bf16.mxu0 0
        %5833 = vmatpush1.bf16.msra.mxu0 0
        %5834 = vmatprep.subr.bf16.mxu0 0
        %5835 = vmatpush1.bf16.msra.mxu0 0
        %5836 = vmatprep.subr.bf16.mxu0 0
        %5837 = vmatpush1.bf16.msra.mxu0 0
        %5838 = vmatprep.subr.bf16.mxu0 0
        %5839 = vmatpush1.bf16.msra.mxu0 0
        %5840 = vmatprep.subr.bf16.mxu0 0
        %5841 = vmatpush1.bf16.msra.mxu0 0
        %5842 = vmatprep.subr.bf16.mxu0 0
        %5843 = vmatpush1.bf16.msra.mxu0 0
        %5844 = vmatprep.mubr.bf16.mxu0 0
        %5845 = vmatmul.mubr.bf16.gmra.mrb[0].mxu0 %v5765
        %v5846 = vpop.f32.mrb[0].mxu0
        %v5847 = vadd.f32 0.0, %v5846
        %v5848 = vpop.f32.mrb[0].mxu0
        %v5849 = vpop.f32.mrb[0].mxu0
        %v5850 = vadd.f32 0.0, %v5849
        %v5851 = vpop.f32.mrb[0].mxu0
        %5852 = vmatprep.mubr.bf16.mxu0 0
        %5853 = vmatmul.mubr.bf16.gmra.mrb[0].mxu0 %v5768
        %v5854 = vpop.f32.mrb[0].mxu0
        %v5855 = vadd.f32 0.0, %v5854
        %v5856 = vpop.f32.mrb[0].mxu0
        %v5857 = vpop.f32.mrb[0].mxu0
        %v5858 = vadd.f32 0.0, %v5857
        %v5859 = vpop.f32.mrb[0].mxu0
        %5860 = vmatprep.mubr.bf16.mxu0 0
        %5861 = vmatmul.mubr.bf16.gmra.mrb[0].mxu0 %v5771
        %v5862 = vpop.f32.mrb[0].mxu0
        %v5863 = vadd.f32 0.0, %v5862
        %v5864 = vpop.f32.mrb[0].mxu0
        %v5865 = vpop.f32.mrb[0].mxu0
        %v5866 = vadd.f32 0.0, %v5865
        %v5867 = vpop.f32.mrb[0].mxu0
        %5868 = vmatprep.mubr.bf16.mxu0 0
        %5869 = vmatmul.mubr.bf16.gmra.mrb[0].mxu0 %v5774
        %v5870 = vpop.f32.mrb[0].mxu0
        %v5871 = vadd.f32 0.0, %v5870
        %v5872 = vpop.f32.mrb[0].mxu0
        %v5873 = vpop.f32.mrb[0].mxu0
        %v5874 = vadd.f32 0.0, %v5873
        %v5875 = vpop.f32.mrb[0].mxu0
        %5876 = vmatprep.mubr.bf16.mxu0 0
        %5877 = vmatmul.mubr.bf16.gmra.mrb[0].mxu0 %v5777
        %v5878 = vpop.f32.mrb[0].mxu0
        %v5879 = vadd.f32 0.0, %v5878
        %v5880 = vpop.f32.mrb[0].mxu0
        %v5881 = vpop.f32.mrb[0].mxu0
        %v5882 = vadd.f32 0.0, %v5881
        %v5883 = vpop.f32.mrb[0].mxu0
        %5884 = vmatprep.mubr.bf16.mxu0 0
        %5885 = vmatmul.mubr.bf16.gmra.mrb[0].mxu0 %v5780
        %v5886 = vpop.f32.mrb[0].mxu0
        %v5887 = vadd.f32 0.0, %v5886
        %v5888 = vpop.f32.mrb[0].mxu0
        %v5889 = vpop.f32.mrb[0].mxu0
        %v5890 = vadd.f32 0.0, %v5889
        %v5891 = vpop.f32.mrb[0].mxu0
        %5892 = vmatprep.mubr.bf16.mxu0 0
        %5893 = vmatmul.mubr.bf16.gmra.mrb[0].mxu0 %v5783
        %v5894 = vpop.f32.mrb[0].mxu0
        %v5895 = vadd.f32 0.0, %v5894
        %v5896 = vpop.f32.mrb[0].mxu0
        %v5897 = vpop.f32.mrb[0].mxu0
        %v5898 = vadd.f32 0.0, %v5897
        %v5899 = vpop.f32.mrb[0].mxu0
        %5900 = vmatprep.mubr.bf16.mxu0 0
        %5901 = vmatmul.mubr.bf16.gmra.mrb[0].mxu0 %v5786
        %v5902 = vpop.f32.mrb[0].mxu0
        %v5903 = vadd.f32 0.0, %v5902
        %v5904 = vpop.f32.mrb[0].mxu0
        %v5905 = vpop.f32.mrb[0].mxu0
        %v5906 = vadd.f32 0.0, %v5905
        %v5907 = vpop.f32.mrb[0].mxu0
        %5908 = vmatprep.mubr.bf16.mxu0 0
        %5909 = vmatmul.mubr.bf16.gmra.mrb[0].mxu0 %v5789
        %v5910 = vpop.f32.mrb[0].mxu0
        %v5911 = vadd.f32 0.0, %v5910
        %v5912 = vpop.f32.mrb[0].mxu0
        %v5913 = vpop.f32.mrb[0].mxu0
        %v5914 = vadd.f32 0.0, %v5913
        %v5915 = vpop.f32.mrb[0].mxu0
        %5916 = vmatprep.mubr.bf16.mxu0 0
        %5917 = vmatmul.mubr.bf16.gmra.mrb[0].mxu0 %v5792
        %v5918 = vpop.f32.mrb[0].mxu0
        %v5919 = vadd.f32 0.0, %v5918
        %v5920 = vpop.f32.mrb[0].mxu0
        %v5921 = vpop.f32.mrb[0].mxu0
        %v5922 = vadd.f32 0.0, %v5921
        %v5923 = vpop.f32.mrb[0].mxu0
        %5924 = vmatprep.mubr.bf16.mxu0 0
        %5925 = vmatmul.mubr.bf16.gmra.mrb[0].mxu0 %v5795
        %v5926 = vpop.f32.mrb[0].mxu0
        %v5927 = vadd.f32 0.0, %v5926
        %v5928 = vpop.f32.mrb[0].mxu0
        %v5929 = vpop.f32.mrb[0].mxu0
        %v5930 = vadd.f32 0.0, %v5929
        %v5931 = vpop.f32.mrb[0].mxu0
        %5932 = vmatprep.mubr.bf16.mxu0 0
        %5933 = vmatmul.mubr.bf16.gmra.mrb[0].mxu0 %v5798
        %v5934 = vpop.f32.mrb[0].mxu0
        %v5935 = vadd.f32 0.0, %v5934
        %v5936 = vpop.f32.mrb[0].mxu0
        %v5937 = vpop.f32.mrb[0].mxu0
        %v5938 = vadd.f32 0.0, %v5937
        %v5939 = vpop.f32.mrb[0].mxu0
        %5940 = vmatprep.mubr.bf16.mxu0 0
        %5941 = vmatmul.mubr.bf16.gmra.mrb[0].mxu0 %v5801
        %v5942 = vpop.f32.mrb[0].mxu0
        %v5943 = vadd.f32 0.0, %v5942
        %v5944 = vpop.f32.mrb[0].mxu0
        %v5945 = vpop.f32.mrb[0].mxu0
        %v5946 = vadd.f32 0.0, %v5945
        %v5947 = vpop.f32.mrb[0].mxu0
        %5948 = vmatprep.mubr.bf16.mxu0 0
        %5949 = vmatmul.mubr.bf16.gmra.mrb[0].mxu0 %v5804
        %v5950 = vpop.f32.mrb[0].mxu0
        %v5951 = vadd.f32 0.0, %v5950
        %v5952 = vpop.f32.mrb[0].mxu0
        %v5953 = vpop.f32.mrb[0].mxu0
        %v5954 = vadd.f32 0.0, %v5953
        %v5955 = vpop.f32.mrb[0].mxu0
        %5956 = vmatprep.mubr.bf16.mxu0 0
        %5957 = vmatmul.mubr.bf16.gmra.mrb[0].mxu0 %v5807
        %v5958 = vpop.f32.mrb[0].mxu0
        %v5959 = vadd.f32 0.0, %v5958
        %v5960 = vpop.f32.mrb[0].mxu0
        %v5961 = vpop.f32.mrb[0].mxu0
        %v5962 = vadd.f32 0.0, %v5961
        %v5963 = vpop.f32.mrb[0].mxu0
        %5964 = vmatprep.mubr.bf16.mxu0 0
        %5965 = vmatmul.mubr.bf16.gmra.mrb[0].mxu0 %v5810
        %v5966 = vpop.f32.mrb[0].mxu0
        %v5967 = vadd.f32 0.0, %v5966
        %v5968 = vpop.f32.mrb[0].mxu0
        %v5969 = vpop.f32.mrb[0].mxu0
        %v5970 = vadd.f32 0.0, %v5969
        %v5971 = vpop.f32.mrb[0].mxu0
        %5972 = vdwg.mxu0
        %v5973 = vadd.f32 %v5675, %v5847
        %v5974 = vadd.f32 %v5676, %v5850
        %v5975 = vadd.f32 %v5677, %v5855
        %v5976 = vadd.f32 %v5678, %v5858
        %v5977 = vadd.f32 %v5679, %v5863
        %v5978 = vadd.f32 %v5680, %v5866
        %v5979 = vadd.f32 %v5681, %v5871
        %v5980 = vadd.f32 %v5682, %v5874
        %v5981 = vadd.f32 %v5683, %v5879
        %v5982 = vadd.f32 %v5684, %v5882
        %v5983 = vadd.f32 %v5685, %v5887
        %v5984 = vadd.f32 %v5686, %v5890
        %v5985 = vadd.f32 %v5687, %v5895
        %v5986 = vadd.f32 %v5688, %v5898
        %v5987 = vadd.f32 %v5689, %v5903
        %v5988 = vadd.f32 %v5690, %v5906
        %v5989 = vadd.f32 %v5691, %v5911
        %v5990 = vadd.f32 %v5692, %v5914
        %v5991 = vadd.f32 %v5693, %v5919
        %v5992 = vadd.f32 %v5694, %v5922
        %v5993 = vadd.f32 %v5695, %v5927
        %v5994 = vadd.f32 %v5696, %v5930
        %v5995 = vadd.f32 %v5697, %v5935
        %v5996 = vadd.f32 %v5698, %v5938
        %v5997 = vadd.f32 %v5699, %v5943
        %v5998 = vadd.f32 %v5700, %v5946
        %v5999 = vadd.f32 %v5701, %v5951
        %v6000 = vadd.f32 %v5702, %v5954
        %v6001 = vadd.f32 %v5703, %v5959
        %v6002 = vadd.f32 %v5704, %v5962
        %v6003 = vadd.f32 %v5705, %v5967
        %v6004 = vadd.f32 %v5706, %v5970
        %v6005 = vld [vmem:[%s2826 + $0x8] sm:$0xff]
        %v6006 = vld [vmem:[%s2826 + $0x10] sm:$0xff]
        %v6007 = vld [vmem:[%s2826 + $0x28] sm:$0xff]
        %v6008 = vld [vmem:[%s2826 + $0x30] sm:$0xff]
        %v6009 = vld [vmem:[%s2826 + $0x48] sm:$0xff]
        %v6010 = vld [vmem:[%s2826 + $0x50] sm:$0xff]
        %v6011 = vld [vmem:[%s2826 + $0x68] sm:$0xff]
        %v6012 = vld [vmem:[%s2826 + $0x70] sm:$0xff]
        %v6013 = vld [vmem:[%s2826 + $0x88] sm:$0xff]
        %v6014 = vld [vmem:[%s2826 + $0x90] sm:$0xff]
        %v6015 = vld [vmem:[%s2826 + $0xa8] sm:$0xff]
        %v6016 = vld [vmem:[%s2826 + $0xb0] sm:$0xff]
        %v6017 = vld [vmem:[%s2826 + $0xc8] sm:$0xff]
        %v6018 = vld [vmem:[%s2826 + $0xd0] sm:$0xff]
        %v6019 = vld [vmem:[%s2826 + $0xe8] sm:$0xff]
        %v6020 = vld [vmem:[%s2826 + $0xf0] sm:$0xff]
        %v6021 = vld [vmem:[%s2826 + $0x108] sm:$0xff]
        %v6022 = vld [vmem:[%s2826 + $0x110] sm:$0xff]
        %v6023 = vld [vmem:[%s2826 + $0x128] sm:$0xff]
        %v6024 = vld [vmem:[%s2826 + $0x130] sm:$0xff]
        %v6025 = vld [vmem:[%s2826 + $0x148] sm:$0xff]
        %v6026 = vld [vmem:[%s2826 + $0x150] sm:$0xff]
        %v6027 = vld [vmem:[%s2826 + $0x168] sm:$0xff]
        %v6028 = vld [vmem:[%s2826 + $0x170] sm:$0xff]
        %v6029 = vld [vmem:[%s2826 + $0x188] sm:$0xff]
        %v6030 = vld [vmem:[%s2826 + $0x190] sm:$0xff]
        %v6031 = vld [vmem:[%s2826 + $0x1a8] sm:$0xff]
        %v6032 = vld [vmem:[%s2826 + $0x1b0] sm:$0xff]
        %v6033 = vld [vmem:[%s2826 + $0x1c8] sm:$0xff]
        %v6034 = vld [vmem:[%s2826 + $0x1d0] sm:$0xff]
        %v6035 = vld [vmem:[%s2826 + $0x1e8] sm:$0xff]
        %v6036 = vld [vmem:[%s2826 + $0x1f0] sm:$0xff]
        %v6037 = vpack.c.bf16 %v6006, %v6005
        %v6038 = vpack.c.bf16 %v6008, %v6007
        %v6039 = vpack.c.bf16 %v6010, %v6009
        %v6040 = vpack.c.bf16 %v6012, %v6011
        %v6041 = vpack.c.bf16 %v6014, %v6013
        %v6042 = vpack.c.bf16 %v6016, %v6015
        %v6043 = vpack.c.bf16 %v6018, %v6017
        %v6044 = vpack.c.bf16 %v6020, %v6019
        %v6045 = vpack.c.bf16 %v6022, %v6021
        %v6046 = vpack.c.bf16 %v6024, %v6023
        %v6047 = vpack.c.bf16 %v6026, %v6025
        %v6048 = vpack.c.bf16 %v6028, %v6027
        %v6049 = vpack.c.bf16 %v6030, %v6029
        %v6050 = vpack.c.bf16 %v6032, %v6031
        %v6051 = vpack.c.bf16 %v6034, %v6033
        %v6052 = vpack.c.bf16 %v6036, %v6035
        %s6053 = scalar_lea.vmem %s5, 56
        %v6054 = vld [vmem:[%s6053] sm:$0xf]
        %v6055 = vld [vmem:[%s6053 + $0x4] sm:$0xf]
        %v6058 = vunpack.c.l.b16 %v6054
        %v6059 = vunpack.c.l.b16 %v6055
        %v6060 = vpack.c.b16 %v6059, %v6058
        %v6063 = vsel %vm364, %v6037, 0
        %v6066 = vsel %vm364, %v6038, 0
        %v6069 = vsel %vm364, %v6039, 0
        %v6072 = vsel %vm364, %v6040, 0
        %v6075 = vsel %vm364, %v6041, 0
        %v6078 = vsel %vm364, %v6042, 0
        %v6081 = vsel %vm364, %v6043, 0
        %v6084 = vsel %vm364, %v6044, 0
        %v6087 = vsel %vm364, %v6045, 0
        %v6090 = vsel %vm364, %v6046, 0
        %v6093 = vsel %vm364, %v6047, 0
        %v6096 = vsel %vm364, %v6048, 0
        %v6099 = vsel %vm364, %v6049, 0
        %v6102 = vsel %vm364, %v6050, 0
        %v6105 = vsel %vm364, %v6051, 0
        %v6108 = vsel %vm364, %v6052, 0
        %6110 = vmatprep.subr.bf16.mxu0 0
        %6111 = vmatpush1.bf16.msra.mxu0 %v6060
        %6112 = vmatprep.subr.bf16.mxu0 0
        %6113 = vmatpush1.bf16.msra.mxu0 0
        %6114 = vmatprep.subr.bf16.mxu0 0
        %6115 = vmatpush1.bf16.msra.mxu0 0
        %6116 = vmatprep.subr.bf16.mxu0 0
        %6117 = vmatpush1.bf16.msra.mxu0 0
        %6118 = vmatprep.subr.bf16.mxu0 0
        %6119 = vmatpush1.bf16.msra.mxu0 0
        %6120 = vmatprep.subr.bf16.mxu0 0
        %6121 = vmatpush1.bf16.msra.mxu0 0
        %6122 = vmatprep.subr.bf16.mxu0 0
        %6123 = vmatpush1.bf16.msra.mxu0 0
        %6124 = vmatprep.subr.bf16.mxu0 0
        %6125 = vmatpush1.bf16.msra.mxu0 0
        %6126 = vmatprep.subr.bf16.mxu0 0
        %6127 = vmatpush1.bf16.msra.mxu0 0
        %6128 = vmatprep.subr.bf16.mxu0 0
        %6129 = vmatpush1.bf16.msra.mxu0 0
        %6130 = vmatprep.subr.bf16.mxu0 0
        %6131 = vmatpush1.bf16.msra.mxu0 0
        %6132 = vmatprep.subr.bf16.mxu0 0
        %6133 = vmatpush1.bf16.msra.mxu0 0
        %6134 = vmatprep.subr.bf16.mxu0 0
        %6135 = vmatpush1.bf16.msra.mxu0 0
        %6136 = vmatprep.subr.bf16.mxu0 0
        %6137 = vmatpush1.bf16.msra.mxu0 0
        %6138 = vmatprep.subr.bf16.mxu0 0
        %6139 = vmatpush1.bf16.msra.mxu0 0
        %6140 = vmatprep.subr.bf16.mxu0 0
        %6141 = vmatpush1.bf16.msra.mxu0 0
        %6142 = vmatprep.mubr.bf16.mxu0 0
        %6143 = vmatmul.mubr.bf16.gmra.mrb[0].mxu0 %v6063
        %v6144 = vpop.f32.mrb[0].mxu0
        %v6145 = vadd.f32 0.0, %v6144
        %v6146 = vpop.f32.mrb[0].mxu0
        %v6147 = vpop.f32.mrb[0].mxu0
        %v6148 = vadd.f32 0.0, %v6147
        %v6149 = vpop.f32.mrb[0].mxu0
        %6150 = vmatprep.mubr.bf16.mxu0 0
        %6151 = vmatmul.mubr.bf16.gmra.mrb[0].mxu0 %v6066
        %v6152 = vpop.f32.mrb[0].mxu0
        %v6153 = vadd.f32 0.0, %v6152
        %v6154 = vpop.f32.mrb[0].mxu0
        %v6155 = vpop.f32.mrb[0].mxu0
        %v6156 = vadd.f32 0.0, %v6155
        %v6157 = vpop.f32.mrb[0].mxu0
        %6158 = vmatprep.mubr.bf16.mxu0 0
        %6159 = vmatmul.mubr.bf16.gmra.mrb[0].mxu0 %v6069
        %v6160 = vpop.f32.mrb[0].mxu0
        %v6161 = vadd.f32 0.0, %v6160
        %v6162 = vpop.f32.mrb[0].mxu0
        %v6163 = vpop.f32.mrb[0].mxu0
        %v6164 = vadd.f32 0.0, %v6163
        %v6165 = vpop.f32.mrb[0].mxu0
        %6166 = vmatprep.mubr.bf16.mxu0 0
        %6167 = vmatmul.mubr.bf16.gmra.mrb[0].mxu0 %v6072
        %v6168 = vpop.f32.mrb[0].mxu0
        %v6169 = vadd.f32 0.0, %v6168
        %v6170 = vpop.f32.mrb[0].mxu0
        %v6171 = vpop.f32.mrb[0].mxu0
        %v6172 = vadd.f32 0.0, %v6171
        %v6173 = vpop.f32.mrb[0].mxu0
        %6174 = vmatprep.mubr.bf16.mxu0 0
        %6175 = vmatmul.mubr.bf16.gmra.mrb[0].mxu0 %v6075
        %v6176 = vpop.f32.mrb[0].mxu0
        %v6177 = vadd.f32 0.0, %v6176
        %v6178 = vpop.f32.mrb[0].mxu0
        %v6179 = vpop.f32.mrb[0].mxu0
        %v6180 = vadd.f32 0.0, %v6179
        %v6181 = vpop.f32.mrb[0].mxu0
        %6182 = vmatprep.mubr.bf16.mxu0 0
        %6183 = vmatmul.mubr.bf16.gmra.mrb[0].mxu0 %v6078
        %v6184 = vpop.f32.mrb[0].mxu0
        %v6185 = vadd.f32 0.0, %v6184
        %v6186 = vpop.f32.mrb[0].mxu0
        %v6187 = vpop.f32.mrb[0].mxu0
        %v6188 = vadd.f32 0.0, %v6187
        %v6189 = vpop.f32.mrb[0].mxu0
        %6190 = vmatprep.mubr.bf16.mxu0 0
        %6191 = vmatmul.mubr.bf16.gmra.mrb[0].mxu0 %v6081
        %v6192 = vpop.f32.mrb[0].mxu0
        %v6193 = vadd.f32 0.0, %v6192
        %v6194 = vpop.f32.mrb[0].mxu0
        %v6195 = vpop.f32.mrb[0].mxu0
        %v6196 = vadd.f32 0.0, %v6195
        %v6197 = vpop.f32.mrb[0].mxu0
        %6198 = vmatprep.mubr.bf16.mxu0 0
        %6199 = vmatmul.mubr.bf16.gmra.mrb[0].mxu0 %v6084
        %v6200 = vpop.f32.mrb[0].mxu0
        %v6201 = vadd.f32 0.0, %v6200
        %v6202 = vpop.f32.mrb[0].mxu0
        %v6203 = vpop.f32.mrb[0].mxu0
        %v6204 = vadd.f32 0.0, %v6203
        %v6205 = vpop.f32.mrb[0].mxu0
        %6206 = vmatprep.mubr.bf16.mxu0 0
        %6207 = vmatmul.mubr.bf16.gmra.mrb[0].mxu0 %v6087
        %v6208 = vpop.f32.mrb[0].mxu0
        %v6209 = vadd.f32 0.0, %v6208
        %v6210 = vpop.f32.mrb[0].mxu0
        %v6211 = vpop.f32.mrb[0].mxu0
        %v6212 = vadd.f32 0.0, %v6211
        %v6213 = vpop.f32.mrb[0].mxu0
        %6214 = vmatprep.mubr.bf16.mxu0 0
        %6215 = vmatmul.mubr.bf16.gmra.mrb[0].mxu0 %v6090
        %v6216 = vpop.f32.mrb[0].mxu0
        %v6217 = vadd.f32 0.0, %v6216
        %v6218 = vpop.f32.mrb[0].mxu0
        %v6219 = vpop.f32.mrb[0].mxu0
        %v6220 = vadd.f32 0.0, %v6219
        %v6221 = vpop.f32.mrb[0].mxu0
        %6222 = vmatprep.mubr.bf16.mxu0 0
        %6223 = vmatmul.mubr.bf16.gmra.mrb[0].mxu0 %v6093
        %v6224 = vpop.f32.mrb[0].mxu0
        %v6225 = vadd.f32 0.0, %v6224
        %v6226 = vpop.f32.mrb[0].mxu0
        %v6227 = vpop.f32.mrb[0].mxu0
        %v6228 = vadd.f32 0.0, %v6227
        %v6229 = vpop.f32.mrb[0].mxu0
        %6230 = vmatprep.mubr.bf16.mxu0 0
        %6231 = vmatmul.mubr.bf16.gmra.mrb[0].mxu0 %v6096
        %v6232 = vpop.f32.mrb[0].mxu0
        %v6233 = vadd.f32 0.0, %v6232
        %v6234 = vpop.f32.mrb[0].mxu0
        %v6235 = vpop.f32.mrb[0].mxu0
        %v6236 = vadd.f32 0.0, %v6235
        %v6237 = vpop.f32.mrb[0].mxu0
        %6238 = vmatprep.mubr.bf16.mxu0 0
        %6239 = vmatmul.mubr.bf16.gmra.mrb[0].mxu0 %v6099
        %v6240 = vpop.f32.mrb[0].mxu0
        %v6241 = vadd.f32 0.0, %v6240
        %v6242 = vpop.f32.mrb[0].mxu0
        %v6243 = vpop.f32.mrb[0].mxu0
        %v6244 = vadd.f32 0.0, %v6243
        %v6245 = vpop.f32.mrb[0].mxu0
        %6246 = vmatprep.mubr.bf16.mxu0 0
        %6247 = vmatmul.mubr.bf16.gmra.mrb[0].mxu0 %v6102
        %v6248 = vpop.f32.mrb[0].mxu0
        %v6249 = vadd.f32 0.0, %v6248
        %v6250 = vpop.f32.mrb[0].mxu0
        %v6251 = vpop.f32.mrb[0].mxu0
        %v6252 = vadd.f32 0.0, %v6251
        %v6253 = vpop.f32.mrb[0].mxu0
        %6254 = vmatprep.mubr.bf16.mxu0 0
        %6255 = vmatmul.mubr.bf16.gmra.mrb[0].mxu0 %v6105
        %v6256 = vpop.f32.mrb[0].mxu0
        %v6257 = vadd.f32 0.0, %v6256
        %v6258 = vpop.f32.mrb[0].mxu0
        %v6259 = vpop.f32.mrb[0].mxu0
        %v6260 = vadd.f32 0.0, %v6259
        %v6261 = vpop.f32.mrb[0].mxu0
        %6262 = vmatprep.mubr.bf16.mxu0 0
        %6263 = vmatmul.mubr.bf16.gmra.mrb[0].mxu0 %v6108
        %v6264 = vpop.f32.mrb[0].mxu0
        %v6265 = vadd.f32 0.0, %v6264
        %v6266 = vpop.f32.mrb[0].mxu0
        %v6267 = vpop.f32.mrb[0].mxu0
        %v6268 = vadd.f32 0.0, %v6267
        %v6269 = vpop.f32.mrb[0].mxu0
        %6270 = vdwg.mxu0
        %v6271 = vadd.f32 %v5973, %v6145
        %v6272 = vadd.f32 %v5974, %v6148
        %v6273 = vadd.f32 %v5975, %v6153
        %v6274 = vadd.f32 %v5976, %v6156
        %v6275 = vadd.f32 %v5977, %v6161
        %v6276 = vadd.f32 %v5978, %v6164
        %v6277 = vadd.f32 %v5979, %v6169
        %v6278 = vadd.f32 %v5980, %v6172
        %v6279 = vadd.f32 %v5981, %v6177
        %v6280 = vadd.f32 %v5982, %v6180
        %v6281 = vadd.f32 %v5983, %v6185
        %v6282 = vadd.f32 %v5984, %v6188
        %v6283 = vadd.f32 %v5985, %v6193
        %v6284 = vadd.f32 %v5986, %v6196
        %v6285 = vadd.f32 %v5987, %v6201
        %v6286 = vadd.f32 %v5988, %v6204
        %v6287 = vadd.f32 %v5989, %v6209
        %v6288 = vadd.f32 %v5990, %v6212
        %v6289 = vadd.f32 %v5991, %v6217
        %v6290 = vadd.f32 %v5992, %v6220
        %v6291 = vadd.f32 %v5993, %v6225
        %v6292 = vadd.f32 %v5994, %v6228
        %v6293 = vadd.f32 %v5995, %v6233
        %v6294 = vadd.f32 %v5996, %v6236
        %v6295 = vadd.f32 %v5997, %v6241
        %v6296 = vadd.f32 %v5998, %v6244
        %v6297 = vadd.f32 %v5999, %v6249
        %v6298 = vadd.f32 %v6000, %v6252
        %v6299 = vadd.f32 %v6001, %v6257
        %v6300 = vadd.f32 %v6002, %v6260
        %v6301 = vadd.f32 %v6003, %v6265
        %v6302 = vadd.f32 %v6004, %v6268
        %v6303 = vld [vmem:[%s2826 + $0x9] sm:$0xff]
        %v6304 = vld [vmem:[%s2826 + $0x11] sm:$0xff]
        %v6305 = vld [vmem:[%s2826 + $0x29] sm:$0xff]
        %v6306 = vld [vmem:[%s2826 + $0x31] sm:$0xff]
        %v6307 = vld [vmem:[%s2826 + $0x49] sm:$0xff]
        %v6308 = vld [vmem:[%s2826 + $0x51] sm:$0xff]
        %v6309 = vld [vmem:[%s2826 + $0x69] sm:$0xff]
        %v6310 = vld [vmem:[%s2826 + $0x71] sm:$0xff]
        %v6311 = vld [vmem:[%s2826 + $0x89] sm:$0xff]
        %v6312 = vld [vmem:[%s2826 + $0x91] sm:$0xff]
        %v6313 = vld [vmem:[%s2826 + $0xa9] sm:$0xff]
        %v6314 = vld [vmem:[%s2826 + $0xb1] sm:$0xff]
        %v6315 = vld [vmem:[%s2826 + $0xc9] sm:$0xff]
        %v6316 = vld [vmem:[%s2826 + $0xd1] sm:$0xff]
        %v6317 = vld [vmem:[%s2826 + $0xe9] sm:$0xff]
        %v6318 = vld [vmem:[%s2826 + $0xf1] sm:$0xff]
        %v6319 = vld [vmem:[%s2826 + $0x109] sm:$0xff]
        %v6320 = vld [vmem:[%s2826 + $0x111] sm:$0xff]
        %v6321 = vld [vmem:[%s2826 + $0x129] sm:$0xff]
        %v6322 = vld [vmem:[%s2826 + $0x131] sm:$0xff]
        %v6323 = vld [vmem:[%s2826 + $0x149] sm:$0xff]
        %v6324 = vld [vmem:[%s2826 + $0x151] sm:$0xff]
        %v6325 = vld [vmem:[%s2826 + $0x169] sm:$0xff]
        %v6326 = vld [vmem:[%s2826 + $0x171] sm:$0xff]
        %v6327 = vld [vmem:[%s2826 + $0x189] sm:$0xff]
        %v6328 = vld [vmem:[%s2826 + $0x191] sm:$0xff]
        %v6329 = vld [vmem:[%s2826 + $0x1a9] sm:$0xff]
        %v6330 = vld [vmem:[%s2826 + $0x1b1] sm:$0xff]
        %v6331 = vld [vmem:[%s2826 + $0x1c9] sm:$0xff]
        %v6332 = vld [vmem:[%s2826 + $0x1d1] sm:$0xff]
        %v6333 = vld [vmem:[%s2826 + $0x1e9] sm:$0xff]
        %v6334 = vld [vmem:[%s2826 + $0x1f1] sm:$0xff]
        %v6335 = vpack.c.bf16 %v6304, %v6303
        %v6336 = vpack.c.bf16 %v6306, %v6305
        %v6337 = vpack.c.bf16 %v6308, %v6307
        %v6338 = vpack.c.bf16 %v6310, %v6309
        %v6339 = vpack.c.bf16 %v6312, %v6311
        %v6340 = vpack.c.bf16 %v6314, %v6313
        %v6341 = vpack.c.bf16 %v6316, %v6315
        %v6342 = vpack.c.bf16 %v6318, %v6317
        %v6343 = vpack.c.bf16 %v6320, %v6319
        %v6344 = vpack.c.bf16 %v6322, %v6321
        %v6345 = vpack.c.bf16 %v6324, %v6323
        %v6346 = vpack.c.bf16 %v6326, %v6325
        %v6347 = vpack.c.bf16 %v6328, %v6327
        %v6348 = vpack.c.bf16 %v6330, %v6329
        %v6349 = vpack.c.bf16 %v6332, %v6331
        %v6350 = vpack.c.bf16 %v6334, %v6333
        %s6351 = scalar_lea.vmem %s5, 64
        %v6352 = vld [vmem:[%s6351] sm:$0xf]
        %v6353 = vld [vmem:[%s6351 + $0x4] sm:$0xf]
        %v6356 = vunpack.c.l.b16 %v6352
        %v6357 = vunpack.c.l.b16 %v6353
        %v6358 = vpack.c.b16 %v6357, %v6356
        %v6361 = vsel %vm364, %v6335, 0
        %v6364 = vsel %vm364, %v6336, 0
        %v6367 = vsel %vm364, %v6337, 0
        %v6370 = vsel %vm364, %v6338, 0
        %v6373 = vsel %vm364, %v6339, 0
        %v6376 = vsel %vm364, %v6340, 0
        %v6379 = vsel %vm364, %v6341, 0
        %v6382 = vsel %vm364, %v6342, 0
        %v6385 = vsel %vm364, %v6343, 0
        %v6388 = vsel %vm364, %v6344, 0
        %v6391 = vsel %vm364, %v6345, 0
        %v6394 = vsel %vm364, %v6346, 0
        %v6397 = vsel %vm364, %v6347, 0
        %v6400 = vsel %vm364, %v6348, 0
        %v6403 = vsel %vm364, %v6349, 0
        %v6406 = vsel %vm364, %v6350, 0
        %6408 = vmatprep.subr.bf16.mxu0 0
        %6409 = vmatpush1.bf16.msra.mxu0 %v6358
        %6410 = vmatprep.subr.bf16.mxu0 0
        %6411 = vmatpush1.bf16.msra.mxu0 0
        %6412 = vmatprep.subr.bf16.mxu0 0
        %6413 = vmatpush1.bf16.msra.mxu0 0
        %6414 = vmatprep.subr.bf16.mxu0 0
        %6415 = vmatpush1.bf16.msra.mxu0 0
        %6416 = vmatprep.subr.bf16.mxu0 0
        %6417 = vmatpush1.bf16.msra.mxu0 0
        %6418 = vmatprep.subr.bf16.mxu0 0
        %6419 = vmatpush1.bf16.msra.mxu0 0
        %6420 = vmatprep.subr.bf16.mxu0 0
        %6421 = vmatpush1.bf16.msra.mxu0 0
        %6422 = vmatprep.subr.bf16.mxu0 0
        %6423 = vmatpush1.bf16.msra.mxu0 0
        %6424 = vmatprep.subr.bf16.mxu0 0
        %6425 = vmatpush1.bf16.msra.mxu0 0
        %6426 = vmatprep.subr.bf16.mxu0 0
        %6427 = vmatpush1.bf16.msra.mxu0 0
        %6428 = vmatprep.subr.bf16.mxu0 0
        %6429 = vmatpush1.bf16.msra.mxu0 0
        %6430 = vmatprep.subr.bf16.mxu0 0
        %6431 = vmatpush1.bf16.msra.mxu0 0
        %6432 = vmatprep.subr.bf16.mxu0 0
        %6433 = vmatpush1.bf16.msra.mxu0 0
        %6434 = vmatprep.subr.bf16.mxu0 0
        %6435 = vmatpush1.bf16.msra.mxu0 0
        %6436 = vmatprep.subr.bf16.mxu0 0
        %6437 = vmatpush1.bf16.msra.mxu0 0
        %6438 = vmatprep.subr.bf16.mxu0 0
        %6439 = vmatpush1.bf16.msra.mxu0 0
        %6440 = vmatprep.mubr.bf16.mxu0 0
        %6441 = vmatmul.mubr.bf16.gmra.mrb[0].mxu0 %v6361
        %v6442 = vpop.f32.mrb[0].mxu0
        %v6443 = vadd.f32 0.0, %v6442
        %v6444 = vpop.f32.mrb[0].mxu0
        %v6445 = vpop.f32.mrb[0].mxu0
        %v6446 = vadd.f32 0.0, %v6445
        %v6447 = vpop.f32.mrb[0].mxu0
        %6448 = vmatprep.mubr.bf16.mxu0 0
        %6449 = vmatmul.mubr.bf16.gmra.mrb[0].mxu0 %v6364
        %v6450 = vpop.f32.mrb[0].mxu0
        %v6451 = vadd.f32 0.0, %v6450
        %v6452 = vpop.f32.mrb[0].mxu0
        %v6453 = vpop.f32.mrb[0].mxu0
        %v6454 = vadd.f32 0.0, %v6453
        %v6455 = vpop.f32.mrb[0].mxu0
        %6456 = vmatprep.mubr.bf16.mxu0 0
        %6457 = vmatmul.mubr.bf16.gmra.mrb[0].mxu0 %v6367
        %v6458 = vpop.f32.mrb[0].mxu0
        %v6459 = vadd.f32 0.0, %v6458
        %v6460 = vpop.f32.mrb[0].mxu0
        %v6461 = vpop.f32.mrb[0].mxu0
        %v6462 = vadd.f32 0.0, %v6461
        %v6463 = vpop.f32.mrb[0].mxu0
        %6464 = vmatprep.mubr.bf16.mxu0 0
        %6465 = vmatmul.mubr.bf16.gmra.mrb[0].mxu0 %v6370
        %v6466 = vpop.f32.mrb[0].mxu0
        %v6467 = vadd.f32 0.0, %v6466
        %v6468 = vpop.f32.mrb[0].mxu0
        %v6469 = vpop.f32.mrb[0].mxu0
        %v6470 = vadd.f32 0.0, %v6469
        %v6471 = vpop.f32.mrb[0].mxu0
        %6472 = vmatprep.mubr.bf16.mxu0 0
        %6473 = vmatmul.mubr.bf16.gmra.mrb[0].mxu0 %v6373
        %v6474 = vpop.f32.mrb[0].mxu0
        %v6475 = vadd.f32 0.0, %v6474
        %v6476 = vpop.f32.mrb[0].mxu0
        %v6477 = vpop.f32.mrb[0].mxu0
        %v6478 = vadd.f32 0.0, %v6477
        %v6479 = vpop.f32.mrb[0].mxu0
        %6480 = vmatprep.mubr.bf16.mxu0 0
        %6481 = vmatmul.mubr.bf16.gmra.mrb[0].mxu0 %v6376
        %v6482 = vpop.f32.mrb[0].mxu0
        %v6483 = vadd.f32 0.0, %v6482
        %v6484 = vpop.f32.mrb[0].mxu0
        %v6485 = vpop.f32.mrb[0].mxu0
        %v6486 = vadd.f32 0.0, %v6485
        %v6487 = vpop.f32.mrb[0].mxu0
        %6488 = vmatprep.mubr.bf16.mxu0 0
        %6489 = vmatmul.mubr.bf16.gmra.mrb[0].mxu0 %v6379
        %v6490 = vpop.f32.mrb[0].mxu0
        %v6491 = vadd.f32 0.0, %v6490
        %v6492 = vpop.f32.mrb[0].mxu0
        %v6493 = vpop.f32.mrb[0].mxu0
        %v6494 = vadd.f32 0.0, %v6493
        %v6495 = vpop.f32.mrb[0].mxu0
        %6496 = vmatprep.mubr.bf16.mxu0 0
        %6497 = vmatmul.mubr.bf16.gmra.mrb[0].mxu0 %v6382
        %v6498 = vpop.f32.mrb[0].mxu0
        %v6499 = vadd.f32 0.0, %v6498
        %v6500 = vpop.f32.mrb[0].mxu0
        %v6501 = vpop.f32.mrb[0].mxu0
        %v6502 = vadd.f32 0.0, %v6501
        %v6503 = vpop.f32.mrb[0].mxu0
        %6504 = vmatprep.mubr.bf16.mxu0 0
        %6505 = vmatmul.mubr.bf16.gmra.mrb[0].mxu0 %v6385
        %v6506 = vpop.f32.mrb[0].mxu0
        %v6507 = vadd.f32 0.0, %v6506
        %v6508 = vpop.f32.mrb[0].mxu0
        %v6509 = vpop.f32.mrb[0].mxu0
        %v6510 = vadd.f32 0.0, %v6509
        %v6511 = vpop.f32.mrb[0].mxu0
        %6512 = vmatprep.mubr.bf16.mxu0 0
        %6513 = vmatmul.mubr.bf16.gmra.mrb[0].mxu0 %v6388
        %v6514 = vpop.f32.mrb[0].mxu0
        %v6515 = vadd.f32 0.0, %v6514
        %v6516 = vpop.f32.mrb[0].mxu0
        %v6517 = vpop.f32.mrb[0].mxu0
        %v6518 = vadd.f32 0.0, %v6517
        %v6519 = vpop.f32.mrb[0].mxu0
        %6520 = vmatprep.mubr.bf16.mxu0 0
        %6521 = vmatmul.mubr.bf16.gmra.mrb[0].mxu0 %v6391
        %v6522 = vpop.f32.mrb[0].mxu0
        %v6523 = vadd.f32 0.0, %v6522
        %v6524 = vpop.f32.mrb[0].mxu0
        %v6525 = vpop.f32.mrb[0].mxu0
        %v6526 = vadd.f32 0.0, %v6525
        %v6527 = vpop.f32.mrb[0].mxu0
        %6528 = vmatprep.mubr.bf16.mxu0 0
        %6529 = vmatmul.mubr.bf16.gmra.mrb[0].mxu0 %v6394
        %v6530 = vpop.f32.mrb[0].mxu0
        %v6531 = vadd.f32 0.0, %v6530
        %v6532 = vpop.f32.mrb[0].mxu0
        %v6533 = vpop.f32.mrb[0].mxu0
        %v6534 = vadd.f32 0.0, %v6533
        %v6535 = vpop.f32.mrb[0].mxu0
        %6536 = vmatprep.mubr.bf16.mxu0 0
        %6537 = vmatmul.mubr.bf16.gmra.mrb[0].mxu0 %v6397
        %v6538 = vpop.f32.mrb[0].mxu0
        %v6539 = vadd.f32 0.0, %v6538
        %v6540 = vpop.f32.mrb[0].mxu0
        %v6541 = vpop.f32.mrb[0].mxu0
        %v6542 = vadd.f32 0.0, %v6541
        %v6543 = vpop.f32.mrb[0].mxu0
        %6544 = vmatprep.mubr.bf16.mxu0 0
        %6545 = vmatmul.mubr.bf16.gmra.mrb[0].mxu0 %v6400
        %v6546 = vpop.f32.mrb[0].mxu0
        %v6547 = vadd.f32 0.0, %v6546
        %v6548 = vpop.f32.mrb[0].mxu0
        %v6549 = vpop.f32.mrb[0].mxu0
        %v6550 = vadd.f32 0.0, %v6549
        %v6551 = vpop.f32.mrb[0].mxu0
        %6552 = vmatprep.mubr.bf16.mxu0 0
        %6553 = vmatmul.mubr.bf16.gmra.mrb[0].mxu0 %v6403
        %v6554 = vpop.f32.mrb[0].mxu0
        %v6555 = vadd.f32 0.0, %v6554
        %v6556 = vpop.f32.mrb[0].mxu0
        %v6557 = vpop.f32.mrb[0].mxu0
        %v6558 = vadd.f32 0.0, %v6557
        %v6559 = vpop.f32.mrb[0].mxu0
        %6560 = vmatprep.mubr.bf16.mxu0 0
        %6561 = vmatmul.mubr.bf16.gmra.mrb[0].mxu0 %v6406
        %v6562 = vpop.f32.mrb[0].mxu0
        %v6563 = vadd.f32 0.0, %v6562
        %v6564 = vpop.f32.mrb[0].mxu0
        %v6565 = vpop.f32.mrb[0].mxu0
        %v6566 = vadd.f32 0.0, %v6565
        %v6567 = vpop.f32.mrb[0].mxu0
        %6568 = vdwg.mxu0
        %v6569 = vadd.f32 %v6271, %v6443
        %v6570 = vadd.f32 %v6272, %v6446
        %v6571 = vadd.f32 %v6273, %v6451
        %v6572 = vadd.f32 %v6274, %v6454
        %v6573 = vadd.f32 %v6275, %v6459
        %v6574 = vadd.f32 %v6276, %v6462
        %v6575 = vadd.f32 %v6277, %v6467
        %v6576 = vadd.f32 %v6278, %v6470
        %v6577 = vadd.f32 %v6279, %v6475
        %v6578 = vadd.f32 %v6280, %v6478
        %v6579 = vadd.f32 %v6281, %v6483
        %v6580 = vadd.f32 %v6282, %v6486
        %v6581 = vadd.f32 %v6283, %v6491
        %v6582 = vadd.f32 %v6284, %v6494
        %v6583 = vadd.f32 %v6285, %v6499
        %v6584 = vadd.f32 %v6286, %v6502
        %v6585 = vadd.f32 %v6287, %v6507
        %v6586 = vadd.f32 %v6288, %v6510
        %v6587 = vadd.f32 %v6289, %v6515
        %v6588 = vadd.f32 %v6290, %v6518
        %v6589 = vadd.f32 %v6291, %v6523
        %v6590 = vadd.f32 %v6292, %v6526
        %v6591 = vadd.f32 %v6293, %v6531
        %v6592 = vadd.f32 %v6294, %v6534
        %v6593 = vadd.f32 %v6295, %v6539
        %v6594 = vadd.f32 %v6296, %v6542
        %v6595 = vadd.f32 %v6297, %v6547
        %v6596 = vadd.f32 %v6298, %v6550
        %v6597 = vadd.f32 %v6299, %v6555
        %v6598 = vadd.f32 %v6300, %v6558
        %v6599 = vadd.f32 %v6301, %v6563
        %v6600 = vadd.f32 %v6302, %v6566
        %v6601 = vld [vmem:[%s6] sm:$0x1]
        %v6603 = vlaneseq
        %v6604 = vshrl.u32 %v6603, 7
        %v6605 = vsub.s32 0, %v6604
        %v6606 = vrot.slane %v6601, %v6605
        %v6608 = vadd.f32 %v6569, %v6606
        %v6609 = vadd.f32 %v6570, %v6606
        %v6610 = vadd.f32 %v6571, %v6606
        %v6611 = vadd.f32 %v6572, %v6606
        %v6612 = vadd.f32 %v6573, %v6606
        %v6613 = vadd.f32 %v6574, %v6606
        %v6614 = vadd.f32 %v6575, %v6606
        %v6615 = vadd.f32 %v6576, %v6606
        %v6616 = vadd.f32 %v6577, %v6606
        %v6617 = vadd.f32 %v6578, %v6606
        %v6618 = vadd.f32 %v6579, %v6606
        %v6619 = vadd.f32 %v6580, %v6606
        %v6620 = vadd.f32 %v6581, %v6606
        %v6621 = vadd.f32 %v6582, %v6606
        %v6622 = vadd.f32 %v6583, %v6606
        %v6623 = vadd.f32 %v6584, %v6606
        %v6624 = vadd.f32 %v6585, %v6606
        %v6625 = vadd.f32 %v6586, %v6606
        %v6626 = vadd.f32 %v6587, %v6606
        %v6627 = vadd.f32 %v6588, %v6606
        %v6628 = vadd.f32 %v6589, %v6606
        %v6629 = vadd.f32 %v6590, %v6606
        %v6630 = vadd.f32 %v6591, %v6606
        %v6631 = vadd.f32 %v6592, %v6606
        %v6632 = vadd.f32 %v6593, %v6606
        %v6633 = vadd.f32 %v6594, %v6606
        %v6634 = vadd.f32 %v6595, %v6606
        %v6635 = vadd.f32 %v6596, %v6606
        %v6636 = vadd.f32 %v6597, %v6606
        %v6637 = vadd.f32 %v6598, %v6606
        %v6638 = vadd.f32 %v6599, %v6606
        %v6639 = vadd.f32 %v6600, %v6606
        %v6640 = vsub.f32 0.0, %v6608
        %v6641 = vsub.f32 0.0, %v6609
        %v6642 = vsub.f32 0.0, %v6610
        %v6643 = vsub.f32 0.0, %v6611
        %v6644 = vsub.f32 0.0, %v6612
        %v6645 = vsub.f32 0.0, %v6613
        %v6646 = vsub.f32 0.0, %v6614
        %v6647 = vsub.f32 0.0, %v6615
        %v6648 = vsub.f32 0.0, %v6616
        %v6649 = vsub.f32 0.0, %v6617
        %v6650 = vsub.f32 0.0, %v6618
        %v6651 = vsub.f32 0.0, %v6619
        %v6652 = vsub.f32 0.0, %v6620
        %v6653 = vsub.f32 0.0, %v6621
        %v6654 = vsub.f32 0.0, %v6622
        %v6655 = vsub.f32 0.0, %v6623
        %v6656 = vsub.f32 0.0, %v6624
        %v6657 = vsub.f32 0.0, %v6625
        %v6658 = vsub.f32 0.0, %v6626
        %v6659 = vsub.f32 0.0, %v6627
        %v6660 = vsub.f32 0.0, %v6628
        %v6661 = vsub.f32 0.0, %v6629
        %v6662 = vsub.f32 0.0, %v6630
        %v6663 = vsub.f32 0.0, %v6631
        %v6664 = vsub.f32 0.0, %v6632
        %v6665 = vsub.f32 0.0, %v6633
        %v6666 = vsub.f32 0.0, %v6634
        %v6667 = vsub.f32 0.0, %v6635
        %v6668 = vsub.f32 0.0, %v6636
        %v6669 = vsub.f32 0.0, %v6637
        %v6670 = vsub.f32 0.0, %v6638
        %v6671 = vsub.f32 0.0, %v6639
        %v6672 = vmul.f32 %v6640, 1.442695
        %v6673 = vpow.pop %v6672
        %v6674 = vmul.f32 %v6641, 1.442695
        %v6675 = vpow.pop %v6674
        %v6676 = vmul.f32 %v6642, 1.442695
        %v6677 = vpow.pop %v6676
        %v6678 = vmul.f32 %v6643, 1.442695
        %v6679 = vpow.pop %v6678
        %v6680 = vmul.f32 %v6644, 1.442695
        %v6681 = vpow.pop %v6680
        %v6682 = vmul.f32 %v6645, 1.442695
        %v6683 = vpow.pop %v6682
        %v6684 = vmul.f32 %v6646, 1.442695
        %v6685 = vpow.pop %v6684
        %v6686 = vmul.f32 %v6647, 1.442695
        %v6687 = vpow.pop %v6686
        %v6688 = vmul.f32 %v6648, 1.442695
        %v6689 = vpow.pop %v6688
        %v6690 = vmul.f32 %v6649, 1.442695
        %v6691 = vpow.pop %v6690
        %v6692 = vmul.f32 %v6650, 1.442695
        %v6693 = vpow.pop %v6692
        %v6694 = vmul.f32 %v6651, 1.442695
        %v6695 = vpow.pop %v6694
        %v6696 = vmul.f32 %v6652, 1.442695
        %v6697 = vpow.pop %v6696
        %v6698 = vmul.f32 %v6653, 1.442695
        %v6699 = vpow.pop %v6698
        %v6700 = vmul.f32 %v6654, 1.442695
        %v6701 = vpow.pop %v6700
        %v6702 = vmul.f32 %v6655, 1.442695
        %v6703 = vpow.pop %v6702
        %v6704 = vmul.f32 %v6656, 1.442695
        %v6705 = vpow.pop %v6704
        %v6706 = vmul.f32 %v6657, 1.442695
        %v6707 = vpow.pop %v6706
        %v6708 = vmul.f32 %v6658, 1.442695
        %v6709 = vpow.pop %v6708
        %v6710 = vmul.f32 %v6659, 1.442695
        %v6711 = vpow.pop %v6710
        %v6712 = vmul.f32 %v6660, 1.442695
        %v6713 = vpow.pop %v6712
        %v6714 = vmul.f32 %v6661, 1.442695
        %v6715 = vpow.pop %v6714
        %v6716 = vmul.f32 %v6662, 1.442695
        %v6717 = vpow.pop %v6716
        %v6718 = vmul.f32 %v6663, 1.442695
        %v6719 = vpow.pop %v6718
        %v6720 = vmul.f32 %v6664, 1.442695
        %v6721 = vpow.pop %v6720
        %v6722 = vmul.f32 %v6665, 1.442695
        %v6723 = vpow.pop %v6722
        %v6724 = vmul.f32 %v6666, 1.442695
        %v6725 = vpow.pop %v6724
        %v6726 = vmul.f32 %v6667, 1.442695
        %v6727 = vpow.pop %v6726
        %v6728 = vmul.f32 %v6668, 1.442695
        %v6729 = vpow.pop %v6728
        %v6730 = vmul.f32 %v6669, 1.442695
        %v6731 = vpow.pop %v6730
        %v6732 = vmul.f32 %v6670, 1.442695
        %v6733 = vpow.pop %v6732
        %v6734 = vmul.f32 %v6671, 1.442695
        %v6735 = vpow.pop %v6734
        %v6736 = vadd.f32 %v6673, 1.0
        %v6737 = vadd.f32 %v6675, 1.0
        %v6738 = vadd.f32 %v6677, 1.0
        %v6739 = vadd.f32 %v6679, 1.0
        %v6740 = vadd.f32 %v6681, 1.0
        %v6741 = vadd.f32 %v6683, 1.0
        %v6742 = vadd.f32 %v6685, 1.0
        %v6743 = vadd.f32 %v6687, 1.0
        %v6744 = vadd.f32 %v6689, 1.0
        %v6745 = vadd.f32 %v6691, 1.0
        %v6746 = vadd.f32 %v6693, 1.0
        %v6747 = vadd.f32 %v6695, 1.0
        %v6748 = vadd.f32 %v6697, 1.0
        %v6749 = vadd.f32 %v6699, 1.0
        %v6750 = vadd.f32 %v6701, 1.0
        %v6751 = vadd.f32 %v6703, 1.0
        %v6752 = vadd.f32 %v6705, 1.0
        %v6753 = vadd.f32 %v6707, 1.0
        %v6754 = vadd.f32 %v6709, 1.0
        %v6755 = vadd.f32 %v6711, 1.0
        %v6756 = vadd.f32 %v6713, 1.0
        %v6757 = vadd.f32 %v6715, 1.0
        %v6758 = vadd.f32 %v6717, 1.0
        %v6759 = vadd.f32 %v6719, 1.0
        %v6760 = vadd.f32 %v6721, 1.0
        %v6761 = vadd.f32 %v6723, 1.0
        %v6762 = vadd.f32 %v6725, 1.0
        %v6763 = vadd.f32 %v6727, 1.0
        %v6764 = vadd.f32 %v6729, 1.0
        %v6765 = vadd.f32 %v6731, 1.0
        %v6766 = vadd.f32 %v6733, 1.0
        %v6767 = vadd.f32 %v6735, 1.0
        %v6768 = vrcp.pop %v6736
        %v6769 = vrcp.pop %v6737
        %v6770 = vrcp.pop %v6738
        %v6771 = vrcp.pop %v6739
        %v6772 = vrcp.pop %v6740
        %v6773 = vrcp.pop %v6741
        %v6774 = vrcp.pop %v6742
        %v6775 = vrcp.pop %v6743
        %v6776 = vrcp.pop %v6744
        %v6777 = vrcp.pop %v6745
        %v6778 = vrcp.pop %v6746
        %v6779 = vrcp.pop %v6747
        %v6780 = vrcp.pop %v6748
        %v6781 = vrcp.pop %v6749
        %v6782 = vrcp.pop %v6750
        %v6783 = vrcp.pop %v6751
        %v6784 = vrcp.pop %v6752
        %v6785 = vrcp.pop %v6753
        %v6786 = vrcp.pop %v6754
        %v6787 = vrcp.pop %v6755
        %v6788 = vrcp.pop %v6756
        %v6789 = vrcp.pop %v6757
        %v6790 = vrcp.pop %v6758
        %v6791 = vrcp.pop %v6759
        %v6792 = vrcp.pop %v6760
        %v6793 = vrcp.pop %v6761
        %v6794 = vrcp.pop %v6762
        %v6795 = vrcp.pop %v6763
        %v6796 = vrcp.pop %v6764
        %v6797 = vrcp.pop %v6765
        %v6798 = vrcp.pop %v6766
        %v6799 = vrcp.pop %v6767
        %v6800 = vmul.f32 %v6608, %v6768
        %v6801 = vmul.f32 %v6609, %v6769
        %v6802 = vmul.f32 %v6610, %v6770
        %v6803 = vmul.f32 %v6611, %v6771
        %v6804 = vmul.f32 %v6612, %v6772
        %v6805 = vmul.f32 %v6613, %v6773
        %v6806 = vmul.f32 %v6614, %v6774
        %v6807 = vmul.f32 %v6615, %v6775
        %v6808 = vmul.f32 %v6616, %v6776
        %v6809 = vmul.f32 %v6617, %v6777
        %v6810 = vmul.f32 %v6618, %v6778
        %v6811 = vmul.f32 %v6619, %v6779
        %v6812 = vmul.f32 %v6620, %v6780
        %v6813 = vmul.f32 %v6621, %v6781
        %v6814 = vmul.f32 %v6622, %v6782
        %v6815 = vmul.f32 %v6623, %v6783
        %v6816 = vmul.f32 %v6624, %v6784
        %v6817 = vmul.f32 %v6625, %v6785
        %v6818 = vmul.f32 %v6626, %v6786
        %v6819 = vmul.f32 %v6627, %v6787
        %v6820 = vmul.f32 %v6628, %v6788
        %v6821 = vmul.f32 %v6629, %v6789
        %v6822 = vmul.f32 %v6630, %v6790
        %v6823 = vmul.f32 %v6631, %v6791
        %v6824 = vmul.f32 %v6632, %v6792
        %v6825 = vmul.f32 %v6633, %v6793
        %v6826 = vmul.f32 %v6634, %v6794
        %v6827 = vmul.f32 %v6635, %v6795
        %v6828 = vmul.f32 %v6636, %v6796
        %v6829 = vmul.f32 %v6637, %v6797
        %v6830 = vmul.f32 %v6638, %v6798
        %v6831 = vmul.f32 %v6639, %v6799
        %v6832 = vpack.c.bf16 %v6801, %v6800
        %v6833 = vpack.c.bf16 %v6803, %v6802
        %v6834 = vpack.c.bf16 %v6805, %v6804
        %v6835 = vpack.c.bf16 %v6807, %v6806
        %v6836 = vpack.c.bf16 %v6809, %v6808
        %v6837 = vpack.c.bf16 %v6811, %v6810
        %v6838 = vpack.c.bf16 %v6813, %v6812
        %v6839 = vpack.c.bf16 %v6815, %v6814
        %v6840 = vpack.c.bf16 %v6817, %v6816
        %v6841 = vpack.c.bf16 %v6819, %v6818
        %v6842 = vpack.c.bf16 %v6821, %v6820
        %v6843 = vpack.c.bf16 %v6823, %v6822
        %v6844 = vpack.c.bf16 %v6825, %v6824
        %v6845 = vpack.c.bf16 %v6827, %v6826
        %v6846 = vpack.c.bf16 %v6829, %v6828
        %v6847 = vpack.c.bf16 %v6831, %v6830
        %v6848 = vld [vmem:[%s7] sm:$0xf]
        %v6849 = vld [vmem:[%s7 + $0x4] sm:$0xf]
        %v6850 = vld [vmem:[%s8] sm:$0x1]
        %v6852 = vlaneseq
        %v6853 = vshrl.u32 %v6852, 7
        %v6854 = vsub.s32 0, %v6853
        %v6855 = vrot.slane %v6850, %v6854
        %v6859 = vunpack.c.l.b16 %v6848
        %v6860 = vunpack.c.l.b16 %v6849
        %v6861 = vpack.c.b16 %v6860, %v6859
        %v6864 = vsel %vm364, %v6832, 0
        %v6867 = vsel %vm364, %v6833, 0
        %v6870 = vsel %vm364, %v6834, 0
        %v6873 = vsel %vm364, %v6835, 0
        %v6876 = vsel %vm364, %v6836, 0
        %v6879 = vsel %vm364, %v6837, 0
        %v6882 = vsel %vm364, %v6838, 0
        %v6885 = vsel %vm364, %v6839, 0
        %v6888 = vsel %vm364, %v6840, 0
        %v6891 = vsel %vm364, %v6841, 0
        %v6894 = vsel %vm364, %v6842, 0
        %v6897 = vsel %vm364, %v6843, 0
        %v6900 = vsel %vm364, %v6844, 0
        %v6903 = vsel %vm364, %v6845, 0
        %v6906 = vsel %vm364, %v6846, 0
        %v6909 = vsel %vm364, %v6847, 0
        %6911 = vmatprep.subr.bf16.mxu0 0
        %6912 = vmatpush1.bf16.msra.mxu0 %v6861
        %6913 = vmatprep.subr.bf16.mxu0 0
        %6914 = vmatpush1.bf16.msra.mxu0 0
        %6915 = vmatprep.subr.bf16.mxu0 0
        %6916 = vmatpush1.bf16.msra.mxu0 0
        %6917 = vmatprep.subr.bf16.mxu0 0
        %6918 = vmatpush1.bf16.msra.mxu0 0
        %6919 = vmatprep.subr.bf16.mxu0 0
        %6920 = vmatpush1.bf16.msra.mxu0 0
        %6921 = vmatprep.subr.bf16.mxu0 0
        %6922 = vmatpush1.bf16.msra.mxu0 0
        %6923 = vmatprep.subr.bf16.mxu0 0
        %6924 = vmatpush1.bf16.msra.mxu0 0
        %6925 = vmatprep.subr.bf16.mxu0 0
        %6926 = vmatpush1.bf16.msra.mxu0 0
        %6927 = vmatprep.subr.bf16.mxu0 0
        %6928 = vmatpush1.bf16.msra.mxu0 0
        %6929 = vmatprep.subr.bf16.mxu0 0
        %6930 = vmatpush1.bf16.msra.mxu0 0
        %6931 = vmatprep.subr.bf16.mxu0 0
        %6932 = vmatpush1.bf16.msra.mxu0 0
        %6933 = vmatprep.subr.bf16.mxu0 0
        %6934 = vmatpush1.bf16.msra.mxu0 0
        %6935 = vmatprep.subr.bf16.mxu0 0
        %6936 = vmatpush1.bf16.msra.mxu0 0
        %6937 = vmatprep.subr.bf16.mxu0 0
        %6938 = vmatpush1.bf16.msra.mxu0 0
        %6939 = vmatprep.subr.bf16.mxu0 0
        %6940 = vmatpush1.bf16.msra.mxu0 0
        %6941 = vmatprep.subr.bf16.mxu0 0
        %6942 = vmatpush1.bf16.msra.mxu0 0
        %6943 = vmatprep.mubr.bf16.mxu0 0
        %6944 = vmatmul.mubr.bf16.gmra.mrb[0].mxu0 %v6864
        %v6945 = vpop.f32.mrb[0].mxu0
        %v6946 = vadd.f32 %v6855, %v6945
        %v6947 = vpop.f32.mrb[0].mxu0
        %v6948 = vpop.f32.mrb[0].mxu0
        %v6949 = vadd.f32 %v6855, %v6948
        %v6950 = vpop.f32.mrb[0].mxu0
        %6951 = vmatprep.mubr.bf16.mxu0 0
        %6952 = vmatmul.mubr.bf16.gmra.mrb[0].mxu0 %v6867
        %v6953 = vpop.f32.mrb[0].mxu0
        %v6954 = vadd.f32 %v6855, %v6953
        %v6955 = vpop.f32.mrb[0].mxu0
        %v6956 = vpop.f32.mrb[0].mxu0
        %v6957 = vadd.f32 %v6855, %v6956
        %v6958 = vpop.f32.mrb[0].mxu0
        %6959 = vmatprep.mubr.bf16.mxu0 0
        %6960 = vmatmul.mubr.bf16.gmra.mrb[0].mxu0 %v6870
        %v6961 = vpop.f32.mrb[0].mxu0
        %v6962 = vadd.f32 %v6855, %v6961
        %v6963 = vpop.f32.mrb[0].mxu0
        %v6964 = vpop.f32.mrb[0].mxu0
        %v6965 = vadd.f32 %v6855, %v6964
        %v6966 = vpop.f32.mrb[0].mxu0
        %6967 = vmatprep.mubr.bf16.mxu0 0
        %6968 = vmatmul.mubr.bf16.gmra.mrb[0].mxu0 %v6873
        %v6969 = vpop.f32.mrb[0].mxu0
        %v6970 = vadd.f32 %v6855, %v6969
        %v6971 = vpop.f32.mrb[0].mxu0
        %v6972 = vpop.f32.mrb[0].mxu0
        %v6973 = vadd.f32 %v6855, %v6972
        %v6974 = vpop.f32.mrb[0].mxu0
        %6975 = vmatprep.mubr.bf16.mxu0 0
        %6976 = vmatmul.mubr.bf16.gmra.mrb[0].mxu0 %v6876
        %v6977 = vpop.f32.mrb[0].mxu0
        %v6978 = vadd.f32 %v6855, %v6977
        %v6979 = vpop.f32.mrb[0].mxu0
        %v6980 = vpop.f32.mrb[0].mxu0
        %v6981 = vadd.f32 %v6855, %v6980
        %v6982 = vpop.f32.mrb[0].mxu0
        %6983 = vmatprep.mubr.bf16.mxu0 0
        %6984 = vmatmul.mubr.bf16.gmra.mrb[0].mxu0 %v6879
        %v6985 = vpop.f32.mrb[0].mxu0
        %v6986 = vadd.f32 %v6855, %v6985
        %v6987 = vpop.f32.mrb[0].mxu0
        %v6988 = vpop.f32.mrb[0].mxu0
        %v6989 = vadd.f32 %v6855, %v6988
        %v6990 = vpop.f32.mrb[0].mxu0
        %6991 = vmatprep.mubr.bf16.mxu0 0
        %6992 = vmatmul.mubr.bf16.gmra.mrb[0].mxu0 %v6882
        %v6993 = vpop.f32.mrb[0].mxu0
        %v6994 = vadd.f32 %v6855, %v6993
        %v6995 = vpop.f32.mrb[0].mxu0
        %v6996 = vpop.f32.mrb[0].mxu0
        %v6997 = vadd.f32 %v6855, %v6996
        %v6998 = vpop.f32.mrb[0].mxu0
        %6999 = vmatprep.mubr.bf16.mxu0 0
        %7000 = vmatmul.mubr.bf16.gmra.mrb[0].mxu0 %v6885
        %v7001 = vpop.f32.mrb[0].mxu0
        %v7002 = vadd.f32 %v6855, %v7001
        %v7003 = vpop.f32.mrb[0].mxu0
        %v7004 = vpop.f32.mrb[0].mxu0
        %v7005 = vadd.f32 %v6855, %v7004
        %v7006 = vpop.f32.mrb[0].mxu0
        %7007 = vmatprep.mubr.bf16.mxu0 0
        %7008 = vmatmul.mubr.bf16.gmra.mrb[0].mxu0 %v6888
        %v7009 = vpop.f32.mrb[0].mxu0
        %v7010 = vadd.f32 %v6855, %v7009
        %v7011 = vpop.f32.mrb[0].mxu0
        %v7012 = vpop.f32.mrb[0].mxu0
        %v7013 = vadd.f32 %v6855, %v7012
        %v7014 = vpop.f32.mrb[0].mxu0
        %7015 = vmatprep.mubr.bf16.mxu0 0
        %7016 = vmatmul.mubr.bf16.gmra.mrb[0].mxu0 %v6891
        %v7017 = vpop.f32.mrb[0].mxu0
        %v7018 = vadd.f32 %v6855, %v7017
        %v7019 = vpop.f32.mrb[0].mxu0
        %v7020 = vpop.f32.mrb[0].mxu0
        %v7021 = vadd.f32 %v6855, %v7020
        %v7022 = vpop.f32.mrb[0].mxu0
        %7023 = vmatprep.mubr.bf16.mxu0 0
        %7024 = vmatmul.mubr.bf16.gmra.mrb[0].mxu0 %v6894
        %v7025 = vpop.f32.mrb[0].mxu0
        %v7026 = vadd.f32 %v6855, %v7025
        %v7027 = vpop.f32.mrb[0].mxu0
        %v7028 = vpop.f32.mrb[0].mxu0
        %v7029 = vadd.f32 %v6855, %v7028
        %v7030 = vpop.f32.mrb[0].mxu0
        %7031 = vmatprep.mubr.bf16.mxu0 0
        %7032 = vmatmul.mubr.bf16.gmra.mrb[0].mxu0 %v6897
        %v7033 = vpop.f32.mrb[0].mxu0
        %v7034 = vadd.f32 %v6855, %v7033
        %v7035 = vpop.f32.mrb[0].mxu0
        %v7036 = vpop.f32.mrb[0].mxu0
        %v7037 = vadd.f32 %v6855, %v7036
        %v7038 = vpop.f32.mrb[0].mxu0
        %7039 = vmatprep.mubr.bf16.mxu0 0
        %7040 = vmatmul.mubr.bf16.gmra.mrb[0].mxu0 %v6900
        %v7041 = vpop.f32.mrb[0].mxu0
        %v7042 = vadd.f32 %v6855, %v7041
        %v7043 = vpop.f32.mrb[0].mxu0
        %v7044 = vpop.f32.mrb[0].mxu0
        %v7045 = vadd.f32 %v6855, %v7044
        %v7046 = vpop.f32.mrb[0].mxu0
        %7047 = vmatprep.mubr.bf16.mxu0 0
        %7048 = vmatmul.mubr.bf16.gmra.mrb[0].mxu0 %v6903
        %v7049 = vpop.f32.mrb[0].mxu0
        %v7050 = vadd.f32 %v6855, %v7049
        %v7051 = vpop.f32.mrb[0].mxu0
        %v7052 = vpop.f32.mrb[0].mxu0
        %v7053 = vadd.f32 %v6855, %v7052
        %v7054 = vpop.f32.mrb[0].mxu0
        %7055 = vmatprep.mubr.bf16.mxu0 0
        %7056 = vmatmul.mubr.bf16.gmra.mrb[0].mxu0 %v6906
        %v7057 = vpop.f32.mrb[0].mxu0
        %v7058 = vadd.f32 %v6855, %v7057
        %v7059 = vpop.f32.mrb[0].mxu0
        %v7060 = vpop.f32.mrb[0].mxu0
        %v7061 = vadd.f32 %v6855, %v7060
        %v7062 = vpop.f32.mrb[0].mxu0
        %7063 = vmatprep.mubr.bf16.mxu0 0
        %7064 = vmatmul.mubr.bf16.gmra.mrb[0].mxu0 %v6909
        %v7065 = vpop.f32.mrb[0].mxu0
        %v7066 = vadd.f32 %v6855, %v7065
        %v7067 = vpop.f32.mrb[0].mxu0
        %v7068 = vpop.f32.mrb[0].mxu0
        %v7069 = vadd.f32 %v6855, %v7068
        %v7070 = vpop.f32.mrb[0].mxu0
        %7071 = vdwg.mxu0
        %v7072 = vadd.f32 %v6946, %v332
        %v7073 = vadd.f32 %v6949, %v333
        %v7074 = vadd.f32 %v6954, %v334
        %v7075 = vadd.f32 %v6957, %v335
        %v7076 = vadd.f32 %v6962, %v336
        %v7077 = vadd.f32 %v6965, %v337
        %v7078 = vadd.f32 %v6970, %v338
        %v7079 = vadd.f32 %v6973, %v339
        %v7080 = vadd.f32 %v6978, %v340
        %v7081 = vadd.f32 %v6981, %v341
        %v7082 = vadd.f32 %v6986, %v342
        %v7083 = vadd.f32 %v6989, %v343
        %v7084 = vadd.f32 %v6994, %v344
        %v7085 = vadd.f32 %v6997, %v345
        %v7086 = vadd.f32 %v7002, %v346
        %v7087 = vadd.f32 %v7005, %v347
        %v7088 = vadd.f32 %v7010, %v348
        %v7089 = vadd.f32 %v7013, %v349
        %v7090 = vadd.f32 %v7018, %v350
        %v7091 = vadd.f32 %v7021, %v351
        %v7092 = vadd.f32 %v7026, %v352
        %v7093 = vadd.f32 %v7029, %v353
        %v7094 = vadd.f32 %v7034, %v354
        %v7095 = vadd.f32 %v7037, %v355
        %v7096 = vadd.f32 %v7042, %v356
        %v7097 = vadd.f32 %v7045, %v357
        %v7098 = vadd.f32 %v7050, %v358
        %v7099 = vadd.f32 %v7053, %v359
        %v7100 = vadd.f32 %v7058, %v360
        %v7101 = vadd.f32 %v7061, %v361
        %v7102 = vadd.f32 %v7066, %v362
        %v7103 = vadd.f32 %v7069, %v363
        %7104 = vst.msk [vmem:[%s325] sm:$0xff] %vm668, %v7072
        %7105 = vst.msk [vmem:[%s325 + $0x8] sm:$0xff] %vm668, %v7073
        %7106 = vst.msk [vmem:[%s325 + $0x10] sm:$0xff] %vm668, %v7074
        %7107 = vst.msk [vmem:[%s325 + $0x18] sm:$0xff] %vm668, %v7075
        %7108 = vst.msk [vmem:[%s325 + $0x20] sm:$0xff] %vm668, %v7076
        %7109 = vst.msk [vmem:[%s325 + $0x28] sm:$0xff] %vm668, %v7077
        %7110 = vst.msk [vmem:[%s325 + $0x30] sm:$0xff] %vm668, %v7078
        %7111 = vst.msk [vmem:[%s325 + $0x38] sm:$0xff] %vm668, %v7079
        %7112 = vst.msk [vmem:[%s325 + $0x40] sm:$0xff] %vm668, %v7080
        %7113 = vst.msk [vmem:[%s325 + $0x48] sm:$0xff] %vm668, %v7081
        %7114 = vst.msk [vmem:[%s325 + $0x50] sm:$0xff] %vm668, %v7082
        %7115 = vst.msk [vmem:[%s325 + $0x58] sm:$0xff] %vm668, %v7083
        %7116 = vst.msk [vmem:[%s325 + $0x60] sm:$0xff] %vm668, %v7084
        %7117 = vst.msk [vmem:[%s325 + $0x68] sm:$0xff] %vm668, %v7085
        %7118 = vst.msk [vmem:[%s325 + $0x70] sm:$0xff] %vm668, %v7086
        %7119 = vst.msk [vmem:[%s325 + $0x78] sm:$0xff] %vm668, %v7087
        %7120 = vst.msk [vmem:[%s325 + $0x80] sm:$0xff] %vm668, %v7088
        %7121 = vst.msk [vmem:[%s325 + $0x88] sm:$0xff] %vm668, %v7089
        %7122 = vst.msk [vmem:[%s325 + $0x90] sm:$0xff] %vm668, %v7090
        %7123 = vst.msk [vmem:[%s325 + $0x98] sm:$0xff] %vm668, %v7091
        %7124 = vst.msk [vmem:[%s325 + $0xa0] sm:$0xff] %vm668, %v7092
        %7125 = vst.msk [vmem:[%s325 + $0xa8] sm:$0xff] %vm668, %v7093
        %7126 = vst.msk [vmem:[%s325 + $0xb0] sm:$0xff] %vm668, %v7094
        %7127 = vst.msk [vmem:[%s325 + $0xb8] sm:$0xff] %vm668, %v7095
        %7128 = vst.msk [vmem:[%s325 + $0xc0] sm:$0xff] %vm668, %v7096
        %7129 = vst.msk [vmem:[%s325 + $0xc8] sm:$0xff] %vm668, %v7097
        %7130 = vst.msk [vmem:[%s325 + $0xd0] sm:$0xff] %vm668, %v7098
        %7131 = vst.msk [vmem:[%s325 + $0xd8] sm:$0xff] %vm668, %v7099
        %7132 = vst.msk [vmem:[%s325 + $0xe0] sm:$0xff] %vm668, %v7100
        %7133 = vst.msk [vmem:[%s325 + $0xe8] sm:$0xff] %vm668, %v7101
        %7134 = vst.msk [vmem:[%s325 + $0xf0] sm:$0xff] %vm668, %v7102
        %7135 = vst.msk [vmem:[%s325 + $0xf8] sm:$0xff] %vm668, %v7103
        %s7136 = sand.u32 %s225, 1
        %s7137 = scalar_lea.sflag [#allocation4], %s7136
        %s7138 = sand.u32 %s225, 1
        %s7139 = smul.addr %s7138, 256
        %s7140 = scalar_lea.vmem [#allocation3], %s7139
        // Predicated region
        $region57: #{_lambda_.1} parent=55 // pred_check
          %p7141 = pneg %p235
        $region58: #{_lambda_.1} parent=55 // pred_check_branch
          %7143 = sbr.rel (%p7141) target = $region60
        $region59: #{_lambda_.1} parent=55 // pred_region
          %s7145 = ssub.s32 4096, 4096
          %7146 = vsyncadd %s7137, %s7145
          %s7147 = smul.addr %s23, 32
          %s7148 = smul.addr %s7147, 128
          %s7149 = scalar_lea.hbm %s9, %s7148
          %s7150 = sshll.u32 %s7140, 4
          %s7151 = int_to_ptr.vmem [resolvable:$true] %s7150
          %7156 = dma.vmem_to_hbm [thread:$0]  %s7151, 4096, %s7149, %s7137, 128, 128, 8
        $region60: #{_lambda_.1} parent=55 // pred_fallthru
          _
      $region56: #{_lambda_.1} parent=5 // pred_fallthru
        _
      %p7157 = scmp.le.s32.totalorder 2, %s18
      // Predicated region
      $region61: #{_lambda_.1} parent=5 // pred_check
        %p7158 = pneg %p7157
      $region62: #{_lambda_.1} parent=5 // pred_check_branch
        %7160 = sbr.rel (%p7158) target = $region64
      $region63: #{_lambda_.1} parent=5 // pred_region
        %s7161 = ssub.s32 %s18, 2
        // Predicated region
        $region65: #{_lambda_.1} parent=63 // pred_check
          %p7162 = pneg %p241
        $region66: #{_lambda_.1} parent=63 // pred_check_branch
          %7164 = sbr.rel (%p7162) target = $region68
        $region67: #{_lambda_.1} parent=63 // pred_region
          %s7165 = sand.u32 %s226, 1
          %s7166 = scalar_lea.sflag [#allocation4], %s7165
          %s7167 = sand.u32 %s226, 1
          %s7168 = smul.addr %s7167, 256
          %s7169 = scalar_lea.vmem [#allocation3], %s7168
          %7170 = dma.done %s7166, 4096
        $region68: #{_lambda_.1} parent=63 // pred_fallthru
          _
      $region64: #{_lambda_.1} parent=5 // pred_fallthru
        _
    $region6: #{_lambda_.1} parent=1 // loop_footer
      %s22 = sadd.s32 1, %s18
    $region7: #{_lambda_.1} parent=1 // loop_footer_branch
      %17 = sbr.rel target = $region3
    $region8: #{_lambda_.1} parent=1 // loop_exit
      _
    %7171 = vsyncpa [#allocation4], 1
    %s7172 = scalar_lea.sflag [#allocation4], 1
    %7173 = vsyncpa %s7172, 1

</llo_original>
